<compile_context>
chip_gen: v6e
topology: v6e:2x2x1
jax: 0.10.0
libtpu: 0.0.40
codegen_flags: <defaults>
</compile_context>

<pallas_src>
import functools
import math

import jax
import jax.numpy as jnp
from jax.experimental import pallas as pl
from jax.experimental.pallas import tpu as pltpu

_MXU_PRECISION = jax.lax.Precision.HIGHEST  # keep f32-exact matmuls (mem-bound workload)


# ----------------------------- in-kernel math helpers ------------------------


def _layer_norm(x, alpha, beta, eps):
    """alpha*(x-mean)/(std+eps)+beta with unbiased std, as in the module."""
    d = x.shape[-1]
    mean = jnp.mean(x, axis=-1, keepdims=True)
    diff = x - mean
    var = jnp.sum(diff * diff, axis=-1, keepdims=True) * (1.0 / (d - 1))
    return alpha * diff / (jnp.sqrt(var) + eps) + beta


def _dropout(v, p, seed, base):
    """Inverted dropout with a counter-based hash PRNG (portable jnp ops only).

    v:    (r, c) float32 value.
    p:    static python float dropout probability.
    seed: traced int32 scalar (per dropout site).
    base: traced int32 scalar global element offset (makes masks unique per
          grid step / batch / head).
    """
    if p <= 0.0:
        return v
    if p >= 1.0:
        return jnp.zeros_like(v)
    r, c = v.shape
    rows = jax.lax.broadcasted_iota(jnp.int32, (r, c), 0)
    cols = jax.lax.broadcasted_iota(jnp.int32, (r, c), 1)
    idx = (base + rows * c + cols).astype(jnp.uint32)
    h = idx ^ seed.astype(jnp.uint32)
    # murmur-style 32-bit finalizer
    h = (h ^ (h >> 16)) * jnp.uint32(0x7FEB352D)
    h = (h ^ (h >> 15)) * jnp.uint32(0x846CA68B)
    h = h ^ (h >> 16)
    # top 24 bits -> uniform in [0, 1)
    u = (h >> 8).astype(jnp.int32).astype(jnp.float32) * (1.0 / 16777216.0)
    keep = u >= p
    return jnp.where(keep, v * (1.0 / (1.0 - p)), jnp.zeros_like(v))


# ----------------------------- kernels ---------------------------------------


def _attn_residual_kernel(x_ref, mask_ref,
                          wq_ref, bq_ref, wk_ref, bk_ref, wv_ref, bv_ref,
                          wo_ref, bo_ref, alpha_ref, beta_ref, seed_ref,
                          o_ref, *, n_heads, dropout_p, eps):
    """x + dropout(MHA(layer_norm(x), mask)) for one batch element per step."""
    b = pl.program_id(0)
    x = x_ref[0].astype(jnp.float32)                    # (S, D)
    s, d = x.shape
    d_k = d // n_heads
    scale = 1.0 / math.sqrt(d_k)

    ln = _layer_norm(x, alpha_ref[0], beta_ref[0], eps)

    q = jnp.dot(ln, wq_ref[...], precision=_MXU_PRECISION,
                preferred_element_type=jnp.float32) + bq_ref[...]
    k = jnp.dot(ln, wk_ref[...], precision=_MXU_PRECISION,
                preferred_element_type=jnp.float32) + bk_ref[...]
    v = jnp.dot(ln, wv_ref[...], precision=_MXU_PRECISION,
                preferred_element_type=jnp.float32) + bv_ref[...]

    key_mask = mask_ref[0]                              # (1, S), broadcasts over queries

    heads = []
    for h in range(n_heads):
        lo, hi = h * d_k, (h + 1) * d_k
        qh, kh, vh = q[:, lo:hi], k[:, lo:hi], v[:, lo:hi]
        scores = jax.lax.dot_general(
            qh, kh, (((1,), (1,)), ((), ())),
            precision=_MXU_PRECISION,
            preferred_element_type=jnp.float32) * scale              # (S, S)
        scores = jnp.where(key_mask == 0.0, -1e9, scores)
        scores = scores - jnp.max(scores, axis=-1, keepdims=True)
        e = jnp.exp(scores)
        probs = e / jnp.sum(e, axis=-1, keepdims=True)
        probs = _dropout(probs, dropout_p, seed_ref[0],
                         (b * n_heads + h) * (s * s))
        heads.append(jnp.dot(probs, vh, precision=_MXU_PRECISION,
                             preferred_element_type=jnp.float32))    # (S, d_k)

    attn = jnp.concatenate(heads, axis=-1)                            # (S, D)
    y = jnp.dot(attn, wo_ref[...], precision=_MXU_PRECISION,
                preferred_element_type=jnp.float32) + bo_ref[...]
    y = _dropout(y, dropout_p, seed_ref[1], b * (s * d))

    o_ref[0] = (x + y).astype(o_ref.dtype)


def _ffn_residual_kernel(x_ref, w1_ref, b1_ref, w2_ref, b2_ref,
                         alpha_ref, beta_ref, seed_ref, o_ref, *,
                         dropout_p, eps):
    """x + dropout(linear2(dropout(relu(linear1(layer_norm(x)))))) per row tile."""
    tm, d = x_ref.shape
    d_ff = w1_ref.shape[1]
    row0 = pl.program_id(0) * tm

    x = x_ref[...].astype(jnp.float32)                  # (tm, D)
    ln = _layer_norm(x, alpha_ref[0], beta_ref[0], eps)

    h = jnp.dot(ln, w1_ref[...], precision=_MXU_PRECISION,
                preferred_element_type=jnp.float32) + b1_ref[...]     # (tm, d_ff)
    h = jnp.maximum(h, 0.0)
    h = _dropout(h, dropout_p, seed_ref[0], row0 * d_ff)

    y = jnp.dot(h, w2_ref[...], precision=_MXU_PRECISION,
                preferred_element_type=jnp.float32) + b2_ref[...]     # (tm, D)
    y = _dropout(y, dropout_p, seed_ref[1], row0 * d)

    o_ref[...] = (x + y).astype(o_ref.dtype)


# ----------------------------- wrappers ---------------------------------------

_SMEM_SPEC = pl.BlockSpec(memory_space=pltpu.MemorySpace.SMEM)


def attention_residual_block(x, src_mask, wq, bq, wk, bk, wv, bv, wo, bo,
                             alpha, beta, *, n_heads, dropout_p, seeds,
                             eps=1e-6):
    B, S, D = x.shape
    seeds_arr = jnp.asarray(seeds, dtype=jnp.int32)

    def full(shape):
        return pl.BlockSpec(shape, lambda b, _n=len(shape): (0,) * _n)

    kernel = functools.partial(_attn_residual_kernel, n_heads=n_heads,
                               dropout_p=float(dropout_p), eps=float(eps))
    return pl.pallas_call(
        kernel,
        out_shape=jax.ShapeDtypeStruct((B, S, D), x.dtype),
        grid_spec=pltpu.PrefetchScalarGridSpec(
            num_scalar_prefetch=0,
            grid=(B,),
            in_specs=[
                pl.BlockSpec((1, S, D), lambda b: (b, 0, 0)),   # x
                pl.BlockSpec((1, 1, S), lambda b: (b, 0, 0)),   # key mask
                full((D, D)), full((1, D)),                     # wq, bq (VMEM-resident)
                full((D, D)), full((1, D)),                     # wk, bk
                full((D, D)), full((1, D)),                     # wv, bv
                full((D, D)), full((1, D)),                     # wo, bo
                _SMEM_SPEC, _SMEM_SPEC, _SMEM_SPEC,             # alpha, beta, seeds
            ],
            out_specs=pl.BlockSpec((1, S, D), lambda b: (b, 0, 0)),
        ),
        compiler_params=pltpu.CompilerParams(
            dimension_semantics=("parallel",),
            vmem_limit_bytes=32 * 1024 * 1024,
        ),
    )(x, src_mask, wq, bq, wk, bk, wv, bv, wo, bo, alpha, beta, seeds_arr)


def feed_forward_residual_block(x, w1, b1, w2, b2, alpha, beta, *,
                                dropout_p, seeds, eps=1e-6, block_rows=512):
    B, S, D = x.shape
    d_ff = w1.shape[1]
    R = B * S
    tm = min(block_rows, R)
    assert R % tm == 0 and (tm % 8 == 0 or tm == R), (R, tm)
    xf = x.reshape(R, D)
    seeds_arr = jnp.asarray(seeds, dtype=jnp.int32)

    kernel = functools.partial(_ffn_residual_kernel,
                               dropout_p=float(dropout_p), eps=float(eps))
    out = pl.pallas_call(
        kernel,
        out_shape=jax.ShapeDtypeStruct((R, D), x.dtype),
        grid_spec=pltpu.PrefetchScalarGridSpec(
            num_scalar_prefetch=0,
            grid=(R // tm,),
            in_specs=[
                pl.BlockSpec((tm, D), lambda i: (i, 0)),        # x row tile
                pl.BlockSpec((D, d_ff), lambda i: (0, 0)),      # w1 (resident)
                pl.BlockSpec((1, d_ff), lambda i: (0, 0)),      # b1
                pl.BlockSpec((d_ff, D), lambda i: (0, 0)),      # w2
                pl.BlockSpec((1, D), lambda i: (0, 0)),         # b2
                _SMEM_SPEC, _SMEM_SPEC, _SMEM_SPEC,             # alpha, beta, seeds
            ],
            out_specs=pl.BlockSpec((tm, D), lambda i: (i, 0)),
        ),
        compiler_params=pltpu.CompilerParams(
            dimension_semantics=("parallel",),
            vmem_limit_bytes=32 * 1024 * 1024,
        ),
    )(xf, w1, b1, w2, b2, alpha, beta, seeds_arr)
    return out.reshape(B, S, D)


def encoder_block_forward(x, src_mask, params, *, n_heads, dropout_p, seed,
                          eps=1e-6, block_rows=512):
    """Pallas equivalent of EncoderBlock.forward(x, src_mask)."""
    p = params
    x = attention_residual_block(
        x, src_mask,
        p["wq"], p["bq"], p["wk"], p["bk"], p["wv"], p["bv"], p["wo"], p["bo"],
        p["ln1_alpha"], p["ln1_beta"],
        n_heads=n_heads, dropout_p=dropout_p, seeds=(seed, seed + 1), eps=eps)
    x = feed_forward_residual_block(
        x, p["w1"], p["b1"], p["w2"], p["b2"], p["ln2_alpha"], p["ln2_beta"],
        dropout_p=dropout_p, seeds=(seed + 2, seed + 3), eps=eps,
        block_rows=block_rows)
    return x


# ----------------------------- pure-JAX reference -----------------------------


def _layer_norm_ref(x, alpha, beta, eps):
    mean = jnp.mean(x, axis=-1, keepdims=True)
    diff = x - mean
    var = jnp.sum(diff * diff, axis=-1, keepdims=True) / (x.shape[-1] - 1)
    return alpha * diff / (jnp.sqrt(var) + eps) + beta


def encoder_block_reference(x, src_mask, params, *, n_heads, eps=1e-6):
    """Dropout-free (eval-mode) reference of the same forward pass."""
    p = params
    D = x.shape[-1]
    d_k = D // n_heads

    ln1 = _layer_norm_ref(x, p["ln1_alpha"][0], p["ln1_beta"][0], eps)
    q = jnp.dot(ln1, p["wq"], precision=_MXU_PRECISION) + p["bq"]
    k = jnp.dot(ln1, p["wk"], precision=_MXU_PRECISION) + p["bk"]
    v = jnp.dot(ln1, p["wv"], precision=_MXU_PRECISION) + p["bv"]

    heads = []
    for h in range(n_heads):
        sl = slice(h * d_k, (h + 1) * d_k)
        qh, kh, vh = q[..., sl], k[..., sl], v[..., sl]
        sc = jnp.einsum("bqd,bkd->bqk", qh, kh,
                        precision=_MXU_PRECISION) / math.sqrt(d_k)
        sc = jnp.where(src_mask == 0.0, -1e9, sc)          # (B,1,S) key mask
        sc = sc - jnp.max(sc, axis=-1, keepdims=True)
        e = jnp.exp(sc)
        probs = e / jnp.sum(e, axis=-1, keepdims=True)
        heads.append(jnp.einsum("bqk,bkd->bqd", probs, vh,
                                precision=_MXU_PRECISION))
    attn = jnp.concatenate(heads, axis=-1)
    x = x + (jnp.dot(attn, p["wo"], precision=_MXU_PRECISION) + p["bo"])

    ln2 = _layer_norm_ref(x, p["ln2_alpha"][0], p["ln2_beta"][0], eps)
    hdd = jnp.maximum(jnp.dot(ln2, p["w1"], precision=_MXU_PRECISION) + p["b1"], 0.0)
    y = jnp.dot(hdd, p["w2"], precision=_MXU_PRECISION) + p["b2"]
    return x + y


# ------------------------------- demo ------------------------------------------

if __name__ == "__main__":
    B, S, D, H, D_FF = 2, 8, 128, 4, 256
    dropout_p = 0.1
    eps = 1e-6

    key = jax.random.PRNGKey(0)
    ks = jax.random.split(key, 13)

    def w_init(k, shape, fan_in):
        return jax.random.normal(k, shape, dtype=jnp.float32) / math.sqrt(fan_in)

    x = jax.random.normal(ks[0], (B, S, D), dtype=jnp.float32)
    params = dict(
        wq=w_init(ks[1], (D, D), D),
        bq=0.01 * jax.random.normal(ks[2], (1, D), dtype=jnp.float32),
        wk=w_init(ks[3], (D, D), D),
        bk=0.01 * jax.random.normal(ks[4], (1, D), dtype=jnp.float32),
        wv=w_init(ks[5], (D, D), D),
        bv=0.01 * jax.random.normal(ks[6], (1, D), dtype=jnp.float32),
        wo=w_init(ks[7], (D, D), D),
        bo=0.01 * jax.random.normal(ks[8], (1, D), dtype=jnp.float32),
        w1=w_init(ks[9], (D, D_FF), D),
        b1=0.01 * jax.random.normal(ks[10], (1, D_FF), dtype=jnp.float32),
        w2=w_init(ks[11], (D_FF, D), D_FF),
        b2=0.01 * jax.random.normal(ks[12], (1, D), dtype=jnp.float32),
        ln1_alpha=jnp.ones((1,), jnp.float32), ln1_beta=jnp.zeros((1,), jnp.float32),
        ln2_alpha=jnp.ones((1,), jnp.float32), ln2_beta=jnp.zeros((1,), jnp.float32),
    )

    # src_mask: 1 = attend, 0 = masked (key mask, broadcast over heads/queries).
    src_mask = jnp.ones((B, 1, S), dtype=jnp.float32).at[1, 0, S - 1].set(0.0)

    # Deterministic correctness check with dropout disabled.
    out_eval = encoder_block_forward(x, src_mask, params, n_heads=H,
                                     dropout_p=0.0, seed=0, eps=eps)
    ref_eval = encoder_block_reference(x, src_mask, params, n_heads=H, eps=eps)
    max_err = float(jnp.max(jnp.abs(out_eval - ref_eval)))
    assert bool(jnp.allclose(out_eval, ref_eval, atol=2e-3, rtol=2e-3)), max_err

    # Training-mode forward with dropout enabled.
    out = encoder_block_forward(x, src_mask, params, n_heads=H,
                                dropout_p=dropout_p, seed=1234, eps=eps)
    out = jax.block_until_ready(out)

    assert out.shape == (B, S, D)
    assert bool(jnp.all(jnp.isfinite(out)))
    print("KERNEL_OK")
</pallas_src>

<mosaic_0001>
module attributes {stable_mosaic.version = 11 : i64} {
  func.func @_attn_residual_kernel(%arg0: i32, %arg1: memref<1x8x128xf32, #tpu.memory_space<vmem>>, %arg2: memref<1x1x8xf32, #tpu.memory_space<vmem>>, %arg3: memref<128x128xf32, #tpu.memory_space<vmem>>, %arg4: memref<1x128xf32, #tpu.memory_space<vmem>>, %arg5: memref<128x128xf32, #tpu.memory_space<vmem>>, %arg6: memref<1x128xf32, #tpu.memory_space<vmem>>, %arg7: memref<128x128xf32, #tpu.memory_space<vmem>>, %arg8: memref<1x128xf32, #tpu.memory_space<vmem>>, %arg9: memref<128x128xf32, #tpu.memory_space<vmem>>, %arg10: memref<1x128xf32, #tpu.memory_space<vmem>>, %arg11: memref<1xf32, #tpu.memory_space<smem>>, %arg12: memref<1xf32, #tpu.memory_space<smem>>, %arg13: memref<2xi32, #tpu.memory_space<smem>>, %arg14: memref<1x8x128xf32, #tpu.memory_space<vmem>>) attributes {dimension_semantics = [#tpu.dimension_semantics<parallel>], iteration_bounds = array<i64: 2>, scalar_prefetch = 0 : i64, scratch_operands = 0 : i64, tpu.core_type = #tpu.core_type<tc>, window_params = [{transform_indices = @transform_0, window_bounds = array<i64: 1, 8, 128>}, {transform_indices = @transform_1, window_bounds = array<i64: 1, 1, 8>}, {pipeline_mode = #tpu.pipeline_mode<synchronous>, transform_indices = @transform_2, window_bounds = array<i64: 128, 128>}, {pipeline_mode = #tpu.pipeline_mode<synchronous>, transform_indices = @transform_3, window_bounds = array<i64: 1, 128>}, {pipeline_mode = #tpu.pipeline_mode<synchronous>, transform_indices = @transform_4, window_bounds = array<i64: 128, 128>}, {pipeline_mode = #tpu.pipeline_mode<synchronous>, transform_indices = @transform_5, window_bounds = array<i64: 1, 128>}, {pipeline_mode = #tpu.pipeline_mode<synchronous>, transform_indices = @transform_6, window_bounds = array<i64: 128, 128>}, {pipeline_mode = #tpu.pipeline_mode<synchronous>, transform_indices = @transform_7, window_bounds = array<i64: 1, 128>}, {pipeline_mode = #tpu.pipeline_mode<synchronous>, transform_indices = @transform_8, window_bounds = array<i64: 128, 128>}, {pipeline_mode = #tpu.pipeline_mode<synchronous>, transform_indices = @transform_9, window_bounds = array<i64: 1, 128>}, {transform_indices = @transform_10, window_bounds = array<i64: 1>}, {transform_indices = @transform_11, window_bounds = array<i64: 1>}, {transform_indices = @transform_12, window_bounds = array<i64: 2>}, {transform_indices = @transform_13, window_bounds = array<i64: 1, 8, 128>}]} {
    %c0 = arith.constant 0 : index
    %c0_0 = arith.constant 0 : index
    %c0_1 = arith.constant 0 : index
    %0 = vector.load %arg1[%c0, %c0_0, %c0_1] : memref<1x8x128xf32, #tpu.memory_space<vmem>>, vector<1x8x128xf32>
    %1 = vector.shape_cast %0 : vector<1x8x128xf32> to vector<8x128xf32>
    %c0_2 = arith.constant 0 : index
    %2 = memref.load %arg11[%c0_2] : memref<1xf32, #tpu.memory_space<smem>>
    %c0_3 = arith.constant 0 : index
    %3 = memref.load %arg12[%c0_3] : memref<1xf32, #tpu.memory_space<smem>>
    %cst = arith.constant dense<0.000000e+00> : vector<8xf32>
    %4 = vector.multi_reduction <add>, %1, %cst [1] : vector<8x128xf32> to vector<8xf32>
    %5 = vector.shape_cast %4 : vector<8xf32> to vector<8x1xf32>
    %cst_4 = arith.constant 1.280000e+02 : f32
    %6 = vector.broadcast %cst_4 : f32 to vector<8x1xf32>
    %7 = arith.divf %5, %6 : vector<8x1xf32>
    %8 = vector.broadcast %7 : vector<8x1xf32> to vector<8x128xf32>
    %9 = arith.subf %1, %8 : vector<8x128xf32>
    %10 = arith.mulf %9, %9 : vector<8x128xf32>
    %cst_5 = arith.constant dense<0.000000e+00> : vector<8xf32>
    %11 = vector.multi_reduction <add>, %10, %cst_5 [1] : vector<8x128xf32> to vector<8xf32>
    %12 = vector.shape_cast %11 : vector<8xf32> to vector<8x1xf32>
    %cst_6 = arith.constant 0.00787401571 : f32
    %13 = vector.broadcast %cst_6 : f32 to vector<8x1xf32>
    %14 = arith.mulf %12, %13 : vector<8x1xf32>
    %15 = vector.broadcast %2 : f32 to vector<8x128xf32>
    %16 = arith.mulf %15, %9 : vector<8x128xf32>
    %17 = math.sqrt %14 : vector<8x1xf32>
    %cst_7 = arith.constant 9.99999997E-7 : f32
    %18 = vector.broadcast %cst_7 : f32 to vector<8x1xf32>
    %19 = arith.addf %17, %18 : vector<8x1xf32>
    %20 = vector.broadcast %19 : vector<8x1xf32> to vector<8x128xf32>
    %21 = arith.divf %16, %20 : vector<8x128xf32>
    %22 = vector.broadcast %3 : f32 to vector<8x128xf32>
    %23 = arith.addf %21, %22 : vector<8x128xf32>
    %c0_8 = arith.constant 0 : index
    %c0_9 = arith.constant 0 : index
    %24 = vector.load %arg3[%c0_8, %c0_9] : memref<128x128xf32, #tpu.memory_space<vmem>>, vector<128x128xf32>
    %cst_10 = arith.constant dense<0.000000e+00> : vector<8x128xf32>
    %25 = tpu.matmul %23, %24, %cst_10 {dimension_numbers = #tpu.dot_dimension_numbers<[1], [0], [0], [1], [0, 0, 1, 1], [], []>, precision = #tpu.contract_precision<fp32>} : vector<8x128xf32>, vector<128x128xf32>, vector<8x128xf32> -> vector<8x128xf32>
    %c0_11 = arith.constant 0 : index
    %c0_12 = arith.constant 0 : index
    %26 = vector.load %arg4[%c0_11, %c0_12] : memref<1x128xf32, #tpu.memory_space<vmem>>, vector<1x128xf32>
    %27 = vector.broadcast %26 : vector<1x128xf32> to vector<8x128xf32>
    %28 = arith.addf %25, %27 : vector<8x128xf32>
    %c0_13 = arith.constant 0 : index
    %c0_14 = arith.constant 0 : index
    %29 = vector.load %arg5[%c0_13, %c0_14] : memref<128x128xf32, #tpu.memory_space<vmem>>, vector<128x128xf32>
    %cst_15 = arith.constant dense<0.000000e+00> : vector<8x128xf32>
    %30 = tpu.matmul %23, %29, %cst_15 {dimension_numbers = #tpu.dot_dimension_numbers<[1], [0], [0], [1], [0, 0, 1, 1], [], []>, precision = #tpu.contract_precision<fp32>} : vector<8x128xf32>, vector<128x128xf32>, vector<8x128xf32> -> vector<8x128xf32>
    %c0_16 = arith.constant 0 : index
    %c0_17 = arith.constant 0 : index
    %31 = vector.load %arg6[%c0_16, %c0_17] : memref<1x128xf32, #tpu.memory_space<vmem>>, vector<1x128xf32>
    %32 = vector.broadcast %31 : vector<1x128xf32> to vector<8x128xf32>
    %33 = arith.addf %30, %32 : vector<8x128xf32>
    %c0_18 = arith.constant 0 : index
    %c0_19 = arith.constant 0 : index
    %34 = vector.load %arg7[%c0_18, %c0_19] : memref<128x128xf32, #tpu.memory_space<vmem>>, vector<128x128xf32>
    %cst_20 = arith.constant dense<0.000000e+00> : vector<8x128xf32>
    %35 = tpu.matmul %23, %34, %cst_20 {dimension_numbers = #tpu.dot_dimension_numbers<[1], [0], [0], [1], [0, 0, 1, 1], [], []>, precision = #tpu.contract_precision<fp32>} : vector<8x128xf32>, vector<128x128xf32>, vector<8x128xf32> -> vector<8x128xf32>
    %c0_21 = arith.constant 0 : index
    %c0_22 = arith.constant 0 : index
    %36 = vector.load %arg8[%c0_21, %c0_22] : memref<1x128xf32, #tpu.memory_space<vmem>>, vector<1x128xf32>
    %37 = vector.broadcast %36 : vector<1x128xf32> to vector<8x128xf32>
    %38 = arith.addf %35, %37 : vector<8x128xf32>
    %c0_23 = arith.constant 0 : index
    %c0_24 = arith.constant 0 : index
    %c0_25 = arith.constant 0 : index
    %39 = vector.load %arg2[%c0_23, %c0_24, %c0_25] : memref<1x1x8xf32, #tpu.memory_space<vmem>>, vector<1x1x8xf32>
    %40 = vector.shape_cast %39 : vector<1x1x8xf32> to vector<1x8xf32>
    %41 = vector.extract_strided_slice %28 {offsets = [0, 0], sizes = [8, 32], strides = [1, 1]} : vector<8x128xf32> to vector<8x32xf32>
    %42 = vector.extract_strided_slice %33 {offsets = [0, 0], sizes = [8, 32], strides = [1, 1]} : vector<8x128xf32> to vector<8x32xf32>
    %43 = vector.extract_strided_slice %38 {offsets = [0, 0], sizes = [8, 32], strides = [1, 1]} : vector<8x128xf32> to vector<8x32xf32>
    %cst_26 = arith.constant dense<0.000000e+00> : vector<8x8xf32>
    %44 = tpu.matmul %41, %42, %cst_26 {dimension_numbers = #tpu.dot_dimension_numbers<[1], [1], [0], [0], [0, 0, 1, 0], [], []>, precision = #tpu.contract_precision<fp32>} : vector<8x32xf32>, vector<8x32xf32>, vector<8x8xf32> -> vector<8x8xf32>
    %cst_27 = arith.constant 0.176776692 : f32
    %45 = vector.broadcast %cst_27 : f32 to vector<8x8xf32>
    %46 = arith.mulf %44, %45 : vector<8x8xf32>
    %cst_28 = arith.constant 0.000000e+00 : f32
    %47 = vector.broadcast %cst_28 : f32 to vector<1x8xf32>
    %48 = arith.cmpf oeq, %40, %47 : vector<1x8xf32>
    %cst_29 = arith.constant -1.000000e+09 : f32
    %49 = vector.shape_cast %48 : vector<1x8xi1> to vector<1x8xi1>
    %50 = vector.broadcast %49 : vector<1x8xi1> to vector<8x8xi1>
    %51 = vector.broadcast %cst_29 : f32 to vector<8x8xf32>
    %52 = arith.select %50, %51, %46 : vector<8x8xi1>, vector<8x8xf32>
    %cst_30 = arith.constant dense<0xFF800000> : vector<8xf32>
    %53 = vector.multi_reduction <maximumf>, %52, %cst_30 [1] : vector<8x8xf32> to vector<8xf32>
    %54 = vector.shape_cast %53 : vector<8xf32> to vector<8x1xf32>
    %55 = vector.broadcast %54 : vector<8x1xf32> to vector<8x8xf32>
    %56 = arith.subf %52, %55 : vector<8x8xf32>
    %57 = math.exp %56 : vector<8x8xf32>
    %cst_31 = arith.constant dense<0.000000e+00> : vector<8xf32>
    %58 = vector.multi_reduction <add>, %57, %cst_31 [1] : vector<8x8xf32> to vector<8xf32>
    %59 = vector.shape_cast %58 : vector<8xf32> to vector<8x1xf32>
    %60 = vector.broadcast %59 : vector<8x1xf32> to vector<8x8xf32>
    %61 = arith.divf %57, %60 : vector<8x8xf32>
    %cst_32 = arith.constant dense<0.000000e+00> : vector<8x32xf32>
    %62 = tpu.matmul %61, %43, %cst_32 {dimension_numbers = #tpu.dot_dimension_numbers<[1], [0], [0], [1], [0, 0, 1, 1], [], []>, precision = #tpu.contract_precision<fp32>} : vector<8x8xf32>, vector<8x32xf32>, vector<8x32xf32> -> vector<8x32xf32>
    %63 = vector.extract_strided_slice %28 {offsets = [0, 32], sizes = [8, 32], strides = [1, 1]} : vector<8x128xf32> to vector<8x32xf32>
    %64 = vector.extract_strided_slice %33 {offsets = [0, 32], sizes = [8, 32], strides = [1, 1]} : vector<8x128xf32> to vector<8x32xf32>
    %65 = vector.extract_strided_slice %38 {offsets = [0, 32], sizes = [8, 32], strides = [1, 1]} : vector<8x128xf32> to vector<8x32xf32>
    %cst_33 = arith.constant dense<0.000000e+00> : vector<8x8xf32>
    %66 = tpu.matmul %63, %64, %cst_33 {dimension_numbers = #tpu.dot_dimension_numbers<[1], [1], [0], [0], [0, 0, 1, 0], [], []>, precision = #tpu.contract_precision<fp32>} : vector<8x32xf32>, vector<8x32xf32>, vector<8x8xf32> -> vector<8x8xf32>
    %cst_34 = arith.constant 0.176776692 : f32
    %67 = vector.broadcast %cst_34 : f32 to vector<8x8xf32>
    %68 = arith.mulf %66, %67 : vector<8x8xf32>
    %cst_35 = arith.constant 0.000000e+00 : f32
    %69 = vector.broadcast %cst_35 : f32 to vector<1x8xf32>
    %70 = arith.cmpf oeq, %40, %69 : vector<1x8xf32>
    %cst_36 = arith.constant -1.000000e+09 : f32
    %71 = vector.shape_cast %70 : vector<1x8xi1> to vector<1x8xi1>
    %72 = vector.broadcast %71 : vector<1x8xi1> to vector<8x8xi1>
    %73 = vector.broadcast %cst_36 : f32 to vector<8x8xf32>
    %74 = arith.select %72, %73, %68 : vector<8x8xi1>, vector<8x8xf32>
    %cst_37 = arith.constant dense<0xFF800000> : vector<8xf32>
    %75 = vector.multi_reduction <maximumf>, %74, %cst_37 [1] : vector<8x8xf32> to vector<8xf32>
    %76 = vector.shape_cast %75 : vector<8xf32> to vector<8x1xf32>
    %77 = vector.broadcast %76 : vector<8x1xf32> to vector<8x8xf32>
    %78 = arith.subf %74, %77 : vector<8x8xf32>
    %79 = math.exp %78 : vector<8x8xf32>
    %cst_38 = arith.constant dense<0.000000e+00> : vector<8xf32>
    %80 = vector.multi_reduction <add>, %79, %cst_38 [1] : vector<8x8xf32> to vector<8xf32>
    %81 = vector.shape_cast %80 : vector<8xf32> to vector<8x1xf32>
    %82 = vector.broadcast %81 : vector<8x1xf32> to vector<8x8xf32>
    %83 = arith.divf %79, %82 : vector<8x8xf32>
    %cst_39 = arith.constant dense<0.000000e+00> : vector<8x32xf32>
    %84 = tpu.matmul %83, %65, %cst_39 {dimension_numbers = #tpu.dot_dimension_numbers<[1], [0], [0], [1], [0, 0, 1, 1], [], []>, precision = #tpu.contract_precision<fp32>} : vector<8x8xf32>, vector<8x32xf32>, vector<8x32xf32> -> vector<8x32xf32>
    %85 = vector.extract_strided_slice %28 {offsets = [0, 64], sizes = [8, 32], strides = [1, 1]} : vector<8x128xf32> to vector<8x32xf32>
    %86 = vector.extract_strided_slice %33 {offsets = [0, 64], sizes = [8, 32], strides = [1, 1]} : vector<8x128xf32> to vector<8x32xf32>
    %87 = vector.extract_strided_slice %38 {offsets = [0, 64], sizes = [8, 32], strides = [1, 1]} : vector<8x128xf32> to vector<8x32xf32>
    %cst_40 = arith.constant dense<0.000000e+00> : vector<8x8xf32>
    %88 = tpu.matmul %85, %86, %cst_40 {dimension_numbers = #tpu.dot_dimension_numbers<[1], [1], [0], [0], [0, 0, 1, 0], [], []>, precision = #tpu.contract_precision<fp32>} : vector<8x32xf32>, vector<8x32xf32>, vector<8x8xf32> -> vector<8x8xf32>
    %cst_41 = arith.constant 0.176776692 : f32
    %89 = vector.broadcast %cst_41 : f32 to vector<8x8xf32>
    %90 = arith.mulf %88, %89 : vector<8x8xf32>
    %cst_42 = arith.constant 0.000000e+00 : f32
    %91 = vector.broadcast %cst_42 : f32 to vector<1x8xf32>
    %92 = arith.cmpf oeq, %40, %91 : vector<1x8xf32>
    %cst_43 = arith.constant -1.000000e+09 : f32
    %93 = vector.shape_cast %92 : vector<1x8xi1> to vector<1x8xi1>
    %94 = vector.broadcast %93 : vector<1x8xi1> to vector<8x8xi1>
    %95 = vector.broadcast %cst_43 : f32 to vector<8x8xf32>
    %96 = arith.select %94, %95, %90 : vector<8x8xi1>, vector<8x8xf32>
    %cst_44 = arith.constant dense<0xFF800000> : vector<8xf32>
    %97 = vector.multi_reduction <maximumf>, %96, %cst_44 [1] : vector<8x8xf32> to vector<8xf32>
    %98 = vector.shape_cast %97 : vector<8xf32> to vector<8x1xf32>
    %99 = vector.broadcast %98 : vector<8x1xf32> to vector<8x8xf32>
    %100 = arith.subf %96, %99 : vector<8x8xf32>
    %101 = math.exp %100 : vector<8x8xf32>
    %cst_45 = arith.constant dense<0.000000e+00> : vector<8xf32>
    %102 = vector.multi_reduction <add>, %101, %cst_45 [1] : vector<8x8xf32> to vector<8xf32>
    %103 = vector.shape_cast %102 : vector<8xf32> to vector<8x1xf32>
    %104 = vector.broadcast %103 : vector<8x1xf32> to vector<8x8xf32>
    %105 = arith.divf %101, %104 : vector<8x8xf32>
    %cst_46 = arith.constant dense<0.000000e+00> : vector<8x32xf32>
    %106 = tpu.matmul %105, %87, %cst_46 {dimension_numbers = #tpu.dot_dimension_numbers<[1], [0], [0], [1], [0, 0, 1, 1], [], []>, precision = #tpu.contract_precision<fp32>} : vector<8x8xf32>, vector<8x32xf32>, vector<8x32xf32> -> vector<8x32xf32>
    %107 = vector.extract_strided_slice %28 {offsets = [0, 96], sizes = [8, 32], strides = [1, 1]} : vector<8x128xf32> to vector<8x32xf32>
    %108 = vector.extract_strided_slice %33 {offsets = [0, 96], sizes = [8, 32], strides = [1, 1]} : vector<8x128xf32> to vector<8x32xf32>
    %109 = vector.extract_strided_slice %38 {offsets = [0, 96], sizes = [8, 32], strides = [1, 1]} : vector<8x128xf32> to vector<8x32xf32>
    %cst_47 = arith.constant dense<0.000000e+00> : vector<8x8xf32>
    %110 = tpu.matmul %107, %108, %cst_47 {dimension_numbers = #tpu.dot_dimension_numbers<[1], [1], [0], [0], [0, 0, 1, 0], [], []>, precision = #tpu.contract_precision<fp32>} : vector<8x32xf32>, vector<8x32xf32>, vector<8x8xf32> -> vector<8x8xf32>
    %cst_48 = arith.constant 0.176776692 : f32
    %111 = vector.broadcast %cst_48 : f32 to vector<8x8xf32>
    %112 = arith.mulf %110, %111 : vector<8x8xf32>
    %cst_49 = arith.constant 0.000000e+00 : f32
    %113 = vector.broadcast %cst_49 : f32 to vector<1x8xf32>
    %114 = arith.cmpf oeq, %40, %113 : vector<1x8xf32>
    %cst_50 = arith.constant -1.000000e+09 : f32
    %115 = vector.shape_cast %114 : vector<1x8xi1> to vector<1x8xi1>
    %116 = vector.broadcast %115 : vector<1x8xi1> to vector<8x8xi1>
    %117 = vector.broadcast %cst_50 : f32 to vector<8x8xf32>
    %118 = arith.select %116, %117, %112 : vector<8x8xi1>, vector<8x8xf32>
    %cst_51 = arith.constant dense<0xFF800000> : vector<8xf32>
    %119 = vector.multi_reduction <maximumf>, %118, %cst_51 [1] : vector<8x8xf32> to vector<8xf32>
    %120 = vector.shape_cast %119 : vector<8xf32> to vector<8x1xf32>
    %121 = vector.broadcast %120 : vector<8x1xf32> to vector<8x8xf32>
    %122 = arith.subf %118, %121 : vector<8x8xf32>
    %123 = math.exp %122 : vector<8x8xf32>
    %cst_52 = arith.constant dense<0.000000e+00> : vector<8xf32>
    %124 = vector.multi_reduction <add>, %123, %cst_52 [1] : vector<8x8xf32> to vector<8xf32>
    %125 = vector.shape_cast %124 : vector<8xf32> to vector<8x1xf32>
    %126 = vector.broadcast %125 : vector<8x1xf32> to vector<8x8xf32>
    %127 = arith.divf %123, %126 : vector<8x8xf32>
    %cst_53 = arith.constant dense<0.000000e+00> : vector<8x32xf32>
    %128 = tpu.matmul %127, %109, %cst_53 {dimension_numbers = #tpu.dot_dimension_numbers<[1], [0], [0], [1], [0, 0, 1, 1], [], []>, precision = #tpu.contract_precision<fp32>} : vector<8x8xf32>, vector<8x32xf32>, vector<8x32xf32> -> vector<8x32xf32>
    %129 = tpu.concatenate %62, %84, %106, %128 in 1 : vector<8x32xf32>, vector<8x32xf32>, vector<8x32xf32>, vector<8x32xf32> -> vector<8x128xf32>
    %c0_54 = arith.constant 0 : index
    %c0_55 = arith.constant 0 : index
    %130 = vector.load %arg9[%c0_54, %c0_55] : memref<128x128xf32, #tpu.memory_space<vmem>>, vector<128x128xf32>
    %cst_56 = arith.constant dense<0.000000e+00> : vector<8x128xf32>
    %131 = tpu.matmul %129, %130, %cst_56 {dimension_numbers = #tpu.dot_dimension_numbers<[1], [0], [0], [1], [0, 0, 1, 1], [], []>, precision = #tpu.contract_precision<fp32>} : vector<8x128xf32>, vector<128x128xf32>, vector<8x128xf32> -> vector<8x128xf32>
    %c0_57 = arith.constant 0 : index
    %c0_58 = arith.constant 0 : index
    %132 = vector.load %arg10[%c0_57, %c0_58] : memref<1x128xf32, #tpu.memory_space<vmem>>, vector<1x128xf32>
    %133 = vector.broadcast %132 : vector<1x128xf32> to vector<8x128xf32>
    %134 = arith.addf %131, %133 : vector<8x128xf32>
    %135 = arith.addf %1, %134 : vector<8x128xf32>
    %c0_59 = arith.constant 0 : index
    %c0_60 = arith.constant 0 : index
    %c0_61 = arith.constant 0 : index
    %136 = vector.load %arg14[%c0_59, %c0_60, %c0_61] : memref<1x8x128xf32, #tpu.memory_space<vmem>>, vector<1x8x128xf32>
    %137 = vector.shape_cast %136 : vector<1x8x128xf32> to vector<8x128xf32>
    %138 = vector.shape_cast %135 : vector<8x128xf32> to vector<1x8x128xf32>
    tpu.vector_store %arg14[%c0_59, %c0_60, %c0_61], %138 {strides = array<i32>} : memref<1x8x128xf32, #tpu.memory_space<vmem>>, vector<1x8x128xf32>,
    return
  }
  func.func @transform_0(%arg0: i32) -> (i32, i32, i32) {
    %c0_i32 = arith.constant 0 : i32
    %c0_i32_0 = arith.constant 0 : i32
    %c0_i32_1 = arith.constant 0 : i32
    return %arg0, %c0_i32, %c0_i32_0 : i32, i32, i32
  }
  func.func @transform_1(%arg0: i32) -> (i32, i32, i32) {
    %c0_i32 = arith.constant 0 : i32
    %c0_i32_0 = arith.constant 0 : i32
    %c0_i32_1 = arith.constant 0 : i32
    return %arg0, %c0_i32, %c0_i32_0 : i32, i32, i32
  }
  func.func @transform_2(%arg0: i32) -> (i32, i32) {
    %c0_i32 = arith.constant 0 : i32
    %c0_i32_0 = arith.constant 0 : i32
    %c0_i32_1 = arith.constant 0 : i32
    return %c0_i32, %c0_i32_0 : i32, i32
  }
  func.func @transform_3(%arg0: i32) -> (i32, i32) {
    %c0_i32 = arith.constant 0 : i32
    %c0_i32_0 = arith.constant 0 : i32
    %c0_i32_1 = arith.constant 0 : i32
    return %c0_i32, %c0_i32_0 : i32, i32
  }
  func.func @transform_4(%arg0: i32) -> (i32, i32) {
    %c0_i32 = arith.constant 0 : i32
    %c0_i32_0 = arith.constant 0 : i32
    %c0_i32_1 = arith.constant 0 : i32
    return %c0_i32, %c0_i32_0 : i32, i32
  }
  func.func @transform_5(%arg0: i32) -> (i32, i32) {
    %c0_i32 = arith.constant 0 : i32
    %c0_i32_0 = arith.constant 0 : i32
    %c0_i32_1 = arith.constant 0 : i32
    return %c0_i32, %c0_i32_0 : i32, i32
  }
  func.func @transform_6(%arg0: i32) -> (i32, i32) {
    %c0_i32 = arith.constant 0 : i32
    %c0_i32_0 = arith.constant 0 : i32
    %c0_i32_1 = arith.constant 0 : i32
    return %c0_i32, %c0_i32_0 : i32, i32
  }
  func.func @transform_7(%arg0: i32) -> (i32, i32) {
    %c0_i32 = arith.constant 0 : i32
    %c0_i32_0 = arith.constant 0 : i32
    %c0_i32_1 = arith.constant 0 : i32
    return %c0_i32, %c0_i32_0 : i32, i32
  }
  func.func @transform_8(%arg0: i32) -> (i32, i32) {
    %c0_i32 = arith.constant 0 : i32
    %c0_i32_0 = arith.constant 0 : i32
    %c0_i32_1 = arith.constant 0 : i32
    return %c0_i32, %c0_i32_0 : i32, i32
  }
  func.func @transform_9(%arg0: i32) -> (i32, i32) {
    %c0_i32 = arith.constant 0 : i32
    %c0_i32_0 = arith.constant 0 : i32
    %c0_i32_1 = arith.constant 0 : i32
    return %c0_i32, %c0_i32_0 : i32, i32
  }
  func.func @transform_10(%arg0: i32) -> i32 {
    %c0_i32 = arith.constant 0 : i32
    %c0_i32_0 = arith.constant 0 : i32
    return %c0_i32 : i32
  }
  func.func @transform_11(%arg0: i32) -> i32 {
    %c0_i32 = arith.constant 0 : i32
    %c0_i32_0 = arith.constant 0 : i32
    return %c0_i32 : i32
  }
  func.func @transform_12(%arg0: i32) -> i32 {
    %c0_i32 = arith.constant 0 : i32
    %c0_i32_0 = arith.constant 0 : i32
    return %c0_i32 : i32
  }
  func.func @transform_13(%arg0: i32) -> (i32, i32, i32) {
    %c0_i32 = arith.constant 0 : i32
    %c0_i32_0 = arith.constant 0 : i32
    %c0_i32_1 = arith.constant 0 : i32
    return %arg0, %c0_i32, %c0_i32_0 : i32, i32, i32
  }
}

</mosaic_0001>

<llo_original>
// kernel: tpu_custom_call.1
$region0: #{tpu_custom_call.1}
  #allocation0 [shape = 'u32[]', space=smem, size = 0x4, offset = 0x4, fixed_abs, tag = 'smem constant byte address 0x4 - core index']
  #allocation1 [shape = 'u32[144,128]{1,0:T(1,128)}', space=vmem, size = 0x12000, scoped, tag = 'internal scratch']
  #allocation2 [shape = 'f32[1]{0:T(128)S(6)}', space=smem, size = 0x200, scoped, tag = 'scoped memory for tpu_custom_call.1']
  #allocation3 [shape = 'f32[1]{0:T(128)S(6)}', space=smem, size = 0x200, scoped, tag = 'scoped memory for tpu_custom_call.1']
  %s0 = inlined_call_operand.hbm [shape: f32[2,8,128], index: 0, kind: input, shape index: {}]
  %s1 = inlined_call_operand.vmem [shape: f32[2,1,8], index: 1, kind: input, shape index: {}]
  %s2 = inlined_call_operand.hbm [shape: f32[128,128], index: 2, kind: input, shape index: {}]
  %s3 = inlined_call_operand.vmem [shape: f32[1,128], index: 3, kind: input, shape index: {}]
  %s4 = inlined_call_operand.hbm [shape: f32[128,128], index: 4, kind: input, shape index: {}]
  %s5 = inlined_call_operand.vmem [shape: f32[1,128], index: 5, kind: input, shape index: {}]
  %s6 = inlined_call_operand.hbm [shape: f32[128,128], index: 6, kind: input, shape index: {}]
  %s7 = inlined_call_operand.vmem [shape: f32[1,128], index: 7, kind: input, shape index: {}]
  %s8 = inlined_call_operand.hbm [shape: f32[128,128], index: 8, kind: input, shape index: {}]
  %s9 = inlined_call_operand.vmem [shape: f32[1,128], index: 9, kind: input, shape index: {}]
  %s10 = inlined_call_operand.<no memory space> [shape: f32[1], index: 10, kind: input, shape index: {}]
  %s11 = inlined_call_operand.<no memory space> [shape: f32[1], index: 11, kind: input, shape index: {}]
  %s12 = inlined_call_operand.vmem [shape: s32[2], index: 12, kind: input, shape index: {}]
  %s13 = inlined_call_operand.hbm [shape: f32[2,8,128], index: 13, kind: output, shape index: {}]
  %s14 = sld [smem:[#allocation0]]
  $region109: #{tpu_custom_call.1} parent=0
    _
  %s16 = ssub.s32 1, %s14
  %s17 = scalar_select 0, %s16, %s14
  %18 = sst [smem:[#allocation2]] %s10
  %19 = sst [smem:[#allocation3]] %s11
  $region1: #{tpu_custom_call.1} parent=0
    #allocation4 [shape = 'u8[8192]{0}', space=vmem, size = 0x2000, scoped, tag = 'input window, operand 0']
    #allocation5 [shape = 's32[2]{0}', space=sflag, size = 0x8, scoped, tag = 'scoped memory for tpu_custom_call.1']
    #allocation6 [shape = 's32[2]{0}', space=sflag, size = 0x8, scoped, tag = 'scoped memory for tpu_custom_call.1']
    #allocation7 [shape = 's32[2]{0}', space=sflag, size = 0x8, scoped, tag = 'scoped memory for tpu_custom_call.1']
    #allocation8 [shape = 'u8[65536]{0}', space=vmem, size = 0x10000, scoped, tag = 'input window, operand 2, single buffered']
    #allocation9 [shape = 's32[1]{0}', space=sflag, size = 0x4, scoped, tag = 'scoped memory for tpu_custom_call.1']
    #allocation10 [shape = 'u8[65536]{0}', space=vmem, size = 0x10000, scoped, tag = 'input window, operand 4, single buffered']
    #allocation11 [shape = 'u8[65536]{0}', space=vmem, size = 0x10000, scoped, tag = 'input window, operand 6, single buffered']
    #allocation12 [shape = 's32[1]{0}', space=sflag, size = 0x4, scoped, tag = 'scoped memory for tpu_custom_call.1']
    #allocation13 [shape = 'u8[65536]{0}', space=vmem, size = 0x10000, scoped, tag = 'input window, operand 8, single buffered']
    #allocation14 [shape = 'u8[512]{0}', space=smem, size = 0x200, scoped, tag = 'input window, operand 12, single buffered']
    #allocation15 [shape = 'u8[8192]{0}', space=vmem, size = 0x2000, scoped, tag = 'output window, operand 0']
    %20 = vsyncpa [#allocation5], 0
    %s21 = scalar_lea.sflag [#allocation5], 1
    %22 = vsyncpa %s21, 0
    %23 = vsyncpa [#allocation9], 0
    %24 = vsyncpa [#allocation12], 0
    %25 = vsyncpa [#allocation7], 0
    %26 = vsyncpa [#allocation6], 0
    %s27 = scalar_lea.sflag [#allocation6], 1
    %28 = vsyncpa %s27, 0
    loop: start=0, step=1, limit=4
    $region2: #{tpu_custom_call.1} parent=1 // loop_pre_header
      _
    $region3: #{tpu_custom_call.1} parent=1 // loop_header
      %s30 = sphi 0, %s34
      %p31 = scmp.ge.s32.totalorder %s30, 4
      %s40 = sphi 0, %s42
      %s43 = sphi 0, %s40
      %s44 = sphi 0, %s43
      %s60 = sphi 0, %s44
      %s66 = sphi 0, %s68
      %s69 = sphi 0, %s66
      %s70 = sphi 0, %s69
      %s86 = sphi 0, %s70
      %s90 = sphi 0, %s90
      %s92 = sphi 0, %s90
      %s93 = sphi 0, %s92
      %s107 = sphi 0, %s93
      %s111 = sphi 0, %s111
      %s113 = sphi 0, %s111
      %s114 = sphi 0, %s113
      %s128 = sphi 0, %s114
      %s132 = sphi 0, %s132
      %s134 = sphi 0, %s132
      %s135 = sphi 0, %s134
      %s149 = sphi 0, %s135
      %s153 = sphi 0, %s153
      %s155 = sphi 0, %s153
      %s156 = sphi 0, %s155
      %s170 = sphi 0, %s156
      %s174 = sphi 0, %s174
      %s176 = sphi 0, %s174
      %s177 = sphi 0, %s176
      %s191 = sphi 0, %s177
      %s195 = sphi 0, %s195
      %s197 = sphi 0, %s195
      %s198 = sphi 0, %s197
      %s212 = sphi 0, %s198
      %s216 = sphi 0, %s216
      %s218 = sphi 0, %s216
      %s219 = sphi 0, %s218
      %s233 = sphi 0, %s219
      %s237 = sphi 0, %s237
      %s239 = sphi 0, %s237
      %s240 = sphi 0, %s239
      %s254 = sphi 0, %s240
      %s258 = sphi 0, %s258
      %s260 = sphi 0, %s258
      %s261 = sphi 0, %s260
      %s275 = sphi 0, %s261
      %s279 = sphi 0, %s279
      %s281 = sphi 0, %s279
      %s282 = sphi 0, %s281
      %s296 = sphi 0, %s282
      %s300 = sphi 0, %s300
      %s302 = sphi 0, %s300
      %s303 = sphi 0, %s302
      %s317 = sphi 0, %s303
      %s323 = sphi 0, %s325
      %s326 = sphi 0, %s323
      %s327 = sphi 0, %s326
      %s343 = sphi 0, %s327
    $region4: #{tpu_custom_call.1} parent=1 // loop_header_branch
      %33 = sbr.rel (%p31) target = $region8
    $region5: #{tpu_custom_call.1} parent=1 // loop_body
      %s35 = ssub.s32 %s30, 1
      %s36 = ssub.s32 %s30, 2
      %s37 = sadd.s32 %s30, 1
      %s38 = ssub.s32 %s30, %s37
      %p39 = scmp.eq.s32.totalorder %s38, 0
      %s41 = sadd.s32 %s40, 1
      %s42 = scalar_select %p39, %s40, %s41
      %p45 = pneg %p39
      %p46 = scmp.eq.s32.totalorder %s30, 1
      %p47 = por %p45, %p46
      %p48 = scmp.ne.s32.totalorder %s40, %s43
      %p49 = scmp.eq.s32.totalorder %s30, 0
      %p50 = por %p48, %p49
      %p51 = scmp.ne.s32.totalorder %s40, %s43
      %p52 = scmp.eq.s32.totalorder %s35, 1
      %p53 = por %p51, %p52
      %p54 = scmp.ne.s32.totalorder %s43, %s44
      %p55 = scmp.eq.s32.totalorder %s35, 0
      %p56 = por %p54, %p55
      %p57 = scmp.ne.s32.totalorder %s43, %s44
      %p58 = scmp.eq.s32.totalorder %s36, 1
      %p59 = por %p57, %p58
      %p61 = scmp.ne.s32.totalorder %s44, %s60
      %p62 = scmp.eq.s32.totalorder %s36, 0
      %p63 = por %p61, %p62
      %s64 = ssub.s32 %s30, %s37
      %p65 = scmp.eq.s32.totalorder %s64, 0
      %s67 = sadd.s32 %s66, 1
      %s68 = scalar_select %p65, %s66, %s67
      %p71 = pneg %p65
      %p72 = scmp.eq.s32.totalorder %s30, 1
      %p73 = por %p71, %p72
      %p74 = scmp.ne.s32.totalorder %s66, %s69
      %p75 = scmp.eq.s32.totalorder %s30, 0
      %p76 = por %p74, %p75
      %p77 = scmp.ne.s32.totalorder %s66, %s69
      %p78 = scmp.eq.s32.totalorder %s35, 1
      %p79 = por %p77, %p78
      %p80 = scmp.ne.s32.totalorder %s69, %s70
      %p81 = scmp.eq.s32.totalorder %s35, 0
      %p82 = por %p80, %p81
      %p83 = scmp.ne.s32.totalorder %s69, %s70
      %p84 = scmp.eq.s32.totalorder %s36, 1
      %p85 = por %p83, %p84
      %p87 = scmp.ne.s32.totalorder %s70, %s86
      %p88 = scmp.eq.s32.totalorder %s36, 0
      %p89 = por %p87, %p88
      %s91 = sadd.s32 %s90, 1
      %p94 = scmp.eq.s32.totalorder %s30, 1
      %p95 = scmp.ne.s32.totalorder %s90, %s92
      %p96 = scmp.eq.s32.totalorder %s30, 0
      %p97 = por %p95, %p96
      %p98 = scmp.ne.s32.totalorder %s90, %s92
      %p99 = scmp.eq.s32.totalorder %s35, 1
      %p100 = por %p98, %p99
      %p101 = scmp.ne.s32.totalorder %s92, %s93
      %p102 = scmp.eq.s32.totalorder %s35, 0
      %p103 = por %p101, %p102
      %p104 = scmp.ne.s32.totalorder %s92, %s93
      %p105 = scmp.eq.s32.totalorder %s36, 1
      %p106 = por %p104, %p105
      %p108 = scmp.ne.s32.totalorder %s93, %s107
      %p109 = scmp.eq.s32.totalorder %s36, 0
      %p110 = por %p108, %p109
      %s112 = sadd.s32 %s111, 1
      %p115 = scmp.eq.s32.totalorder %s30, 1
      %p116 = scmp.ne.s32.totalorder %s111, %s113
      %p117 = scmp.eq.s32.totalorder %s30, 0
      %p118 = por %p116, %p117
      %p119 = scmp.ne.s32.totalorder %s111, %s113
      %p120 = scmp.eq.s32.totalorder %s35, 1
      %p121 = por %p119, %p120
      %p122 = scmp.ne.s32.totalorder %s113, %s114
      %p123 = scmp.eq.s32.totalorder %s35, 0
      %p124 = por %p122, %p123
      %p125 = scmp.ne.s32.totalorder %s113, %s114
      %p126 = scmp.eq.s32.totalorder %s36, 1
      %p127 = por %p125, %p126
      %p129 = scmp.ne.s32.totalorder %s114, %s128
      %p130 = scmp.eq.s32.totalorder %s36, 0
      %p131 = por %p129, %p130
      %s133 = sadd.s32 %s132, 1
      %p136 = scmp.eq.s32.totalorder %s30, 1
      %p137 = scmp.ne.s32.totalorder %s132, %s134
      %p138 = scmp.eq.s32.totalorder %s30, 0
      %p139 = por %p137, %p138
      %p140 = scmp.ne.s32.totalorder %s132, %s134
      %p141 = scmp.eq.s32.totalorder %s35, 1
      %p142 = por %p140, %p141
      %p143 = scmp.ne.s32.totalorder %s134, %s135
      %p144 = scmp.eq.s32.totalorder %s35, 0
      %p145 = por %p143, %p144
      %p146 = scmp.ne.s32.totalorder %s134, %s135
      %p147 = scmp.eq.s32.totalorder %s36, 1
      %p148 = por %p146, %p147
      %p150 = scmp.ne.s32.totalorder %s135, %s149
      %p151 = scmp.eq.s32.totalorder %s36, 0
      %p152 = por %p150, %p151
      %s154 = sadd.s32 %s153, 1
      %p157 = scmp.eq.s32.totalorder %s30, 1
      %p158 = scmp.ne.s32.totalorder %s153, %s155
      %p159 = scmp.eq.s32.totalorder %s30, 0
      %p160 = por %p158, %p159
      %p161 = scmp.ne.s32.totalorder %s153, %s155
      %p162 = scmp.eq.s32.totalorder %s35, 1
      %p163 = por %p161, %p162
      %p164 = scmp.ne.s32.totalorder %s155, %s156
      %p165 = scmp.eq.s32.totalorder %s35, 0
      %p166 = por %p164, %p165
      %p167 = scmp.ne.s32.totalorder %s155, %s156
      %p168 = scmp.eq.s32.totalorder %s36, 1
      %p169 = por %p167, %p168
      %p171 = scmp.ne.s32.totalorder %s156, %s170
      %p172 = scmp.eq.s32.totalorder %s36, 0
      %p173 = por %p171, %p172
      %s175 = sadd.s32 %s174, 1
      %p178 = scmp.eq.s32.totalorder %s30, 1
      %p179 = scmp.ne.s32.totalorder %s174, %s176
      %p180 = scmp.eq.s32.totalorder %s30, 0
      %p181 = por %p179, %p180
      %p182 = scmp.ne.s32.totalorder %s174, %s176
      %p183 = scmp.eq.s32.totalorder %s35, 1
      %p184 = por %p182, %p183
      %p185 = scmp.ne.s32.totalorder %s176, %s177
      %p186 = scmp.eq.s32.totalorder %s35, 0
      %p187 = por %p185, %p186
      %p188 = scmp.ne.s32.totalorder %s176, %s177
      %p189 = scmp.eq.s32.totalorder %s36, 1
      %p190 = por %p188, %p189
      %p192 = scmp.ne.s32.totalorder %s177, %s191
      %p193 = scmp.eq.s32.totalorder %s36, 0
      %p194 = por %p192, %p193
      %s196 = sadd.s32 %s195, 1
      %p199 = scmp.eq.s32.totalorder %s30, 1
      %p200 = scmp.ne.s32.totalorder %s195, %s197
      %p201 = scmp.eq.s32.totalorder %s30, 0
      %p202 = por %p200, %p201
      %p203 = scmp.ne.s32.totalorder %s195, %s197
      %p204 = scmp.eq.s32.totalorder %s35, 1
      %p205 = por %p203, %p204
      %p206 = scmp.ne.s32.totalorder %s197, %s198
      %p207 = scmp.eq.s32.totalorder %s35, 0
      %p208 = por %p206, %p207
      %p209 = scmp.ne.s32.totalorder %s197, %s198
      %p210 = scmp.eq.s32.totalorder %s36, 1
      %p211 = por %p209, %p210
      %p213 = scmp.ne.s32.totalorder %s198, %s212
      %p214 = scmp.eq.s32.totalorder %s36, 0
      %p215 = por %p213, %p214
      %s217 = sadd.s32 %s216, 1
      %p220 = scmp.eq.s32.totalorder %s30, 1
      %p221 = scmp.ne.s32.totalorder %s216, %s218
      %p222 = scmp.eq.s32.totalorder %s30, 0
      %p223 = por %p221, %p222
      %p224 = scmp.ne.s32.totalorder %s216, %s218
      %p225 = scmp.eq.s32.totalorder %s35, 1
      %p226 = por %p224, %p225
      %p227 = scmp.ne.s32.totalorder %s218, %s219
      %p228 = scmp.eq.s32.totalorder %s35, 0
      %p229 = por %p227, %p228
      %p230 = scmp.ne.s32.totalorder %s218, %s219
      %p231 = scmp.eq.s32.totalorder %s36, 1
      %p232 = por %p230, %p231
      %p234 = scmp.ne.s32.totalorder %s219, %s233
      %p235 = scmp.eq.s32.totalorder %s36, 0
      %p236 = por %p234, %p235
      %s238 = sadd.s32 %s237, 1
      %p241 = scmp.eq.s32.totalorder %s30, 1
      %p242 = scmp.ne.s32.totalorder %s237, %s239
      %p243 = scmp.eq.s32.totalorder %s30, 0
      %p244 = por %p242, %p243
      %p245 = scmp.ne.s32.totalorder %s237, %s239
      %p246 = scmp.eq.s32.totalorder %s35, 1
      %p247 = por %p245, %p246
      %p248 = scmp.ne.s32.totalorder %s239, %s240
      %p249 = scmp.eq.s32.totalorder %s35, 0
      %p250 = por %p248, %p249
      %p251 = scmp.ne.s32.totalorder %s239, %s240
      %p252 = scmp.eq.s32.totalorder %s36, 1
      %p253 = por %p251, %p252
      %p255 = scmp.ne.s32.totalorder %s240, %s254
      %p256 = scmp.eq.s32.totalorder %s36, 0
      %p257 = por %p255, %p256
      %s259 = sadd.s32 %s258, 1
      %p262 = scmp.eq.s32.totalorder %s30, 1
      %p263 = scmp.ne.s32.totalorder %s258, %s260
      %p264 = scmp.eq.s32.totalorder %s30, 0
      %p265 = por %p263, %p264
      %p266 = scmp.ne.s32.totalorder %s258, %s260
      %p267 = scmp.eq.s32.totalorder %s35, 1
      %p268 = por %p266, %p267
      %p269 = scmp.ne.s32.totalorder %s260, %s261
      %p270 = scmp.eq.s32.totalorder %s35, 0
      %p271 = por %p269, %p270
      %p272 = scmp.ne.s32.totalorder %s260, %s261
      %p273 = scmp.eq.s32.totalorder %s36, 1
      %p274 = por %p272, %p273
      %p276 = scmp.ne.s32.totalorder %s261, %s275
      %p277 = scmp.eq.s32.totalorder %s36, 0
      %p278 = por %p276, %p277
      %s280 = sadd.s32 %s279, 1
      %p283 = scmp.eq.s32.totalorder %s30, 1
      %p284 = scmp.ne.s32.totalorder %s279, %s281
      %p285 = scmp.eq.s32.totalorder %s30, 0
      %p286 = por %p284, %p285
      %p287 = scmp.ne.s32.totalorder %s279, %s281
      %p288 = scmp.eq.s32.totalorder %s35, 1
      %p289 = por %p287, %p288
      %p290 = scmp.ne.s32.totalorder %s281, %s282
      %p291 = scmp.eq.s32.totalorder %s35, 0
      %p292 = por %p290, %p291
      %p293 = scmp.ne.s32.totalorder %s281, %s282
      %p294 = scmp.eq.s32.totalorder %s36, 1
      %p295 = por %p293, %p294
      %p297 = scmp.ne.s32.totalorder %s282, %s296
      %p298 = scmp.eq.s32.totalorder %s36, 0
      %p299 = por %p297, %p298
      %s301 = sadd.s32 %s300, 1
      %p304 = scmp.eq.s32.totalorder %s30, 1
      %p305 = scmp.ne.s32.totalorder %s300, %s302
      %p306 = scmp.eq.s32.totalorder %s30, 0
      %p307 = por %p305, %p306
      %p308 = scmp.ne.s32.totalorder %s300, %s302
      %p309 = scmp.eq.s32.totalorder %s35, 1
      %p310 = por %p308, %p309
      %p311 = scmp.ne.s32.totalorder %s302, %s303
      %p312 = scmp.eq.s32.totalorder %s35, 0
      %p313 = por %p311, %p312
      %p314 = scmp.ne.s32.totalorder %s302, %s303
      %p315 = scmp.eq.s32.totalorder %s36, 1
      %p316 = por %p314, %p315
      %p318 = scmp.ne.s32.totalorder %s303, %s317
      %p319 = scmp.eq.s32.totalorder %s36, 0
      %p320 = por %p318, %p319
      %s321 = ssub.s32 %s30, %s37
      %p322 = scmp.eq.s32.totalorder %s321, 0
      %s324 = sadd.s32 %s323, 1
      %s325 = scalar_select %p322, %s323, %s324
      %p328 = pneg %p322
      %p329 = scmp.eq.s32.totalorder %s30, 1
      %p330 = por %p328, %p329
      %p331 = scmp.ne.s32.totalorder %s323, %s326
      %p332 = scmp.eq.s32.totalorder %s30, 0
      %p333 = por %p331, %p332
      %p334 = scmp.ne.s32.totalorder %s323, %s326
      %p335 = scmp.eq.s32.totalorder %s35, 1
      %p336 = por %p334, %p335
      %p337 = scmp.ne.s32.totalorder %s326, %s327
      %p338 = scmp.eq.s32.totalorder %s35, 0
      %p339 = por %p337, %p338
      %p340 = scmp.ne.s32.totalorder %s326, %s327
      %p341 = scmp.eq.s32.totalorder %s36, 1
      %p342 = por %p340, %p341
      %p344 = scmp.ne.s32.totalorder %s327, %s343
      %p345 = scmp.eq.s32.totalorder %s36, 0
      %p346 = por %p344, %p345
      %p347 = scmp.le.s32.totalorder 1, %s30
      %p348 = scmp.lt.s32.totalorder %s30, 3
      %p349 = pnand %p347, %p348
      %p350 = pneg %p349
      // Predicated region
      $region9: #{tpu_custom_call.1} parent=5 // pred_check
        _
      $region10: #{tpu_custom_call.1} parent=5 // pred_check_branch
        %352 = sbr.rel (%p349) target = $region12
      $region11: #{tpu_custom_call.1} parent=5 // pred_region
        %s353 = ssub.s32 %s30, 1
        // Predicated region
        $region13: #{tpu_custom_call.1} parent=11 // pred_check
          %p354 = pneg %p103
        $region14: #{tpu_custom_call.1} parent=11 // pred_check_branch
          %356 = sbr.rel (%p354) target = $region16
        $region15: #{tpu_custom_call.1} parent=11 // pred_region
          %s358 = ssub.s32 2048, 2048
          %359 = vsyncadd [#allocation9], %s358
          %s360 = sshll.u32 [#allocation8], 4
          %s361 = int_to_ptr.vmem [resolvable:$true] %s360
          %366 = dma.hbm_to_vmem [thread:$0]  %s2, 2048, %s361, [#allocation9], 128, 128, 8
        $region16: #{tpu_custom_call.1} parent=11 // pred_fallthru
          _
        // Predicated region
        $region17: #{tpu_custom_call.1} parent=11 // pred_check
          %p367 = pneg %p124
        $region18: #{tpu_custom_call.1} parent=11 // pred_check_branch
          %369 = sbr.rel (%p367) target = $region20
        $region19: #{tpu_custom_call.1} parent=11 // pred_region
          _
        $region20: #{tpu_custom_call.1} parent=11 // pred_fallthru
          _
        // Predicated region
        $region21: #{tpu_custom_call.1} parent=11 // pred_check
          %p370 = pneg %p145
        $region22: #{tpu_custom_call.1} parent=11 // pred_check_branch
          %372 = sbr.rel (%p370) target = $region24
        $region23: #{tpu_custom_call.1} parent=11 // pred_region
          %s374 = ssub.s32 2048, 2048
          %375 = vsyncadd [#allocation9], %s374
          %s376 = sshll.u32 [#allocation10], 4
          %s377 = int_to_ptr.vmem [resolvable:$true] %s376
          %382 = dma.hbm_to_vmem [thread:$0]  %s4, 2048, %s377, [#allocation9], 128, 128, 8
        $region24: #{tpu_custom_call.1} parent=11 // pred_fallthru
          _
        // Predicated region
        $region25: #{tpu_custom_call.1} parent=11 // pred_check
          %p383 = pneg %p166
        $region26: #{tpu_custom_call.1} parent=11 // pred_check_branch
          %385 = sbr.rel (%p383) target = $region28
        $region27: #{tpu_custom_call.1} parent=11 // pred_region
          _
        $region28: #{tpu_custom_call.1} parent=11 // pred_fallthru
          _
        // Predicated region
        $region29: #{tpu_custom_call.1} parent=11 // pred_check
          %p386 = pneg %p187
        $region30: #{tpu_custom_call.1} parent=11 // pred_check_branch
          %388 = sbr.rel (%p386) target = $region32
        $region31: #{tpu_custom_call.1} parent=11 // pred_region
          %s390 = ssub.s32 2048, 2048
          %391 = vsyncadd [#allocation12], %s390
          %s392 = sshll.u32 [#allocation11], 4
          %s393 = int_to_ptr.vmem [resolvable:$true] %s392
          %398 = dma.hbm_to_vmem [thread:$0]  %s6, 2048, %s393, [#allocation12], 128, 128, 8
        $region32: #{tpu_custom_call.1} parent=11 // pred_fallthru
          _
        // Predicated region
        $region33: #{tpu_custom_call.1} parent=11 // pred_check
          %p399 = pneg %p208
        $region34: #{tpu_custom_call.1} parent=11 // pred_check_branch
          %401 = sbr.rel (%p399) target = $region36
        $region35: #{tpu_custom_call.1} parent=11 // pred_region
          _
        $region36: #{tpu_custom_call.1} parent=11 // pred_fallthru
          _
        // Predicated region
        $region37: #{tpu_custom_call.1} parent=11 // pred_check
          %p402 = pneg %p229
        $region38: #{tpu_custom_call.1} parent=11 // pred_check_branch
          %404 = sbr.rel (%p402) target = $region40
        $region39: #{tpu_custom_call.1} parent=11 // pred_region
          %s406 = ssub.s32 2048, 2048
          %407 = vsyncadd [#allocation12], %s406
          %s408 = sshll.u32 [#allocation13], 4
          %s409 = int_to_ptr.vmem [resolvable:$true] %s408
          %414 = dma.hbm_to_vmem [thread:$0]  %s8, 2048, %s409, [#allocation12], 128, 128, 8
        $region40: #{tpu_custom_call.1} parent=11 // pred_fallthru
          _
        // Predicated region
        $region41: #{tpu_custom_call.1} parent=11 // pred_check
          %p415 = pneg %p250
        $region42: #{tpu_custom_call.1} parent=11 // pred_check_branch
          %417 = sbr.rel (%p415) target = $region44
        $region43: #{tpu_custom_call.1} parent=11 // pred_region
          _
        $region44: #{tpu_custom_call.1} parent=11 // pred_fallthru
          _
        // Predicated region
        $region45: #{tpu_custom_call.1} parent=11 // pred_check
          %p418 = pneg %p271
        $region46: #{tpu_custom_call.1} parent=11 // pred_check_branch
          %420 = sbr.rel (%p418) target = $region48
        $region47: #{tpu_custom_call.1} parent=11 // pred_region
          _
        $region48: #{tpu_custom_call.1} parent=11 // pred_fallthru
          _
        // Predicated region
        $region49: #{tpu_custom_call.1} parent=11 // pred_check
          %p421 = pneg %p292
        $region50: #{tpu_custom_call.1} parent=11 // pred_check_branch
          %423 = sbr.rel (%p421) target = $region52
        $region51: #{tpu_custom_call.1} parent=11 // pred_region
          _
        $region52: #{tpu_custom_call.1} parent=11 // pred_fallthru
          _
        // Predicated region
        $region53: #{tpu_custom_call.1} parent=11 // pred_check
          %p424 = pneg %p313
        $region54: #{tpu_custom_call.1} parent=11 // pred_check_branch
          %426 = sbr.rel (%p424) target = $region56
        $region55: #{tpu_custom_call.1} parent=11 // pred_region
          %s428 = ssub.s32 16, 16
          %429 = vsyncadd [#allocation7], %s428
          %s431 = sshll.u32 %s12, 4
          %s432 = int_to_ptr.vmem [resolvable:$true] %s431
          %434 = dma.vmem_to_smem %s432, 16, [#allocation14], [#allocation7]
        $region56: #{tpu_custom_call.1} parent=11 // pred_fallthru
          _
      $region12: #{tpu_custom_call.1} parent=5 // pred_fallthru
        _
      %p435 = scmp.lt.s32.totalorder %s30, 2
      // Predicated region
      $region57: #{tpu_custom_call.1} parent=5 // pred_check
        %p436 = pneg %p435
      $region58: #{tpu_custom_call.1} parent=5 // pred_check_branch
        %438 = sbr.rel (%p436) target = $region60
      $region59: #{tpu_custom_call.1} parent=5 // pred_region
        // Predicated region
        $region61: #{tpu_custom_call.1} parent=59 // pred_check
          %p439 = pneg %p50
        $region62: #{tpu_custom_call.1} parent=59 // pred_check_branch
          %441 = sbr.rel (%p439) target = $region64
        $region63: #{tpu_custom_call.1} parent=59 // pred_region
          %s442 = sand.u32 %s40, 1
          %s443 = scalar_lea.sflag [#allocation5], %s442
          %s444 = sand.u32 %s40, 1
          %s445 = smul.addr %s444, 8
          %s446 = scalar_lea.vmem [#allocation4], %s445
          %s448 = ssub.s32 128, 128
          %449 = vsyncadd %s443, %s448
          %s450 = smul.addr %s30, 128
          %s451 = scalar_lea.hbm %s0, %s450
          %s453 = sshll.u32 %s446, 4
          %s454 = int_to_ptr.vmem [resolvable:$true] %s453
          %456 = dma.hbm_to_vmem [thread:$0]  %s451, 128, %s454, %s443
        $region64: #{tpu_custom_call.1} parent=59 // pred_fallthru
          _
        // Predicated region
        $region65: #{tpu_custom_call.1} parent=59 // pred_check
          %p457 = pneg %p76
        $region66: #{tpu_custom_call.1} parent=59 // pred_check_branch
          %459 = sbr.rel (%p457) target = $region68
        $region67: #{tpu_custom_call.1} parent=59 // pred_region
          %p460 = scmp.lt.s32.totalorder %s30, 1
          %s461 = scalar_select %p460, %s30, 1
          %s462 = scalar_lea.vmem %s1, %s461
        $region68: #{tpu_custom_call.1} parent=59 // pred_fallthru
          _
      $region60: #{tpu_custom_call.1} parent=5 // pred_fallthru
        _
      %p463 = scmp.le.s32.totalorder 1, %s30
      %p464 = scmp.lt.s32.totalorder %s30, 3
      %p465 = pnand %p463, %p464
      %p466 = pneg %p465
      // Predicated region
      $region69: #{tpu_custom_call.1} parent=5 // pred_check
        _
      $region70: #{tpu_custom_call.1} parent=5 // pred_check_branch
        %468 = sbr.rel (%p465) target = $region72
      $region71: #{tpu_custom_call.1} parent=5 // pred_region
        %s469 = ssub.s32 %s30, 1
        %s470 = sand.u32 %s43, 1
        %s471 = scalar_lea.sflag [#allocation5], %s470
        %s472 = sand.u32 %s43, 1
        %s473 = smul.addr %s472, 8
        %s474 = scalar_lea.vmem [#allocation4], %s473
        // Predicated region
        $region73: #{tpu_custom_call.1} parent=71 // pred_check
          %p475 = pneg %p56
        $region74: #{tpu_custom_call.1} parent=71 // pred_check_branch
          %477 = sbr.rel (%p475) target = $region76
        $region75: #{tpu_custom_call.1} parent=71 // pred_region
          %478 = dma.done %s471, 128
        $region76: #{tpu_custom_call.1} parent=71 // pred_fallthru
          _
        // Predicated region
        $region77: #{tpu_custom_call.1} parent=71 // pred_check
          %p479 = pneg %p103
        $region78: #{tpu_custom_call.1} parent=71 // pred_check_branch
          %481 = sbr.rel (%p479) target = $region80
        $region79: #{tpu_custom_call.1} parent=71 // pred_region
          %482 = dma.done [#allocation9], 2048
        $region80: #{tpu_custom_call.1} parent=71 // pred_fallthru
          _
        // Predicated region
        $region81: #{tpu_custom_call.1} parent=71 // pred_check
          %p483 = pneg %p145
        $region82: #{tpu_custom_call.1} parent=71 // pred_check_branch
          %485 = sbr.rel (%p483) target = $region84
        $region83: #{tpu_custom_call.1} parent=71 // pred_region
          %486 = dma.done [#allocation9], 2048
        $region84: #{tpu_custom_call.1} parent=71 // pred_fallthru
          _
        // Predicated region
        $region85: #{tpu_custom_call.1} parent=71 // pred_check
          %p487 = pneg %p187
        $region86: #{tpu_custom_call.1} parent=71 // pred_check_branch
          %489 = sbr.rel (%p487) target = $region88
        $region87: #{tpu_custom_call.1} parent=71 // pred_region
          %490 = dma.done [#allocation12], 2048
        $region88: #{tpu_custom_call.1} parent=71 // pred_fallthru
          _
        // Predicated region
        $region89: #{tpu_custom_call.1} parent=71 // pred_check
          %p491 = pneg %p229
        $region90: #{tpu_custom_call.1} parent=71 // pred_check_branch
          %493 = sbr.rel (%p491) target = $region92
        $region91: #{tpu_custom_call.1} parent=71 // pred_region
          %494 = dma.done [#allocation12], 2048
        $region92: #{tpu_custom_call.1} parent=71 // pred_fallthru
          _
        // Predicated region
        $region93: #{tpu_custom_call.1} parent=71 // pred_check
          %p495 = pneg %p313
        $region94: #{tpu_custom_call.1} parent=71 // pred_check_branch
          %497 = sbr.rel (%p495) target = $region96
        $region95: #{tpu_custom_call.1} parent=71 // pred_region
          %498 = dma.done [#allocation7], 16
        $region96: #{tpu_custom_call.1} parent=71 // pred_fallthru
          _
        %499 = sfence
        %s500 = sand.u32 %s43, 1
        %s501 = scalar_lea.sflag [#allocation5], %s500
        %s502 = sand.u32 %s43, 1
        %s503 = smul.addr %s502, 8
        %s504 = scalar_lea.vmem [#allocation4], %s503
        %p505 = pneg %p56
        %p506 = pneg %p53
        %p507 = scmp.lt.s32.totalorder %s35, 1
        %s508 = scalar_select %p507, %s35, 1
        %s509 = scalar_lea.vmem %s1, %s508
        %p510 = pneg %p82
        %p511 = pneg %p79
        %p512 = pneg %p103
        %p513 = pneg %p100
        %p514 = pneg %p124
        %p515 = pneg %p121
        %p516 = pneg %p145
        %p517 = pneg %p142
        %p518 = pneg %p166
        %p519 = pneg %p163
        %p520 = pneg %p187
        %p521 = pneg %p184
        %p522 = pneg %p208
        %p523 = pneg %p205
        %p524 = pneg %p229
        %p525 = pneg %p226
        %p526 = pneg %p250
        %p527 = pneg %p247
        %p528 = pneg %p271
        %p529 = pneg %p268
        %p530 = pneg %p292
        %p531 = pneg %p289
        %p532 = pneg %p313
        %p533 = pneg %p310
        %p534 = pneg %p339
        %p535 = pneg %p336
        %s536 = sand.u32 %s326, 1
        %s537 = scalar_lea.sflag [#allocation6], %s536
        %s538 = sand.u32 %s326, 1
        %s539 = smul.addr %s538, 8
        %s540 = scalar_lea.vmem [#allocation15], %s539
        %p541 = scmp.lt.s32.totalorder %s35, 1
        %s542 = scalar_select %p541, %s35, 1
        %s543 = scalar_lea.vmem %s1, %s542
        %v544 = vld [vmem:[%s474] sm:$0xff]
        %s545 = sld [smem:[#allocation2]]
        %s546 = sld [smem:[#allocation3]]
        %547 = vadd.xlane.f32.xlu0 %v544
        %v548 = vpop.xlane.xlu0 %547
        %v549 = vrcp.pop 128.0
        %v550 = vmul.f32 %v548, %v549
        %v551 = vsub.f32 %v544, %v550
        %v552 = vmul.f32 %v551, %v551
        %553 = vadd.xlane.f32.xlu0 %v552
        %v554 = vpop.xlane.xlu0 %553
        %v555 = vmul.f32 %v554, 0.007874016
        %v556 = vstv %s545
        %v557 = vmul.f32 %v556, %v551
        %v558 = vrsqrt.pop %v555
        %v559 = vmul.f32 %v555, %v558
        %vm560 = vcmp.eq.f32.partialorder %v555, inf
        %v561 = vsel %vm560, %v555, %v559
        %vm562 = vcmp.eq.f32.partialorder %v555, 0.0
        %v563 = vand.u32 %v555, 2147483648
        %v564 = vsel %vm562, %v563, %v561
        %v565 = vadd.f32 %v564, 1e-06
        %v566 = vrcp.pop %v565
        %v567 = vmul.f32 %v557, %v566
        %v568 = vstv %s546
        %v569 = vadd.f32 %v567, %v568
        %v570 = vld [vmem:[#allocation8] sm:$0xff]
        %v571 = vld [vmem:[#allocation8 + $0x8] sm:$0xff]
        %v572 = vld [vmem:[#allocation8 + $0x10] sm:$0xff]
        %v573 = vld [vmem:[#allocation8 + $0x18] sm:$0xff]
        %v574 = vld [vmem:[#allocation8 + $0x20] sm:$0xff]
        %v575 = vld [vmem:[#allocation8 + $0x28] sm:$0xff]
        %v576 = vld [vmem:[#allocation8 + $0x30] sm:$0xff]
        %v577 = vld [vmem:[#allocation8 + $0x38] sm:$0xff]
        %v578 = vld [vmem:[#allocation8 + $0x40] sm:$0xff]
        %v579 = vld [vmem:[#allocation8 + $0x48] sm:$0xff]
        %v580 = vld [vmem:[#allocation8 + $0x50] sm:$0xff]
        %v581 = vld [vmem:[#allocation8 + $0x58] sm:$0xff]
        %v582 = vld [vmem:[#allocation8 + $0x60] sm:$0xff]
        %v583 = vld [vmem:[#allocation8 + $0x68] sm:$0xff]
        %v584 = vld [vmem:[#allocation8 + $0x70] sm:$0xff]
        %v585 = vld [vmem:[#allocation8 + $0x78] sm:$0xff]
        %v586 = vld [vmem:[%s3] sm:$0x1]
        %v588 = vlaneseq
        %v589 = vshrl.u32 %v588, 7
        %v590 = vsub.s32 0, %v589
        %v591 = vrot.slane %v586, %v590
        %593 = vmatprep.subr.mxu0 0.0
        %v594 = vand.u32 %v585, 4294901760
        %595 = vmatpush1.msra.mxu0 %v594
        %596 = vmatprep.subr.mxu0 0.0
        %v597 = vand.u32 %v584, 4294901760
        %598 = vmatpush1.msra.mxu0 %v597
        %599 = vmatprep.subr.mxu0 0.0
        %v600 = vand.u32 %v583, 4294901760
        %601 = vmatpush1.msra.mxu0 %v600
        %602 = vmatprep.subr.mxu0 0.0
        %v603 = vand.u32 %v582, 4294901760
        %604 = vmatpush1.msra.mxu0 %v603
        %605 = vmatprep.subr.mxu0 0.0
        %v606 = vand.u32 %v581, 4294901760
        %607 = vmatpush1.msra.mxu0 %v606
        %608 = vmatprep.subr.mxu0 0.0
        %v609 = vand.u32 %v580, 4294901760
        %610 = vmatpush1.msra.mxu0 %v609
        %611 = vmatprep.subr.mxu0 0.0
        %v612 = vand.u32 %v579, 4294901760
        %613 = vmatpush1.msra.mxu0 %v612
        %614 = vmatprep.subr.mxu0 0.0
        %v615 = vand.u32 %v578, 4294901760
        %616 = vmatpush1.msra.mxu0 %v615
        %617 = vmatprep.subr.mxu0 0.0
        %v618 = vand.u32 %v577, 4294901760
        %619 = vmatpush1.msra.mxu0 %v618
        %620 = vmatprep.subr.mxu0 0.0
        %v621 = vand.u32 %v576, 4294901760
        %622 = vmatpush1.msra.mxu0 %v621
        %623 = vmatprep.subr.mxu0 0.0
        %v624 = vand.u32 %v575, 4294901760
        %625 = vmatpush1.msra.mxu0 %v624
        %626 = vmatprep.subr.mxu0 0.0
        %v627 = vand.u32 %v574, 4294901760
        %628 = vmatpush1.msra.mxu0 %v627
        %629 = vmatprep.subr.mxu0 0.0
        %v630 = vand.u32 %v573, 4294901760
        %631 = vmatpush1.msra.mxu0 %v630
        %632 = vmatprep.subr.mxu0 0.0
        %v633 = vand.u32 %v572, 4294901760
        %634 = vmatpush1.msra.mxu0 %v633
        %635 = vmatprep.subr.mxu0 0.0
        %v636 = vand.u32 %v571, 4294901760
        %637 = vmatpush1.msra.mxu0 %v636
        %638 = vmatprep.subr.mxu0 0.0
        %v639 = vand.u32 %v570, 4294901760
        %640 = vmatpush1.msra.mxu0 %v639
        %641 = vmatprep.subr.mxu0 0.0
        %642 = vmatpush2.msra.mxu0 0.0
        %643 = vmatprep.subr.mxu0 0.0
        %644 = vmatpush2.msra.mxu0 0.0
        %645 = vmatprep.subr.mxu0 0.0
        %646 = vmatpush2.msra.mxu0 0.0
        %647 = vmatprep.subr.mxu0 0.0
        %648 = vmatpush2.msra.mxu0 0.0
        %649 = vmatprep.subr.mxu0 0.0
        %650 = vmatpush2.msra.mxu0 0.0
        %651 = vmatprep.subr.mxu0 0.0
        %652 = vmatpush2.msra.mxu0 0.0
        %653 = vmatprep.subr.mxu0 0.0
        %654 = vmatpush2.msra.mxu0 0.0
        %655 = vmatprep.subr.mxu0 0.0
        %656 = vmatpush2.msra.mxu0 0.0
        %657 = vmatprep.subr.mxu0 0.0
        %658 = vmatpush2.msra.mxu0 0.0
        %659 = vmatprep.subr.mxu0 0.0
        %660 = vmatpush2.msra.mxu0 0.0
        %661 = vmatprep.subr.mxu0 0.0
        %662 = vmatpush2.msra.mxu0 0.0
        %663 = vmatprep.subr.mxu0 0.0
        %664 = vmatpush2.msra.mxu0 0.0
        %665 = vmatprep.subr.mxu0 0.0
        %666 = vmatpush2.msra.mxu0 0.0
        %667 = vmatprep.subr.mxu0 0.0
        %668 = vmatpush2.msra.mxu0 0.0
        %669 = vmatprep.subr.mxu0 0.0
        %670 = vmatpush2.msra.mxu0 0.0
        %671 = vmatprep.subr.mxu0 0.0
        %672 = vmatpush2.msra.mxu0 0.0
        %673 = vmatprep.mubr.f32.mxu0 0.0
        %v674 = vand.u32 %v569, 4294901760
        %v675 = vsub.f32 %v569, %v674
        %v676 = vand.u32 %v675, 4294901760
        %v677 = vsub.f32 %v675, %v676
        %v678 = vand.u32 %v677, 4294901760
        %679 = vmatmul.mubr.f32.gmra.mxu0 %v678
        %v680 = vpop.f32.mrf.mxu0
        %v681 = vadd.f32 %v591, %v680
        %v682 = vpop.f32.mrf.mxu0
        %683 = vdwg.mxu0
        %684 = vmatprep.subr.mxu0 0.0
        %v685 = vand.u32 %v585, 4294901760
        %v686 = vsub.f32 %v585, %v685
        %v687 = vand.u32 %v686, 4294901760
        %v688 = vsub.f32 %v686, %v687
        %v689 = vand.u32 %v688, 4294901760
        %690 = vmatpush1.msra.mxu0 %v689
        %691 = vmatprep.subr.mxu0 0.0
        %v692 = vand.u32 %v584, 4294901760
        %v693 = vsub.f32 %v584, %v692
        %v694 = vand.u32 %v693, 4294901760
        %v695 = vsub.f32 %v693, %v694
        %v696 = vand.u32 %v695, 4294901760
        %697 = vmatpush1.msra.mxu0 %v696
        %698 = vmatprep.subr.mxu0 0.0
        %v699 = vand.u32 %v583, 4294901760
        %v700 = vsub.f32 %v583, %v699
        %v701 = vand.u32 %v700, 4294901760
        %v702 = vsub.f32 %v700, %v701
        %v703 = vand.u32 %v702, 4294901760
        %704 = vmatpush1.msra.mxu0 %v703
        %705 = vmatprep.subr.mxu0 0.0
        %v706 = vand.u32 %v582, 4294901760
        %v707 = vsub.f32 %v582, %v706
        %v708 = vand.u32 %v707, 4294901760
        %v709 = vsub.f32 %v707, %v708
        %v710 = vand.u32 %v709, 4294901760
        %711 = vmatpush1.msra.mxu0 %v710
        %712 = vmatprep.subr.mxu0 0.0
        %v713 = vand.u32 %v581, 4294901760
        %v714 = vsub.f32 %v581, %v713
        %v715 = vand.u32 %v714, 4294901760
        %v716 = vsub.f32 %v714, %v715
        %v717 = vand.u32 %v716, 4294901760
        %718 = vmatpush1.msra.mxu0 %v717
        %719 = vmatprep.subr.mxu0 0.0
        %v720 = vand.u32 %v580, 4294901760
        %v721 = vsub.f32 %v580, %v720
        %v722 = vand.u32 %v721, 4294901760
        %v723 = vsub.f32 %v721, %v722
        %v724 = vand.u32 %v723, 4294901760
        %725 = vmatpush1.msra.mxu0 %v724
        %726 = vmatprep.subr.mxu0 0.0
        %v727 = vand.u32 %v579, 4294901760
        %v728 = vsub.f32 %v579, %v727
        %v729 = vand.u32 %v728, 4294901760
        %v730 = vsub.f32 %v728, %v729
        %v731 = vand.u32 %v730, 4294901760
        %732 = vmatpush1.msra.mxu0 %v731
        %733 = vmatprep.subr.mxu0 0.0
        %v734 = vand.u32 %v578, 4294901760
        %v735 = vsub.f32 %v578, %v734
        %v736 = vand.u32 %v735, 4294901760
        %v737 = vsub.f32 %v735, %v736
        %v738 = vand.u32 %v737, 4294901760
        %739 = vmatpush1.msra.mxu0 %v738
        %740 = vmatprep.subr.mxu0 0.0
        %v741 = vand.u32 %v577, 4294901760
        %v742 = vsub.f32 %v577, %v741
        %v743 = vand.u32 %v742, 4294901760
        %v744 = vsub.f32 %v742, %v743
        %v745 = vand.u32 %v744, 4294901760
        %746 = vmatpush1.msra.mxu0 %v745
        %747 = vmatprep.subr.mxu0 0.0
        %v748 = vand.u32 %v576, 4294901760
        %v749 = vsub.f32 %v576, %v748
        %v750 = vand.u32 %v749, 4294901760
        %v751 = vsub.f32 %v749, %v750
        %v752 = vand.u32 %v751, 4294901760
        %753 = vmatpush1.msra.mxu0 %v752
        %754 = vmatprep.subr.mxu0 0.0
        %v755 = vand.u32 %v575, 4294901760
        %v756 = vsub.f32 %v575, %v755
        %v757 = vand.u32 %v756, 4294901760
        %v758 = vsub.f32 %v756, %v757
        %v759 = vand.u32 %v758, 4294901760
        %760 = vmatpush1.msra.mxu0 %v759
        %761 = vmatprep.subr.mxu0 0.0
        %v762 = vand.u32 %v574, 4294901760
        %v763 = vsub.f32 %v574, %v762
        %v764 = vand.u32 %v763, 4294901760
        %v765 = vsub.f32 %v763, %v764
        %v766 = vand.u32 %v765, 4294901760
        %767 = vmatpush1.msra.mxu0 %v766
        %768 = vmatprep.subr.mxu0 0.0
        %v769 = vand.u32 %v573, 4294901760
        %v770 = vsub.f32 %v573, %v769
        %v771 = vand.u32 %v770, 4294901760
        %v772 = vsub.f32 %v770, %v771
        %v773 = vand.u32 %v772, 4294901760
        %774 = vmatpush1.msra.mxu0 %v773
        %775 = vmatprep.subr.mxu0 0.0
        %v776 = vand.u32 %v572, 4294901760
        %v777 = vsub.f32 %v572, %v776
        %v778 = vand.u32 %v777, 4294901760
        %v779 = vsub.f32 %v777, %v778
        %v780 = vand.u32 %v779, 4294901760
        %781 = vmatpush1.msra.mxu0 %v780
        %782 = vmatprep.subr.mxu0 0.0
        %v783 = vand.u32 %v571, 4294901760
        %v784 = vsub.f32 %v571, %v783
        %v785 = vand.u32 %v784, 4294901760
        %v786 = vsub.f32 %v784, %v785
        %v787 = vand.u32 %v786, 4294901760
        %788 = vmatpush1.msra.mxu0 %v787
        %789 = vmatprep.subr.mxu0 0.0
        %v790 = vand.u32 %v570, 4294901760
        %v791 = vsub.f32 %v570, %v790
        %v792 = vand.u32 %v791, 4294901760
        %v793 = vsub.f32 %v791, %v792
        %v794 = vand.u32 %v793, 4294901760
        %795 = vmatpush1.msra.mxu0 %v794
        %796 = vmatprep.subr.mxu0 0.0
        %797 = vmatpush2.msra.mxu0 0.0
        %798 = vmatprep.subr.mxu0 0.0
        %799 = vmatpush2.msra.mxu0 0.0
        %800 = vmatprep.subr.mxu0 0.0
        %801 = vmatpush2.msra.mxu0 0.0
        %802 = vmatprep.subr.mxu0 0.0
        %803 = vmatpush2.msra.mxu0 0.0
        %804 = vmatprep.subr.mxu0 0.0
        %805 = vmatpush2.msra.mxu0 0.0
        %806 = vmatprep.subr.mxu0 0.0
        %807 = vmatpush2.msra.mxu0 0.0
        %808 = vmatprep.subr.mxu0 0.0
        %809 = vmatpush2.msra.mxu0 0.0
        %810 = vmatprep.subr.mxu0 0.0
        %811 = vmatpush2.msra.mxu0 0.0
        %812 = vmatprep.subr.mxu0 0.0
        %813 = vmatpush2.msra.mxu0 0.0
        %814 = vmatprep.subr.mxu0 0.0
        %815 = vmatpush2.msra.mxu0 0.0
        %816 = vmatprep.subr.mxu0 0.0
        %817 = vmatpush2.msra.mxu0 0.0
        %818 = vmatprep.subr.mxu0 0.0
        %819 = vmatpush2.msra.mxu0 0.0
        %820 = vmatprep.subr.mxu0 0.0
        %821 = vmatpush2.msra.mxu0 0.0
        %822 = vmatprep.subr.mxu0 0.0
        %823 = vmatpush2.msra.mxu0 0.0
        %824 = vmatprep.subr.mxu0 0.0
        %825 = vmatpush2.msra.mxu0 0.0
        %826 = vmatprep.subr.mxu0 0.0
        %827 = vmatpush2.msra.mxu0 0.0
        %828 = vmatprep.mubr.f32.mxu0 0.0
        %v829 = vand.u32 %v569, 4294901760
        %830 = vmatmul.mubr.f32.gmra.mxu0 %v829
        %v831 = vpop.f32.mrf.mxu0
        %v832 = vadd.f32 %v681, %v831
        %v833 = vpop.f32.mrf.mxu0
        %834 = vdwg.mxu0
        %835 = vmatprep.subr.mxu0 0.0
        %v836 = vand.u32 %v585, 4294901760
        %v837 = vsub.f32 %v585, %v836
        %838 = vmatpush1.msra.mxu0 %v837
        %839 = vmatprep.subr.mxu0 0.0
        %v840 = vand.u32 %v584, 4294901760
        %v841 = vsub.f32 %v584, %v840
        %842 = vmatpush1.msra.mxu0 %v841
        %843 = vmatprep.subr.mxu0 0.0
        %v844 = vand.u32 %v583, 4294901760
        %v845 = vsub.f32 %v583, %v844
        %846 = vmatpush1.msra.mxu0 %v845
        %847 = vmatprep.subr.mxu0 0.0
        %v848 = vand.u32 %v582, 4294901760
        %v849 = vsub.f32 %v582, %v848
        %850 = vmatpush1.msra.mxu0 %v849
        %851 = vmatprep.subr.mxu0 0.0
        %v852 = vand.u32 %v581, 4294901760
        %v853 = vsub.f32 %v581, %v852
        %854 = vmatpush1.msra.mxu0 %v853
        %855 = vmatprep.subr.mxu0 0.0
        %v856 = vand.u32 %v580, 4294901760
        %v857 = vsub.f32 %v580, %v856
        %858 = vmatpush1.msra.mxu0 %v857
        %859 = vmatprep.subr.mxu0 0.0
        %v860 = vand.u32 %v579, 4294901760
        %v861 = vsub.f32 %v579, %v860
        %862 = vmatpush1.msra.mxu0 %v861
        %863 = vmatprep.subr.mxu0 0.0
        %v864 = vand.u32 %v578, 4294901760
        %v865 = vsub.f32 %v578, %v864
        %866 = vmatpush1.msra.mxu0 %v865
        %867 = vmatprep.subr.mxu0 0.0
        %v868 = vand.u32 %v577, 4294901760
        %v869 = vsub.f32 %v577, %v868
        %870 = vmatpush1.msra.mxu0 %v869
        %871 = vmatprep.subr.mxu0 0.0
        %v872 = vand.u32 %v576, 4294901760
        %v873 = vsub.f32 %v576, %v872
        %874 = vmatpush1.msra.mxu0 %v873
        %875 = vmatprep.subr.mxu0 0.0
        %v876 = vand.u32 %v575, 4294901760
        %v877 = vsub.f32 %v575, %v876
        %878 = vmatpush1.msra.mxu0 %v877
        %879 = vmatprep.subr.mxu0 0.0
        %v880 = vand.u32 %v574, 4294901760
        %v881 = vsub.f32 %v574, %v880
        %882 = vmatpush1.msra.mxu0 %v881
        %883 = vmatprep.subr.mxu0 0.0
        %v884 = vand.u32 %v573, 4294901760
        %v885 = vsub.f32 %v573, %v884
        %886 = vmatpush1.msra.mxu0 %v885
        %887 = vmatprep.subr.mxu0 0.0
        %v888 = vand.u32 %v572, 4294901760
        %v889 = vsub.f32 %v572, %v888
        %890 = vmatpush1.msra.mxu0 %v889
        %891 = vmatprep.subr.mxu0 0.0
        %v892 = vand.u32 %v571, 4294901760
        %v893 = vsub.f32 %v571, %v892
        %894 = vmatpush1.msra.mxu0 %v893
        %895 = vmatprep.subr.mxu0 0.0
        %v896 = vand.u32 %v570, 4294901760
        %v897 = vsub.f32 %v570, %v896
        %898 = vmatpush1.msra.mxu0 %v897
        %899 = vmatprep.subr.mxu0 0.0
        %900 = vmatpush2.msra.mxu0 0.0
        %901 = vmatprep.subr.mxu0 0.0
        %902 = vmatpush2.msra.mxu0 0.0
        %903 = vmatprep.subr.mxu0 0.0
        %904 = vmatpush2.msra.mxu0 0.0
        %905 = vmatprep.subr.mxu0 0.0
        %906 = vmatpush2.msra.mxu0 0.0
        %907 = vmatprep.subr.mxu0 0.0
        %908 = vmatpush2.msra.mxu0 0.0
        %909 = vmatprep.subr.mxu0 0.0
        %910 = vmatpush2.msra.mxu0 0.0
        %911 = vmatprep.subr.mxu0 0.0
        %912 = vmatpush2.msra.mxu0 0.0
        %913 = vmatprep.subr.mxu0 0.0
        %914 = vmatpush2.msra.mxu0 0.0
        %915 = vmatprep.subr.mxu0 0.0
        %916 = vmatpush2.msra.mxu0 0.0
        %917 = vmatprep.subr.mxu0 0.0
        %918 = vmatpush2.msra.mxu0 0.0
        %919 = vmatprep.subr.mxu0 0.0
        %920 = vmatpush2.msra.mxu0 0.0
        %921 = vmatprep.subr.mxu0 0.0
        %922 = vmatpush2.msra.mxu0 0.0
        %923 = vmatprep.subr.mxu0 0.0
        %924 = vmatpush2.msra.mxu0 0.0
        %925 = vmatprep.subr.mxu0 0.0
        %926 = vmatpush2.msra.mxu0 0.0
        %927 = vmatprep.subr.mxu0 0.0
        %928 = vmatpush2.msra.mxu0 0.0
        %929 = vmatprep.subr.mxu0 0.0
        %930 = vmatpush2.msra.mxu0 0.0
        %931 = vmatprep.mubr.f32.mxu0 0.0
        %v932 = vand.u32 %v569, 4294901760
        %v933 = vsub.f32 %v569, %v932
        %934 = vmatmul.mubr.f32.gmra.mxu0 %v933
        %v935 = vpop.f32.mrf.mxu0
        %v936 = vadd.f32 %v832, %v935
        %v937 = vpop.f32.mrf.mxu0
        %938 = vdwg.mxu0
        %939 = vmatprep.subr.mxu0 0.0
        %v940 = vand.u32 %v585, 4294901760
        %941 = vmatpush1.msra.mxu0 %v940
        %942 = vmatprep.subr.mxu0 0.0
        %v943 = vand.u32 %v584, 4294901760
        %944 = vmatpush1.msra.mxu0 %v943
        %945 = vmatprep.subr.mxu0 0.0
        %v946 = vand.u32 %v583, 4294901760
        %947 = vmatpush1.msra.mxu0 %v946
        %948 = vmatprep.subr.mxu0 0.0
        %v949 = vand.u32 %v582, 4294901760
        %950 = vmatpush1.msra.mxu0 %v949
        %951 = vmatprep.subr.mxu0 0.0
        %v952 = vand.u32 %v581, 4294901760
        %953 = vmatpush1.msra.mxu0 %v952
        %954 = vmatprep.subr.mxu0 0.0
        %v955 = vand.u32 %v580, 4294901760
        %956 = vmatpush1.msra.mxu0 %v955
        %957 = vmatprep.subr.mxu0 0.0
        %v958 = vand.u32 %v579, 4294901760
        %959 = vmatpush1.msra.mxu0 %v958
        %960 = vmatprep.subr.mxu0 0.0
        %v961 = vand.u32 %v578, 4294901760
        %962 = vmatpush1.msra.mxu0 %v961
        %963 = vmatprep.subr.mxu0 0.0
        %v964 = vand.u32 %v577, 4294901760
        %965 = vmatpush1.msra.mxu0 %v964
        %966 = vmatprep.subr.mxu0 0.0
        %v967 = vand.u32 %v576, 4294901760
        %968 = vmatpush1.msra.mxu0 %v967
        %969 = vmatprep.subr.mxu0 0.0
        %v970 = vand.u32 %v575, 4294901760
        %971 = vmatpush1.msra.mxu0 %v970
        %972 = vmatprep.subr.mxu0 0.0
        %v973 = vand.u32 %v574, 4294901760
        %974 = vmatpush1.msra.mxu0 %v973
        %975 = vmatprep.subr.mxu0 0.0
        %v976 = vand.u32 %v573, 4294901760
        %977 = vmatpush1.msra.mxu0 %v976
        %978 = vmatprep.subr.mxu0 0.0
        %v979 = vand.u32 %v572, 4294901760
        %980 = vmatpush1.msra.mxu0 %v979
        %981 = vmatprep.subr.mxu0 0.0
        %v982 = vand.u32 %v571, 4294901760
        %983 = vmatpush1.msra.mxu0 %v982
        %984 = vmatprep.subr.mxu0 0.0
        %v985 = vand.u32 %v570, 4294901760
        %986 = vmatpush1.msra.mxu0 %v985
        %987 = vmatprep.subr.mxu0 0.0
        %988 = vmatpush2.msra.mxu0 0.0
        %989 = vmatprep.subr.mxu0 0.0
        %990 = vmatpush2.msra.mxu0 0.0
        %991 = vmatprep.subr.mxu0 0.0
        %992 = vmatpush2.msra.mxu0 0.0
        %993 = vmatprep.subr.mxu0 0.0
        %994 = vmatpush2.msra.mxu0 0.0
        %995 = vmatprep.subr.mxu0 0.0
        %996 = vmatpush2.msra.mxu0 0.0
        %997 = vmatprep.subr.mxu0 0.0
        %998 = vmatpush2.msra.mxu0 0.0
        %999 = vmatprep.subr.mxu0 0.0
        %1000 = vmatpush2.msra.mxu0 0.0
        %1001 = vmatprep.subr.mxu0 0.0
        %1002 = vmatpush2.msra.mxu0 0.0
        %1003 = vmatprep.subr.mxu0 0.0
        %1004 = vmatpush2.msra.mxu0 0.0
        %1005 = vmatprep.subr.mxu0 0.0
        %1006 = vmatpush2.msra.mxu0 0.0
        %1007 = vmatprep.subr.mxu0 0.0
        %1008 = vmatpush2.msra.mxu0 0.0
        %1009 = vmatprep.subr.mxu0 0.0
        %1010 = vmatpush2.msra.mxu0 0.0
        %1011 = vmatprep.subr.mxu0 0.0
        %1012 = vmatpush2.msra.mxu0 0.0
        %1013 = vmatprep.subr.mxu0 0.0
        %1014 = vmatpush2.msra.mxu0 0.0
        %1015 = vmatprep.subr.mxu0 0.0
        %1016 = vmatpush2.msra.mxu0 0.0
        %1017 = vmatprep.subr.mxu0 0.0
        %1018 = vmatpush2.msra.mxu0 0.0
        %1019 = vmatprep.mubr.f32.mxu0 0.0
        %v1020 = vand.u32 %v569, 4294901760
        %v1021 = vsub.f32 %v569, %v1020
        %v1022 = vand.u32 %v1021, 4294901760
        %1023 = vmatmul.mubr.f32.gmra.mxu0 %v1022
        %v1024 = vpop.f32.mrf.mxu0
        %v1025 = vadd.f32 %v936, %v1024
        %v1026 = vpop.f32.mrf.mxu0
        %1027 = vdwg.mxu0
        %1028 = vmatprep.subr.mxu0 0.0
        %v1029 = vand.u32 %v585, 4294901760
        %v1030 = vsub.f32 %v585, %v1029
        %v1031 = vand.u32 %v1030, 4294901760
        %1032 = vmatpush1.msra.mxu0 %v1031
        %1033 = vmatprep.subr.mxu0 0.0
        %v1034 = vand.u32 %v584, 4294901760
        %v1035 = vsub.f32 %v584, %v1034
        %v1036 = vand.u32 %v1035, 4294901760
        %1037 = vmatpush1.msra.mxu0 %v1036
        %1038 = vmatprep.subr.mxu0 0.0
        %v1039 = vand.u32 %v583, 4294901760
        %v1040 = vsub.f32 %v583, %v1039
        %v1041 = vand.u32 %v1040, 4294901760
        %1042 = vmatpush1.msra.mxu0 %v1041
        %1043 = vmatprep.subr.mxu0 0.0
        %v1044 = vand.u32 %v582, 4294901760
        %v1045 = vsub.f32 %v582, %v1044
        %v1046 = vand.u32 %v1045, 4294901760
        %1047 = vmatpush1.msra.mxu0 %v1046
        %1048 = vmatprep.subr.mxu0 0.0
        %v1049 = vand.u32 %v581, 4294901760
        %v1050 = vsub.f32 %v581, %v1049
        %v1051 = vand.u32 %v1050, 4294901760
        %1052 = vmatpush1.msra.mxu0 %v1051
        %1053 = vmatprep.subr.mxu0 0.0
        %v1054 = vand.u32 %v580, 4294901760
        %v1055 = vsub.f32 %v580, %v1054
        %v1056 = vand.u32 %v1055, 4294901760
        %1057 = vmatpush1.msra.mxu0 %v1056
        %1058 = vmatprep.subr.mxu0 0.0
        %v1059 = vand.u32 %v579, 4294901760
        %v1060 = vsub.f32 %v579, %v1059
        %v1061 = vand.u32 %v1060, 4294901760
        %1062 = vmatpush1.msra.mxu0 %v1061
        %1063 = vmatprep.subr.mxu0 0.0
        %v1064 = vand.u32 %v578, 4294901760
        %v1065 = vsub.f32 %v578, %v1064
        %v1066 = vand.u32 %v1065, 4294901760
        %1067 = vmatpush1.msra.mxu0 %v1066
        %1068 = vmatprep.subr.mxu0 0.0
        %v1069 = vand.u32 %v577, 4294901760
        %v1070 = vsub.f32 %v577, %v1069
        %v1071 = vand.u32 %v1070, 4294901760
        %1072 = vmatpush1.msra.mxu0 %v1071
        %1073 = vmatprep.subr.mxu0 0.0
        %v1074 = vand.u32 %v576, 4294901760
        %v1075 = vsub.f32 %v576, %v1074
        %v1076 = vand.u32 %v1075, 4294901760
        %1077 = vmatpush1.msra.mxu0 %v1076
        %1078 = vmatprep.subr.mxu0 0.0
        %v1079 = vand.u32 %v575, 4294901760
        %v1080 = vsub.f32 %v575, %v1079
        %v1081 = vand.u32 %v1080, 4294901760
        %1082 = vmatpush1.msra.mxu0 %v1081
        %1083 = vmatprep.subr.mxu0 0.0
        %v1084 = vand.u32 %v574, 4294901760
        %v1085 = vsub.f32 %v574, %v1084
        %v1086 = vand.u32 %v1085, 4294901760
        %1087 = vmatpush1.msra.mxu0 %v1086
        %1088 = vmatprep.subr.mxu0 0.0
        %v1089 = vand.u32 %v573, 4294901760
        %v1090 = vsub.f32 %v573, %v1089
        %v1091 = vand.u32 %v1090, 4294901760
        %1092 = vmatpush1.msra.mxu0 %v1091
        %1093 = vmatprep.subr.mxu0 0.0
        %v1094 = vand.u32 %v572, 4294901760
        %v1095 = vsub.f32 %v572, %v1094
        %v1096 = vand.u32 %v1095, 4294901760
        %1097 = vmatpush1.msra.mxu0 %v1096
        %1098 = vmatprep.subr.mxu0 0.0
        %v1099 = vand.u32 %v571, 4294901760
        %v1100 = vsub.f32 %v571, %v1099
        %v1101 = vand.u32 %v1100, 4294901760
        %1102 = vmatpush1.msra.mxu0 %v1101
        %1103 = vmatprep.subr.mxu0 0.0
        %v1104 = vand.u32 %v570, 4294901760
        %v1105 = vsub.f32 %v570, %v1104
        %v1106 = vand.u32 %v1105, 4294901760
        %1107 = vmatpush1.msra.mxu0 %v1106
        %1108 = vmatprep.subr.mxu0 0.0
        %1109 = vmatpush2.msra.mxu0 0.0
        %1110 = vmatprep.subr.mxu0 0.0
        %1111 = vmatpush2.msra.mxu0 0.0
        %1112 = vmatprep.subr.mxu0 0.0
        %1113 = vmatpush2.msra.mxu0 0.0
        %1114 = vmatprep.subr.mxu0 0.0
        %1115 = vmatpush2.msra.mxu0 0.0
        %1116 = vmatprep.subr.mxu0 0.0
        %1117 = vmatpush2.msra.mxu0 0.0
        %1118 = vmatprep.subr.mxu0 0.0
        %1119 = vmatpush2.msra.mxu0 0.0
        %1120 = vmatprep.subr.mxu0 0.0
        %1121 = vmatpush2.msra.mxu0 0.0
        %1122 = vmatprep.subr.mxu0 0.0
        %1123 = vmatpush2.msra.mxu0 0.0
        %1124 = vmatprep.subr.mxu0 0.0
        %1125 = vmatpush2.msra.mxu0 0.0
        %1126 = vmatprep.subr.mxu0 0.0
        %1127 = vmatpush2.msra.mxu0 0.0
        %1128 = vmatprep.subr.mxu0 0.0
        %1129 = vmatpush2.msra.mxu0 0.0
        %1130 = vmatprep.subr.mxu0 0.0
        %1131 = vmatpush2.msra.mxu0 0.0
        %1132 = vmatprep.subr.mxu0 0.0
        %1133 = vmatpush2.msra.mxu0 0.0
        %1134 = vmatprep.subr.mxu0 0.0
        %1135 = vmatpush2.msra.mxu0 0.0
        %1136 = vmatprep.subr.mxu0 0.0
        %1137 = vmatpush2.msra.mxu0 0.0
        %1138 = vmatprep.subr.mxu0 0.0
        %1139 = vmatpush2.msra.mxu0 0.0
        %1140 = vmatprep.mubr.f32.mxu0 0.0
        %v1141 = vand.u32 %v569, 4294901760
        %1142 = vmatmul.mubr.f32.gmra.mxu0 %v1141
        %v1143 = vpop.f32.mrf.mxu0
        %v1144 = vadd.f32 %v1025, %v1143
        %v1145 = vpop.f32.mrf.mxu0
        %1146 = vdwg.mxu0
        %1147 = vmatprep.subr.mxu0 0.0
        %v1148 = vand.u32 %v585, 4294901760
        %1149 = vmatpush1.msra.mxu0 %v1148
        %1150 = vmatprep.subr.mxu0 0.0
        %v1151 = vand.u32 %v584, 4294901760
        %1152 = vmatpush1.msra.mxu0 %v1151
        %1153 = vmatprep.subr.mxu0 0.0
        %v1154 = vand.u32 %v583, 4294901760
        %1155 = vmatpush1.msra.mxu0 %v1154
        %1156 = vmatprep.subr.mxu0 0.0
        %v1157 = vand.u32 %v582, 4294901760
        %1158 = vmatpush1.msra.mxu0 %v1157
        %1159 = vmatprep.subr.mxu0 0.0
        %v1160 = vand.u32 %v581, 4294901760
        %1161 = vmatpush1.msra.mxu0 %v1160
        %1162 = vmatprep.subr.mxu0 0.0
        %v1163 = vand.u32 %v580, 4294901760
        %1164 = vmatpush1.msra.mxu0 %v1163
        %1165 = vmatprep.subr.mxu0 0.0
        %v1166 = vand.u32 %v579, 4294901760
        %1167 = vmatpush1.msra.mxu0 %v1166
        %1168 = vmatprep.subr.mxu0 0.0
        %v1169 = vand.u32 %v578, 4294901760
        %1170 = vmatpush1.msra.mxu0 %v1169
        %1171 = vmatprep.subr.mxu0 0.0
        %v1172 = vand.u32 %v577, 4294901760
        %1173 = vmatpush1.msra.mxu0 %v1172
        %1174 = vmatprep.subr.mxu0 0.0
        %v1175 = vand.u32 %v576, 4294901760
        %1176 = vmatpush1.msra.mxu0 %v1175
        %1177 = vmatprep.subr.mxu0 0.0
        %v1178 = vand.u32 %v575, 4294901760
        %1179 = vmatpush1.msra.mxu0 %v1178
        %1180 = vmatprep.subr.mxu0 0.0
        %v1181 = vand.u32 %v574, 4294901760
        %1182 = vmatpush1.msra.mxu0 %v1181
        %1183 = vmatprep.subr.mxu0 0.0
        %v1184 = vand.u32 %v573, 4294901760
        %1185 = vmatpush1.msra.mxu0 %v1184
        %1186 = vmatprep.subr.mxu0 0.0
        %v1187 = vand.u32 %v572, 4294901760
        %1188 = vmatpush1.msra.mxu0 %v1187
        %1189 = vmatprep.subr.mxu0 0.0
        %v1190 = vand.u32 %v571, 4294901760
        %1191 = vmatpush1.msra.mxu0 %v1190
        %1192 = vmatprep.subr.mxu0 0.0
        %v1193 = vand.u32 %v570, 4294901760
        %1194 = vmatpush1.msra.mxu0 %v1193
        %1195 = vmatprep.subr.mxu0 0.0
        %1196 = vmatpush2.msra.mxu0 0.0
        %1197 = vmatprep.subr.mxu0 0.0
        %1198 = vmatpush2.msra.mxu0 0.0
        %1199 = vmatprep.subr.mxu0 0.0
        %1200 = vmatpush2.msra.mxu0 0.0
        %1201 = vmatprep.subr.mxu0 0.0
        %1202 = vmatpush2.msra.mxu0 0.0
        %1203 = vmatprep.subr.mxu0 0.0
        %1204 = vmatpush2.msra.mxu0 0.0
        %1205 = vmatprep.subr.mxu0 0.0
        %1206 = vmatpush2.msra.mxu0 0.0
        %1207 = vmatprep.subr.mxu0 0.0
        %1208 = vmatpush2.msra.mxu0 0.0
        %1209 = vmatprep.subr.mxu0 0.0
        %1210 = vmatpush2.msra.mxu0 0.0
        %1211 = vmatprep.subr.mxu0 0.0
        %1212 = vmatpush2.msra.mxu0 0.0
        %1213 = vmatprep.subr.mxu0 0.0
        %1214 = vmatpush2.msra.mxu0 0.0
        %1215 = vmatprep.subr.mxu0 0.0
        %1216 = vmatpush2.msra.mxu0 0.0
        %1217 = vmatprep.subr.mxu0 0.0
        %1218 = vmatpush2.msra.mxu0 0.0
        %1219 = vmatprep.subr.mxu0 0.0
        %1220 = vmatpush2.msra.mxu0 0.0
        %1221 = vmatprep.subr.mxu0 0.0
        %1222 = vmatpush2.msra.mxu0 0.0
        %1223 = vmatprep.subr.mxu0 0.0
        %1224 = vmatpush2.msra.mxu0 0.0
        %1225 = vmatprep.subr.mxu0 0.0
        %1226 = vmatpush2.msra.mxu0 0.0
        %1227 = vmatprep.mubr.f32.mxu0 0.0
        %v1228 = vand.u32 %v569, 4294901760
        %1229 = vmatmul.mubr.f32.gmra.mxu0 %v1228
        %v1230 = vpop.f32.mrf.mxu0
        %v1231 = vadd.f32 %v1144, %v1230
        %v1232 = vpop.f32.mrf.mxu0
        %1233 = vdwg.mxu0
        %v1234 = vld [vmem:[#allocation10] sm:$0xff]
        %v1235 = vld [vmem:[#allocation10 + $0x8] sm:$0xff]
        %v1236 = vld [vmem:[#allocation10 + $0x10] sm:$0xff]
        %v1237 = vld [vmem:[#allocation10 + $0x18] sm:$0xff]
        %v1238 = vld [vmem:[#allocation10 + $0x20] sm:$0xff]
        %v1239 = vld [vmem:[#allocation10 + $0x28] sm:$0xff]
        %v1240 = vld [vmem:[#allocation10 + $0x30] sm:$0xff]
        %v1241 = vld [vmem:[#allocation10 + $0x38] sm:$0xff]
        %v1242 = vld [vmem:[#allocation10 + $0x40] sm:$0xff]
        %v1243 = vld [vmem:[#allocation10 + $0x48] sm:$0xff]
        %v1244 = vld [vmem:[#allocation10 + $0x50] sm:$0xff]
        %v1245 = vld [vmem:[#allocation10 + $0x58] sm:$0xff]
        %v1246 = vld [vmem:[#allocation10 + $0x60] sm:$0xff]
        %v1247 = vld [vmem:[#allocation10 + $0x68] sm:$0xff]
        %v1248 = vld [vmem:[#allocation10 + $0x70] sm:$0xff]
        %v1249 = vld [vmem:[#allocation10 + $0x78] sm:$0xff]
        %v1250 = vld [vmem:[%s5] sm:$0x1]
        %v1252 = vlaneseq
        %v1253 = vshrl.u32 %v1252, 7
        %v1254 = vsub.s32 0, %v1253
        %v1255 = vrot.slane %v1250, %v1254
        %1257 = vmatprep.subr.mxu0 0.0
        %v1258 = vand.u32 %v1249, 4294901760
        %1259 = vmatpush1.msra.mxu0 %v1258
        %1260 = vmatprep.subr.mxu0 0.0
        %v1261 = vand.u32 %v1248, 4294901760
        %1262 = vmatpush1.msra.mxu0 %v1261
        %1263 = vmatprep.subr.mxu0 0.0
        %v1264 = vand.u32 %v1247, 4294901760
        %1265 = vmatpush1.msra.mxu0 %v1264
        %1266 = vmatprep.subr.mxu0 0.0
        %v1267 = vand.u32 %v1246, 4294901760
        %1268 = vmatpush1.msra.mxu0 %v1267
        %1269 = vmatprep.subr.mxu0 0.0
        %v1270 = vand.u32 %v1245, 4294901760
        %1271 = vmatpush1.msra.mxu0 %v1270
        %1272 = vmatprep.subr.mxu0 0.0
        %v1273 = vand.u32 %v1244, 4294901760
        %1274 = vmatpush1.msra.mxu0 %v1273
        %1275 = vmatprep.subr.mxu0 0.0
        %v1276 = vand.u32 %v1243, 4294901760
        %1277 = vmatpush1.msra.mxu0 %v1276
        %1278 = vmatprep.subr.mxu0 0.0
        %v1279 = vand.u32 %v1242, 4294901760
        %1280 = vmatpush1.msra.mxu0 %v1279
        %1281 = vmatprep.subr.mxu0 0.0
        %v1282 = vand.u32 %v1241, 4294901760
        %1283 = vmatpush1.msra.mxu0 %v1282
        %1284 = vmatprep.subr.mxu0 0.0
        %v1285 = vand.u32 %v1240, 4294901760
        %1286 = vmatpush1.msra.mxu0 %v1285
        %1287 = vmatprep.subr.mxu0 0.0
        %v1288 = vand.u32 %v1239, 4294901760
        %1289 = vmatpush1.msra.mxu0 %v1288
        %1290 = vmatprep.subr.mxu0 0.0
        %v1291 = vand.u32 %v1238, 4294901760
        %1292 = vmatpush1.msra.mxu0 %v1291
        %1293 = vmatprep.subr.mxu0 0.0
        %v1294 = vand.u32 %v1237, 4294901760
        %1295 = vmatpush1.msra.mxu0 %v1294
        %1296 = vmatprep.subr.mxu0 0.0
        %v1297 = vand.u32 %v1236, 4294901760
        %1298 = vmatpush1.msra.mxu0 %v1297
        %1299 = vmatprep.subr.mxu0 0.0
        %v1300 = vand.u32 %v1235, 4294901760
        %1301 = vmatpush1.msra.mxu0 %v1300
        %1302 = vmatprep.subr.mxu0 0.0
        %v1303 = vand.u32 %v1234, 4294901760
        %1304 = vmatpush1.msra.mxu0 %v1303
        %1305 = vmatprep.subr.mxu0 0.0
        %1306 = vmatpush2.msra.mxu0 0.0
        %1307 = vmatprep.subr.mxu0 0.0
        %1308 = vmatpush2.msra.mxu0 0.0
        %1309 = vmatprep.subr.mxu0 0.0
        %1310 = vmatpush2.msra.mxu0 0.0
        %1311 = vmatprep.subr.mxu0 0.0
        %1312 = vmatpush2.msra.mxu0 0.0
        %1313 = vmatprep.subr.mxu0 0.0
        %1314 = vmatpush2.msra.mxu0 0.0
        %1315 = vmatprep.subr.mxu0 0.0
        %1316 = vmatpush2.msra.mxu0 0.0
        %1317 = vmatprep.subr.mxu0 0.0
        %1318 = vmatpush2.msra.mxu0 0.0
        %1319 = vmatprep.subr.mxu0 0.0
        %1320 = vmatpush2.msra.mxu0 0.0
        %1321 = vmatprep.subr.mxu0 0.0
        %1322 = vmatpush2.msra.mxu0 0.0
        %1323 = vmatprep.subr.mxu0 0.0
        %1324 = vmatpush2.msra.mxu0 0.0
        %1325 = vmatprep.subr.mxu0 0.0
        %1326 = vmatpush2.msra.mxu0 0.0
        %1327 = vmatprep.subr.mxu0 0.0
        %1328 = vmatpush2.msra.mxu0 0.0
        %1329 = vmatprep.subr.mxu0 0.0
        %1330 = vmatpush2.msra.mxu0 0.0
        %1331 = vmatprep.subr.mxu0 0.0
        %1332 = vmatpush2.msra.mxu0 0.0
        %1333 = vmatprep.subr.mxu0 0.0
        %1334 = vmatpush2.msra.mxu0 0.0
        %1335 = vmatprep.subr.mxu0 0.0
        %1336 = vmatpush2.msra.mxu0 0.0
        %1337 = vmatprep.mubr.f32.mxu0 0.0
        %v1338 = vand.u32 %v569, 4294901760
        %v1339 = vsub.f32 %v569, %v1338
        %v1340 = vand.u32 %v1339, 4294901760
        %v1341 = vsub.f32 %v1339, %v1340
        %v1342 = vand.u32 %v1341, 4294901760
        %1343 = vmatmul.mubr.f32.gmra.mxu0 %v1342
        %v1344 = vpop.f32.mrf.mxu0
        %v1345 = vadd.f32 %v1255, %v1344
        %v1346 = vpop.f32.mrf.mxu0
        %1347 = vdwg.mxu0
        %1348 = vmatprep.subr.mxu0 0.0
        %v1349 = vand.u32 %v1249, 4294901760
        %v1350 = vsub.f32 %v1249, %v1349
        %v1351 = vand.u32 %v1350, 4294901760
        %v1352 = vsub.f32 %v1350, %v1351
        %v1353 = vand.u32 %v1352, 4294901760
        %1354 = vmatpush1.msra.mxu0 %v1353
        %1355 = vmatprep.subr.mxu0 0.0
        %v1356 = vand.u32 %v1248, 4294901760
        %v1357 = vsub.f32 %v1248, %v1356
        %v1358 = vand.u32 %v1357, 4294901760
        %v1359 = vsub.f32 %v1357, %v1358
        %v1360 = vand.u32 %v1359, 4294901760
        %1361 = vmatpush1.msra.mxu0 %v1360
        %1362 = vmatprep.subr.mxu0 0.0
        %v1363 = vand.u32 %v1247, 4294901760
        %v1364 = vsub.f32 %v1247, %v1363
        %v1365 = vand.u32 %v1364, 4294901760
        %v1366 = vsub.f32 %v1364, %v1365
        %v1367 = vand.u32 %v1366, 4294901760
        %1368 = vmatpush1.msra.mxu0 %v1367
        %1369 = vmatprep.subr.mxu0 0.0
        %v1370 = vand.u32 %v1246, 4294901760
        %v1371 = vsub.f32 %v1246, %v1370
        %v1372 = vand.u32 %v1371, 4294901760
        %v1373 = vsub.f32 %v1371, %v1372
        %v1374 = vand.u32 %v1373, 4294901760
        %1375 = vmatpush1.msra.mxu0 %v1374
        %1376 = vmatprep.subr.mxu0 0.0
        %v1377 = vand.u32 %v1245, 4294901760
        %v1378 = vsub.f32 %v1245, %v1377
        %v1379 = vand.u32 %v1378, 4294901760
        %v1380 = vsub.f32 %v1378, %v1379
        %v1381 = vand.u32 %v1380, 4294901760
        %1382 = vmatpush1.msra.mxu0 %v1381
        %1383 = vmatprep.subr.mxu0 0.0
        %v1384 = vand.u32 %v1244, 4294901760
        %v1385 = vsub.f32 %v1244, %v1384
        %v1386 = vand.u32 %v1385, 4294901760
        %v1387 = vsub.f32 %v1385, %v1386
        %v1388 = vand.u32 %v1387, 4294901760
        %1389 = vmatpush1.msra.mxu0 %v1388
        %1390 = vmatprep.subr.mxu0 0.0
        %v1391 = vand.u32 %v1243, 4294901760
        %v1392 = vsub.f32 %v1243, %v1391
        %v1393 = vand.u32 %v1392, 4294901760
        %v1394 = vsub.f32 %v1392, %v1393
        %v1395 = vand.u32 %v1394, 4294901760
        %1396 = vmatpush1.msra.mxu0 %v1395
        %1397 = vmatprep.subr.mxu0 0.0
        %v1398 = vand.u32 %v1242, 4294901760
        %v1399 = vsub.f32 %v1242, %v1398
        %v1400 = vand.u32 %v1399, 4294901760
        %v1401 = vsub.f32 %v1399, %v1400
        %v1402 = vand.u32 %v1401, 4294901760
        %1403 = vmatpush1.msra.mxu0 %v1402
        %1404 = vmatprep.subr.mxu0 0.0
        %v1405 = vand.u32 %v1241, 4294901760
        %v1406 = vsub.f32 %v1241, %v1405
        %v1407 = vand.u32 %v1406, 4294901760
        %v1408 = vsub.f32 %v1406, %v1407
        %v1409 = vand.u32 %v1408, 4294901760
        %1410 = vmatpush1.msra.mxu0 %v1409
        %1411 = vmatprep.subr.mxu0 0.0
        %v1412 = vand.u32 %v1240, 4294901760
        %v1413 = vsub.f32 %v1240, %v1412
        %v1414 = vand.u32 %v1413, 4294901760
        %v1415 = vsub.f32 %v1413, %v1414
        %v1416 = vand.u32 %v1415, 4294901760
        %1417 = vmatpush1.msra.mxu0 %v1416
        %1418 = vmatprep.subr.mxu0 0.0
        %v1419 = vand.u32 %v1239, 4294901760
        %v1420 = vsub.f32 %v1239, %v1419
        %v1421 = vand.u32 %v1420, 4294901760
        %v1422 = vsub.f32 %v1420, %v1421
        %v1423 = vand.u32 %v1422, 4294901760
        %1424 = vmatpush1.msra.mxu0 %v1423
        %1425 = vmatprep.subr.mxu0 0.0
        %v1426 = vand.u32 %v1238, 4294901760
        %v1427 = vsub.f32 %v1238, %v1426
        %v1428 = vand.u32 %v1427, 4294901760
        %v1429 = vsub.f32 %v1427, %v1428
        %v1430 = vand.u32 %v1429, 4294901760
        %1431 = vmatpush1.msra.mxu0 %v1430
        %1432 = vmatprep.subr.mxu0 0.0
        %v1433 = vand.u32 %v1237, 4294901760
        %v1434 = vsub.f32 %v1237, %v1433
        %v1435 = vand.u32 %v1434, 4294901760
        %v1436 = vsub.f32 %v1434, %v1435
        %v1437 = vand.u32 %v1436, 4294901760
        %1438 = vmatpush1.msra.mxu0 %v1437
        %1439 = vmatprep.subr.mxu0 0.0
        %v1440 = vand.u32 %v1236, 4294901760
        %v1441 = vsub.f32 %v1236, %v1440
        %v1442 = vand.u32 %v1441, 4294901760
        %v1443 = vsub.f32 %v1441, %v1442
        %v1444 = vand.u32 %v1443, 4294901760
        %1445 = vmatpush1.msra.mxu0 %v1444
        %1446 = vmatprep.subr.mxu0 0.0
        %v1447 = vand.u32 %v1235, 4294901760
        %v1448 = vsub.f32 %v1235, %v1447
        %v1449 = vand.u32 %v1448, 4294901760
        %v1450 = vsub.f32 %v1448, %v1449
        %v1451 = vand.u32 %v1450, 4294901760
        %1452 = vmatpush1.msra.mxu0 %v1451
        %1453 = vmatprep.subr.mxu0 0.0
        %v1454 = vand.u32 %v1234, 4294901760
        %v1455 = vsub.f32 %v1234, %v1454
        %v1456 = vand.u32 %v1455, 4294901760
        %v1457 = vsub.f32 %v1455, %v1456
        %v1458 = vand.u32 %v1457, 4294901760
        %1459 = vmatpush1.msra.mxu0 %v1458
        %1460 = vmatprep.subr.mxu0 0.0
        %1461 = vmatpush2.msra.mxu0 0.0
        %1462 = vmatprep.subr.mxu0 0.0
        %1463 = vmatpush2.msra.mxu0 0.0
        %1464 = vmatprep.subr.mxu0 0.0
        %1465 = vmatpush2.msra.mxu0 0.0
        %1466 = vmatprep.subr.mxu0 0.0
        %1467 = vmatpush2.msra.mxu0 0.0
        %1468 = vmatprep.subr.mxu0 0.0
        %1469 = vmatpush2.msra.mxu0 0.0
        %1470 = vmatprep.subr.mxu0 0.0
        %1471 = vmatpush2.msra.mxu0 0.0
        %1472 = vmatprep.subr.mxu0 0.0
        %1473 = vmatpush2.msra.mxu0 0.0
        %1474 = vmatprep.subr.mxu0 0.0
        %1475 = vmatpush2.msra.mxu0 0.0
        %1476 = vmatprep.subr.mxu0 0.0
        %1477 = vmatpush2.msra.mxu0 0.0
        %1478 = vmatprep.subr.mxu0 0.0
        %1479 = vmatpush2.msra.mxu0 0.0
        %1480 = vmatprep.subr.mxu0 0.0
        %1481 = vmatpush2.msra.mxu0 0.0
        %1482 = vmatprep.subr.mxu0 0.0
        %1483 = vmatpush2.msra.mxu0 0.0
        %1484 = vmatprep.subr.mxu0 0.0
        %1485 = vmatpush2.msra.mxu0 0.0
        %1486 = vmatprep.subr.mxu0 0.0
        %1487 = vmatpush2.msra.mxu0 0.0
        %1488 = vmatprep.subr.mxu0 0.0
        %1489 = vmatpush2.msra.mxu0 0.0
        %1490 = vmatprep.subr.mxu0 0.0
        %1491 = vmatpush2.msra.mxu0 0.0
        %1492 = vmatprep.mubr.f32.mxu0 0.0
        %v1493 = vand.u32 %v569, 4294901760
        %1494 = vmatmul.mubr.f32.gmra.mxu0 %v1493
        %v1495 = vpop.f32.mrf.mxu0
        %v1496 = vadd.f32 %v1345, %v1495
        %v1497 = vpop.f32.mrf.mxu0
        %1498 = vdwg.mxu0
        %1499 = vmatprep.subr.mxu0 0.0
        %v1500 = vand.u32 %v1249, 4294901760
        %v1501 = vsub.f32 %v1249, %v1500
        %1502 = vmatpush1.msra.mxu0 %v1501
        %1503 = vmatprep.subr.mxu0 0.0
        %v1504 = vand.u32 %v1248, 4294901760
        %v1505 = vsub.f32 %v1248, %v1504
        %1506 = vmatpush1.msra.mxu0 %v1505
        %1507 = vmatprep.subr.mxu0 0.0
        %v1508 = vand.u32 %v1247, 4294901760
        %v1509 = vsub.f32 %v1247, %v1508
        %1510 = vmatpush1.msra.mxu0 %v1509
        %1511 = vmatprep.subr.mxu0 0.0
        %v1512 = vand.u32 %v1246, 4294901760
        %v1513 = vsub.f32 %v1246, %v1512
        %1514 = vmatpush1.msra.mxu0 %v1513
        %1515 = vmatprep.subr.mxu0 0.0
        %v1516 = vand.u32 %v1245, 4294901760
        %v1517 = vsub.f32 %v1245, %v1516
        %1518 = vmatpush1.msra.mxu0 %v1517
        %1519 = vmatprep.subr.mxu0 0.0
        %v1520 = vand.u32 %v1244, 4294901760
        %v1521 = vsub.f32 %v1244, %v1520
        %1522 = vmatpush1.msra.mxu0 %v1521
        %1523 = vmatprep.subr.mxu0 0.0
        %v1524 = vand.u32 %v1243, 4294901760
        %v1525 = vsub.f32 %v1243, %v1524
        %1526 = vmatpush1.msra.mxu0 %v1525
        %1527 = vmatprep.subr.mxu0 0.0
        %v1528 = vand.u32 %v1242, 4294901760
        %v1529 = vsub.f32 %v1242, %v1528
        %1530 = vmatpush1.msra.mxu0 %v1529
        %1531 = vmatprep.subr.mxu0 0.0
        %v1532 = vand.u32 %v1241, 4294901760
        %v1533 = vsub.f32 %v1241, %v1532
        %1534 = vmatpush1.msra.mxu0 %v1533
        %1535 = vmatprep.subr.mxu0 0.0
        %v1536 = vand.u32 %v1240, 4294901760
        %v1537 = vsub.f32 %v1240, %v1536
        %1538 = vmatpush1.msra.mxu0 %v1537
        %1539 = vmatprep.subr.mxu0 0.0
        %v1540 = vand.u32 %v1239, 4294901760
        %v1541 = vsub.f32 %v1239, %v1540
        %1542 = vmatpush1.msra.mxu0 %v1541
        %1543 = vmatprep.subr.mxu0 0.0
        %v1544 = vand.u32 %v1238, 4294901760
        %v1545 = vsub.f32 %v1238, %v1544
        %1546 = vmatpush1.msra.mxu0 %v1545
        %1547 = vmatprep.subr.mxu0 0.0
        %v1548 = vand.u32 %v1237, 4294901760
        %v1549 = vsub.f32 %v1237, %v1548
        %1550 = vmatpush1.msra.mxu0 %v1549
        %1551 = vmatprep.subr.mxu0 0.0
        %v1552 = vand.u32 %v1236, 4294901760
        %v1553 = vsub.f32 %v1236, %v1552
        %1554 = vmatpush1.msra.mxu0 %v1553
        %1555 = vmatprep.subr.mxu0 0.0
        %v1556 = vand.u32 %v1235, 4294901760
        %v1557 = vsub.f32 %v1235, %v1556
        %1558 = vmatpush1.msra.mxu0 %v1557
        %1559 = vmatprep.subr.mxu0 0.0
        %v1560 = vand.u32 %v1234, 4294901760
        %v1561 = vsub.f32 %v1234, %v1560
        %1562 = vmatpush1.msra.mxu0 %v1561
        %1563 = vmatprep.subr.mxu0 0.0
        %1564 = vmatpush2.msra.mxu0 0.0
        %1565 = vmatprep.subr.mxu0 0.0
        %1566 = vmatpush2.msra.mxu0 0.0
        %1567 = vmatprep.subr.mxu0 0.0
        %1568 = vmatpush2.msra.mxu0 0.0
        %1569 = vmatprep.subr.mxu0 0.0
        %1570 = vmatpush2.msra.mxu0 0.0
        %1571 = vmatprep.subr.mxu0 0.0
        %1572 = vmatpush2.msra.mxu0 0.0
        %1573 = vmatprep.subr.mxu0 0.0
        %1574 = vmatpush2.msra.mxu0 0.0
        %1575 = vmatprep.subr.mxu0 0.0
        %1576 = vmatpush2.msra.mxu0 0.0
        %1577 = vmatprep.subr.mxu0 0.0
        %1578 = vmatpush2.msra.mxu0 0.0
        %1579 = vmatprep.subr.mxu0 0.0
        %1580 = vmatpush2.msra.mxu0 0.0
        %1581 = vmatprep.subr.mxu0 0.0
        %1582 = vmatpush2.msra.mxu0 0.0
        %1583 = vmatprep.subr.mxu0 0.0
        %1584 = vmatpush2.msra.mxu0 0.0
        %1585 = vmatprep.subr.mxu0 0.0
        %1586 = vmatpush2.msra.mxu0 0.0
        %1587 = vmatprep.subr.mxu0 0.0
        %1588 = vmatpush2.msra.mxu0 0.0
        %1589 = vmatprep.subr.mxu0 0.0
        %1590 = vmatpush2.msra.mxu0 0.0
        %1591 = vmatprep.subr.mxu0 0.0
        %1592 = vmatpush2.msra.mxu0 0.0
        %1593 = vmatprep.subr.mxu0 0.0
        %1594 = vmatpush2.msra.mxu0 0.0
        %1595 = vmatprep.mubr.f32.mxu0 0.0
        %v1596 = vand.u32 %v569, 4294901760
        %v1597 = vsub.f32 %v569, %v1596
        %1598 = vmatmul.mubr.f32.gmra.mxu0 %v1597
        %v1599 = vpop.f32.mrf.mxu0
        %v1600 = vadd.f32 %v1496, %v1599
        %v1601 = vpop.f32.mrf.mxu0
        %1602 = vdwg.mxu0
        %1603 = vmatprep.subr.mxu0 0.0
        %v1604 = vand.u32 %v1249, 4294901760
        %1605 = vmatpush1.msra.mxu0 %v1604
        %1606 = vmatprep.subr.mxu0 0.0
        %v1607 = vand.u32 %v1248, 4294901760
        %1608 = vmatpush1.msra.mxu0 %v1607
        %1609 = vmatprep.subr.mxu0 0.0
        %v1610 = vand.u32 %v1247, 4294901760
        %1611 = vmatpush1.msra.mxu0 %v1610
        %1612 = vmatprep.subr.mxu0 0.0
        %v1613 = vand.u32 %v1246, 4294901760
        %1614 = vmatpush1.msra.mxu0 %v1613
        %1615 = vmatprep.subr.mxu0 0.0
        %v1616 = vand.u32 %v1245, 4294901760
        %1617 = vmatpush1.msra.mxu0 %v1616
        %1618 = vmatprep.subr.mxu0 0.0
        %v1619 = vand.u32 %v1244, 4294901760
        %1620 = vmatpush1.msra.mxu0 %v1619
        %1621 = vmatprep.subr.mxu0 0.0
        %v1622 = vand.u32 %v1243, 4294901760
        %1623 = vmatpush1.msra.mxu0 %v1622
        %1624 = vmatprep.subr.mxu0 0.0
        %v1625 = vand.u32 %v1242, 4294901760
        %1626 = vmatpush1.msra.mxu0 %v1625
        %1627 = vmatprep.subr.mxu0 0.0
        %v1628 = vand.u32 %v1241, 4294901760
        %1629 = vmatpush1.msra.mxu0 %v1628
        %1630 = vmatprep.subr.mxu0 0.0
        %v1631 = vand.u32 %v1240, 4294901760
        %1632 = vmatpush1.msra.mxu0 %v1631
        %1633 = vmatprep.subr.mxu0 0.0
        %v1634 = vand.u32 %v1239, 4294901760
        %1635 = vmatpush1.msra.mxu0 %v1634
        %1636 = vmatprep.subr.mxu0 0.0
        %v1637 = vand.u32 %v1238, 4294901760
        %1638 = vmatpush1.msra.mxu0 %v1637
        %1639 = vmatprep.subr.mxu0 0.0
        %v1640 = vand.u32 %v1237, 4294901760
        %1641 = vmatpush1.msra.mxu0 %v1640
        %1642 = vmatprep.subr.mxu0 0.0
        %v1643 = vand.u32 %v1236, 4294901760
        %1644 = vmatpush1.msra.mxu0 %v1643
        %1645 = vmatprep.subr.mxu0 0.0
        %v1646 = vand.u32 %v1235, 4294901760
        %1647 = vmatpush1.msra.mxu0 %v1646
        %1648 = vmatprep.subr.mxu0 0.0
        %v1649 = vand.u32 %v1234, 4294901760
        %1650 = vmatpush1.msra.mxu0 %v1649
        %1651 = vmatprep.subr.mxu0 0.0
        %1652 = vmatpush2.msra.mxu0 0.0
        %1653 = vmatprep.subr.mxu0 0.0
        %1654 = vmatpush2.msra.mxu0 0.0
        %1655 = vmatprep.subr.mxu0 0.0
        %1656 = vmatpush2.msra.mxu0 0.0
        %1657 = vmatprep.subr.mxu0 0.0
        %1658 = vmatpush2.msra.mxu0 0.0
        %1659 = vmatprep.subr.mxu0 0.0
        %1660 = vmatpush2.msra.mxu0 0.0
        %1661 = vmatprep.subr.mxu0 0.0
        %1662 = vmatpush2.msra.mxu0 0.0
        %1663 = vmatprep.subr.mxu0 0.0
        %1664 = vmatpush2.msra.mxu0 0.0
        %1665 = vmatprep.subr.mxu0 0.0
        %1666 = vmatpush2.msra.mxu0 0.0
        %1667 = vmatprep.subr.mxu0 0.0
        %1668 = vmatpush2.msra.mxu0 0.0
        %1669 = vmatprep.subr.mxu0 0.0
        %1670 = vmatpush2.msra.mxu0 0.0
        %1671 = vmatprep.subr.mxu0 0.0
        %1672 = vmatpush2.msra.mxu0 0.0
        %1673 = vmatprep.subr.mxu0 0.0
        %1674 = vmatpush2.msra.mxu0 0.0
        %1675 = vmatprep.subr.mxu0 0.0
        %1676 = vmatpush2.msra.mxu0 0.0
        %1677 = vmatprep.subr.mxu0 0.0
        %1678 = vmatpush2.msra.mxu0 0.0
        %1679 = vmatprep.subr.mxu0 0.0
        %1680 = vmatpush2.msra.mxu0 0.0
        %1681 = vmatprep.subr.mxu0 0.0
        %1682 = vmatpush2.msra.mxu0 0.0
        %1683 = vmatprep.mubr.f32.mxu0 0.0
        %v1684 = vand.u32 %v569, 4294901760
        %v1685 = vsub.f32 %v569, %v1684
        %v1686 = vand.u32 %v1685, 4294901760
        %1687 = vmatmul.mubr.f32.gmra.mxu0 %v1686
        %v1688 = vpop.f32.mrf.mxu0
        %v1689 = vadd.f32 %v1600, %v1688
        %v1690 = vpop.f32.mrf.mxu0
        %1691 = vdwg.mxu0
        %1692 = vmatprep.subr.mxu0 0.0
        %v1693 = vand.u32 %v1249, 4294901760
        %v1694 = vsub.f32 %v1249, %v1693
        %v1695 = vand.u32 %v1694, 4294901760
        %1696 = vmatpush1.msra.mxu0 %v1695
        %1697 = vmatprep.subr.mxu0 0.0
        %v1698 = vand.u32 %v1248, 4294901760
        %v1699 = vsub.f32 %v1248, %v1698
        %v1700 = vand.u32 %v1699, 4294901760
        %1701 = vmatpush1.msra.mxu0 %v1700
        %1702 = vmatprep.subr.mxu0 0.0
        %v1703 = vand.u32 %v1247, 4294901760
        %v1704 = vsub.f32 %v1247, %v1703
        %v1705 = vand.u32 %v1704, 4294901760
        %1706 = vmatpush1.msra.mxu0 %v1705
        %1707 = vmatprep.subr.mxu0 0.0
        %v1708 = vand.u32 %v1246, 4294901760
        %v1709 = vsub.f32 %v1246, %v1708
        %v1710 = vand.u32 %v1709, 4294901760
        %1711 = vmatpush1.msra.mxu0 %v1710
        %1712 = vmatprep.subr.mxu0 0.0
        %v1713 = vand.u32 %v1245, 4294901760
        %v1714 = vsub.f32 %v1245, %v1713
        %v1715 = vand.u32 %v1714, 4294901760
        %1716 = vmatpush1.msra.mxu0 %v1715
        %1717 = vmatprep.subr.mxu0 0.0
        %v1718 = vand.u32 %v1244, 4294901760
        %v1719 = vsub.f32 %v1244, %v1718
        %v1720 = vand.u32 %v1719, 4294901760
        %1721 = vmatpush1.msra.mxu0 %v1720
        %1722 = vmatprep.subr.mxu0 0.0
        %v1723 = vand.u32 %v1243, 4294901760
        %v1724 = vsub.f32 %v1243, %v1723
        %v1725 = vand.u32 %v1724, 4294901760
        %1726 = vmatpush1.msra.mxu0 %v1725
        %1727 = vmatprep.subr.mxu0 0.0
        %v1728 = vand.u32 %v1242, 4294901760
        %v1729 = vsub.f32 %v1242, %v1728
        %v1730 = vand.u32 %v1729, 4294901760
        %1731 = vmatpush1.msra.mxu0 %v1730
        %1732 = vmatprep.subr.mxu0 0.0
        %v1733 = vand.u32 %v1241, 4294901760
        %v1734 = vsub.f32 %v1241, %v1733
        %v1735 = vand.u32 %v1734, 4294901760
        %1736 = vmatpush1.msra.mxu0 %v1735
        %1737 = vmatprep.subr.mxu0 0.0
        %v1738 = vand.u32 %v1240, 4294901760
        %v1739 = vsub.f32 %v1240, %v1738
        %v1740 = vand.u32 %v1739, 4294901760
        %1741 = vmatpush1.msra.mxu0 %v1740
        %1742 = vmatprep.subr.mxu0 0.0
        %v1743 = vand.u32 %v1239, 4294901760
        %v1744 = vsub.f32 %v1239, %v1743
        %v1745 = vand.u32 %v1744, 4294901760
        %1746 = vmatpush1.msra.mxu0 %v1745
        %1747 = vmatprep.subr.mxu0 0.0
        %v1748 = vand.u32 %v1238, 4294901760
        %v1749 = vsub.f32 %v1238, %v1748
        %v1750 = vand.u32 %v1749, 4294901760
        %1751 = vmatpush1.msra.mxu0 %v1750
        %1752 = vmatprep.subr.mxu0 0.0
        %v1753 = vand.u32 %v1237, 4294901760
        %v1754 = vsub.f32 %v1237, %v1753
        %v1755 = vand.u32 %v1754, 4294901760
        %1756 = vmatpush1.msra.mxu0 %v1755
        %1757 = vmatprep.subr.mxu0 0.0
        %v1758 = vand.u32 %v1236, 4294901760
        %v1759 = vsub.f32 %v1236, %v1758
        %v1760 = vand.u32 %v1759, 4294901760
        %1761 = vmatpush1.msra.mxu0 %v1760
        %1762 = vmatprep.subr.mxu0 0.0
        %v1763 = vand.u32 %v1235, 4294901760
        %v1764 = vsub.f32 %v1235, %v1763
        %v1765 = vand.u32 %v1764, 4294901760
        %1766 = vmatpush1.msra.mxu0 %v1765
        %1767 = vmatprep.subr.mxu0 0.0
        %v1768 = vand.u32 %v1234, 4294901760
        %v1769 = vsub.f32 %v1234, %v1768
        %v1770 = vand.u32 %v1769, 4294901760
        %1771 = vmatpush1.msra.mxu0 %v1770
        %1772 = vmatprep.subr.mxu0 0.0
        %1773 = vmatpush2.msra.mxu0 0.0
        %1774 = vmatprep.subr.mxu0 0.0
        %1775 = vmatpush2.msra.mxu0 0.0
        %1776 = vmatprep.subr.mxu0 0.0
        %1777 = vmatpush2.msra.mxu0 0.0
        %1778 = vmatprep.subr.mxu0 0.0
        %1779 = vmatpush2.msra.mxu0 0.0
        %1780 = vmatprep.subr.mxu0 0.0
        %1781 = vmatpush2.msra.mxu0 0.0
        %1782 = vmatprep.subr.mxu0 0.0
        %1783 = vmatpush2.msra.mxu0 0.0
        %1784 = vmatprep.subr.mxu0 0.0
        %1785 = vmatpush2.msra.mxu0 0.0
        %1786 = vmatprep.subr.mxu0 0.0
        %1787 = vmatpush2.msra.mxu0 0.0
        %1788 = vmatprep.subr.mxu0 0.0
        %1789 = vmatpush2.msra.mxu0 0.0
        %1790 = vmatprep.subr.mxu0 0.0
        %1791 = vmatpush2.msra.mxu0 0.0
        %1792 = vmatprep.subr.mxu0 0.0
        %1793 = vmatpush2.msra.mxu0 0.0
        %1794 = vmatprep.subr.mxu0 0.0
        %1795 = vmatpush2.msra.mxu0 0.0
        %1796 = vmatprep.subr.mxu0 0.0
        %1797 = vmatpush2.msra.mxu0 0.0
        %1798 = vmatprep.subr.mxu0 0.0
        %1799 = vmatpush2.msra.mxu0 0.0
        %1800 = vmatprep.subr.mxu0 0.0
        %1801 = vmatpush2.msra.mxu0 0.0
        %1802 = vmatprep.subr.mxu0 0.0
        %1803 = vmatpush2.msra.mxu0 0.0
        %1804 = vmatprep.mubr.f32.mxu0 0.0
        %v1805 = vand.u32 %v569, 4294901760
        %1806 = vmatmul.mubr.f32.gmra.mxu0 %v1805
        %v1807 = vpop.f32.mrf.mxu0
        %v1808 = vadd.f32 %v1689, %v1807
        %v1809 = vpop.f32.mrf.mxu0
        %1810 = vdwg.mxu0
        %1811 = vmatprep.subr.mxu0 0.0
        %v1812 = vand.u32 %v1249, 4294901760
        %1813 = vmatpush1.msra.mxu0 %v1812
        %1814 = vmatprep.subr.mxu0 0.0
        %v1815 = vand.u32 %v1248, 4294901760
        %1816 = vmatpush1.msra.mxu0 %v1815
        %1817 = vmatprep.subr.mxu0 0.0
        %v1818 = vand.u32 %v1247, 4294901760
        %1819 = vmatpush1.msra.mxu0 %v1818
        %1820 = vmatprep.subr.mxu0 0.0
        %v1821 = vand.u32 %v1246, 4294901760
        %1822 = vmatpush1.msra.mxu0 %v1821
        %1823 = vmatprep.subr.mxu0 0.0
        %v1824 = vand.u32 %v1245, 4294901760
        %1825 = vmatpush1.msra.mxu0 %v1824
        %1826 = vmatprep.subr.mxu0 0.0
        %v1827 = vand.u32 %v1244, 4294901760
        %1828 = vmatpush1.msra.mxu0 %v1827
        %1829 = vmatprep.subr.mxu0 0.0
        %v1830 = vand.u32 %v1243, 4294901760
        %1831 = vmatpush1.msra.mxu0 %v1830
        %1832 = vmatprep.subr.mxu0 0.0
        %v1833 = vand.u32 %v1242, 4294901760
        %1834 = vmatpush1.msra.mxu0 %v1833
        %1835 = vmatprep.subr.mxu0 0.0
        %v1836 = vand.u32 %v1241, 4294901760
        %1837 = vmatpush1.msra.mxu0 %v1836
        %1838 = vmatprep.subr.mxu0 0.0
        %v1839 = vand.u32 %v1240, 4294901760
        %1840 = vmatpush1.msra.mxu0 %v1839
        %1841 = vmatprep.subr.mxu0 0.0
        %v1842 = vand.u32 %v1239, 4294901760
        %1843 = vmatpush1.msra.mxu0 %v1842
        %1844 = vmatprep.subr.mxu0 0.0
        %v1845 = vand.u32 %v1238, 4294901760
        %1846 = vmatpush1.msra.mxu0 %v1845
        %1847 = vmatprep.subr.mxu0 0.0
        %v1848 = vand.u32 %v1237, 4294901760
        %1849 = vmatpush1.msra.mxu0 %v1848
        %1850 = vmatprep.subr.mxu0 0.0
        %v1851 = vand.u32 %v1236, 4294901760
        %1852 = vmatpush1.msra.mxu0 %v1851
        %1853 = vmatprep.subr.mxu0 0.0
        %v1854 = vand.u32 %v1235, 4294901760
        %1855 = vmatpush1.msra.mxu0 %v1854
        %1856 = vmatprep.subr.mxu0 0.0
        %v1857 = vand.u32 %v1234, 4294901760
        %1858 = vmatpush1.msra.mxu0 %v1857
        %1859 = vmatprep.subr.mxu0 0.0
        %1860 = vmatpush2.msra.mxu0 0.0
        %1861 = vmatprep.subr.mxu0 0.0
        %1862 = vmatpush2.msra.mxu0 0.0
        %1863 = vmatprep.subr.mxu0 0.0
        %1864 = vmatpush2.msra.mxu0 0.0
        %1865 = vmatprep.subr.mxu0 0.0
        %1866 = vmatpush2.msra.mxu0 0.0
        %1867 = vmatprep.subr.mxu0 0.0
        %1868 = vmatpush2.msra.mxu0 0.0
        %1869 = vmatprep.subr.mxu0 0.0
        %1870 = vmatpush2.msra.mxu0 0.0
        %1871 = vmatprep.subr.mxu0 0.0
        %1872 = vmatpush2.msra.mxu0 0.0
        %1873 = vmatprep.subr.mxu0 0.0
        %1874 = vmatpush2.msra.mxu0 0.0
        %1875 = vmatprep.subr.mxu0 0.0
        %1876 = vmatpush2.msra.mxu0 0.0
        %1877 = vmatprep.subr.mxu0 0.0
        %1878 = vmatpush2.msra.mxu0 0.0
        %1879 = vmatprep.subr.mxu0 0.0
        %1880 = vmatpush2.msra.mxu0 0.0
        %1881 = vmatprep.subr.mxu0 0.0
        %1882 = vmatpush2.msra.mxu0 0.0
        %1883 = vmatprep.subr.mxu0 0.0
        %1884 = vmatpush2.msra.mxu0 0.0
        %1885 = vmatprep.subr.mxu0 0.0
        %1886 = vmatpush2.msra.mxu0 0.0
        %1887 = vmatprep.subr.mxu0 0.0
        %1888 = vmatpush2.msra.mxu0 0.0
        %1889 = vmatprep.subr.mxu0 0.0
        %1890 = vmatpush2.msra.mxu0 0.0
        %1891 = vmatprep.mubr.f32.mxu0 0.0
        %v1892 = vand.u32 %v569, 4294901760
        %1893 = vmatmul.mubr.f32.gmra.mxu0 %v1892
        %v1894 = vpop.f32.mrf.mxu0
        %v1895 = vadd.f32 %v1808, %v1894
        %v1896 = vpop.f32.mrf.mxu0
        %1897 = vdwg.mxu0
        %v1898 = vld [vmem:[#allocation11] sm:$0xff]
        %v1899 = vld [vmem:[#allocation11 + $0x8] sm:$0xff]
        %v1900 = vld [vmem:[#allocation11 + $0x10] sm:$0xff]
        %v1901 = vld [vmem:[#allocation11 + $0x18] sm:$0xff]
        %v1902 = vld [vmem:[#allocation11 + $0x20] sm:$0xff]
        %v1903 = vld [vmem:[#allocation11 + $0x28] sm:$0xff]
        %v1904 = vld [vmem:[#allocation11 + $0x30] sm:$0xff]
        %v1905 = vld [vmem:[#allocation11 + $0x38] sm:$0xff]
        %v1906 = vld [vmem:[#allocation11 + $0x40] sm:$0xff]
        %v1907 = vld [vmem:[#allocation11 + $0x48] sm:$0xff]
        %v1908 = vld [vmem:[#allocation11 + $0x50] sm:$0xff]
        %v1909 = vld [vmem:[#allocation11 + $0x58] sm:$0xff]
        %v1910 = vld [vmem:[#allocation11 + $0x60] sm:$0xff]
        %v1911 = vld [vmem:[#allocation11 + $0x68] sm:$0xff]
        %v1912 = vld [vmem:[#allocation11 + $0x70] sm:$0xff]
        %v1913 = vld [vmem:[#allocation11 + $0x78] sm:$0xff]
        %v1914 = vld [vmem:[%s7] sm:$0x1]
        %v1916 = vlaneseq
        %v1917 = vshrl.u32 %v1916, 7
        %v1918 = vsub.s32 0, %v1917
        %v1919 = vrot.slane %v1914, %v1918
        %1921 = vmatprep.subr.mxu0 0.0
        %v1922 = vand.u32 %v1913, 4294901760
        %1923 = vmatpush1.msra.mxu0 %v1922
        %1924 = vmatprep.subr.mxu0 0.0
        %v1925 = vand.u32 %v1912, 4294901760
        %1926 = vmatpush1.msra.mxu0 %v1925
        %1927 = vmatprep.subr.mxu0 0.0
        %v1928 = vand.u32 %v1911, 4294901760
        %1929 = vmatpush1.msra.mxu0 %v1928
        %1930 = vmatprep.subr.mxu0 0.0
        %v1931 = vand.u32 %v1910, 4294901760
        %1932 = vmatpush1.msra.mxu0 %v1931
        %1933 = vmatprep.subr.mxu0 0.0
        %v1934 = vand.u32 %v1909, 4294901760
        %1935 = vmatpush1.msra.mxu0 %v1934
        %1936 = vmatprep.subr.mxu0 0.0
        %v1937 = vand.u32 %v1908, 4294901760
        %1938 = vmatpush1.msra.mxu0 %v1937
        %1939 = vmatprep.subr.mxu0 0.0
        %v1940 = vand.u32 %v1907, 4294901760
        %1941 = vmatpush1.msra.mxu0 %v1940
        %1942 = vmatprep.subr.mxu0 0.0
        %v1943 = vand.u32 %v1906, 4294901760
        %1944 = vmatpush1.msra.mxu0 %v1943
        %1945 = vmatprep.subr.mxu0 0.0
        %v1946 = vand.u32 %v1905, 4294901760
        %1947 = vmatpush1.msra.mxu0 %v1946
        %1948 = vmatprep.subr.mxu0 0.0
        %v1949 = vand.u32 %v1904, 4294901760
        %1950 = vmatpush1.msra.mxu0 %v1949
        %1951 = vmatprep.subr.mxu0 0.0
        %v1952 = vand.u32 %v1903, 4294901760
        %1953 = vmatpush1.msra.mxu0 %v1952
        %1954 = vmatprep.subr.mxu0 0.0
        %v1955 = vand.u32 %v1902, 4294901760
        %1956 = vmatpush1.msra.mxu0 %v1955
        %1957 = vmatprep.subr.mxu0 0.0
        %v1958 = vand.u32 %v1901, 4294901760
        %1959 = vmatpush1.msra.mxu0 %v1958
        %1960 = vmatprep.subr.mxu0 0.0
        %v1961 = vand.u32 %v1900, 4294901760
        %1962 = vmatpush1.msra.mxu0 %v1961
        %1963 = vmatprep.subr.mxu0 0.0
        %v1964 = vand.u32 %v1899, 4294901760
        %1965 = vmatpush1.msra.mxu0 %v1964
        %1966 = vmatprep.subr.mxu0 0.0
        %v1967 = vand.u32 %v1898, 4294901760
        %1968 = vmatpush1.msra.mxu0 %v1967
        %1969 = vmatprep.subr.mxu0 0.0
        %1970 = vmatpush2.msra.mxu0 0.0
        %1971 = vmatprep.subr.mxu0 0.0
        %1972 = vmatpush2.msra.mxu0 0.0
        %1973 = vmatprep.subr.mxu0 0.0
        %1974 = vmatpush2.msra.mxu0 0.0
        %1975 = vmatprep.subr.mxu0 0.0
        %1976 = vmatpush2.msra.mxu0 0.0
        %1977 = vmatprep.subr.mxu0 0.0
        %1978 = vmatpush2.msra.mxu0 0.0
        %1979 = vmatprep.subr.mxu0 0.0
        %1980 = vmatpush2.msra.mxu0 0.0
        %1981 = vmatprep.subr.mxu0 0.0
        %1982 = vmatpush2.msra.mxu0 0.0
        %1983 = vmatprep.subr.mxu0 0.0
        %1984 = vmatpush2.msra.mxu0 0.0
        %1985 = vmatprep.subr.mxu0 0.0
        %1986 = vmatpush2.msra.mxu0 0.0
        %1987 = vmatprep.subr.mxu0 0.0
        %1988 = vmatpush2.msra.mxu0 0.0
        %1989 = vmatprep.subr.mxu0 0.0
        %1990 = vmatpush2.msra.mxu0 0.0
        %1991 = vmatprep.subr.mxu0 0.0
        %1992 = vmatpush2.msra.mxu0 0.0
        %1993 = vmatprep.subr.mxu0 0.0
        %1994 = vmatpush2.msra.mxu0 0.0
        %1995 = vmatprep.subr.mxu0 0.0
        %1996 = vmatpush2.msra.mxu0 0.0
        %1997 = vmatprep.subr.mxu0 0.0
        %1998 = vmatpush2.msra.mxu0 0.0
        %1999 = vmatprep.subr.mxu0 0.0
        %2000 = vmatpush2.msra.mxu0 0.0
        %2001 = vmatprep.mubr.f32.mxu0 0.0
        %v2002 = vand.u32 %v569, 4294901760
        %v2003 = vsub.f32 %v569, %v2002
        %v2004 = vand.u32 %v2003, 4294901760
        %v2005 = vsub.f32 %v2003, %v2004
        %v2006 = vand.u32 %v2005, 4294901760
        %2007 = vmatmul.mubr.f32.gmra.mxu0 %v2006
        %v2008 = vpop.f32.mrf.mxu0
        %v2009 = vadd.f32 %v1919, %v2008
        %v2010 = vpop.f32.mrf.mxu0
        %2011 = vdwg.mxu0
        %2012 = vmatprep.subr.mxu0 0.0
        %v2013 = vand.u32 %v1913, 4294901760
        %v2014 = vsub.f32 %v1913, %v2013
        %v2015 = vand.u32 %v2014, 4294901760
        %v2016 = vsub.f32 %v2014, %v2015
        %v2017 = vand.u32 %v2016, 4294901760
        %2018 = vmatpush1.msra.mxu0 %v2017
        %2019 = vmatprep.subr.mxu0 0.0
        %v2020 = vand.u32 %v1912, 4294901760
        %v2021 = vsub.f32 %v1912, %v2020
        %v2022 = vand.u32 %v2021, 4294901760
        %v2023 = vsub.f32 %v2021, %v2022
        %v2024 = vand.u32 %v2023, 4294901760
        %2025 = vmatpush1.msra.mxu0 %v2024
        %2026 = vmatprep.subr.mxu0 0.0
        %v2027 = vand.u32 %v1911, 4294901760
        %v2028 = vsub.f32 %v1911, %v2027
        %v2029 = vand.u32 %v2028, 4294901760
        %v2030 = vsub.f32 %v2028, %v2029
        %v2031 = vand.u32 %v2030, 4294901760
        %2032 = vmatpush1.msra.mxu0 %v2031
        %2033 = vmatprep.subr.mxu0 0.0
        %v2034 = vand.u32 %v1910, 4294901760
        %v2035 = vsub.f32 %v1910, %v2034
        %v2036 = vand.u32 %v2035, 4294901760
        %v2037 = vsub.f32 %v2035, %v2036
        %v2038 = vand.u32 %v2037, 4294901760
        %2039 = vmatpush1.msra.mxu0 %v2038
        %2040 = vmatprep.subr.mxu0 0.0
        %v2041 = vand.u32 %v1909, 4294901760
        %v2042 = vsub.f32 %v1909, %v2041
        %v2043 = vand.u32 %v2042, 4294901760
        %v2044 = vsub.f32 %v2042, %v2043
        %v2045 = vand.u32 %v2044, 4294901760
        %2046 = vmatpush1.msra.mxu0 %v2045
        %2047 = vmatprep.subr.mxu0 0.0
        %v2048 = vand.u32 %v1908, 4294901760
        %v2049 = vsub.f32 %v1908, %v2048
        %v2050 = vand.u32 %v2049, 4294901760
        %v2051 = vsub.f32 %v2049, %v2050
        %v2052 = vand.u32 %v2051, 4294901760
        %2053 = vmatpush1.msra.mxu0 %v2052
        %2054 = vmatprep.subr.mxu0 0.0
        %v2055 = vand.u32 %v1907, 4294901760
        %v2056 = vsub.f32 %v1907, %v2055
        %v2057 = vand.u32 %v2056, 4294901760
        %v2058 = vsub.f32 %v2056, %v2057
        %v2059 = vand.u32 %v2058, 4294901760
        %2060 = vmatpush1.msra.mxu0 %v2059
        %2061 = vmatprep.subr.mxu0 0.0
        %v2062 = vand.u32 %v1906, 4294901760
        %v2063 = vsub.f32 %v1906, %v2062
        %v2064 = vand.u32 %v2063, 4294901760
        %v2065 = vsub.f32 %v2063, %v2064
        %v2066 = vand.u32 %v2065, 4294901760
        %2067 = vmatpush1.msra.mxu0 %v2066
        %2068 = vmatprep.subr.mxu0 0.0
        %v2069 = vand.u32 %v1905, 4294901760
        %v2070 = vsub.f32 %v1905, %v2069
        %v2071 = vand.u32 %v2070, 4294901760
        %v2072 = vsub.f32 %v2070, %v2071
        %v2073 = vand.u32 %v2072, 4294901760
        %2074 = vmatpush1.msra.mxu0 %v2073
        %2075 = vmatprep.subr.mxu0 0.0
        %v2076 = vand.u32 %v1904, 4294901760
        %v2077 = vsub.f32 %v1904, %v2076
        %v2078 = vand.u32 %v2077, 4294901760
        %v2079 = vsub.f32 %v2077, %v2078
        %v2080 = vand.u32 %v2079, 4294901760
        %2081 = vmatpush1.msra.mxu0 %v2080
        %2082 = vmatprep.subr.mxu0 0.0
        %v2083 = vand.u32 %v1903, 4294901760
        %v2084 = vsub.f32 %v1903, %v2083
        %v2085 = vand.u32 %v2084, 4294901760
        %v2086 = vsub.f32 %v2084, %v2085
        %v2087 = vand.u32 %v2086, 4294901760
        %2088 = vmatpush1.msra.mxu0 %v2087
        %2089 = vmatprep.subr.mxu0 0.0
        %v2090 = vand.u32 %v1902, 4294901760
        %v2091 = vsub.f32 %v1902, %v2090
        %v2092 = vand.u32 %v2091, 4294901760
        %v2093 = vsub.f32 %v2091, %v2092
        %v2094 = vand.u32 %v2093, 4294901760
        %2095 = vmatpush1.msra.mxu0 %v2094
        %2096 = vmatprep.subr.mxu0 0.0
        %v2097 = vand.u32 %v1901, 4294901760
        %v2098 = vsub.f32 %v1901, %v2097
        %v2099 = vand.u32 %v2098, 4294901760
        %v2100 = vsub.f32 %v2098, %v2099
        %v2101 = vand.u32 %v2100, 4294901760
        %2102 = vmatpush1.msra.mxu0 %v2101
        %2103 = vmatprep.subr.mxu0 0.0
        %v2104 = vand.u32 %v1900, 4294901760
        %v2105 = vsub.f32 %v1900, %v2104
        %v2106 = vand.u32 %v2105, 4294901760
        %v2107 = vsub.f32 %v2105, %v2106
        %v2108 = vand.u32 %v2107, 4294901760
        %2109 = vmatpush1.msra.mxu0 %v2108
        %2110 = vmatprep.subr.mxu0 0.0
        %v2111 = vand.u32 %v1899, 4294901760
        %v2112 = vsub.f32 %v1899, %v2111
        %v2113 = vand.u32 %v2112, 4294901760
        %v2114 = vsub.f32 %v2112, %v2113
        %v2115 = vand.u32 %v2114, 4294901760
        %2116 = vmatpush1.msra.mxu0 %v2115
        %2117 = vmatprep.subr.mxu0 0.0
        %v2118 = vand.u32 %v1898, 4294901760
        %v2119 = vsub.f32 %v1898, %v2118
        %v2120 = vand.u32 %v2119, 4294901760
        %v2121 = vsub.f32 %v2119, %v2120
        %v2122 = vand.u32 %v2121, 4294901760
        %2123 = vmatpush1.msra.mxu0 %v2122
        %2124 = vmatprep.subr.mxu0 0.0
        %2125 = vmatpush2.msra.mxu0 0.0
        %2126 = vmatprep.subr.mxu0 0.0
        %2127 = vmatpush2.msra.mxu0 0.0
        %2128 = vmatprep.subr.mxu0 0.0
        %2129 = vmatpush2.msra.mxu0 0.0
        %2130 = vmatprep.subr.mxu0 0.0
        %2131 = vmatpush2.msra.mxu0 0.0
        %2132 = vmatprep.subr.mxu0 0.0
        %2133 = vmatpush2.msra.mxu0 0.0
        %2134 = vmatprep.subr.mxu0 0.0
        %2135 = vmatpush2.msra.mxu0 0.0
        %2136 = vmatprep.subr.mxu0 0.0
        %2137 = vmatpush2.msra.mxu0 0.0
        %2138 = vmatprep.subr.mxu0 0.0
        %2139 = vmatpush2.msra.mxu0 0.0
        %2140 = vmatprep.subr.mxu0 0.0
        %2141 = vmatpush2.msra.mxu0 0.0
        %2142 = vmatprep.subr.mxu0 0.0
        %2143 = vmatpush2.msra.mxu0 0.0
        %2144 = vmatprep.subr.mxu0 0.0
        %2145 = vmatpush2.msra.mxu0 0.0
        %2146 = vmatprep.subr.mxu0 0.0
        %2147 = vmatpush2.msra.mxu0 0.0
        %2148 = vmatprep.subr.mxu0 0.0
        %2149 = vmatpush2.msra.mxu0 0.0
        %2150 = vmatprep.subr.mxu0 0.0
        %2151 = vmatpush2.msra.mxu0 0.0
        %2152 = vmatprep.subr.mxu0 0.0
        %2153 = vmatpush2.msra.mxu0 0.0
        %2154 = vmatprep.subr.mxu0 0.0
        %2155 = vmatpush2.msra.mxu0 0.0
        %2156 = vmatprep.mubr.f32.mxu0 0.0
        %v2157 = vand.u32 %v569, 4294901760
        %2158 = vmatmul.mubr.f32.gmra.mxu0 %v2157
        %v2159 = vpop.f32.mrf.mxu0
        %v2160 = vadd.f32 %v2009, %v2159
        %v2161 = vpop.f32.mrf.mxu0
        %2162 = vdwg.mxu0
        %2163 = vmatprep.subr.mxu0 0.0
        %v2164 = vand.u32 %v1913, 4294901760
        %v2165 = vsub.f32 %v1913, %v2164
        %2166 = vmatpush1.msra.mxu0 %v2165
        %2167 = vmatprep.subr.mxu0 0.0
        %v2168 = vand.u32 %v1912, 4294901760
        %v2169 = vsub.f32 %v1912, %v2168
        %2170 = vmatpush1.msra.mxu0 %v2169
        %2171 = vmatprep.subr.mxu0 0.0
        %v2172 = vand.u32 %v1911, 4294901760
        %v2173 = vsub.f32 %v1911, %v2172
        %2174 = vmatpush1.msra.mxu0 %v2173
        %2175 = vmatprep.subr.mxu0 0.0
        %v2176 = vand.u32 %v1910, 4294901760
        %v2177 = vsub.f32 %v1910, %v2176
        %2178 = vmatpush1.msra.mxu0 %v2177
        %2179 = vmatprep.subr.mxu0 0.0
        %v2180 = vand.u32 %v1909, 4294901760
        %v2181 = vsub.f32 %v1909, %v2180
        %2182 = vmatpush1.msra.mxu0 %v2181
        %2183 = vmatprep.subr.mxu0 0.0
        %v2184 = vand.u32 %v1908, 4294901760
        %v2185 = vsub.f32 %v1908, %v2184
        %2186 = vmatpush1.msra.mxu0 %v2185
        %2187 = vmatprep.subr.mxu0 0.0
        %v2188 = vand.u32 %v1907, 4294901760
        %v2189 = vsub.f32 %v1907, %v2188
        %2190 = vmatpush1.msra.mxu0 %v2189
        %2191 = vmatprep.subr.mxu0 0.0
        %v2192 = vand.u32 %v1906, 4294901760
        %v2193 = vsub.f32 %v1906, %v2192
        %2194 = vmatpush1.msra.mxu0 %v2193
        %2195 = vmatprep.subr.mxu0 0.0
        %v2196 = vand.u32 %v1905, 4294901760
        %v2197 = vsub.f32 %v1905, %v2196
        %2198 = vmatpush1.msra.mxu0 %v2197
        %2199 = vmatprep.subr.mxu0 0.0
        %v2200 = vand.u32 %v1904, 4294901760
        %v2201 = vsub.f32 %v1904, %v2200
        %2202 = vmatpush1.msra.mxu0 %v2201
        %2203 = vmatprep.subr.mxu0 0.0
        %v2204 = vand.u32 %v1903, 4294901760
        %v2205 = vsub.f32 %v1903, %v2204
        %2206 = vmatpush1.msra.mxu0 %v2205
        %2207 = vmatprep.subr.mxu0 0.0
        %v2208 = vand.u32 %v1902, 4294901760
        %v2209 = vsub.f32 %v1902, %v2208
        %2210 = vmatpush1.msra.mxu0 %v2209
        %2211 = vmatprep.subr.mxu0 0.0
        %v2212 = vand.u32 %v1901, 4294901760
        %v2213 = vsub.f32 %v1901, %v2212
        %2214 = vmatpush1.msra.mxu0 %v2213
        %2215 = vmatprep.subr.mxu0 0.0
        %v2216 = vand.u32 %v1900, 4294901760
        %v2217 = vsub.f32 %v1900, %v2216
        %2218 = vmatpush1.msra.mxu0 %v2217
        %2219 = vmatprep.subr.mxu0 0.0
        %v2220 = vand.u32 %v1899, 4294901760
        %v2221 = vsub.f32 %v1899, %v2220
        %2222 = vmatpush1.msra.mxu0 %v2221
        %2223 = vmatprep.subr.mxu0 0.0
        %v2224 = vand.u32 %v1898, 4294901760
        %v2225 = vsub.f32 %v1898, %v2224
        %2226 = vmatpush1.msra.mxu0 %v2225
        %2227 = vmatprep.subr.mxu0 0.0
        %2228 = vmatpush2.msra.mxu0 0.0
        %2229 = vmatprep.subr.mxu0 0.0
        %2230 = vmatpush2.msra.mxu0 0.0
        %2231 = vmatprep.subr.mxu0 0.0
        %2232 = vmatpush2.msra.mxu0 0.0
        %2233 = vmatprep.subr.mxu0 0.0
        %2234 = vmatpush2.msra.mxu0 0.0
        %2235 = vmatprep.subr.mxu0 0.0
        %2236 = vmatpush2.msra.mxu0 0.0
        %2237 = vmatprep.subr.mxu0 0.0
        %2238 = vmatpush2.msra.mxu0 0.0
        %2239 = vmatprep.subr.mxu0 0.0
        %2240 = vmatpush2.msra.mxu0 0.0
        %2241 = vmatprep.subr.mxu0 0.0
        %2242 = vmatpush2.msra.mxu0 0.0
        %2243 = vmatprep.subr.mxu0 0.0
        %2244 = vmatpush2.msra.mxu0 0.0
        %2245 = vmatprep.subr.mxu0 0.0
        %2246 = vmatpush2.msra.mxu0 0.0
        %2247 = vmatprep.subr.mxu0 0.0
        %2248 = vmatpush2.msra.mxu0 0.0
        %2249 = vmatprep.subr.mxu0 0.0
        %2250 = vmatpush2.msra.mxu0 0.0
        %2251 = vmatprep.subr.mxu0 0.0
        %2252 = vmatpush2.msra.mxu0 0.0
        %2253 = vmatprep.subr.mxu0 0.0
        %2254 = vmatpush2.msra.mxu0 0.0
        %2255 = vmatprep.subr.mxu0 0.0
        %2256 = vmatpush2.msra.mxu0 0.0
        %2257 = vmatprep.subr.mxu0 0.0
        %2258 = vmatpush2.msra.mxu0 0.0
        %2259 = vmatprep.mubr.f32.mxu0 0.0
        %v2260 = vand.u32 %v569, 4294901760
        %v2261 = vsub.f32 %v569, %v2260
        %2262 = vmatmul.mubr.f32.gmra.mxu0 %v2261
        %v2263 = vpop.f32.mrf.mxu0
        %v2264 = vadd.f32 %v2160, %v2263
        %v2265 = vpop.f32.mrf.mxu0
        %2266 = vdwg.mxu0
        %2267 = vmatprep.subr.mxu0 0.0
        %v2268 = vand.u32 %v1913, 4294901760
        %2269 = vmatpush1.msra.mxu0 %v2268
        %2270 = vmatprep.subr.mxu0 0.0
        %v2271 = vand.u32 %v1912, 4294901760
        %2272 = vmatpush1.msra.mxu0 %v2271
        %2273 = vmatprep.subr.mxu0 0.0
        %v2274 = vand.u32 %v1911, 4294901760
        %2275 = vmatpush1.msra.mxu0 %v2274
        %2276 = vmatprep.subr.mxu0 0.0
        %v2277 = vand.u32 %v1910, 4294901760
        %2278 = vmatpush1.msra.mxu0 %v2277
        %2279 = vmatprep.subr.mxu0 0.0
        %v2280 = vand.u32 %v1909, 4294901760
        %2281 = vmatpush1.msra.mxu0 %v2280
        %2282 = vmatprep.subr.mxu0 0.0
        %v2283 = vand.u32 %v1908, 4294901760
        %2284 = vmatpush1.msra.mxu0 %v2283
        %2285 = vmatprep.subr.mxu0 0.0
        %v2286 = vand.u32 %v1907, 4294901760
        %2287 = vmatpush1.msra.mxu0 %v2286
        %2288 = vmatprep.subr.mxu0 0.0
        %v2289 = vand.u32 %v1906, 4294901760
        %2290 = vmatpush1.msra.mxu0 %v2289
        %2291 = vmatprep.subr.mxu0 0.0
        %v2292 = vand.u32 %v1905, 4294901760
        %2293 = vmatpush1.msra.mxu0 %v2292
        %2294 = vmatprep.subr.mxu0 0.0
        %v2295 = vand.u32 %v1904, 4294901760
        %2296 = vmatpush1.msra.mxu0 %v2295
        %2297 = vmatprep.subr.mxu0 0.0
        %v2298 = vand.u32 %v1903, 4294901760
        %2299 = vmatpush1.msra.mxu0 %v2298
        %2300 = vmatprep.subr.mxu0 0.0
        %v2301 = vand.u32 %v1902, 4294901760
        %2302 = vmatpush1.msra.mxu0 %v2301
        %2303 = vmatprep.subr.mxu0 0.0
        %v2304 = vand.u32 %v1901, 4294901760
        %2305 = vmatpush1.msra.mxu0 %v2304
        %2306 = vmatprep.subr.mxu0 0.0
        %v2307 = vand.u32 %v1900, 4294901760
        %2308 = vmatpush1.msra.mxu0 %v2307
        %2309 = vmatprep.subr.mxu0 0.0
        %v2310 = vand.u32 %v1899, 4294901760
        %2311 = vmatpush1.msra.mxu0 %v2310
        %2312 = vmatprep.subr.mxu0 0.0
        %v2313 = vand.u32 %v1898, 4294901760
        %2314 = vmatpush1.msra.mxu0 %v2313
        %2315 = vmatprep.subr.mxu0 0.0
        %2316 = vmatpush2.msra.mxu0 0.0
        %2317 = vmatprep.subr.mxu0 0.0
        %2318 = vmatpush2.msra.mxu0 0.0
        %2319 = vmatprep.subr.mxu0 0.0
        %2320 = vmatpush2.msra.mxu0 0.0
        %2321 = vmatprep.subr.mxu0 0.0
        %2322 = vmatpush2.msra.mxu0 0.0
        %2323 = vmatprep.subr.mxu0 0.0
        %2324 = vmatpush2.msra.mxu0 0.0
        %2325 = vmatprep.subr.mxu0 0.0
        %2326 = vmatpush2.msra.mxu0 0.0
        %2327 = vmatprep.subr.mxu0 0.0
        %2328 = vmatpush2.msra.mxu0 0.0
        %2329 = vmatprep.subr.mxu0 0.0
        %2330 = vmatpush2.msra.mxu0 0.0
        %2331 = vmatprep.subr.mxu0 0.0
        %2332 = vmatpush2.msra.mxu0 0.0
        %2333 = vmatprep.subr.mxu0 0.0
        %2334 = vmatpush2.msra.mxu0 0.0
        %2335 = vmatprep.subr.mxu0 0.0
        %2336 = vmatpush2.msra.mxu0 0.0
        %2337 = vmatprep.subr.mxu0 0.0
        %2338 = vmatpush2.msra.mxu0 0.0
        %2339 = vmatprep.subr.mxu0 0.0
        %2340 = vmatpush2.msra.mxu0 0.0
        %2341 = vmatprep.subr.mxu0 0.0
        %2342 = vmatpush2.msra.mxu0 0.0
        %2343 = vmatprep.subr.mxu0 0.0
        %2344 = vmatpush2.msra.mxu0 0.0
        %2345 = vmatprep.subr.mxu0 0.0
        %2346 = vmatpush2.msra.mxu0 0.0
        %2347 = vmatprep.mubr.f32.mxu0 0.0
        %v2348 = vand.u32 %v569, 4294901760
        %v2349 = vsub.f32 %v569, %v2348
        %v2350 = vand.u32 %v2349, 4294901760
        %2351 = vmatmul.mubr.f32.gmra.mxu0 %v2350
        %v2352 = vpop.f32.mrf.mxu0
        %v2353 = vadd.f32 %v2264, %v2352
        %v2354 = vpop.f32.mrf.mxu0
        %2355 = vdwg.mxu0
        %2356 = vmatprep.subr.mxu0 0.0
        %v2357 = vand.u32 %v1913, 4294901760
        %v2358 = vsub.f32 %v1913, %v2357
        %v2359 = vand.u32 %v2358, 4294901760
        %2360 = vmatpush1.msra.mxu0 %v2359
        %2361 = vmatprep.subr.mxu0 0.0
        %v2362 = vand.u32 %v1912, 4294901760
        %v2363 = vsub.f32 %v1912, %v2362
        %v2364 = vand.u32 %v2363, 4294901760
        %2365 = vmatpush1.msra.mxu0 %v2364
        %2366 = vmatprep.subr.mxu0 0.0
        %v2367 = vand.u32 %v1911, 4294901760
        %v2368 = vsub.f32 %v1911, %v2367
        %v2369 = vand.u32 %v2368, 4294901760
        %2370 = vmatpush1.msra.mxu0 %v2369
        %2371 = vmatprep.subr.mxu0 0.0
        %v2372 = vand.u32 %v1910, 4294901760
        %v2373 = vsub.f32 %v1910, %v2372
        %v2374 = vand.u32 %v2373, 4294901760
        %2375 = vmatpush1.msra.mxu0 %v2374
        %2376 = vmatprep.subr.mxu0 0.0
        %v2377 = vand.u32 %v1909, 4294901760
        %v2378 = vsub.f32 %v1909, %v2377
        %v2379 = vand.u32 %v2378, 4294901760
        %2380 = vmatpush1.msra.mxu0 %v2379
        %2381 = vmatprep.subr.mxu0 0.0
        %v2382 = vand.u32 %v1908, 4294901760
        %v2383 = vsub.f32 %v1908, %v2382
        %v2384 = vand.u32 %v2383, 4294901760
        %2385 = vmatpush1.msra.mxu0 %v2384
        %2386 = vmatprep.subr.mxu0 0.0
        %v2387 = vand.u32 %v1907, 4294901760
        %v2388 = vsub.f32 %v1907, %v2387
        %v2389 = vand.u32 %v2388, 4294901760
        %2390 = vmatpush1.msra.mxu0 %v2389
        %2391 = vmatprep.subr.mxu0 0.0
        %v2392 = vand.u32 %v1906, 4294901760
        %v2393 = vsub.f32 %v1906, %v2392
        %v2394 = vand.u32 %v2393, 4294901760
        %2395 = vmatpush1.msra.mxu0 %v2394
        %2396 = vmatprep.subr.mxu0 0.0
        %v2397 = vand.u32 %v1905, 4294901760
        %v2398 = vsub.f32 %v1905, %v2397
        %v2399 = vand.u32 %v2398, 4294901760
        %2400 = vmatpush1.msra.mxu0 %v2399
        %2401 = vmatprep.subr.mxu0 0.0
        %v2402 = vand.u32 %v1904, 4294901760
        %v2403 = vsub.f32 %v1904, %v2402
        %v2404 = vand.u32 %v2403, 4294901760
        %2405 = vmatpush1.msra.mxu0 %v2404
        %2406 = vmatprep.subr.mxu0 0.0
        %v2407 = vand.u32 %v1903, 4294901760
        %v2408 = vsub.f32 %v1903, %v2407
        %v2409 = vand.u32 %v2408, 4294901760
        %2410 = vmatpush1.msra.mxu0 %v2409
        %2411 = vmatprep.subr.mxu0 0.0
        %v2412 = vand.u32 %v1902, 4294901760
        %v2413 = vsub.f32 %v1902, %v2412
        %v2414 = vand.u32 %v2413, 4294901760
        %2415 = vmatpush1.msra.mxu0 %v2414
        %2416 = vmatprep.subr.mxu0 0.0
        %v2417 = vand.u32 %v1901, 4294901760
        %v2418 = vsub.f32 %v1901, %v2417
        %v2419 = vand.u32 %v2418, 4294901760
        %2420 = vmatpush1.msra.mxu0 %v2419
        %2421 = vmatprep.subr.mxu0 0.0
        %v2422 = vand.u32 %v1900, 4294901760
        %v2423 = vsub.f32 %v1900, %v2422
        %v2424 = vand.u32 %v2423, 4294901760
        %2425 = vmatpush1.msra.mxu0 %v2424
        %2426 = vmatprep.subr.mxu0 0.0
        %v2427 = vand.u32 %v1899, 4294901760
        %v2428 = vsub.f32 %v1899, %v2427
        %v2429 = vand.u32 %v2428, 4294901760
        %2430 = vmatpush1.msra.mxu0 %v2429
        %2431 = vmatprep.subr.mxu0 0.0
        %v2432 = vand.u32 %v1898, 4294901760
        %v2433 = vsub.f32 %v1898, %v2432
        %v2434 = vand.u32 %v2433, 4294901760
        %2435 = vmatpush1.msra.mxu0 %v2434
        %2436 = vmatprep.subr.mxu0 0.0
        %2437 = vmatpush2.msra.mxu0 0.0
        %2438 = vmatprep.subr.mxu0 0.0
        %2439 = vmatpush2.msra.mxu0 0.0
        %2440 = vmatprep.subr.mxu0 0.0
        %2441 = vmatpush2.msra.mxu0 0.0
        %2442 = vmatprep.subr.mxu0 0.0
        %2443 = vmatpush2.msra.mxu0 0.0
        %2444 = vmatprep.subr.mxu0 0.0
        %2445 = vmatpush2.msra.mxu0 0.0
        %2446 = vmatprep.subr.mxu0 0.0
        %2447 = vmatpush2.msra.mxu0 0.0
        %2448 = vmatprep.subr.mxu0 0.0
        %2449 = vmatpush2.msra.mxu0 0.0
        %2450 = vmatprep.subr.mxu0 0.0
        %2451 = vmatpush2.msra.mxu0 0.0
        %2452 = vmatprep.subr.mxu0 0.0
        %2453 = vmatpush2.msra.mxu0 0.0
        %2454 = vmatprep.subr.mxu0 0.0
        %2455 = vmatpush2.msra.mxu0 0.0
        %2456 = vmatprep.subr.mxu0 0.0
        %2457 = vmatpush2.msra.mxu0 0.0
        %2458 = vmatprep.subr.mxu0 0.0
        %2459 = vmatpush2.msra.mxu0 0.0
        %2460 = vmatprep.subr.mxu0 0.0
        %2461 = vmatpush2.msra.mxu0 0.0
        %2462 = vmatprep.subr.mxu0 0.0
        %2463 = vmatpush2.msra.mxu0 0.0
        %2464 = vmatprep.subr.mxu0 0.0
        %2465 = vmatpush2.msra.mxu0 0.0
        %2466 = vmatprep.subr.mxu0 0.0
        %2467 = vmatpush2.msra.mxu0 0.0
        %2468 = vmatprep.mubr.f32.mxu0 0.0
        %v2469 = vand.u32 %v569, 4294901760
        %2470 = vmatmul.mubr.f32.gmra.mxu0 %v2469
        %v2471 = vpop.f32.mrf.mxu0
        %v2472 = vadd.f32 %v2353, %v2471
        %v2473 = vpop.f32.mrf.mxu0
        %2474 = vdwg.mxu0
        %2475 = vmatprep.subr.mxu0 0.0
        %v2476 = vand.u32 %v1913, 4294901760
        %2477 = vmatpush1.msra.mxu0 %v2476
        %2478 = vmatprep.subr.mxu0 0.0
        %v2479 = vand.u32 %v1912, 4294901760
        %2480 = vmatpush1.msra.mxu0 %v2479
        %2481 = vmatprep.subr.mxu0 0.0
        %v2482 = vand.u32 %v1911, 4294901760
        %2483 = vmatpush1.msra.mxu0 %v2482
        %2484 = vmatprep.subr.mxu0 0.0
        %v2485 = vand.u32 %v1910, 4294901760
        %2486 = vmatpush1.msra.mxu0 %v2485
        %2487 = vmatprep.subr.mxu0 0.0
        %v2488 = vand.u32 %v1909, 4294901760
        %2489 = vmatpush1.msra.mxu0 %v2488
        %2490 = vmatprep.subr.mxu0 0.0
        %v2491 = vand.u32 %v1908, 4294901760
        %2492 = vmatpush1.msra.mxu0 %v2491
        %2493 = vmatprep.subr.mxu0 0.0
        %v2494 = vand.u32 %v1907, 4294901760
        %2495 = vmatpush1.msra.mxu0 %v2494
        %2496 = vmatprep.subr.mxu0 0.0
        %v2497 = vand.u32 %v1906, 4294901760
        %2498 = vmatpush1.msra.mxu0 %v2497
        %2499 = vmatprep.subr.mxu0 0.0
        %v2500 = vand.u32 %v1905, 4294901760
        %2501 = vmatpush1.msra.mxu0 %v2500
        %2502 = vmatprep.subr.mxu0 0.0
        %v2503 = vand.u32 %v1904, 4294901760
        %2504 = vmatpush1.msra.mxu0 %v2503
        %2505 = vmatprep.subr.mxu0 0.0
        %v2506 = vand.u32 %v1903, 4294901760
        %2507 = vmatpush1.msra.mxu0 %v2506
        %2508 = vmatprep.subr.mxu0 0.0
        %v2509 = vand.u32 %v1902, 4294901760
        %2510 = vmatpush1.msra.mxu0 %v2509
        %2511 = vmatprep.subr.mxu0 0.0
        %v2512 = vand.u32 %v1901, 4294901760
        %2513 = vmatpush1.msra.mxu0 %v2512
        %2514 = vmatprep.subr.mxu0 0.0
        %v2515 = vand.u32 %v1900, 4294901760
        %2516 = vmatpush1.msra.mxu0 %v2515
        %2517 = vmatprep.subr.mxu0 0.0
        %v2518 = vand.u32 %v1899, 4294901760
        %2519 = vmatpush1.msra.mxu0 %v2518
        %2520 = vmatprep.subr.mxu0 0.0
        %v2521 = vand.u32 %v1898, 4294901760
        %2522 = vmatpush1.msra.mxu0 %v2521
        %2523 = vmatprep.subr.mxu0 0.0
        %2524 = vmatpush2.msra.mxu0 0.0
        %2525 = vmatprep.subr.mxu0 0.0
        %2526 = vmatpush2.msra.mxu0 0.0
        %2527 = vmatprep.subr.mxu0 0.0
        %2528 = vmatpush2.msra.mxu0 0.0
        %2529 = vmatprep.subr.mxu0 0.0
        %2530 = vmatpush2.msra.mxu0 0.0
        %2531 = vmatprep.subr.mxu0 0.0
        %2532 = vmatpush2.msra.mxu0 0.0
        %2533 = vmatprep.subr.mxu0 0.0
        %2534 = vmatpush2.msra.mxu0 0.0
        %2535 = vmatprep.subr.mxu0 0.0
        %2536 = vmatpush2.msra.mxu0 0.0
        %2537 = vmatprep.subr.mxu0 0.0
        %2538 = vmatpush2.msra.mxu0 0.0
        %2539 = vmatprep.subr.mxu0 0.0
        %2540 = vmatpush2.msra.mxu0 0.0
        %2541 = vmatprep.subr.mxu0 0.0
        %2542 = vmatpush2.msra.mxu0 0.0
        %2543 = vmatprep.subr.mxu0 0.0
        %2544 = vmatpush2.msra.mxu0 0.0
        %2545 = vmatprep.subr.mxu0 0.0
        %2546 = vmatpush2.msra.mxu0 0.0
        %2547 = vmatprep.subr.mxu0 0.0
        %2548 = vmatpush2.msra.mxu0 0.0
        %2549 = vmatprep.subr.mxu0 0.0
        %2550 = vmatpush2.msra.mxu0 0.0
        %2551 = vmatprep.subr.mxu0 0.0
        %2552 = vmatpush2.msra.mxu0 0.0
        %2553 = vmatprep.subr.mxu0 0.0
        %2554 = vmatpush2.msra.mxu0 0.0
        %2555 = vmatprep.mubr.f32.mxu0 0.0
        %v2556 = vand.u32 %v569, 4294901760
        %2557 = vmatmul.mubr.f32.gmra.mxu0 %v2556
        %v2558 = vpop.f32.mrf.mxu0
        %v2559 = vadd.f32 %v2472, %v2558
        %v2560 = vpop.f32.mrf.mxu0
        %2561 = vdwg.mxu0
        %v2562 = vld [vmem:[%s543] sm:$0x1]
        %vm2563 = vcmask 261120
        %v2565 = vsel %vm2563, %v1231, 0
        %v2568 = vsel %vm2563, %v1895, 0
        %2570 = vmatprep.subr.mxu0 0.0
        %2571 = vmatpush1.xpose.msra.mxu0 0.0
        %2572 = vmatprep.subr.mxu0 0.0
        %2573 = vmatpush1.xpose.msra.mxu0 0.0
        %2574 = vmatprep.subr.mxu0 0.0
        %2575 = vmatpush1.xpose.msra.mxu0 0.0
        %2576 = vmatprep.subr.mxu0 0.0
        %2577 = vmatpush1.xpose.msra.mxu0 0.0
        %2578 = vmatprep.subr.mxu0 0.0
        %2579 = vmatpush1.xpose.msra.mxu0 0.0
        %2580 = vmatprep.subr.mxu0 0.0
        %2581 = vmatpush1.xpose.msra.mxu0 0.0
        %2582 = vmatprep.subr.mxu0 0.0
        %2583 = vmatpush1.xpose.msra.mxu0 0.0
        %2584 = vmatprep.subr.mxu0 0.0
        %2585 = vmatpush1.xpose.msra.mxu0 0.0
        %2586 = vmatprep.subr.mxu0 0.0
        %2587 = vmatpush1.xpose.msra.mxu0 0.0
        %2588 = vmatprep.subr.mxu0 0.0
        %2589 = vmatpush1.xpose.msra.mxu0 0.0
        %2590 = vmatprep.subr.mxu0 0.0
        %2591 = vmatpush1.xpose.msra.mxu0 0.0
        %2592 = vmatprep.subr.mxu0 0.0
        %2593 = vmatpush1.xpose.msra.mxu0 0.0
        %2594 = vmatprep.subr.mxu0 0.0
        %2595 = vmatpush1.xpose.msra.mxu0 0.0
        %2596 = vmatprep.subr.mxu0 0.0
        %2597 = vmatpush1.xpose.msra.mxu0 0.0
        %2598 = vmatprep.subr.mxu0 0.0
        %2599 = vmatpush1.xpose.msra.mxu0 0.0
        %2600 = vmatprep.subr.mxu0 0.0
        %v2601 = vand.u32 %v2568, 4294901760
        %2602 = vmatpush1.xpose.msra.mxu0 %v2601
        %2603 = vmatprep.subr.mxu0 0.0
        %2604 = vmatpush2.xpose.msra.mxu0 0.0
        %2605 = vmatprep.subr.mxu0 0.0
        %2606 = vmatpush2.xpose.msra.mxu0 0.0
        %2607 = vmatprep.subr.mxu0 0.0
        %2608 = vmatpush2.xpose.msra.mxu0 0.0
        %2609 = vmatprep.subr.mxu0 0.0
        %2610 = vmatpush2.xpose.msra.mxu0 0.0
        %2611 = vmatprep.subr.mxu0 0.0
        %2612 = vmatpush2.xpose.msra.mxu0 0.0
        %2613 = vmatprep.subr.mxu0 0.0
        %2614 = vmatpush2.xpose.msra.mxu0 0.0
        %2615 = vmatprep.subr.mxu0 0.0
        %2616 = vmatpush2.xpose.msra.mxu0 0.0
        %2617 = vmatprep.subr.mxu0 0.0
        %2618 = vmatpush2.xpose.msra.mxu0 0.0
        %2619 = vmatprep.subr.mxu0 0.0
        %2620 = vmatpush2.xpose.msra.mxu0 0.0
        %2621 = vmatprep.subr.mxu0 0.0
        %2622 = vmatpush2.xpose.msra.mxu0 0.0
        %2623 = vmatprep.subr.mxu0 0.0
        %2624 = vmatpush2.xpose.msra.mxu0 0.0
        %2625 = vmatprep.subr.mxu0 0.0
        %2626 = vmatpush2.xpose.msra.mxu0 0.0
        %2627 = vmatprep.subr.mxu0 0.0
        %2628 = vmatpush2.xpose.msra.mxu0 0.0
        %2629 = vmatprep.subr.mxu0 0.0
        %2630 = vmatpush2.xpose.msra.mxu0 0.0
        %2631 = vmatprep.subr.mxu0 0.0
        %2632 = vmatpush2.xpose.msra.mxu0 0.0
        %2633 = vmatprep.subr.mxu0 0.0
        %2634 = vmatpush2.xpose.msra.mxu0 0.0
        %2635 = vmatprep.mubr.f32.mxu0 0.0
        %v2636 = vand.u32 %v2565, 4294901760
        %v2637 = vsub.f32 %v2565, %v2636
        %v2638 = vand.u32 %v2637, 4294901760
        %v2639 = vsub.f32 %v2637, %v2638
        %v2640 = vand.u32 %v2639, 4294901760
        %2641 = vmatmul.mubr.f32.gmra.mxu0 %v2640
        %v2642 = vpop.f32.mrf.mxu0
        %v2643 = vadd.f32 0.0, %v2642
        %v2644 = vpop.f32.mrf.mxu0
        %2645 = vdwg.mxu0
        %2646 = vmatprep.subr.mxu0 0.0
        %2647 = vmatpush1.xpose.msra.mxu0 0.0
        %2648 = vmatprep.subr.mxu0 0.0
        %2649 = vmatpush1.xpose.msra.mxu0 0.0
        %2650 = vmatprep.subr.mxu0 0.0
        %2651 = vmatpush1.xpose.msra.mxu0 0.0
        %2652 = vmatprep.subr.mxu0 0.0
        %2653 = vmatpush1.xpose.msra.mxu0 0.0
        %2654 = vmatprep.subr.mxu0 0.0
        %2655 = vmatpush1.xpose.msra.mxu0 0.0
        %2656 = vmatprep.subr.mxu0 0.0
        %2657 = vmatpush1.xpose.msra.mxu0 0.0
        %2658 = vmatprep.subr.mxu0 0.0
        %2659 = vmatpush1.xpose.msra.mxu0 0.0
        %2660 = vmatprep.subr.mxu0 0.0
        %2661 = vmatpush1.xpose.msra.mxu0 0.0
        %2662 = vmatprep.subr.mxu0 0.0
        %2663 = vmatpush1.xpose.msra.mxu0 0.0
        %2664 = vmatprep.subr.mxu0 0.0
        %2665 = vmatpush1.xpose.msra.mxu0 0.0
        %2666 = vmatprep.subr.mxu0 0.0
        %2667 = vmatpush1.xpose.msra.mxu0 0.0
        %2668 = vmatprep.subr.mxu0 0.0
        %2669 = vmatpush1.xpose.msra.mxu0 0.0
        %2670 = vmatprep.subr.mxu0 0.0
        %2671 = vmatpush1.xpose.msra.mxu0 0.0
        %2672 = vmatprep.subr.mxu0 0.0
        %2673 = vmatpush1.xpose.msra.mxu0 0.0
        %2674 = vmatprep.subr.mxu0 0.0
        %2675 = vmatpush1.xpose.msra.mxu0 0.0
        %2676 = vmatprep.subr.mxu0 0.0
        %v2677 = vand.u32 %v2568, 4294901760
        %v2678 = vsub.f32 %v2568, %v2677
        %v2679 = vand.u32 %v2678, 4294901760
        %v2680 = vsub.f32 %v2678, %v2679
        %v2681 = vand.u32 %v2680, 4294901760
        %2682 = vmatpush1.xpose.msra.mxu0 %v2681
        %2683 = vmatprep.subr.mxu0 0.0
        %2684 = vmatpush2.xpose.msra.mxu0 0.0
        %2685 = vmatprep.subr.mxu0 0.0
        %2686 = vmatpush2.xpose.msra.mxu0 0.0
        %2687 = vmatprep.subr.mxu0 0.0
        %2688 = vmatpush2.xpose.msra.mxu0 0.0
        %2689 = vmatprep.subr.mxu0 0.0
        %2690 = vmatpush2.xpose.msra.mxu0 0.0
        %2691 = vmatprep.subr.mxu0 0.0
        %2692 = vmatpush2.xpose.msra.mxu0 0.0
        %2693 = vmatprep.subr.mxu0 0.0
        %2694 = vmatpush2.xpose.msra.mxu0 0.0
        %2695 = vmatprep.subr.mxu0 0.0
        %2696 = vmatpush2.xpose.msra.mxu0 0.0
        %2697 = vmatprep.subr.mxu0 0.0
        %2698 = vmatpush2.xpose.msra.mxu0 0.0
        %2699 = vmatprep.subr.mxu0 0.0
        %2700 = vmatpush2.xpose.msra.mxu0 0.0
        %2701 = vmatprep.subr.mxu0 0.0
        %2702 = vmatpush2.xpose.msra.mxu0 0.0
        %2703 = vmatprep.subr.mxu0 0.0
        %2704 = vmatpush2.xpose.msra.mxu0 0.0
        %2705 = vmatprep.subr.mxu0 0.0
        %2706 = vmatpush2.xpose.msra.mxu0 0.0
        %2707 = vmatprep.subr.mxu0 0.0
        %2708 = vmatpush2.xpose.msra.mxu0 0.0
        %2709 = vmatprep.subr.mxu0 0.0
        %2710 = vmatpush2.xpose.msra.mxu0 0.0
        %2711 = vmatprep.subr.mxu0 0.0
        %2712 = vmatpush2.xpose.msra.mxu0 0.0
        %2713 = vmatprep.subr.mxu0 0.0
        %2714 = vmatpush2.xpose.msra.mxu0 0.0
        %2715 = vmatprep.mubr.f32.mxu0 0.0
        %v2716 = vand.u32 %v2565, 4294901760
        %2717 = vmatmul.mubr.f32.gmra.mxu0 %v2716
        %v2718 = vpop.f32.mrf.mxu0
        %v2719 = vadd.f32 %v2643, %v2718
        %v2720 = vpop.f32.mrf.mxu0
        %2721 = vdwg.mxu0
        %2722 = vmatprep.subr.mxu0 0.0
        %2723 = vmatpush1.xpose.msra.mxu0 0.0
        %2724 = vmatprep.subr.mxu0 0.0
        %2725 = vmatpush1.xpose.msra.mxu0 0.0
        %2726 = vmatprep.subr.mxu0 0.0
        %2727 = vmatpush1.xpose.msra.mxu0 0.0
        %2728 = vmatprep.subr.mxu0 0.0
        %2729 = vmatpush1.xpose.msra.mxu0 0.0
        %2730 = vmatprep.subr.mxu0 0.0
        %2731 = vmatpush1.xpose.msra.mxu0 0.0
        %2732 = vmatprep.subr.mxu0 0.0
        %2733 = vmatpush1.xpose.msra.mxu0 0.0
        %2734 = vmatprep.subr.mxu0 0.0
        %2735 = vmatpush1.xpose.msra.mxu0 0.0
        %2736 = vmatprep.subr.mxu0 0.0
        %2737 = vmatpush1.xpose.msra.mxu0 0.0
        %2738 = vmatprep.subr.mxu0 0.0
        %2739 = vmatpush1.xpose.msra.mxu0 0.0
        %2740 = vmatprep.subr.mxu0 0.0
        %2741 = vmatpush1.xpose.msra.mxu0 0.0
        %2742 = vmatprep.subr.mxu0 0.0
        %2743 = vmatpush1.xpose.msra.mxu0 0.0
        %2744 = vmatprep.subr.mxu0 0.0
        %2745 = vmatpush1.xpose.msra.mxu0 0.0
        %2746 = vmatprep.subr.mxu0 0.0
        %2747 = vmatpush1.xpose.msra.mxu0 0.0
        %2748 = vmatprep.subr.mxu0 0.0
        %2749 = vmatpush1.xpose.msra.mxu0 0.0
        %2750 = vmatprep.subr.mxu0 0.0
        %2751 = vmatpush1.xpose.msra.mxu0 0.0
        %2752 = vmatprep.subr.mxu0 0.0
        %v2753 = vand.u32 %v2568, 4294901760
        %v2754 = vsub.f32 %v2568, %v2753
        %2755 = vmatpush1.xpose.msra.mxu0 %v2754
        %2756 = vmatprep.subr.mxu0 0.0
        %2757 = vmatpush2.xpose.msra.mxu0 0.0
        %2758 = vmatprep.subr.mxu0 0.0
        %2759 = vmatpush2.xpose.msra.mxu0 0.0
        %2760 = vmatprep.subr.mxu0 0.0
        %2761 = vmatpush2.xpose.msra.mxu0 0.0
        %2762 = vmatprep.subr.mxu0 0.0
        %2763 = vmatpush2.xpose.msra.mxu0 0.0
        %2764 = vmatprep.subr.mxu0 0.0
        %2765 = vmatpush2.xpose.msra.mxu0 0.0
        %2766 = vmatprep.subr.mxu0 0.0
        %2767 = vmatpush2.xpose.msra.mxu0 0.0
        %2768 = vmatprep.subr.mxu0 0.0
        %2769 = vmatpush2.xpose.msra.mxu0 0.0
        %2770 = vmatprep.subr.mxu0 0.0
        %2771 = vmatpush2.xpose.msra.mxu0 0.0
        %2772 = vmatprep.subr.mxu0 0.0
        %2773 = vmatpush2.xpose.msra.mxu0 0.0
        %2774 = vmatprep.subr.mxu0 0.0
        %2775 = vmatpush2.xpose.msra.mxu0 0.0
        %2776 = vmatprep.subr.mxu0 0.0
        %2777 = vmatpush2.xpose.msra.mxu0 0.0
        %2778 = vmatprep.subr.mxu0 0.0
        %2779 = vmatpush2.xpose.msra.mxu0 0.0
        %2780 = vmatprep.subr.mxu0 0.0
        %2781 = vmatpush2.xpose.msra.mxu0 0.0
        %2782 = vmatprep.subr.mxu0 0.0
        %2783 = vmatpush2.xpose.msra.mxu0 0.0
        %2784 = vmatprep.subr.mxu0 0.0
        %2785 = vmatpush2.xpose.msra.mxu0 0.0
        %2786 = vmatprep.subr.mxu0 0.0
        %2787 = vmatpush2.xpose.msra.mxu0 0.0
        %2788 = vmatprep.mubr.f32.mxu0 0.0
        %v2789 = vand.u32 %v2565, 4294901760
        %v2790 = vsub.f32 %v2565, %v2789
        %2791 = vmatmul.mubr.f32.gmra.mxu0 %v2790
        %v2792 = vpop.f32.mrf.mxu0
        %v2793 = vadd.f32 %v2719, %v2792
        %v2794 = vpop.f32.mrf.mxu0
        %2795 = vdwg.mxu0
        %2796 = vmatprep.subr.mxu0 0.0
        %2797 = vmatpush1.xpose.msra.mxu0 0.0
        %2798 = vmatprep.subr.mxu0 0.0
        %2799 = vmatpush1.xpose.msra.mxu0 0.0
        %2800 = vmatprep.subr.mxu0 0.0
        %2801 = vmatpush1.xpose.msra.mxu0 0.0
        %2802 = vmatprep.subr.mxu0 0.0
        %2803 = vmatpush1.xpose.msra.mxu0 0.0
        %2804 = vmatprep.subr.mxu0 0.0
        %2805 = vmatpush1.xpose.msra.mxu0 0.0
        %2806 = vmatprep.subr.mxu0 0.0
        %2807 = vmatpush1.xpose.msra.mxu0 0.0
        %2808 = vmatprep.subr.mxu0 0.0
        %2809 = vmatpush1.xpose.msra.mxu0 0.0
        %2810 = vmatprep.subr.mxu0 0.0
        %2811 = vmatpush1.xpose.msra.mxu0 0.0
        %2812 = vmatprep.subr.mxu0 0.0
        %2813 = vmatpush1.xpose.msra.mxu0 0.0
        %2814 = vmatprep.subr.mxu0 0.0
        %2815 = vmatpush1.xpose.msra.mxu0 0.0
        %2816 = vmatprep.subr.mxu0 0.0
        %2817 = vmatpush1.xpose.msra.mxu0 0.0
        %2818 = vmatprep.subr.mxu0 0.0
        %2819 = vmatpush1.xpose.msra.mxu0 0.0
        %2820 = vmatprep.subr.mxu0 0.0
        %2821 = vmatpush1.xpose.msra.mxu0 0.0
        %2822 = vmatprep.subr.mxu0 0.0
        %2823 = vmatpush1.xpose.msra.mxu0 0.0
        %2824 = vmatprep.subr.mxu0 0.0
        %2825 = vmatpush1.xpose.msra.mxu0 0.0
        %2826 = vmatprep.subr.mxu0 0.0
        %v2827 = vand.u32 %v2568, 4294901760
        %2828 = vmatpush1.xpose.msra.mxu0 %v2827
        %2829 = vmatprep.subr.mxu0 0.0
        %2830 = vmatpush2.xpose.msra.mxu0 0.0
        %2831 = vmatprep.subr.mxu0 0.0
        %2832 = vmatpush2.xpose.msra.mxu0 0.0
        %2833 = vmatprep.subr.mxu0 0.0
        %2834 = vmatpush2.xpose.msra.mxu0 0.0
        %2835 = vmatprep.subr.mxu0 0.0
        %2836 = vmatpush2.xpose.msra.mxu0 0.0
        %2837 = vmatprep.subr.mxu0 0.0
        %2838 = vmatpush2.xpose.msra.mxu0 0.0
        %2839 = vmatprep.subr.mxu0 0.0
        %2840 = vmatpush2.xpose.msra.mxu0 0.0
        %2841 = vmatprep.subr.mxu0 0.0
        %2842 = vmatpush2.xpose.msra.mxu0 0.0
        %2843 = vmatprep.subr.mxu0 0.0
        %2844 = vmatpush2.xpose.msra.mxu0 0.0
        %2845 = vmatprep.subr.mxu0 0.0
        %2846 = vmatpush2.xpose.msra.mxu0 0.0
        %2847 = vmatprep.subr.mxu0 0.0
        %2848 = vmatpush2.xpose.msra.mxu0 0.0
        %2849 = vmatprep.subr.mxu0 0.0
        %2850 = vmatpush2.xpose.msra.mxu0 0.0
        %2851 = vmatprep.subr.mxu0 0.0
        %2852 = vmatpush2.xpose.msra.mxu0 0.0
        %2853 = vmatprep.subr.mxu0 0.0
        %2854 = vmatpush2.xpose.msra.mxu0 0.0
        %2855 = vmatprep.subr.mxu0 0.0
        %2856 = vmatpush2.xpose.msra.mxu0 0.0
        %2857 = vmatprep.subr.mxu0 0.0
        %2858 = vmatpush2.xpose.msra.mxu0 0.0
        %2859 = vmatprep.subr.mxu0 0.0
        %2860 = vmatpush2.xpose.msra.mxu0 0.0
        %2861 = vmatprep.mubr.f32.mxu0 0.0
        %v2862 = vand.u32 %v2565, 4294901760
        %v2863 = vsub.f32 %v2565, %v2862
        %v2864 = vand.u32 %v2863, 4294901760
        %2865 = vmatmul.mubr.f32.gmra.mxu0 %v2864
        %v2866 = vpop.f32.mrf.mxu0
        %v2867 = vadd.f32 %v2793, %v2866
        %v2868 = vpop.f32.mrf.mxu0
        %2869 = vdwg.mxu0
        %2870 = vmatprep.subr.mxu0 0.0
        %2871 = vmatpush1.xpose.msra.mxu0 0.0
        %2872 = vmatprep.subr.mxu0 0.0
        %2873 = vmatpush1.xpose.msra.mxu0 0.0
        %2874 = vmatprep.subr.mxu0 0.0
        %2875 = vmatpush1.xpose.msra.mxu0 0.0
        %2876 = vmatprep.subr.mxu0 0.0
        %2877 = vmatpush1.xpose.msra.mxu0 0.0
        %2878 = vmatprep.subr.mxu0 0.0
        %2879 = vmatpush1.xpose.msra.mxu0 0.0
        %2880 = vmatprep.subr.mxu0 0.0
        %2881 = vmatpush1.xpose.msra.mxu0 0.0
        %2882 = vmatprep.subr.mxu0 0.0
        %2883 = vmatpush1.xpose.msra.mxu0 0.0
        %2884 = vmatprep.subr.mxu0 0.0
        %2885 = vmatpush1.xpose.msra.mxu0 0.0
        %2886 = vmatprep.subr.mxu0 0.0
        %2887 = vmatpush1.xpose.msra.mxu0 0.0
        %2888 = vmatprep.subr.mxu0 0.0
        %2889 = vmatpush1.xpose.msra.mxu0 0.0
        %2890 = vmatprep.subr.mxu0 0.0
        %2891 = vmatpush1.xpose.msra.mxu0 0.0
        %2892 = vmatprep.subr.mxu0 0.0
        %2893 = vmatpush1.xpose.msra.mxu0 0.0
        %2894 = vmatprep.subr.mxu0 0.0
        %2895 = vmatpush1.xpose.msra.mxu0 0.0
        %2896 = vmatprep.subr.mxu0 0.0
        %2897 = vmatpush1.xpose.msra.mxu0 0.0
        %2898 = vmatprep.subr.mxu0 0.0
        %2899 = vmatpush1.xpose.msra.mxu0 0.0
        %2900 = vmatprep.subr.mxu0 0.0
        %v2901 = vand.u32 %v2568, 4294901760
        %v2902 = vsub.f32 %v2568, %v2901
        %v2903 = vand.u32 %v2902, 4294901760
        %2904 = vmatpush1.xpose.msra.mxu0 %v2903
        %2905 = vmatprep.subr.mxu0 0.0
        %2906 = vmatpush2.xpose.msra.mxu0 0.0
        %2907 = vmatprep.subr.mxu0 0.0
        %2908 = vmatpush2.xpose.msra.mxu0 0.0
        %2909 = vmatprep.subr.mxu0 0.0
        %2910 = vmatpush2.xpose.msra.mxu0 0.0
        %2911 = vmatprep.subr.mxu0 0.0
        %2912 = vmatpush2.xpose.msra.mxu0 0.0
        %2913 = vmatprep.subr.mxu0 0.0
        %2914 = vmatpush2.xpose.msra.mxu0 0.0
        %2915 = vmatprep.subr.mxu0 0.0
        %2916 = vmatpush2.xpose.msra.mxu0 0.0
        %2917 = vmatprep.subr.mxu0 0.0
        %2918 = vmatpush2.xpose.msra.mxu0 0.0
        %2919 = vmatprep.subr.mxu0 0.0
        %2920 = vmatpush2.xpose.msra.mxu0 0.0
        %2921 = vmatprep.subr.mxu0 0.0
        %2922 = vmatpush2.xpose.msra.mxu0 0.0
        %2923 = vmatprep.subr.mxu0 0.0
        %2924 = vmatpush2.xpose.msra.mxu0 0.0
        %2925 = vmatprep.subr.mxu0 0.0
        %2926 = vmatpush2.xpose.msra.mxu0 0.0
        %2927 = vmatprep.subr.mxu0 0.0
        %2928 = vmatpush2.xpose.msra.mxu0 0.0
        %2929 = vmatprep.subr.mxu0 0.0
        %2930 = vmatpush2.xpose.msra.mxu0 0.0
        %2931 = vmatprep.subr.mxu0 0.0
        %2932 = vmatpush2.xpose.msra.mxu0 0.0
        %2933 = vmatprep.subr.mxu0 0.0
        %2934 = vmatpush2.xpose.msra.mxu0 0.0
        %2935 = vmatprep.subr.mxu0 0.0
        %2936 = vmatpush2.xpose.msra.mxu0 0.0
        %2937 = vmatprep.mubr.f32.mxu0 0.0
        %v2938 = vand.u32 %v2565, 4294901760
        %2939 = vmatmul.mubr.f32.gmra.mxu0 %v2938
        %v2940 = vpop.f32.mrf.mxu0
        %v2941 = vadd.f32 %v2867, %v2940
        %v2942 = vpop.f32.mrf.mxu0
        %2943 = vdwg.mxu0
        %2944 = vmatprep.subr.mxu0 0.0
        %2945 = vmatpush1.xpose.msra.mxu0 0.0
        %2946 = vmatprep.subr.mxu0 0.0
        %2947 = vmatpush1.xpose.msra.mxu0 0.0
        %2948 = vmatprep.subr.mxu0 0.0
        %2949 = vmatpush1.xpose.msra.mxu0 0.0
        %2950 = vmatprep.subr.mxu0 0.0
        %2951 = vmatpush1.xpose.msra.mxu0 0.0
        %2952 = vmatprep.subr.mxu0 0.0
        %2953 = vmatpush1.xpose.msra.mxu0 0.0
        %2954 = vmatprep.subr.mxu0 0.0
        %2955 = vmatpush1.xpose.msra.mxu0 0.0
        %2956 = vmatprep.subr.mxu0 0.0
        %2957 = vmatpush1.xpose.msra.mxu0 0.0
        %2958 = vmatprep.subr.mxu0 0.0
        %2959 = vmatpush1.xpose.msra.mxu0 0.0
        %2960 = vmatprep.subr.mxu0 0.0
        %2961 = vmatpush1.xpose.msra.mxu0 0.0
        %2962 = vmatprep.subr.mxu0 0.0
        %2963 = vmatpush1.xpose.msra.mxu0 0.0
        %2964 = vmatprep.subr.mxu0 0.0
        %2965 = vmatpush1.xpose.msra.mxu0 0.0
        %2966 = vmatprep.subr.mxu0 0.0
        %2967 = vmatpush1.xpose.msra.mxu0 0.0
        %2968 = vmatprep.subr.mxu0 0.0
        %2969 = vmatpush1.xpose.msra.mxu0 0.0
        %2970 = vmatprep.subr.mxu0 0.0
        %2971 = vmatpush1.xpose.msra.mxu0 0.0
        %2972 = vmatprep.subr.mxu0 0.0
        %2973 = vmatpush1.xpose.msra.mxu0 0.0
        %2974 = vmatprep.subr.mxu0 0.0
        %v2975 = vand.u32 %v2568, 4294901760
        %2976 = vmatpush1.xpose.msra.mxu0 %v2975
        %2977 = vmatprep.subr.mxu0 0.0
        %2978 = vmatpush2.xpose.msra.mxu0 0.0
        %2979 = vmatprep.subr.mxu0 0.0
        %2980 = vmatpush2.xpose.msra.mxu0 0.0
        %2981 = vmatprep.subr.mxu0 0.0
        %2982 = vmatpush2.xpose.msra.mxu0 0.0
        %2983 = vmatprep.subr.mxu0 0.0
        %2984 = vmatpush2.xpose.msra.mxu0 0.0
        %2985 = vmatprep.subr.mxu0 0.0
        %2986 = vmatpush2.xpose.msra.mxu0 0.0
        %2987 = vmatprep.subr.mxu0 0.0
        %2988 = vmatpush2.xpose.msra.mxu0 0.0
        %2989 = vmatprep.subr.mxu0 0.0
        %2990 = vmatpush2.xpose.msra.mxu0 0.0
        %2991 = vmatprep.subr.mxu0 0.0
        %2992 = vmatpush2.xpose.msra.mxu0 0.0
        %2993 = vmatprep.subr.mxu0 0.0
        %2994 = vmatpush2.xpose.msra.mxu0 0.0
        %2995 = vmatprep.subr.mxu0 0.0
        %2996 = vmatpush2.xpose.msra.mxu0 0.0
        %2997 = vmatprep.subr.mxu0 0.0
        %2998 = vmatpush2.xpose.msra.mxu0 0.0
        %2999 = vmatprep.subr.mxu0 0.0
        %3000 = vmatpush2.xpose.msra.mxu0 0.0
        %3001 = vmatprep.subr.mxu0 0.0
        %3002 = vmatpush2.xpose.msra.mxu0 0.0
        %3003 = vmatprep.subr.mxu0 0.0
        %3004 = vmatpush2.xpose.msra.mxu0 0.0
        %3005 = vmatprep.subr.mxu0 0.0
        %3006 = vmatpush2.xpose.msra.mxu0 0.0
        %3007 = vmatprep.subr.mxu0 0.0
        %3008 = vmatpush2.xpose.msra.mxu0 0.0
        %3009 = vmatprep.mubr.f32.mxu0 0.0
        %v3010 = vand.u32 %v2565, 4294901760
        %3011 = vmatmul.mubr.f32.gmra.mxu0 %v3010
        %v3012 = vpop.f32.mrf.mxu0
        %v3013 = vadd.f32 %v2941, %v3012
        %v3014 = vpop.f32.mrf.mxu0
        %3015 = vdwg.mxu0
        %v3016 = vmul.f32 %v3013, 0.17677669
        %vm3017 = vcmp.eq.f32.partialorder %v2562, 0.0
        %v3018 = vsel %vm3017, 1, 0
        %v3019 = vlaneseq
        %v3020 = vshrl.u32 %v3019, 7
        %v3021 = vsub.s32 0, %v3020
        %v3022 = vrot.slane %v3018, %v3021
        %vm3023 = vcmp.eq.s32.totalorder %v3022, 1
        %v3024 = vsel %vm3023, -1e+09, %v3016
        %vm3025 = vcmask 64512
        %v3026 = vsel %vm3025, %v3024, -inf
        %3027 = vmax.xlane.f32.xlu0 %v3026
        %v3028 = vpop.xlane.xlu0 %3027
        %v3029 = vsub.f32 %v3024, %v3028
        %v3030 = vmul.f32 %v3029, 1.442695
        %v3031 = vpow.pop %v3030
        %v3032 = vsel %vm3025, %v3031, 0.0
        %3033 = vadd.xlane.f32.xlu0 %v3032
        %v3034 = vpop.xlane.xlu0 %3033
        %v3035 = vrcp.pop %v3034
        %v3036 = vmul.f32 %v3031, %v3035
        %v3038 = vsel %vm3025, %v3036, 0
        %3040 = vmatprep.subr.mxu0 0.0
        %3041 = vmatpush1.msra.mxu0 0.0
        %3042 = vmatprep.subr.mxu0 0.0
        %3043 = vmatpush1.msra.mxu0 0.0
        %3044 = vmatprep.subr.mxu0 0.0
        %3045 = vmatpush1.msra.mxu0 0.0
        %3046 = vmatprep.subr.mxu0 0.0
        %3047 = vmatpush1.msra.mxu0 0.0
        %3048 = vmatprep.subr.mxu0 0.0
        %3049 = vmatpush1.msra.mxu0 0.0
        %3050 = vmatprep.subr.mxu0 0.0
        %3051 = vmatpush1.msra.mxu0 0.0
        %3052 = vmatprep.subr.mxu0 0.0
        %3053 = vmatpush1.msra.mxu0 0.0
        %3054 = vmatprep.subr.mxu0 0.0
        %3055 = vmatpush1.msra.mxu0 0.0
        %3056 = vmatprep.subr.mxu0 0.0
        %3057 = vmatpush1.msra.mxu0 0.0
        %3058 = vmatprep.subr.mxu0 0.0
        %3059 = vmatpush1.msra.mxu0 0.0
        %3060 = vmatprep.subr.mxu0 0.0
        %3061 = vmatpush1.msra.mxu0 0.0
        %3062 = vmatprep.subr.mxu0 0.0
        %3063 = vmatpush1.msra.mxu0 0.0
        %3064 = vmatprep.subr.mxu0 0.0
        %3065 = vmatpush1.msra.mxu0 0.0
        %3066 = vmatprep.subr.mxu0 0.0
        %3067 = vmatpush1.msra.mxu0 0.0
        %3068 = vmatprep.subr.mxu0 0.0
        %3069 = vmatpush1.msra.mxu0 0.0
        %3070 = vmatprep.subr.mxu0 0.0
        %v3071 = vand.u32 %v2559, 4294901760
        %3072 = vmatpush1.msra.mxu0 %v3071
        %3073 = vmatprep.subr.mxu0 0.0
        %3074 = vmatpush2.msra.mxu0 0.0
        %3075 = vmatprep.subr.mxu0 0.0
        %3076 = vmatpush2.msra.mxu0 0.0
        %3077 = vmatprep.subr.mxu0 0.0
        %3078 = vmatpush2.msra.mxu0 0.0
        %3079 = vmatprep.subr.mxu0 0.0
        %3080 = vmatpush2.msra.mxu0 0.0
        %3081 = vmatprep.subr.mxu0 0.0
        %3082 = vmatpush2.msra.mxu0 0.0
        %3083 = vmatprep.subr.mxu0 0.0
        %3084 = vmatpush2.msra.mxu0 0.0
        %3085 = vmatprep.subr.mxu0 0.0
        %3086 = vmatpush2.msra.mxu0 0.0
        %3087 = vmatprep.subr.mxu0 0.0
        %3088 = vmatpush2.msra.mxu0 0.0
        %3089 = vmatprep.subr.mxu0 0.0
        %3090 = vmatpush2.msra.mxu0 0.0
        %3091 = vmatprep.subr.mxu0 0.0
        %3092 = vmatpush2.msra.mxu0 0.0
        %3093 = vmatprep.subr.mxu0 0.0
        %3094 = vmatpush2.msra.mxu0 0.0
        %3095 = vmatprep.subr.mxu0 0.0
        %3096 = vmatpush2.msra.mxu0 0.0
        %3097 = vmatprep.subr.mxu0 0.0
        %3098 = vmatpush2.msra.mxu0 0.0
        %3099 = vmatprep.subr.mxu0 0.0
        %3100 = vmatpush2.msra.mxu0 0.0
        %3101 = vmatprep.subr.mxu0 0.0
        %3102 = vmatpush2.msra.mxu0 0.0
        %3103 = vmatprep.subr.mxu0 0.0
        %3104 = vmatpush2.msra.mxu0 0.0
        %3105 = vmatprep.mubr.f32.mxu0 0.0
        %v3106 = vand.u32 %v3038, 4294901760
        %v3107 = vsub.f32 %v3038, %v3106
        %v3108 = vand.u32 %v3107, 4294901760
        %v3109 = vsub.f32 %v3107, %v3108
        %v3110 = vand.u32 %v3109, 4294901760
        %3111 = vmatmul.mubr.f32.gmra.mxu0 %v3110
        %v3112 = vpop.f32.mrf.mxu0
        %v3113 = vadd.f32 0.0, %v3112
        %v3114 = vpop.f32.mrf.mxu0
        %3115 = vdwg.mxu0
        %3116 = vmatprep.subr.mxu0 0.0
        %3117 = vmatpush1.msra.mxu0 0.0
        %3118 = vmatprep.subr.mxu0 0.0
        %3119 = vmatpush1.msra.mxu0 0.0
        %3120 = vmatprep.subr.mxu0 0.0
        %3121 = vmatpush1.msra.mxu0 0.0
        %3122 = vmatprep.subr.mxu0 0.0
        %3123 = vmatpush1.msra.mxu0 0.0
        %3124 = vmatprep.subr.mxu0 0.0
        %3125 = vmatpush1.msra.mxu0 0.0
        %3126 = vmatprep.subr.mxu0 0.0
        %3127 = vmatpush1.msra.mxu0 0.0
        %3128 = vmatprep.subr.mxu0 0.0
        %3129 = vmatpush1.msra.mxu0 0.0
        %3130 = vmatprep.subr.mxu0 0.0
        %3131 = vmatpush1.msra.mxu0 0.0
        %3132 = vmatprep.subr.mxu0 0.0
        %3133 = vmatpush1.msra.mxu0 0.0
        %3134 = vmatprep.subr.mxu0 0.0
        %3135 = vmatpush1.msra.mxu0 0.0
        %3136 = vmatprep.subr.mxu0 0.0
        %3137 = vmatpush1.msra.mxu0 0.0
        %3138 = vmatprep.subr.mxu0 0.0
        %3139 = vmatpush1.msra.mxu0 0.0
        %3140 = vmatprep.subr.mxu0 0.0
        %3141 = vmatpush1.msra.mxu0 0.0
        %3142 = vmatprep.subr.mxu0 0.0
        %3143 = vmatpush1.msra.mxu0 0.0
        %3144 = vmatprep.subr.mxu0 0.0
        %3145 = vmatpush1.msra.mxu0 0.0
        %3146 = vmatprep.subr.mxu0 0.0
        %v3147 = vand.u32 %v2559, 4294901760
        %v3148 = vsub.f32 %v2559, %v3147
        %v3149 = vand.u32 %v3148, 4294901760
        %v3150 = vsub.f32 %v3148, %v3149
        %v3151 = vand.u32 %v3150, 4294901760
        %3152 = vmatpush1.msra.mxu0 %v3151
        %3153 = vmatprep.subr.mxu0 0.0
        %3154 = vmatpush2.msra.mxu0 0.0
        %3155 = vmatprep.subr.mxu0 0.0
        %3156 = vmatpush2.msra.mxu0 0.0
        %3157 = vmatprep.subr.mxu0 0.0
        %3158 = vmatpush2.msra.mxu0 0.0
        %3159 = vmatprep.subr.mxu0 0.0
        %3160 = vmatpush2.msra.mxu0 0.0
        %3161 = vmatprep.subr.mxu0 0.0
        %3162 = vmatpush2.msra.mxu0 0.0
        %3163 = vmatprep.subr.mxu0 0.0
        %3164 = vmatpush2.msra.mxu0 0.0
        %3165 = vmatprep.subr.mxu0 0.0
        %3166 = vmatpush2.msra.mxu0 0.0
        %3167 = vmatprep.subr.mxu0 0.0
        %3168 = vmatpush2.msra.mxu0 0.0
        %3169 = vmatprep.subr.mxu0 0.0
        %3170 = vmatpush2.msra.mxu0 0.0
        %3171 = vmatprep.subr.mxu0 0.0
        %3172 = vmatpush2.msra.mxu0 0.0
        %3173 = vmatprep.subr.mxu0 0.0
        %3174 = vmatpush2.msra.mxu0 0.0
        %3175 = vmatprep.subr.mxu0 0.0
        %3176 = vmatpush2.msra.mxu0 0.0
        %3177 = vmatprep.subr.mxu0 0.0
        %3178 = vmatpush2.msra.mxu0 0.0
        %3179 = vmatprep.subr.mxu0 0.0
        %3180 = vmatpush2.msra.mxu0 0.0
        %3181 = vmatprep.subr.mxu0 0.0
        %3182 = vmatpush2.msra.mxu0 0.0
        %3183 = vmatprep.subr.mxu0 0.0
        %3184 = vmatpush2.msra.mxu0 0.0
        %3185 = vmatprep.mubr.f32.mxu0 0.0
        %v3186 = vand.u32 %v3038, 4294901760
        %3187 = vmatmul.mubr.f32.gmra.mxu0 %v3186
        %v3188 = vpop.f32.mrf.mxu0
        %v3189 = vadd.f32 %v3113, %v3188
        %v3190 = vpop.f32.mrf.mxu0
        %3191 = vdwg.mxu0
        %3192 = vmatprep.subr.mxu0 0.0
        %3193 = vmatpush1.msra.mxu0 0.0
        %3194 = vmatprep.subr.mxu0 0.0
        %3195 = vmatpush1.msra.mxu0 0.0
        %3196 = vmatprep.subr.mxu0 0.0
        %3197 = vmatpush1.msra.mxu0 0.0
        %3198 = vmatprep.subr.mxu0 0.0
        %3199 = vmatpush1.msra.mxu0 0.0
        %3200 = vmatprep.subr.mxu0 0.0
        %3201 = vmatpush1.msra.mxu0 0.0
        %3202 = vmatprep.subr.mxu0 0.0
        %3203 = vmatpush1.msra.mxu0 0.0
        %3204 = vmatprep.subr.mxu0 0.0
        %3205 = vmatpush1.msra.mxu0 0.0
        %3206 = vmatprep.subr.mxu0 0.0
        %3207 = vmatpush1.msra.mxu0 0.0
        %3208 = vmatprep.subr.mxu0 0.0
        %3209 = vmatpush1.msra.mxu0 0.0
        %3210 = vmatprep.subr.mxu0 0.0
        %3211 = vmatpush1.msra.mxu0 0.0
        %3212 = vmatprep.subr.mxu0 0.0
        %3213 = vmatpush1.msra.mxu0 0.0
        %3214 = vmatprep.subr.mxu0 0.0
        %3215 = vmatpush1.msra.mxu0 0.0
        %3216 = vmatprep.subr.mxu0 0.0
        %3217 = vmatpush1.msra.mxu0 0.0
        %3218 = vmatprep.subr.mxu0 0.0
        %3219 = vmatpush1.msra.mxu0 0.0
        %3220 = vmatprep.subr.mxu0 0.0
        %3221 = vmatpush1.msra.mxu0 0.0
        %3222 = vmatprep.subr.mxu0 0.0
        %v3223 = vand.u32 %v2559, 4294901760
        %v3224 = vsub.f32 %v2559, %v3223
        %3225 = vmatpush1.msra.mxu0 %v3224
        %3226 = vmatprep.subr.mxu0 0.0
        %3227 = vmatpush2.msra.mxu0 0.0
        %3228 = vmatprep.subr.mxu0 0.0
        %3229 = vmatpush2.msra.mxu0 0.0
        %3230 = vmatprep.subr.mxu0 0.0
        %3231 = vmatpush2.msra.mxu0 0.0
        %3232 = vmatprep.subr.mxu0 0.0
        %3233 = vmatpush2.msra.mxu0 0.0
        %3234 = vmatprep.subr.mxu0 0.0
        %3235 = vmatpush2.msra.mxu0 0.0
        %3236 = vmatprep.subr.mxu0 0.0
        %3237 = vmatpush2.msra.mxu0 0.0
        %3238 = vmatprep.subr.mxu0 0.0
        %3239 = vmatpush2.msra.mxu0 0.0
        %3240 = vmatprep.subr.mxu0 0.0
        %3241 = vmatpush2.msra.mxu0 0.0
        %3242 = vmatprep.subr.mxu0 0.0
        %3243 = vmatpush2.msra.mxu0 0.0
        %3244 = vmatprep.subr.mxu0 0.0
        %3245 = vmatpush2.msra.mxu0 0.0
        %3246 = vmatprep.subr.mxu0 0.0
        %3247 = vmatpush2.msra.mxu0 0.0
        %3248 = vmatprep.subr.mxu0 0.0
        %3249 = vmatpush2.msra.mxu0 0.0
        %3250 = vmatprep.subr.mxu0 0.0
        %3251 = vmatpush2.msra.mxu0 0.0
        %3252 = vmatprep.subr.mxu0 0.0
        %3253 = vmatpush2.msra.mxu0 0.0
        %3254 = vmatprep.subr.mxu0 0.0
        %3255 = vmatpush2.msra.mxu0 0.0
        %3256 = vmatprep.subr.mxu0 0.0
        %3257 = vmatpush2.msra.mxu0 0.0
        %3258 = vmatprep.mubr.f32.mxu0 0.0
        %v3259 = vand.u32 %v3038, 4294901760
        %v3260 = vsub.f32 %v3038, %v3259
        %3261 = vmatmul.mubr.f32.gmra.mxu0 %v3260
        %v3262 = vpop.f32.mrf.mxu0
        %v3263 = vadd.f32 %v3189, %v3262
        %v3264 = vpop.f32.mrf.mxu0
        %3265 = vdwg.mxu0
        %3266 = vmatprep.subr.mxu0 0.0
        %3267 = vmatpush1.msra.mxu0 0.0
        %3268 = vmatprep.subr.mxu0 0.0
        %3269 = vmatpush1.msra.mxu0 0.0
        %3270 = vmatprep.subr.mxu0 0.0
        %3271 = vmatpush1.msra.mxu0 0.0
        %3272 = vmatprep.subr.mxu0 0.0
        %3273 = vmatpush1.msra.mxu0 0.0
        %3274 = vmatprep.subr.mxu0 0.0
        %3275 = vmatpush1.msra.mxu0 0.0
        %3276 = vmatprep.subr.mxu0 0.0
        %3277 = vmatpush1.msra.mxu0 0.0
        %3278 = vmatprep.subr.mxu0 0.0
        %3279 = vmatpush1.msra.mxu0 0.0
        %3280 = vmatprep.subr.mxu0 0.0
        %3281 = vmatpush1.msra.mxu0 0.0
        %3282 = vmatprep.subr.mxu0 0.0
        %3283 = vmatpush1.msra.mxu0 0.0
        %3284 = vmatprep.subr.mxu0 0.0
        %3285 = vmatpush1.msra.mxu0 0.0
        %3286 = vmatprep.subr.mxu0 0.0
        %3287 = vmatpush1.msra.mxu0 0.0
        %3288 = vmatprep.subr.mxu0 0.0
        %3289 = vmatpush1.msra.mxu0 0.0
        %3290 = vmatprep.subr.mxu0 0.0
        %3291 = vmatpush1.msra.mxu0 0.0
        %3292 = vmatprep.subr.mxu0 0.0
        %3293 = vmatpush1.msra.mxu0 0.0
        %3294 = vmatprep.subr.mxu0 0.0
        %3295 = vmatpush1.msra.mxu0 0.0
        %3296 = vmatprep.subr.mxu0 0.0
        %v3297 = vand.u32 %v2559, 4294901760
        %3298 = vmatpush1.msra.mxu0 %v3297
        %3299 = vmatprep.subr.mxu0 0.0
        %3300 = vmatpush2.msra.mxu0 0.0
        %3301 = vmatprep.subr.mxu0 0.0
        %3302 = vmatpush2.msra.mxu0 0.0
        %3303 = vmatprep.subr.mxu0 0.0
        %3304 = vmatpush2.msra.mxu0 0.0
        %3305 = vmatprep.subr.mxu0 0.0
        %3306 = vmatpush2.msra.mxu0 0.0
        %3307 = vmatprep.subr.mxu0 0.0
        %3308 = vmatpush2.msra.mxu0 0.0
        %3309 = vmatprep.subr.mxu0 0.0
        %3310 = vmatpush2.msra.mxu0 0.0
        %3311 = vmatprep.subr.mxu0 0.0
        %3312 = vmatpush2.msra.mxu0 0.0
        %3313 = vmatprep.subr.mxu0 0.0
        %3314 = vmatpush2.msra.mxu0 0.0
        %3315 = vmatprep.subr.mxu0 0.0
        %3316 = vmatpush2.msra.mxu0 0.0
        %3317 = vmatprep.subr.mxu0 0.0
        %3318 = vmatpush2.msra.mxu0 0.0
        %3319 = vmatprep.subr.mxu0 0.0
        %3320 = vmatpush2.msra.mxu0 0.0
        %3321 = vmatprep.subr.mxu0 0.0
        %3322 = vmatpush2.msra.mxu0 0.0
        %3323 = vmatprep.subr.mxu0 0.0
        %3324 = vmatpush2.msra.mxu0 0.0
        %3325 = vmatprep.subr.mxu0 0.0
        %3326 = vmatpush2.msra.mxu0 0.0
        %3327 = vmatprep.subr.mxu0 0.0
        %3328 = vmatpush2.msra.mxu0 0.0
        %3329 = vmatprep.subr.mxu0 0.0
        %3330 = vmatpush2.msra.mxu0 0.0
        %3331 = vmatprep.mubr.f32.mxu0 0.0
        %v3332 = vand.u32 %v3038, 4294901760
        %v3333 = vsub.f32 %v3038, %v3332
        %v3334 = vand.u32 %v3333, 4294901760
        %3335 = vmatmul.mubr.f32.gmra.mxu0 %v3334
        %v3336 = vpop.f32.mrf.mxu0
        %v3337 = vadd.f32 %v3263, %v3336
        %v3338 = vpop.f32.mrf.mxu0
        %3339 = vdwg.mxu0
        %3340 = vmatprep.subr.mxu0 0.0
        %3341 = vmatpush1.msra.mxu0 0.0
        %3342 = vmatprep.subr.mxu0 0.0
        %3343 = vmatpush1.msra.mxu0 0.0
        %3344 = vmatprep.subr.mxu0 0.0
        %3345 = vmatpush1.msra.mxu0 0.0
        %3346 = vmatprep.subr.mxu0 0.0
        %3347 = vmatpush1.msra.mxu0 0.0
        %3348 = vmatprep.subr.mxu0 0.0
        %3349 = vmatpush1.msra.mxu0 0.0
        %3350 = vmatprep.subr.mxu0 0.0
        %3351 = vmatpush1.msra.mxu0 0.0
        %3352 = vmatprep.subr.mxu0 0.0
        %3353 = vmatpush1.msra.mxu0 0.0
        %3354 = vmatprep.subr.mxu0 0.0
        %3355 = vmatpush1.msra.mxu0 0.0
        %3356 = vmatprep.subr.mxu0 0.0
        %3357 = vmatpush1.msra.mxu0 0.0
        %3358 = vmatprep.subr.mxu0 0.0
        %3359 = vmatpush1.msra.mxu0 0.0
        %3360 = vmatprep.subr.mxu0 0.0
        %3361 = vmatpush1.msra.mxu0 0.0
        %3362 = vmatprep.subr.mxu0 0.0
        %3363 = vmatpush1.msra.mxu0 0.0
        %3364 = vmatprep.subr.mxu0 0.0
        %3365 = vmatpush1.msra.mxu0 0.0
        %3366 = vmatprep.subr.mxu0 0.0
        %3367 = vmatpush1.msra.mxu0 0.0
        %3368 = vmatprep.subr.mxu0 0.0
        %3369 = vmatpush1.msra.mxu0 0.0
        %3370 = vmatprep.subr.mxu0 0.0
        %v3371 = vand.u32 %v2559, 4294901760
        %v3372 = vsub.f32 %v2559, %v3371
        %v3373 = vand.u32 %v3372, 4294901760
        %3374 = vmatpush1.msra.mxu0 %v3373
        %3375 = vmatprep.subr.mxu0 0.0
        %3376 = vmatpush2.msra.mxu0 0.0
        %3377 = vmatprep.subr.mxu0 0.0
        %3378 = vmatpush2.msra.mxu0 0.0
        %3379 = vmatprep.subr.mxu0 0.0
        %3380 = vmatpush2.msra.mxu0 0.0
        %3381 = vmatprep.subr.mxu0 0.0
        %3382 = vmatpush2.msra.mxu0 0.0
        %3383 = vmatprep.subr.mxu0 0.0
        %3384 = vmatpush2.msra.mxu0 0.0
        %3385 = vmatprep.subr.mxu0 0.0
        %3386 = vmatpush2.msra.mxu0 0.0
        %3387 = vmatprep.subr.mxu0 0.0
        %3388 = vmatpush2.msra.mxu0 0.0
        %3389 = vmatprep.subr.mxu0 0.0
        %3390 = vmatpush2.msra.mxu0 0.0
        %3391 = vmatprep.subr.mxu0 0.0
        %3392 = vmatpush2.msra.mxu0 0.0
        %3393 = vmatprep.subr.mxu0 0.0
        %3394 = vmatpush2.msra.mxu0 0.0
        %3395 = vmatprep.subr.mxu0 0.0
        %3396 = vmatpush2.msra.mxu0 0.0
        %3397 = vmatprep.subr.mxu0 0.0
        %3398 = vmatpush2.msra.mxu0 0.0
        %3399 = vmatprep.subr.mxu0 0.0
        %3400 = vmatpush2.msra.mxu0 0.0
        %3401 = vmatprep.subr.mxu0 0.0
        %3402 = vmatpush2.msra.mxu0 0.0
        %3403 = vmatprep.subr.mxu0 0.0
        %3404 = vmatpush2.msra.mxu0 0.0
        %3405 = vmatprep.subr.mxu0 0.0
        %3406 = vmatpush2.msra.mxu0 0.0
        %3407 = vmatprep.mubr.f32.mxu0 0.0
        %v3408 = vand.u32 %v3038, 4294901760
        %3409 = vmatmul.mubr.f32.gmra.mxu0 %v3408
        %v3410 = vpop.f32.mrf.mxu0
        %v3411 = vadd.f32 %v3337, %v3410
        %v3412 = vpop.f32.mrf.mxu0
        %3413 = vdwg.mxu0
        %3414 = vmatprep.subr.mxu0 0.0
        %3415 = vmatpush1.msra.mxu0 0.0
        %3416 = vmatprep.subr.mxu0 0.0
        %3417 = vmatpush1.msra.mxu0 0.0
        %3418 = vmatprep.subr.mxu0 0.0
        %3419 = vmatpush1.msra.mxu0 0.0
        %3420 = vmatprep.subr.mxu0 0.0
        %3421 = vmatpush1.msra.mxu0 0.0
        %3422 = vmatprep.subr.mxu0 0.0
        %3423 = vmatpush1.msra.mxu0 0.0
        %3424 = vmatprep.subr.mxu0 0.0
        %3425 = vmatpush1.msra.mxu0 0.0
        %3426 = vmatprep.subr.mxu0 0.0
        %3427 = vmatpush1.msra.mxu0 0.0
        %3428 = vmatprep.subr.mxu0 0.0
        %3429 = vmatpush1.msra.mxu0 0.0
        %3430 = vmatprep.subr.mxu0 0.0
        %3431 = vmatpush1.msra.mxu0 0.0
        %3432 = vmatprep.subr.mxu0 0.0
        %3433 = vmatpush1.msra.mxu0 0.0
        %3434 = vmatprep.subr.mxu0 0.0
        %3435 = vmatpush1.msra.mxu0 0.0
        %3436 = vmatprep.subr.mxu0 0.0
        %3437 = vmatpush1.msra.mxu0 0.0
        %3438 = vmatprep.subr.mxu0 0.0
        %3439 = vmatpush1.msra.mxu0 0.0
        %3440 = vmatprep.subr.mxu0 0.0
        %3441 = vmatpush1.msra.mxu0 0.0
        %3442 = vmatprep.subr.mxu0 0.0
        %3443 = vmatpush1.msra.mxu0 0.0
        %3444 = vmatprep.subr.mxu0 0.0
        %v3445 = vand.u32 %v2559, 4294901760
        %3446 = vmatpush1.msra.mxu0 %v3445
        %3447 = vmatprep.subr.mxu0 0.0
        %3448 = vmatpush2.msra.mxu0 0.0
        %3449 = vmatprep.subr.mxu0 0.0
        %3450 = vmatpush2.msra.mxu0 0.0
        %3451 = vmatprep.subr.mxu0 0.0
        %3452 = vmatpush2.msra.mxu0 0.0
        %3453 = vmatprep.subr.mxu0 0.0
        %3454 = vmatpush2.msra.mxu0 0.0
        %3455 = vmatprep.subr.mxu0 0.0
        %3456 = vmatpush2.msra.mxu0 0.0
        %3457 = vmatprep.subr.mxu0 0.0
        %3458 = vmatpush2.msra.mxu0 0.0
        %3459 = vmatprep.subr.mxu0 0.0
        %3460 = vmatpush2.msra.mxu0 0.0
        %3461 = vmatprep.subr.mxu0 0.0
        %3462 = vmatpush2.msra.mxu0 0.0
        %3463 = vmatprep.subr.mxu0 0.0
        %3464 = vmatpush2.msra.mxu0 0.0
        %3465 = vmatprep.subr.mxu0 0.0
        %3466 = vmatpush2.msra.mxu0 0.0
        %3467 = vmatprep.subr.mxu0 0.0
        %3468 = vmatpush2.msra.mxu0 0.0
        %3469 = vmatprep.subr.mxu0 0.0
        %3470 = vmatpush2.msra.mxu0 0.0
        %3471 = vmatprep.subr.mxu0 0.0
        %3472 = vmatpush2.msra.mxu0 0.0
        %3473 = vmatprep.subr.mxu0 0.0
        %3474 = vmatpush2.msra.mxu0 0.0
        %3475 = vmatprep.subr.mxu0 0.0
        %3476 = vmatpush2.msra.mxu0 0.0
        %3477 = vmatprep.subr.mxu0 0.0
        %3478 = vmatpush2.msra.mxu0 0.0
        %3479 = vmatprep.mubr.f32.mxu0 0.0
        %v3480 = vand.u32 %v3038, 4294901760
        %3481 = vmatmul.mubr.f32.gmra.mxu0 %v3480
        %v3482 = vpop.f32.mrf.mxu0
        %v3483 = vadd.f32 %v3411, %v3482
        %v3484 = vpop.f32.mrf.mxu0
        %3485 = vdwg.mxu0
        %3486 = vrot.lane.b32.xlu0 %v1231, 96
        %v3487 = vpop.permute.xlu0 %3486
        %3488 = vrot.lane.b32.xlu0 %v1895, 96
        %v3489 = vpop.permute.xlu0 %3488
        %v3490 = vsel %vm2563, %v3487, 0
        %v3492 = vsel %vm2563, %v3489, 0
        %3494 = vmatprep.subr.mxu0 0.0
        %3495 = vmatpush1.xpose.msra.mxu0 0.0
        %3496 = vmatprep.subr.mxu0 0.0
        %3497 = vmatpush1.xpose.msra.mxu0 0.0
        %3498 = vmatprep.subr.mxu0 0.0
        %3499 = vmatpush1.xpose.msra.mxu0 0.0
        %3500 = vmatprep.subr.mxu0 0.0
        %3501 = vmatpush1.xpose.msra.mxu0 0.0
        %3502 = vmatprep.subr.mxu0 0.0
        %3503 = vmatpush1.xpose.msra.mxu0 0.0
        %3504 = vmatprep.subr.mxu0 0.0
        %3505 = vmatpush1.xpose.msra.mxu0 0.0
        %3506 = vmatprep.subr.mxu0 0.0
        %3507 = vmatpush1.xpose.msra.mxu0 0.0
        %3508 = vmatprep.subr.mxu0 0.0
        %3509 = vmatpush1.xpose.msra.mxu0 0.0
        %3510 = vmatprep.subr.mxu0 0.0
        %3511 = vmatpush1.xpose.msra.mxu0 0.0
        %3512 = vmatprep.subr.mxu0 0.0
        %3513 = vmatpush1.xpose.msra.mxu0 0.0
        %3514 = vmatprep.subr.mxu0 0.0
        %3515 = vmatpush1.xpose.msra.mxu0 0.0
        %3516 = vmatprep.subr.mxu0 0.0
        %3517 = vmatpush1.xpose.msra.mxu0 0.0
        %3518 = vmatprep.subr.mxu0 0.0
        %3519 = vmatpush1.xpose.msra.mxu0 0.0
        %3520 = vmatprep.subr.mxu0 0.0
        %3521 = vmatpush1.xpose.msra.mxu0 0.0
        %3522 = vmatprep.subr.mxu0 0.0
        %3523 = vmatpush1.xpose.msra.mxu0 0.0
        %3524 = vmatprep.subr.mxu0 0.0
        %v3525 = vand.u32 %v3492, 4294901760
        %3526 = vmatpush1.xpose.msra.mxu0 %v3525
        %3527 = vmatprep.subr.mxu0 0.0
        %3528 = vmatpush2.xpose.msra.mxu0 0.0
        %3529 = vmatprep.subr.mxu0 0.0
        %3530 = vmatpush2.xpose.msra.mxu0 0.0
        %3531 = vmatprep.subr.mxu0 0.0
        %3532 = vmatpush2.xpose.msra.mxu0 0.0
        %3533 = vmatprep.subr.mxu0 0.0
        %3534 = vmatpush2.xpose.msra.mxu0 0.0
        %3535 = vmatprep.subr.mxu0 0.0
        %3536 = vmatpush2.xpose.msra.mxu0 0.0
        %3537 = vmatprep.subr.mxu0 0.0
        %3538 = vmatpush2.xpose.msra.mxu0 0.0
        %3539 = vmatprep.subr.mxu0 0.0
        %3540 = vmatpush2.xpose.msra.mxu0 0.0
        %3541 = vmatprep.subr.mxu0 0.0
        %3542 = vmatpush2.xpose.msra.mxu0 0.0
        %3543 = vmatprep.subr.mxu0 0.0
        %3544 = vmatpush2.xpose.msra.mxu0 0.0
        %3545 = vmatprep.subr.mxu0 0.0
        %3546 = vmatpush2.xpose.msra.mxu0 0.0
        %3547 = vmatprep.subr.mxu0 0.0
        %3548 = vmatpush2.xpose.msra.mxu0 0.0
        %3549 = vmatprep.subr.mxu0 0.0
        %3550 = vmatpush2.xpose.msra.mxu0 0.0
        %3551 = vmatprep.subr.mxu0 0.0
        %3552 = vmatpush2.xpose.msra.mxu0 0.0
        %3553 = vmatprep.subr.mxu0 0.0
        %3554 = vmatpush2.xpose.msra.mxu0 0.0
        %3555 = vmatprep.subr.mxu0 0.0
        %3556 = vmatpush2.xpose.msra.mxu0 0.0
        %3557 = vmatprep.subr.mxu0 0.0
        %3558 = vmatpush2.xpose.msra.mxu0 0.0
        %3559 = vmatprep.mubr.f32.mxu0 0.0
        %v3560 = vand.u32 %v3490, 4294901760
        %v3561 = vsub.f32 %v3490, %v3560
        %v3562 = vand.u32 %v3561, 4294901760
        %v3563 = vsub.f32 %v3561, %v3562
        %v3564 = vand.u32 %v3563, 4294901760
        %3565 = vmatmul.mubr.f32.gmra.mxu0 %v3564
        %v3566 = vpop.f32.mrf.mxu0
        %v3567 = vadd.f32 0.0, %v3566
        %v3568 = vpop.f32.mrf.mxu0
        %3569 = vdwg.mxu0
        %3570 = vmatprep.subr.mxu0 0.0
        %3571 = vmatpush1.xpose.msra.mxu0 0.0
        %3572 = vmatprep.subr.mxu0 0.0
        %3573 = vmatpush1.xpose.msra.mxu0 0.0
        %3574 = vmatprep.subr.mxu0 0.0
        %3575 = vmatpush1.xpose.msra.mxu0 0.0
        %3576 = vmatprep.subr.mxu0 0.0
        %3577 = vmatpush1.xpose.msra.mxu0 0.0
        %3578 = vmatprep.subr.mxu0 0.0
        %3579 = vmatpush1.xpose.msra.mxu0 0.0
        %3580 = vmatprep.subr.mxu0 0.0
        %3581 = vmatpush1.xpose.msra.mxu0 0.0
        %3582 = vmatprep.subr.mxu0 0.0
        %3583 = vmatpush1.xpose.msra.mxu0 0.0
        %3584 = vmatprep.subr.mxu0 0.0
        %3585 = vmatpush1.xpose.msra.mxu0 0.0
        %3586 = vmatprep.subr.mxu0 0.0
        %3587 = vmatpush1.xpose.msra.mxu0 0.0
        %3588 = vmatprep.subr.mxu0 0.0
        %3589 = vmatpush1.xpose.msra.mxu0 0.0
        %3590 = vmatprep.subr.mxu0 0.0
        %3591 = vmatpush1.xpose.msra.mxu0 0.0
        %3592 = vmatprep.subr.mxu0 0.0
        %3593 = vmatpush1.xpose.msra.mxu0 0.0
        %3594 = vmatprep.subr.mxu0 0.0
        %3595 = vmatpush1.xpose.msra.mxu0 0.0
        %3596 = vmatprep.subr.mxu0 0.0
        %3597 = vmatpush1.xpose.msra.mxu0 0.0
        %3598 = vmatprep.subr.mxu0 0.0
        %3599 = vmatpush1.xpose.msra.mxu0 0.0
        %3600 = vmatprep.subr.mxu0 0.0
        %v3601 = vand.u32 %v3492, 4294901760
        %v3602 = vsub.f32 %v3492, %v3601
        %v3603 = vand.u32 %v3602, 4294901760
        %v3604 = vsub.f32 %v3602, %v3603
        %v3605 = vand.u32 %v3604, 4294901760
        %3606 = vmatpush1.xpose.msra.mxu0 %v3605
        %3607 = vmatprep.subr.mxu0 0.0
        %3608 = vmatpush2.xpose.msra.mxu0 0.0
        %3609 = vmatprep.subr.mxu0 0.0
        %3610 = vmatpush2.xpose.msra.mxu0 0.0
        %3611 = vmatprep.subr.mxu0 0.0
        %3612 = vmatpush2.xpose.msra.mxu0 0.0
        %3613 = vmatprep.subr.mxu0 0.0
        %3614 = vmatpush2.xpose.msra.mxu0 0.0
        %3615 = vmatprep.subr.mxu0 0.0
        %3616 = vmatpush2.xpose.msra.mxu0 0.0
        %3617 = vmatprep.subr.mxu0 0.0
        %3618 = vmatpush2.xpose.msra.mxu0 0.0
        %3619 = vmatprep.subr.mxu0 0.0
        %3620 = vmatpush2.xpose.msra.mxu0 0.0
        %3621 = vmatprep.subr.mxu0 0.0
        %3622 = vmatpush2.xpose.msra.mxu0 0.0
        %3623 = vmatprep.subr.mxu0 0.0
        %3624 = vmatpush2.xpose.msra.mxu0 0.0
        %3625 = vmatprep.subr.mxu0 0.0
        %3626 = vmatpush2.xpose.msra.mxu0 0.0
        %3627 = vmatprep.subr.mxu0 0.0
        %3628 = vmatpush2.xpose.msra.mxu0 0.0
        %3629 = vmatprep.subr.mxu0 0.0
        %3630 = vmatpush2.xpose.msra.mxu0 0.0
        %3631 = vmatprep.subr.mxu0 0.0
        %3632 = vmatpush2.xpose.msra.mxu0 0.0
        %3633 = vmatprep.subr.mxu0 0.0
        %3634 = vmatpush2.xpose.msra.mxu0 0.0
        %3635 = vmatprep.subr.mxu0 0.0
        %3636 = vmatpush2.xpose.msra.mxu0 0.0
        %3637 = vmatprep.subr.mxu0 0.0
        %3638 = vmatpush2.xpose.msra.mxu0 0.0
        %3639 = vmatprep.mubr.f32.mxu0 0.0
        %v3640 = vand.u32 %v3490, 4294901760
        %3641 = vmatmul.mubr.f32.gmra.mxu0 %v3640
        %v3642 = vpop.f32.mrf.mxu0
        %v3643 = vadd.f32 %v3567, %v3642
        %v3644 = vpop.f32.mrf.mxu0
        %3645 = vdwg.mxu0
        %3646 = vmatprep.subr.mxu0 0.0
        %3647 = vmatpush1.xpose.msra.mxu0 0.0
        %3648 = vmatprep.subr.mxu0 0.0
        %3649 = vmatpush1.xpose.msra.mxu0 0.0
        %3650 = vmatprep.subr.mxu0 0.0
        %3651 = vmatpush1.xpose.msra.mxu0 0.0
        %3652 = vmatprep.subr.mxu0 0.0
        %3653 = vmatpush1.xpose.msra.mxu0 0.0
        %3654 = vmatprep.subr.mxu0 0.0
        %3655 = vmatpush1.xpose.msra.mxu0 0.0
        %3656 = vmatprep.subr.mxu0 0.0
        %3657 = vmatpush1.xpose.msra.mxu0 0.0
        %3658 = vmatprep.subr.mxu0 0.0
        %3659 = vmatpush1.xpose.msra.mxu0 0.0
        %3660 = vmatprep.subr.mxu0 0.0
        %3661 = vmatpush1.xpose.msra.mxu0 0.0
        %3662 = vmatprep.subr.mxu0 0.0
        %3663 = vmatpush1.xpose.msra.mxu0 0.0
        %3664 = vmatprep.subr.mxu0 0.0
        %3665 = vmatpush1.xpose.msra.mxu0 0.0
        %3666 = vmatprep.subr.mxu0 0.0
        %3667 = vmatpush1.xpose.msra.mxu0 0.0
        %3668 = vmatprep.subr.mxu0 0.0
        %3669 = vmatpush1.xpose.msra.mxu0 0.0
        %3670 = vmatprep.subr.mxu0 0.0
        %3671 = vmatpush1.xpose.msra.mxu0 0.0
        %3672 = vmatprep.subr.mxu0 0.0
        %3673 = vmatpush1.xpose.msra.mxu0 0.0
        %3674 = vmatprep.subr.mxu0 0.0
        %3675 = vmatpush1.xpose.msra.mxu0 0.0
        %3676 = vmatprep.subr.mxu0 0.0
        %v3677 = vand.u32 %v3492, 4294901760
        %v3678 = vsub.f32 %v3492, %v3677
        %3679 = vmatpush1.xpose.msra.mxu0 %v3678
        %3680 = vmatprep.subr.mxu0 0.0
        %3681 = vmatpush2.xpose.msra.mxu0 0.0
        %3682 = vmatprep.subr.mxu0 0.0
        %3683 = vmatpush2.xpose.msra.mxu0 0.0
        %3684 = vmatprep.subr.mxu0 0.0
        %3685 = vmatpush2.xpose.msra.mxu0 0.0
        %3686 = vmatprep.subr.mxu0 0.0
        %3687 = vmatpush2.xpose.msra.mxu0 0.0
        %3688 = vmatprep.subr.mxu0 0.0
        %3689 = vmatpush2.xpose.msra.mxu0 0.0
        %3690 = vmatprep.subr.mxu0 0.0
        %3691 = vmatpush2.xpose.msra.mxu0 0.0
        %3692 = vmatprep.subr.mxu0 0.0
        %3693 = vmatpush2.xpose.msra.mxu0 0.0
        %3694 = vmatprep.subr.mxu0 0.0
        %3695 = vmatpush2.xpose.msra.mxu0 0.0
        %3696 = vmatprep.subr.mxu0 0.0
        %3697 = vmatpush2.xpose.msra.mxu0 0.0
        %3698 = vmatprep.subr.mxu0 0.0
        %3699 = vmatpush2.xpose.msra.mxu0 0.0
        %3700 = vmatprep.subr.mxu0 0.0
        %3701 = vmatpush2.xpose.msra.mxu0 0.0
        %3702 = vmatprep.subr.mxu0 0.0
        %3703 = vmatpush2.xpose.msra.mxu0 0.0
        %3704 = vmatprep.subr.mxu0 0.0
        %3705 = vmatpush2.xpose.msra.mxu0 0.0
        %3706 = vmatprep.subr.mxu0 0.0
        %3707 = vmatpush2.xpose.msra.mxu0 0.0
        %3708 = vmatprep.subr.mxu0 0.0
        %3709 = vmatpush2.xpose.msra.mxu0 0.0
        %3710 = vmatprep.subr.mxu0 0.0
        %3711 = vmatpush2.xpose.msra.mxu0 0.0
        %3712 = vmatprep.mubr.f32.mxu0 0.0
        %v3713 = vand.u32 %v3490, 4294901760
        %v3714 = vsub.f32 %v3490, %v3713
        %3715 = vmatmul.mubr.f32.gmra.mxu0 %v3714
        %v3716 = vpop.f32.mrf.mxu0
        %v3717 = vadd.f32 %v3643, %v3716
        %v3718 = vpop.f32.mrf.mxu0
        %3719 = vdwg.mxu0
        %3720 = vmatprep.subr.mxu0 0.0
        %3721 = vmatpush1.xpose.msra.mxu0 0.0
        %3722 = vmatprep.subr.mxu0 0.0
        %3723 = vmatpush1.xpose.msra.mxu0 0.0
        %3724 = vmatprep.subr.mxu0 0.0
        %3725 = vmatpush1.xpose.msra.mxu0 0.0
        %3726 = vmatprep.subr.mxu0 0.0
        %3727 = vmatpush1.xpose.msra.mxu0 0.0
        %3728 = vmatprep.subr.mxu0 0.0
        %3729 = vmatpush1.xpose.msra.mxu0 0.0
        %3730 = vmatprep.subr.mxu0 0.0
        %3731 = vmatpush1.xpose.msra.mxu0 0.0
        %3732 = vmatprep.subr.mxu0 0.0
        %3733 = vmatpush1.xpose.msra.mxu0 0.0
        %3734 = vmatprep.subr.mxu0 0.0
        %3735 = vmatpush1.xpose.msra.mxu0 0.0
        %3736 = vmatprep.subr.mxu0 0.0
        %3737 = vmatpush1.xpose.msra.mxu0 0.0
        %3738 = vmatprep.subr.mxu0 0.0
        %3739 = vmatpush1.xpose.msra.mxu0 0.0
        %3740 = vmatprep.subr.mxu0 0.0
        %3741 = vmatpush1.xpose.msra.mxu0 0.0
        %3742 = vmatprep.subr.mxu0 0.0
        %3743 = vmatpush1.xpose.msra.mxu0 0.0
        %3744 = vmatprep.subr.mxu0 0.0
        %3745 = vmatpush1.xpose.msra.mxu0 0.0
        %3746 = vmatprep.subr.mxu0 0.0
        %3747 = vmatpush1.xpose.msra.mxu0 0.0
        %3748 = vmatprep.subr.mxu0 0.0
        %3749 = vmatpush1.xpose.msra.mxu0 0.0
        %3750 = vmatprep.subr.mxu0 0.0
        %v3751 = vand.u32 %v3492, 4294901760
        %3752 = vmatpush1.xpose.msra.mxu0 %v3751
        %3753 = vmatprep.subr.mxu0 0.0
        %3754 = vmatpush2.xpose.msra.mxu0 0.0
        %3755 = vmatprep.subr.mxu0 0.0
        %3756 = vmatpush2.xpose.msra.mxu0 0.0
        %3757 = vmatprep.subr.mxu0 0.0
        %3758 = vmatpush2.xpose.msra.mxu0 0.0
        %3759 = vmatprep.subr.mxu0 0.0
        %3760 = vmatpush2.xpose.msra.mxu0 0.0
        %3761 = vmatprep.subr.mxu0 0.0
        %3762 = vmatpush2.xpose.msra.mxu0 0.0
        %3763 = vmatprep.subr.mxu0 0.0
        %3764 = vmatpush2.xpose.msra.mxu0 0.0
        %3765 = vmatprep.subr.mxu0 0.0
        %3766 = vmatpush2.xpose.msra.mxu0 0.0
        %3767 = vmatprep.subr.mxu0 0.0
        %3768 = vmatpush2.xpose.msra.mxu0 0.0
        %3769 = vmatprep.subr.mxu0 0.0
        %3770 = vmatpush2.xpose.msra.mxu0 0.0
        %3771 = vmatprep.subr.mxu0 0.0
        %3772 = vmatpush2.xpose.msra.mxu0 0.0
        %3773 = vmatprep.subr.mxu0 0.0
        %3774 = vmatpush2.xpose.msra.mxu0 0.0
        %3775 = vmatprep.subr.mxu0 0.0
        %3776 = vmatpush2.xpose.msra.mxu0 0.0
        %3777 = vmatprep.subr.mxu0 0.0
        %3778 = vmatpush2.xpose.msra.mxu0 0.0
        %3779 = vmatprep.subr.mxu0 0.0
        %3780 = vmatpush2.xpose.msra.mxu0 0.0
        %3781 = vmatprep.subr.mxu0 0.0
        %3782 = vmatpush2.xpose.msra.mxu0 0.0
        %3783 = vmatprep.subr.mxu0 0.0
        %3784 = vmatpush2.xpose.msra.mxu0 0.0
        %3785 = vmatprep.mubr.f32.mxu0 0.0
        %v3786 = vand.u32 %v3490, 4294901760
        %v3787 = vsub.f32 %v3490, %v3786
        %v3788 = vand.u32 %v3787, 4294901760
        %3789 = vmatmul.mubr.f32.gmra.mxu0 %v3788
        %v3790 = vpop.f32.mrf.mxu0
        %v3791 = vadd.f32 %v3717, %v3790
        %v3792 = vpop.f32.mrf.mxu0
        %3793 = vdwg.mxu0
        %3794 = vmatprep.subr.mxu0 0.0
        %3795 = vmatpush1.xpose.msra.mxu0 0.0
        %3796 = vmatprep.subr.mxu0 0.0
        %3797 = vmatpush1.xpose.msra.mxu0 0.0
        %3798 = vmatprep.subr.mxu0 0.0
        %3799 = vmatpush1.xpose.msra.mxu0 0.0
        %3800 = vmatprep.subr.mxu0 0.0
        %3801 = vmatpush1.xpose.msra.mxu0 0.0
        %3802 = vmatprep.subr.mxu0 0.0
        %3803 = vmatpush1.xpose.msra.mxu0 0.0
        %3804 = vmatprep.subr.mxu0 0.0
        %3805 = vmatpush1.xpose.msra.mxu0 0.0
        %3806 = vmatprep.subr.mxu0 0.0
        %3807 = vmatpush1.xpose.msra.mxu0 0.0
        %3808 = vmatprep.subr.mxu0 0.0
        %3809 = vmatpush1.xpose.msra.mxu0 0.0
        %3810 = vmatprep.subr.mxu0 0.0
        %3811 = vmatpush1.xpose.msra.mxu0 0.0
        %3812 = vmatprep.subr.mxu0 0.0
        %3813 = vmatpush1.xpose.msra.mxu0 0.0
        %3814 = vmatprep.subr.mxu0 0.0
        %3815 = vmatpush1.xpose.msra.mxu0 0.0
        %3816 = vmatprep.subr.mxu0 0.0
        %3817 = vmatpush1.xpose.msra.mxu0 0.0
        %3818 = vmatprep.subr.mxu0 0.0
        %3819 = vmatpush1.xpose.msra.mxu0 0.0
        %3820 = vmatprep.subr.mxu0 0.0
        %3821 = vmatpush1.xpose.msra.mxu0 0.0
        %3822 = vmatprep.subr.mxu0 0.0
        %3823 = vmatpush1.xpose.msra.mxu0 0.0
        %3824 = vmatprep.subr.mxu0 0.0
        %v3825 = vand.u32 %v3492, 4294901760
        %v3826 = vsub.f32 %v3492, %v3825
        %v3827 = vand.u32 %v3826, 4294901760
        %3828 = vmatpush1.xpose.msra.mxu0 %v3827
        %3829 = vmatprep.subr.mxu0 0.0
        %3830 = vmatpush2.xpose.msra.mxu0 0.0
        %3831 = vmatprep.subr.mxu0 0.0
        %3832 = vmatpush2.xpose.msra.mxu0 0.0
        %3833 = vmatprep.subr.mxu0 0.0
        %3834 = vmatpush2.xpose.msra.mxu0 0.0
        %3835 = vmatprep.subr.mxu0 0.0
        %3836 = vmatpush2.xpose.msra.mxu0 0.0
        %3837 = vmatprep.subr.mxu0 0.0
        %3838 = vmatpush2.xpose.msra.mxu0 0.0
        %3839 = vmatprep.subr.mxu0 0.0
        %3840 = vmatpush2.xpose.msra.mxu0 0.0
        %3841 = vmatprep.subr.mxu0 0.0
        %3842 = vmatpush2.xpose.msra.mxu0 0.0
        %3843 = vmatprep.subr.mxu0 0.0
        %3844 = vmatpush2.xpose.msra.mxu0 0.0
        %3845 = vmatprep.subr.mxu0 0.0
        %3846 = vmatpush2.xpose.msra.mxu0 0.0
        %3847 = vmatprep.subr.mxu0 0.0
        %3848 = vmatpush2.xpose.msra.mxu0 0.0
        %3849 = vmatprep.subr.mxu0 0.0
        %3850 = vmatpush2.xpose.msra.mxu0 0.0
        %3851 = vmatprep.subr.mxu0 0.0
        %3852 = vmatpush2.xpose.msra.mxu0 0.0
        %3853 = vmatprep.subr.mxu0 0.0
        %3854 = vmatpush2.xpose.msra.mxu0 0.0
        %3855 = vmatprep.subr.mxu0 0.0
        %3856 = vmatpush2.xpose.msra.mxu0 0.0
        %3857 = vmatprep.subr.mxu0 0.0
        %3858 = vmatpush2.xpose.msra.mxu0 0.0
        %3859 = vmatprep.subr.mxu0 0.0
        %3860 = vmatpush2.xpose.msra.mxu0 0.0
        %3861 = vmatprep.mubr.f32.mxu0 0.0
        %v3862 = vand.u32 %v3490, 4294901760
        %3863 = vmatmul.mubr.f32.gmra.mxu0 %v3862
        %v3864 = vpop.f32.mrf.mxu0
        %v3865 = vadd.f32 %v3791, %v3864
        %v3866 = vpop.f32.mrf.mxu0
        %3867 = vdwg.mxu0
        %3868 = vmatprep.subr.mxu0 0.0
        %3869 = vmatpush1.xpose.msra.mxu0 0.0
        %3870 = vmatprep.subr.mxu0 0.0
        %3871 = vmatpush1.xpose.msra.mxu0 0.0
        %3872 = vmatprep.subr.mxu0 0.0
        %3873 = vmatpush1.xpose.msra.mxu0 0.0
        %3874 = vmatprep.subr.mxu0 0.0
        %3875 = vmatpush1.xpose.msra.mxu0 0.0
        %3876 = vmatprep.subr.mxu0 0.0
        %3877 = vmatpush1.xpose.msra.mxu0 0.0
        %3878 = vmatprep.subr.mxu0 0.0
        %3879 = vmatpush1.xpose.msra.mxu0 0.0
        %3880 = vmatprep.subr.mxu0 0.0
        %3881 = vmatpush1.xpose.msra.mxu0 0.0
        %3882 = vmatprep.subr.mxu0 0.0
        %3883 = vmatpush1.xpose.msra.mxu0 0.0
        %3884 = vmatprep.subr.mxu0 0.0
        %3885 = vmatpush1.xpose.msra.mxu0 0.0
        %3886 = vmatprep.subr.mxu0 0.0
        %3887 = vmatpush1.xpose.msra.mxu0 0.0
        %3888 = vmatprep.subr.mxu0 0.0
        %3889 = vmatpush1.xpose.msra.mxu0 0.0
        %3890 = vmatprep.subr.mxu0 0.0
        %3891 = vmatpush1.xpose.msra.mxu0 0.0
        %3892 = vmatprep.subr.mxu0 0.0
        %3893 = vmatpush1.xpose.msra.mxu0 0.0
        %3894 = vmatprep.subr.mxu0 0.0
        %3895 = vmatpush1.xpose.msra.mxu0 0.0
        %3896 = vmatprep.subr.mxu0 0.0
        %3897 = vmatpush1.xpose.msra.mxu0 0.0
        %3898 = vmatprep.subr.mxu0 0.0
        %v3899 = vand.u32 %v3492, 4294901760
        %3900 = vmatpush1.xpose.msra.mxu0 %v3899
        %3901 = vmatprep.subr.mxu0 0.0
        %3902 = vmatpush2.xpose.msra.mxu0 0.0
        %3903 = vmatprep.subr.mxu0 0.0
        %3904 = vmatpush2.xpose.msra.mxu0 0.0
        %3905 = vmatprep.subr.mxu0 0.0
        %3906 = vmatpush2.xpose.msra.mxu0 0.0
        %3907 = vmatprep.subr.mxu0 0.0
        %3908 = vmatpush2.xpose.msra.mxu0 0.0
        %3909 = vmatprep.subr.mxu0 0.0
        %3910 = vmatpush2.xpose.msra.mxu0 0.0
        %3911 = vmatprep.subr.mxu0 0.0
        %3912 = vmatpush2.xpose.msra.mxu0 0.0
        %3913 = vmatprep.subr.mxu0 0.0
        %3914 = vmatpush2.xpose.msra.mxu0 0.0
        %3915 = vmatprep.subr.mxu0 0.0
        %3916 = vmatpush2.xpose.msra.mxu0 0.0
        %3917 = vmatprep.subr.mxu0 0.0
        %3918 = vmatpush2.xpose.msra.mxu0 0.0
        %3919 = vmatprep.subr.mxu0 0.0
        %3920 = vmatpush2.xpose.msra.mxu0 0.0
        %3921 = vmatprep.subr.mxu0 0.0
        %3922 = vmatpush2.xpose.msra.mxu0 0.0
        %3923 = vmatprep.subr.mxu0 0.0
        %3924 = vmatpush2.xpose.msra.mxu0 0.0
        %3925 = vmatprep.subr.mxu0 0.0
        %3926 = vmatpush2.xpose.msra.mxu0 0.0
        %3927 = vmatprep.subr.mxu0 0.0
        %3928 = vmatpush2.xpose.msra.mxu0 0.0
        %3929 = vmatprep.subr.mxu0 0.0
        %3930 = vmatpush2.xpose.msra.mxu0 0.0
        %3931 = vmatprep.subr.mxu0 0.0
        %3932 = vmatpush2.xpose.msra.mxu0 0.0
        %3933 = vmatprep.mubr.f32.mxu0 0.0
        %v3934 = vand.u32 %v3490, 4294901760
        %3935 = vmatmul.mubr.f32.gmra.mxu0 %v3934
        %v3936 = vpop.f32.mrf.mxu0
        %v3937 = vadd.f32 %v3865, %v3936
        %v3938 = vpop.f32.mrf.mxu0
        %3939 = vdwg.mxu0
        %v3940 = vmul.f32 %v3937, 0.17677669
        %v3941 = vsel %vm3023, -1e+09, %v3940
        %v3942 = vsel %vm3025, %v3941, -inf
        %3943 = vmax.xlane.f32.xlu0 %v3942
        %v3944 = vpop.xlane.xlu0 %3943
        %v3945 = vsub.f32 %v3941, %v3944
        %v3946 = vmul.f32 %v3945, 1.442695
        %v3947 = vpow.pop %v3946
        %v3948 = vsel %vm3025, %v3947, 0.0
        %3949 = vadd.xlane.f32.xlu0 %v3948
        %v3950 = vpop.xlane.xlu0 %3949
        %v3951 = vrcp.pop %v3950
        %v3952 = vmul.f32 %v3947, %v3951
        %3954 = vrot.lane.b32.xlu0 %v2559, 96
        %v3955 = vpop.permute.xlu0 %3954
        %v3958 = vsel %vm3025, %v3952, 0
        %3960 = vmatprep.subr.mxu0 0.0
        %3961 = vmatpush1.msra.mxu0 0.0
        %3962 = vmatprep.subr.mxu0 0.0
        %3963 = vmatpush1.msra.mxu0 0.0
        %3964 = vmatprep.subr.mxu0 0.0
        %3965 = vmatpush1.msra.mxu0 0.0
        %3966 = vmatprep.subr.mxu0 0.0
        %3967 = vmatpush1.msra.mxu0 0.0
        %3968 = vmatprep.subr.mxu0 0.0
        %3969 = vmatpush1.msra.mxu0 0.0
        %3970 = vmatprep.subr.mxu0 0.0
        %3971 = vmatpush1.msra.mxu0 0.0
        %3972 = vmatprep.subr.mxu0 0.0
        %3973 = vmatpush1.msra.mxu0 0.0
        %3974 = vmatprep.subr.mxu0 0.0
        %3975 = vmatpush1.msra.mxu0 0.0
        %3976 = vmatprep.subr.mxu0 0.0
        %3977 = vmatpush1.msra.mxu0 0.0
        %3978 = vmatprep.subr.mxu0 0.0
        %3979 = vmatpush1.msra.mxu0 0.0
        %3980 = vmatprep.subr.mxu0 0.0
        %3981 = vmatpush1.msra.mxu0 0.0
        %3982 = vmatprep.subr.mxu0 0.0
        %3983 = vmatpush1.msra.mxu0 0.0
        %3984 = vmatprep.subr.mxu0 0.0
        %3985 = vmatpush1.msra.mxu0 0.0
        %3986 = vmatprep.subr.mxu0 0.0
        %3987 = vmatpush1.msra.mxu0 0.0
        %3988 = vmatprep.subr.mxu0 0.0
        %3989 = vmatpush1.msra.mxu0 0.0
        %3990 = vmatprep.subr.mxu0 0.0
        %v3991 = vand.u32 %v3955, 4294901760
        %3992 = vmatpush1.msra.mxu0 %v3991
        %3993 = vmatprep.subr.mxu0 0.0
        %3994 = vmatpush2.msra.mxu0 0.0
        %3995 = vmatprep.subr.mxu0 0.0
        %3996 = vmatpush2.msra.mxu0 0.0
        %3997 = vmatprep.subr.mxu0 0.0
        %3998 = vmatpush2.msra.mxu0 0.0
        %3999 = vmatprep.subr.mxu0 0.0
        %4000 = vmatpush2.msra.mxu0 0.0
        %4001 = vmatprep.subr.mxu0 0.0
        %4002 = vmatpush2.msra.mxu0 0.0
        %4003 = vmatprep.subr.mxu0 0.0
        %4004 = vmatpush2.msra.mxu0 0.0
        %4005 = vmatprep.subr.mxu0 0.0
        %4006 = vmatpush2.msra.mxu0 0.0
        %4007 = vmatprep.subr.mxu0 0.0
        %4008 = vmatpush2.msra.mxu0 0.0
        %4009 = vmatprep.subr.mxu0 0.0
        %4010 = vmatpush2.msra.mxu0 0.0
        %4011 = vmatprep.subr.mxu0 0.0
        %4012 = vmatpush2.msra.mxu0 0.0
        %4013 = vmatprep.subr.mxu0 0.0
        %4014 = vmatpush2.msra.mxu0 0.0
        %4015 = vmatprep.subr.mxu0 0.0
        %4016 = vmatpush2.msra.mxu0 0.0
        %4017 = vmatprep.subr.mxu0 0.0
        %4018 = vmatpush2.msra.mxu0 0.0
        %4019 = vmatprep.subr.mxu0 0.0
        %4020 = vmatpush2.msra.mxu0 0.0
        %4021 = vmatprep.subr.mxu0 0.0
        %4022 = vmatpush2.msra.mxu0 0.0
        %4023 = vmatprep.subr.mxu0 0.0
        %4024 = vmatpush2.msra.mxu0 0.0
        %4025 = vmatprep.mubr.f32.mxu0 0.0
        %v4026 = vand.u32 %v3958, 4294901760
        %v4027 = vsub.f32 %v3958, %v4026
        %v4028 = vand.u32 %v4027, 4294901760
        %v4029 = vsub.f32 %v4027, %v4028
        %v4030 = vand.u32 %v4029, 4294901760
        %4031 = vmatmul.mubr.f32.gmra.mxu0 %v4030
        %v4032 = vpop.f32.mrf.mxu0
        %v4033 = vadd.f32 0.0, %v4032
        %v4034 = vpop.f32.mrf.mxu0
        %4035 = vdwg.mxu0
        %4036 = vmatprep.subr.mxu0 0.0
        %4037 = vmatpush1.msra.mxu0 0.0
        %4038 = vmatprep.subr.mxu0 0.0
        %4039 = vmatpush1.msra.mxu0 0.0
        %4040 = vmatprep.subr.mxu0 0.0
        %4041 = vmatpush1.msra.mxu0 0.0
        %4042 = vmatprep.subr.mxu0 0.0
        %4043 = vmatpush1.msra.mxu0 0.0
        %4044 = vmatprep.subr.mxu0 0.0
        %4045 = vmatpush1.msra.mxu0 0.0
        %4046 = vmatprep.subr.mxu0 0.0
        %4047 = vmatpush1.msra.mxu0 0.0
        %4048 = vmatprep.subr.mxu0 0.0
        %4049 = vmatpush1.msra.mxu0 0.0
        %4050 = vmatprep.subr.mxu0 0.0
        %4051 = vmatpush1.msra.mxu0 0.0
        %4052 = vmatprep.subr.mxu0 0.0
        %4053 = vmatpush1.msra.mxu0 0.0
        %4054 = vmatprep.subr.mxu0 0.0
        %4055 = vmatpush1.msra.mxu0 0.0
        %4056 = vmatprep.subr.mxu0 0.0
        %4057 = vmatpush1.msra.mxu0 0.0
        %4058 = vmatprep.subr.mxu0 0.0
        %4059 = vmatpush1.msra.mxu0 0.0
        %4060 = vmatprep.subr.mxu0 0.0
        %4061 = vmatpush1.msra.mxu0 0.0
        %4062 = vmatprep.subr.mxu0 0.0
        %4063 = vmatpush1.msra.mxu0 0.0
        %4064 = vmatprep.subr.mxu0 0.0
        %4065 = vmatpush1.msra.mxu0 0.0
        %4066 = vmatprep.subr.mxu0 0.0
        %v4067 = vand.u32 %v3955, 4294901760
        %v4068 = vsub.f32 %v3955, %v4067
        %v4069 = vand.u32 %v4068, 4294901760
        %v4070 = vsub.f32 %v4068, %v4069
        %v4071 = vand.u32 %v4070, 4294901760
        %4072 = vmatpush1.msra.mxu0 %v4071
        %4073 = vmatprep.subr.mxu0 0.0
        %4074 = vmatpush2.msra.mxu0 0.0
        %4075 = vmatprep.subr.mxu0 0.0
        %4076 = vmatpush2.msra.mxu0 0.0
        %4077 = vmatprep.subr.mxu0 0.0
        %4078 = vmatpush2.msra.mxu0 0.0
        %4079 = vmatprep.subr.mxu0 0.0
        %4080 = vmatpush2.msra.mxu0 0.0
        %4081 = vmatprep.subr.mxu0 0.0
        %4082 = vmatpush2.msra.mxu0 0.0
        %4083 = vmatprep.subr.mxu0 0.0
        %4084 = vmatpush2.msra.mxu0 0.0
        %4085 = vmatprep.subr.mxu0 0.0
        %4086 = vmatpush2.msra.mxu0 0.0
        %4087 = vmatprep.subr.mxu0 0.0
        %4088 = vmatpush2.msra.mxu0 0.0
        %4089 = vmatprep.subr.mxu0 0.0
        %4090 = vmatpush2.msra.mxu0 0.0
        %4091 = vmatprep.subr.mxu0 0.0
        %4092 = vmatpush2.msra.mxu0 0.0
        %4093 = vmatprep.subr.mxu0 0.0
        %4094 = vmatpush2.msra.mxu0 0.0
        %4095 = vmatprep.subr.mxu0 0.0
        %4096 = vmatpush2.msra.mxu0 0.0
        %4097 = vmatprep.subr.mxu0 0.0
        %4098 = vmatpush2.msra.mxu0 0.0
        %4099 = vmatprep.subr.mxu0 0.0
        %4100 = vmatpush2.msra.mxu0 0.0
        %4101 = vmatprep.subr.mxu0 0.0
        %4102 = vmatpush2.msra.mxu0 0.0
        %4103 = vmatprep.subr.mxu0 0.0
        %4104 = vmatpush2.msra.mxu0 0.0
        %4105 = vmatprep.mubr.f32.mxu0 0.0
        %v4106 = vand.u32 %v3958, 4294901760
        %4107 = vmatmul.mubr.f32.gmra.mxu0 %v4106
        %v4108 = vpop.f32.mrf.mxu0
        %v4109 = vadd.f32 %v4033, %v4108
        %v4110 = vpop.f32.mrf.mxu0
        %4111 = vdwg.mxu0
        %4112 = vmatprep.subr.mxu0 0.0
        %4113 = vmatpush1.msra.mxu0 0.0
        %4114 = vmatprep.subr.mxu0 0.0
        %4115 = vmatpush1.msra.mxu0 0.0
        %4116 = vmatprep.subr.mxu0 0.0
        %4117 = vmatpush1.msra.mxu0 0.0
        %4118 = vmatprep.subr.mxu0 0.0
        %4119 = vmatpush1.msra.mxu0 0.0
        %4120 = vmatprep.subr.mxu0 0.0
        %4121 = vmatpush1.msra.mxu0 0.0
        %4122 = vmatprep.subr.mxu0 0.0
        %4123 = vmatpush1.msra.mxu0 0.0
        %4124 = vmatprep.subr.mxu0 0.0
        %4125 = vmatpush1.msra.mxu0 0.0
        %4126 = vmatprep.subr.mxu0 0.0
        %4127 = vmatpush1.msra.mxu0 0.0
        %4128 = vmatprep.subr.mxu0 0.0
        %4129 = vmatpush1.msra.mxu0 0.0
        %4130 = vmatprep.subr.mxu0 0.0
        %4131 = vmatpush1.msra.mxu0 0.0
        %4132 = vmatprep.subr.mxu0 0.0
        %4133 = vmatpush1.msra.mxu0 0.0
        %4134 = vmatprep.subr.mxu0 0.0
        %4135 = vmatpush1.msra.mxu0 0.0
        %4136 = vmatprep.subr.mxu0 0.0
        %4137 = vmatpush1.msra.mxu0 0.0
        %4138 = vmatprep.subr.mxu0 0.0
        %4139 = vmatpush1.msra.mxu0 0.0
        %4140 = vmatprep.subr.mxu0 0.0
        %4141 = vmatpush1.msra.mxu0 0.0
        %4142 = vmatprep.subr.mxu0 0.0
        %v4143 = vand.u32 %v3955, 4294901760
        %v4144 = vsub.f32 %v3955, %v4143
        %4145 = vmatpush1.msra.mxu0 %v4144
        %4146 = vmatprep.subr.mxu0 0.0
        %4147 = vmatpush2.msra.mxu0 0.0
        %4148 = vmatprep.subr.mxu0 0.0
        %4149 = vmatpush2.msra.mxu0 0.0
        %4150 = vmatprep.subr.mxu0 0.0
        %4151 = vmatpush2.msra.mxu0 0.0
        %4152 = vmatprep.subr.mxu0 0.0
        %4153 = vmatpush2.msra.mxu0 0.0
        %4154 = vmatprep.subr.mxu0 0.0
        %4155 = vmatpush2.msra.mxu0 0.0
        %4156 = vmatprep.subr.mxu0 0.0
        %4157 = vmatpush2.msra.mxu0 0.0
        %4158 = vmatprep.subr.mxu0 0.0
        %4159 = vmatpush2.msra.mxu0 0.0
        %4160 = vmatprep.subr.mxu0 0.0
        %4161 = vmatpush2.msra.mxu0 0.0
        %4162 = vmatprep.subr.mxu0 0.0
        %4163 = vmatpush2.msra.mxu0 0.0
        %4164 = vmatprep.subr.mxu0 0.0
        %4165 = vmatpush2.msra.mxu0 0.0
        %4166 = vmatprep.subr.mxu0 0.0
        %4167 = vmatpush2.msra.mxu0 0.0
        %4168 = vmatprep.subr.mxu0 0.0
        %4169 = vmatpush2.msra.mxu0 0.0
        %4170 = vmatprep.subr.mxu0 0.0
        %4171 = vmatpush2.msra.mxu0 0.0
        %4172 = vmatprep.subr.mxu0 0.0
        %4173 = vmatpush2.msra.mxu0 0.0
        %4174 = vmatprep.subr.mxu0 0.0
        %4175 = vmatpush2.msra.mxu0 0.0
        %4176 = vmatprep.subr.mxu0 0.0
        %4177 = vmatpush2.msra.mxu0 0.0
        %4178 = vmatprep.mubr.f32.mxu0 0.0
        %v4179 = vand.u32 %v3958, 4294901760
        %v4180 = vsub.f32 %v3958, %v4179
        %4181 = vmatmul.mubr.f32.gmra.mxu0 %v4180
        %v4182 = vpop.f32.mrf.mxu0
        %v4183 = vadd.f32 %v4109, %v4182
        %v4184 = vpop.f32.mrf.mxu0
        %4185 = vdwg.mxu0
        %4186 = vmatprep.subr.mxu0 0.0
        %4187 = vmatpush1.msra.mxu0 0.0
        %4188 = vmatprep.subr.mxu0 0.0
        %4189 = vmatpush1.msra.mxu0 0.0
        %4190 = vmatprep.subr.mxu0 0.0
        %4191 = vmatpush1.msra.mxu0 0.0
        %4192 = vmatprep.subr.mxu0 0.0
        %4193 = vmatpush1.msra.mxu0 0.0
        %4194 = vmatprep.subr.mxu0 0.0
        %4195 = vmatpush1.msra.mxu0 0.0
        %4196 = vmatprep.subr.mxu0 0.0
        %4197 = vmatpush1.msra.mxu0 0.0
        %4198 = vmatprep.subr.mxu0 0.0
        %4199 = vmatpush1.msra.mxu0 0.0
        %4200 = vmatprep.subr.mxu0 0.0
        %4201 = vmatpush1.msra.mxu0 0.0
        %4202 = vmatprep.subr.mxu0 0.0
        %4203 = vmatpush1.msra.mxu0 0.0
        %4204 = vmatprep.subr.mxu0 0.0
        %4205 = vmatpush1.msra.mxu0 0.0
        %4206 = vmatprep.subr.mxu0 0.0
        %4207 = vmatpush1.msra.mxu0 0.0
        %4208 = vmatprep.subr.mxu0 0.0
        %4209 = vmatpush1.msra.mxu0 0.0
        %4210 = vmatprep.subr.mxu0 0.0
        %4211 = vmatpush1.msra.mxu0 0.0
        %4212 = vmatprep.subr.mxu0 0.0
        %4213 = vmatpush1.msra.mxu0 0.0
        %4214 = vmatprep.subr.mxu0 0.0
        %4215 = vmatpush1.msra.mxu0 0.0
        %4216 = vmatprep.subr.mxu0 0.0
        %v4217 = vand.u32 %v3955, 4294901760
        %4218 = vmatpush1.msra.mxu0 %v4217
        %4219 = vmatprep.subr.mxu0 0.0
        %4220 = vmatpush2.msra.mxu0 0.0
        %4221 = vmatprep.subr.mxu0 0.0
        %4222 = vmatpush2.msra.mxu0 0.0
        %4223 = vmatprep.subr.mxu0 0.0
        %4224 = vmatpush2.msra.mxu0 0.0
        %4225 = vmatprep.subr.mxu0 0.0
        %4226 = vmatpush2.msra.mxu0 0.0
        %4227 = vmatprep.subr.mxu0 0.0
        %4228 = vmatpush2.msra.mxu0 0.0
        %4229 = vmatprep.subr.mxu0 0.0
        %4230 = vmatpush2.msra.mxu0 0.0
        %4231 = vmatprep.subr.mxu0 0.0
        %4232 = vmatpush2.msra.mxu0 0.0
        %4233 = vmatprep.subr.mxu0 0.0
        %4234 = vmatpush2.msra.mxu0 0.0
        %4235 = vmatprep.subr.mxu0 0.0
        %4236 = vmatpush2.msra.mxu0 0.0
        %4237 = vmatprep.subr.mxu0 0.0
        %4238 = vmatpush2.msra.mxu0 0.0
        %4239 = vmatprep.subr.mxu0 0.0
        %4240 = vmatpush2.msra.mxu0 0.0
        %4241 = vmatprep.subr.mxu0 0.0
        %4242 = vmatpush2.msra.mxu0 0.0
        %4243 = vmatprep.subr.mxu0 0.0
        %4244 = vmatpush2.msra.mxu0 0.0
        %4245 = vmatprep.subr.mxu0 0.0
        %4246 = vmatpush2.msra.mxu0 0.0
        %4247 = vmatprep.subr.mxu0 0.0
        %4248 = vmatpush2.msra.mxu0 0.0
        %4249 = vmatprep.subr.mxu0 0.0
        %4250 = vmatpush2.msra.mxu0 0.0
        %4251 = vmatprep.mubr.f32.mxu0 0.0
        %v4252 = vand.u32 %v3958, 4294901760
        %v4253 = vsub.f32 %v3958, %v4252
        %v4254 = vand.u32 %v4253, 4294901760
        %4255 = vmatmul.mubr.f32.gmra.mxu0 %v4254
        %v4256 = vpop.f32.mrf.mxu0
        %v4257 = vadd.f32 %v4183, %v4256
        %v4258 = vpop.f32.mrf.mxu0
        %4259 = vdwg.mxu0
        %4260 = vmatprep.subr.mxu0 0.0
        %4261 = vmatpush1.msra.mxu0 0.0
        %4262 = vmatprep.subr.mxu0 0.0
        %4263 = vmatpush1.msra.mxu0 0.0
        %4264 = vmatprep.subr.mxu0 0.0
        %4265 = vmatpush1.msra.mxu0 0.0
        %4266 = vmatprep.subr.mxu0 0.0
        %4267 = vmatpush1.msra.mxu0 0.0
        %4268 = vmatprep.subr.mxu0 0.0
        %4269 = vmatpush1.msra.mxu0 0.0
        %4270 = vmatprep.subr.mxu0 0.0
        %4271 = vmatpush1.msra.mxu0 0.0
        %4272 = vmatprep.subr.mxu0 0.0
        %4273 = vmatpush1.msra.mxu0 0.0
        %4274 = vmatprep.subr.mxu0 0.0
        %4275 = vmatpush1.msra.mxu0 0.0
        %4276 = vmatprep.subr.mxu0 0.0
        %4277 = vmatpush1.msra.mxu0 0.0
        %4278 = vmatprep.subr.mxu0 0.0
        %4279 = vmatpush1.msra.mxu0 0.0
        %4280 = vmatprep.subr.mxu0 0.0
        %4281 = vmatpush1.msra.mxu0 0.0
        %4282 = vmatprep.subr.mxu0 0.0
        %4283 = vmatpush1.msra.mxu0 0.0
        %4284 = vmatprep.subr.mxu0 0.0
        %4285 = vmatpush1.msra.mxu0 0.0
        %4286 = vmatprep.subr.mxu0 0.0
        %4287 = vmatpush1.msra.mxu0 0.0
        %4288 = vmatprep.subr.mxu0 0.0
        %4289 = vmatpush1.msra.mxu0 0.0
        %4290 = vmatprep.subr.mxu0 0.0
        %v4291 = vand.u32 %v3955, 4294901760
        %v4292 = vsub.f32 %v3955, %v4291
        %v4293 = vand.u32 %v4292, 4294901760
        %4294 = vmatpush1.msra.mxu0 %v4293
        %4295 = vmatprep.subr.mxu0 0.0
        %4296 = vmatpush2.msra.mxu0 0.0
        %4297 = vmatprep.subr.mxu0 0.0
        %4298 = vmatpush2.msra.mxu0 0.0
        %4299 = vmatprep.subr.mxu0 0.0
        %4300 = vmatpush2.msra.mxu0 0.0
        %4301 = vmatprep.subr.mxu0 0.0
        %4302 = vmatpush2.msra.mxu0 0.0
        %4303 = vmatprep.subr.mxu0 0.0
        %4304 = vmatpush2.msra.mxu0 0.0
        %4305 = vmatprep.subr.mxu0 0.0
        %4306 = vmatpush2.msra.mxu0 0.0
        %4307 = vmatprep.subr.mxu0 0.0
        %4308 = vmatpush2.msra.mxu0 0.0
        %4309 = vmatprep.subr.mxu0 0.0
        %4310 = vmatpush2.msra.mxu0 0.0
        %4311 = vmatprep.subr.mxu0 0.0
        %4312 = vmatpush2.msra.mxu0 0.0
        %4313 = vmatprep.subr.mxu0 0.0
        %4314 = vmatpush2.msra.mxu0 0.0
        %4315 = vmatprep.subr.mxu0 0.0
        %4316 = vmatpush2.msra.mxu0 0.0
        %4317 = vmatprep.subr.mxu0 0.0
        %4318 = vmatpush2.msra.mxu0 0.0
        %4319 = vmatprep.subr.mxu0 0.0
        %4320 = vmatpush2.msra.mxu0 0.0
        %4321 = vmatprep.subr.mxu0 0.0
        %4322 = vmatpush2.msra.mxu0 0.0
        %4323 = vmatprep.subr.mxu0 0.0
        %4324 = vmatpush2.msra.mxu0 0.0
        %4325 = vmatprep.subr.mxu0 0.0
        %4326 = vmatpush2.msra.mxu0 0.0
        %4327 = vmatprep.mubr.f32.mxu0 0.0
        %v4328 = vand.u32 %v3958, 4294901760
        %4329 = vmatmul.mubr.f32.gmra.mxu0 %v4328
        %v4330 = vpop.f32.mrf.mxu0
        %v4331 = vadd.f32 %v4257, %v4330
        %v4332 = vpop.f32.mrf.mxu0
        %4333 = vdwg.mxu0
        %4334 = vmatprep.subr.mxu0 0.0
        %4335 = vmatpush1.msra.mxu0 0.0
        %4336 = vmatprep.subr.mxu0 0.0
        %4337 = vmatpush1.msra.mxu0 0.0
        %4338 = vmatprep.subr.mxu0 0.0
        %4339 = vmatpush1.msra.mxu0 0.0
        %4340 = vmatprep.subr.mxu0 0.0
        %4341 = vmatpush1.msra.mxu0 0.0
        %4342 = vmatprep.subr.mxu0 0.0
        %4343 = vmatpush1.msra.mxu0 0.0
        %4344 = vmatprep.subr.mxu0 0.0
        %4345 = vmatpush1.msra.mxu0 0.0
        %4346 = vmatprep.subr.mxu0 0.0
        %4347 = vmatpush1.msra.mxu0 0.0
        %4348 = vmatprep.subr.mxu0 0.0
        %4349 = vmatpush1.msra.mxu0 0.0
        %4350 = vmatprep.subr.mxu0 0.0
        %4351 = vmatpush1.msra.mxu0 0.0
        %4352 = vmatprep.subr.mxu0 0.0
        %4353 = vmatpush1.msra.mxu0 0.0
        %4354 = vmatprep.subr.mxu0 0.0
        %4355 = vmatpush1.msra.mxu0 0.0
        %4356 = vmatprep.subr.mxu0 0.0
        %4357 = vmatpush1.msra.mxu0 0.0
        %4358 = vmatprep.subr.mxu0 0.0
        %4359 = vmatpush1.msra.mxu0 0.0
        %4360 = vmatprep.subr.mxu0 0.0
        %4361 = vmatpush1.msra.mxu0 0.0
        %4362 = vmatprep.subr.mxu0 0.0
        %4363 = vmatpush1.msra.mxu0 0.0
        %4364 = vmatprep.subr.mxu0 0.0
        %v4365 = vand.u32 %v3955, 4294901760
        %4366 = vmatpush1.msra.mxu0 %v4365
        %4367 = vmatprep.subr.mxu0 0.0
        %4368 = vmatpush2.msra.mxu0 0.0
        %4369 = vmatprep.subr.mxu0 0.0
        %4370 = vmatpush2.msra.mxu0 0.0
        %4371 = vmatprep.subr.mxu0 0.0
        %4372 = vmatpush2.msra.mxu0 0.0
        %4373 = vmatprep.subr.mxu0 0.0
        %4374 = vmatpush2.msra.mxu0 0.0
        %4375 = vmatprep.subr.mxu0 0.0
        %4376 = vmatpush2.msra.mxu0 0.0
        %4377 = vmatprep.subr.mxu0 0.0
        %4378 = vmatpush2.msra.mxu0 0.0
        %4379 = vmatprep.subr.mxu0 0.0
        %4380 = vmatpush2.msra.mxu0 0.0
        %4381 = vmatprep.subr.mxu0 0.0
        %4382 = vmatpush2.msra.mxu0 0.0
        %4383 = vmatprep.subr.mxu0 0.0
        %4384 = vmatpush2.msra.mxu0 0.0
        %4385 = vmatprep.subr.mxu0 0.0
        %4386 = vmatpush2.msra.mxu0 0.0
        %4387 = vmatprep.subr.mxu0 0.0
        %4388 = vmatpush2.msra.mxu0 0.0
        %4389 = vmatprep.subr.mxu0 0.0
        %4390 = vmatpush2.msra.mxu0 0.0
        %4391 = vmatprep.subr.mxu0 0.0
        %4392 = vmatpush2.msra.mxu0 0.0
        %4393 = vmatprep.subr.mxu0 0.0
        %4394 = vmatpush2.msra.mxu0 0.0
        %4395 = vmatprep.subr.mxu0 0.0
        %4396 = vmatpush2.msra.mxu0 0.0
        %4397 = vmatprep.subr.mxu0 0.0
        %4398 = vmatpush2.msra.mxu0 0.0
        %4399 = vmatprep.mubr.f32.mxu0 0.0
        %v4400 = vand.u32 %v3958, 4294901760
        %4401 = vmatmul.mubr.f32.gmra.mxu0 %v4400
        %v4402 = vpop.f32.mrf.mxu0
        %v4403 = vadd.f32 %v4331, %v4402
        %v4404 = vpop.f32.mrf.mxu0
        %4405 = vdwg.mxu0
        %4406 = vrot.lane.b32.xlu0 %v1231, 64
        %v4407 = vpop.permute.xlu0 %4406
        %4408 = vrot.lane.b32.xlu0 %v1895, 64
        %v4409 = vpop.permute.xlu0 %4408
        %v4410 = vsel %vm2563, %v4407, 0
        %v4412 = vsel %vm2563, %v4409, 0
        %4414 = vmatprep.subr.mxu0 0.0
        %4415 = vmatpush1.xpose.msra.mxu0 0.0
        %4416 = vmatprep.subr.mxu0 0.0
        %4417 = vmatpush1.xpose.msra.mxu0 0.0
        %4418 = vmatprep.subr.mxu0 0.0
        %4419 = vmatpush1.xpose.msra.mxu0 0.0
        %4420 = vmatprep.subr.mxu0 0.0
        %4421 = vmatpush1.xpose.msra.mxu0 0.0
        %4422 = vmatprep.subr.mxu0 0.0
        %4423 = vmatpush1.xpose.msra.mxu0 0.0
        %4424 = vmatprep.subr.mxu0 0.0
        %4425 = vmatpush1.xpose.msra.mxu0 0.0
        %4426 = vmatprep.subr.mxu0 0.0
        %4427 = vmatpush1.xpose.msra.mxu0 0.0
        %4428 = vmatprep.subr.mxu0 0.0
        %4429 = vmatpush1.xpose.msra.mxu0 0.0
        %4430 = vmatprep.subr.mxu0 0.0
        %4431 = vmatpush1.xpose.msra.mxu0 0.0
        %4432 = vmatprep.subr.mxu0 0.0
        %4433 = vmatpush1.xpose.msra.mxu0 0.0
        %4434 = vmatprep.subr.mxu0 0.0
        %4435 = vmatpush1.xpose.msra.mxu0 0.0
        %4436 = vmatprep.subr.mxu0 0.0
        %4437 = vmatpush1.xpose.msra.mxu0 0.0
        %4438 = vmatprep.subr.mxu0 0.0
        %4439 = vmatpush1.xpose.msra.mxu0 0.0
        %4440 = vmatprep.subr.mxu0 0.0
        %4441 = vmatpush1.xpose.msra.mxu0 0.0
        %4442 = vmatprep.subr.mxu0 0.0
        %4443 = vmatpush1.xpose.msra.mxu0 0.0
        %4444 = vmatprep.subr.mxu0 0.0
        %v4445 = vand.u32 %v4412, 4294901760
        %4446 = vmatpush1.xpose.msra.mxu0 %v4445
        %4447 = vmatprep.subr.mxu0 0.0
        %4448 = vmatpush2.xpose.msra.mxu0 0.0
        %4449 = vmatprep.subr.mxu0 0.0
        %4450 = vmatpush2.xpose.msra.mxu0 0.0
        %4451 = vmatprep.subr.mxu0 0.0
        %4452 = vmatpush2.xpose.msra.mxu0 0.0
        %4453 = vmatprep.subr.mxu0 0.0
        %4454 = vmatpush2.xpose.msra.mxu0 0.0
        %4455 = vmatprep.subr.mxu0 0.0
        %4456 = vmatpush2.xpose.msra.mxu0 0.0
        %4457 = vmatprep.subr.mxu0 0.0
        %4458 = vmatpush2.xpose.msra.mxu0 0.0
        %4459 = vmatprep.subr.mxu0 0.0
        %4460 = vmatpush2.xpose.msra.mxu0 0.0
        %4461 = vmatprep.subr.mxu0 0.0
        %4462 = vmatpush2.xpose.msra.mxu0 0.0
        %4463 = vmatprep.subr.mxu0 0.0
        %4464 = vmatpush2.xpose.msra.mxu0 0.0
        %4465 = vmatprep.subr.mxu0 0.0
        %4466 = vmatpush2.xpose.msra.mxu0 0.0
        %4467 = vmatprep.subr.mxu0 0.0
        %4468 = vmatpush2.xpose.msra.mxu0 0.0
        %4469 = vmatprep.subr.mxu0 0.0
        %4470 = vmatpush2.xpose.msra.mxu0 0.0
        %4471 = vmatprep.subr.mxu0 0.0
        %4472 = vmatpush2.xpose.msra.mxu0 0.0
        %4473 = vmatprep.subr.mxu0 0.0
        %4474 = vmatpush2.xpose.msra.mxu0 0.0
        %4475 = vmatprep.subr.mxu0 0.0
        %4476 = vmatpush2.xpose.msra.mxu0 0.0
        %4477 = vmatprep.subr.mxu0 0.0
        %4478 = vmatpush2.xpose.msra.mxu0 0.0
        %4479 = vmatprep.mubr.f32.mxu0 0.0
        %v4480 = vand.u32 %v4410, 4294901760
        %v4481 = vsub.f32 %v4410, %v4480
        %v4482 = vand.u32 %v4481, 4294901760
        %v4483 = vsub.f32 %v4481, %v4482
        %v4484 = vand.u32 %v4483, 4294901760
        %4485 = vmatmul.mubr.f32.gmra.mxu0 %v4484
        %v4486 = vpop.f32.mrf.mxu0
        %v4487 = vadd.f32 0.0, %v4486
        %v4488 = vpop.f32.mrf.mxu0
        %4489 = vdwg.mxu0
        %4490 = vmatprep.subr.mxu0 0.0
        %4491 = vmatpush1.xpose.msra.mxu0 0.0
        %4492 = vmatprep.subr.mxu0 0.0
        %4493 = vmatpush1.xpose.msra.mxu0 0.0
        %4494 = vmatprep.subr.mxu0 0.0
        %4495 = vmatpush1.xpose.msra.mxu0 0.0
        %4496 = vmatprep.subr.mxu0 0.0
        %4497 = vmatpush1.xpose.msra.mxu0 0.0
        %4498 = vmatprep.subr.mxu0 0.0
        %4499 = vmatpush1.xpose.msra.mxu0 0.0
        %4500 = vmatprep.subr.mxu0 0.0
        %4501 = vmatpush1.xpose.msra.mxu0 0.0
        %4502 = vmatprep.subr.mxu0 0.0
        %4503 = vmatpush1.xpose.msra.mxu0 0.0
        %4504 = vmatprep.subr.mxu0 0.0
        %4505 = vmatpush1.xpose.msra.mxu0 0.0
        %4506 = vmatprep.subr.mxu0 0.0
        %4507 = vmatpush1.xpose.msra.mxu0 0.0
        %4508 = vmatprep.subr.mxu0 0.0
        %4509 = vmatpush1.xpose.msra.mxu0 0.0
        %4510 = vmatprep.subr.mxu0 0.0
        %4511 = vmatpush1.xpose.msra.mxu0 0.0
        %4512 = vmatprep.subr.mxu0 0.0
        %4513 = vmatpush1.xpose.msra.mxu0 0.0
        %4514 = vmatprep.subr.mxu0 0.0
        %4515 = vmatpush1.xpose.msra.mxu0 0.0
        %4516 = vmatprep.subr.mxu0 0.0
        %4517 = vmatpush1.xpose.msra.mxu0 0.0
        %4518 = vmatprep.subr.mxu0 0.0
        %4519 = vmatpush1.xpose.msra.mxu0 0.0
        %4520 = vmatprep.subr.mxu0 0.0
        %v4521 = vand.u32 %v4412, 4294901760
        %v4522 = vsub.f32 %v4412, %v4521
        %v4523 = vand.u32 %v4522, 4294901760
        %v4524 = vsub.f32 %v4522, %v4523
        %v4525 = vand.u32 %v4524, 4294901760
        %4526 = vmatpush1.xpose.msra.mxu0 %v4525
        %4527 = vmatprep.subr.mxu0 0.0
        %4528 = vmatpush2.xpose.msra.mxu0 0.0
        %4529 = vmatprep.subr.mxu0 0.0
        %4530 = vmatpush2.xpose.msra.mxu0 0.0
        %4531 = vmatprep.subr.mxu0 0.0
        %4532 = vmatpush2.xpose.msra.mxu0 0.0
        %4533 = vmatprep.subr.mxu0 0.0
        %4534 = vmatpush2.xpose.msra.mxu0 0.0
        %4535 = vmatprep.subr.mxu0 0.0
        %4536 = vmatpush2.xpose.msra.mxu0 0.0
        %4537 = vmatprep.subr.mxu0 0.0
        %4538 = vmatpush2.xpose.msra.mxu0 0.0
        %4539 = vmatprep.subr.mxu0 0.0
        %4540 = vmatpush2.xpose.msra.mxu0 0.0
        %4541 = vmatprep.subr.mxu0 0.0
        %4542 = vmatpush2.xpose.msra.mxu0 0.0
        %4543 = vmatprep.subr.mxu0 0.0
        %4544 = vmatpush2.xpose.msra.mxu0 0.0
        %4545 = vmatprep.subr.mxu0 0.0
        %4546 = vmatpush2.xpose.msra.mxu0 0.0
        %4547 = vmatprep.subr.mxu0 0.0
        %4548 = vmatpush2.xpose.msra.mxu0 0.0
        %4549 = vmatprep.subr.mxu0 0.0
        %4550 = vmatpush2.xpose.msra.mxu0 0.0
        %4551 = vmatprep.subr.mxu0 0.0
        %4552 = vmatpush2.xpose.msra.mxu0 0.0
        %4553 = vmatprep.subr.mxu0 0.0
        %4554 = vmatpush2.xpose.msra.mxu0 0.0
        %4555 = vmatprep.subr.mxu0 0.0
        %4556 = vmatpush2.xpose.msra.mxu0 0.0
        %4557 = vmatprep.subr.mxu0 0.0
        %4558 = vmatpush2.xpose.msra.mxu0 0.0
        %4559 = vmatprep.mubr.f32.mxu0 0.0
        %v4560 = vand.u32 %v4410, 4294901760
        %4561 = vmatmul.mubr.f32.gmra.mxu0 %v4560
        %v4562 = vpop.f32.mrf.mxu0
        %v4563 = vadd.f32 %v4487, %v4562
        %v4564 = vpop.f32.mrf.mxu0
        %4565 = vdwg.mxu0
        %4566 = vmatprep.subr.mxu0 0.0
        %4567 = vmatpush1.xpose.msra.mxu0 0.0
        %4568 = vmatprep.subr.mxu0 0.0
        %4569 = vmatpush1.xpose.msra.mxu0 0.0
        %4570 = vmatprep.subr.mxu0 0.0
        %4571 = vmatpush1.xpose.msra.mxu0 0.0
        %4572 = vmatprep.subr.mxu0 0.0
        %4573 = vmatpush1.xpose.msra.mxu0 0.0
        %4574 = vmatprep.subr.mxu0 0.0
        %4575 = vmatpush1.xpose.msra.mxu0 0.0
        %4576 = vmatprep.subr.mxu0 0.0
        %4577 = vmatpush1.xpose.msra.mxu0 0.0
        %4578 = vmatprep.subr.mxu0 0.0
        %4579 = vmatpush1.xpose.msra.mxu0 0.0
        %4580 = vmatprep.subr.mxu0 0.0
        %4581 = vmatpush1.xpose.msra.mxu0 0.0
        %4582 = vmatprep.subr.mxu0 0.0
        %4583 = vmatpush1.xpose.msra.mxu0 0.0
        %4584 = vmatprep.subr.mxu0 0.0
        %4585 = vmatpush1.xpose.msra.mxu0 0.0
        %4586 = vmatprep.subr.mxu0 0.0
        %4587 = vmatpush1.xpose.msra.mxu0 0.0
        %4588 = vmatprep.subr.mxu0 0.0
        %4589 = vmatpush1.xpose.msra.mxu0 0.0
        %4590 = vmatprep.subr.mxu0 0.0
        %4591 = vmatpush1.xpose.msra.mxu0 0.0
        %4592 = vmatprep.subr.mxu0 0.0
        %4593 = vmatpush1.xpose.msra.mxu0 0.0
        %4594 = vmatprep.subr.mxu0 0.0
        %4595 = vmatpush1.xpose.msra.mxu0 0.0
        %4596 = vmatprep.subr.mxu0 0.0
        %v4597 = vand.u32 %v4412, 4294901760
        %v4598 = vsub.f32 %v4412, %v4597
        %4599 = vmatpush1.xpose.msra.mxu0 %v4598
        %4600 = vmatprep.subr.mxu0 0.0
        %4601 = vmatpush2.xpose.msra.mxu0 0.0
        %4602 = vmatprep.subr.mxu0 0.0
        %4603 = vmatpush2.xpose.msra.mxu0 0.0
        %4604 = vmatprep.subr.mxu0 0.0
        %4605 = vmatpush2.xpose.msra.mxu0 0.0
        %4606 = vmatprep.subr.mxu0 0.0
        %4607 = vmatpush2.xpose.msra.mxu0 0.0
        %4608 = vmatprep.subr.mxu0 0.0
        %4609 = vmatpush2.xpose.msra.mxu0 0.0
        %4610 = vmatprep.subr.mxu0 0.0
        %4611 = vmatpush2.xpose.msra.mxu0 0.0
        %4612 = vmatprep.subr.mxu0 0.0
        %4613 = vmatpush2.xpose.msra.mxu0 0.0
        %4614 = vmatprep.subr.mxu0 0.0
        %4615 = vmatpush2.xpose.msra.mxu0 0.0
        %4616 = vmatprep.subr.mxu0 0.0
        %4617 = vmatpush2.xpose.msra.mxu0 0.0
        %4618 = vmatprep.subr.mxu0 0.0
        %4619 = vmatpush2.xpose.msra.mxu0 0.0
        %4620 = vmatprep.subr.mxu0 0.0
        %4621 = vmatpush2.xpose.msra.mxu0 0.0
        %4622 = vmatprep.subr.mxu0 0.0
        %4623 = vmatpush2.xpose.msra.mxu0 0.0
        %4624 = vmatprep.subr.mxu0 0.0
        %4625 = vmatpush2.xpose.msra.mxu0 0.0
        %4626 = vmatprep.subr.mxu0 0.0
        %4627 = vmatpush2.xpose.msra.mxu0 0.0
        %4628 = vmatprep.subr.mxu0 0.0
        %4629 = vmatpush2.xpose.msra.mxu0 0.0
        %4630 = vmatprep.subr.mxu0 0.0
        %4631 = vmatpush2.xpose.msra.mxu0 0.0
        %4632 = vmatprep.mubr.f32.mxu0 0.0
        %v4633 = vand.u32 %v4410, 4294901760
        %v4634 = vsub.f32 %v4410, %v4633
        %4635 = vmatmul.mubr.f32.gmra.mxu0 %v4634
        %v4636 = vpop.f32.mrf.mxu0
        %v4637 = vadd.f32 %v4563, %v4636
        %v4638 = vpop.f32.mrf.mxu0
        %4639 = vdwg.mxu0
        %4640 = vmatprep.subr.mxu0 0.0
        %4641 = vmatpush1.xpose.msra.mxu0 0.0
        %4642 = vmatprep.subr.mxu0 0.0
        %4643 = vmatpush1.xpose.msra.mxu0 0.0
        %4644 = vmatprep.subr.mxu0 0.0
        %4645 = vmatpush1.xpose.msra.mxu0 0.0
        %4646 = vmatprep.subr.mxu0 0.0
        %4647 = vmatpush1.xpose.msra.mxu0 0.0
        %4648 = vmatprep.subr.mxu0 0.0
        %4649 = vmatpush1.xpose.msra.mxu0 0.0
        %4650 = vmatprep.subr.mxu0 0.0
        %4651 = vmatpush1.xpose.msra.mxu0 0.0
        %4652 = vmatprep.subr.mxu0 0.0
        %4653 = vmatpush1.xpose.msra.mxu0 0.0
        %4654 = vmatprep.subr.mxu0 0.0
        %4655 = vmatpush1.xpose.msra.mxu0 0.0
        %4656 = vmatprep.subr.mxu0 0.0
        %4657 = vmatpush1.xpose.msra.mxu0 0.0
        %4658 = vmatprep.subr.mxu0 0.0
        %4659 = vmatpush1.xpose.msra.mxu0 0.0
        %4660 = vmatprep.subr.mxu0 0.0
        %4661 = vmatpush1.xpose.msra.mxu0 0.0
        %4662 = vmatprep.subr.mxu0 0.0
        %4663 = vmatpush1.xpose.msra.mxu0 0.0
        %4664 = vmatprep.subr.mxu0 0.0
        %4665 = vmatpush1.xpose.msra.mxu0 0.0
        %4666 = vmatprep.subr.mxu0 0.0
        %4667 = vmatpush1.xpose.msra.mxu0 0.0
        %4668 = vmatprep.subr.mxu0 0.0
        %4669 = vmatpush1.xpose.msra.mxu0 0.0
        %4670 = vmatprep.subr.mxu0 0.0
        %v4671 = vand.u32 %v4412, 4294901760
        %4672 = vmatpush1.xpose.msra.mxu0 %v4671
        %4673 = vmatprep.subr.mxu0 0.0
        %4674 = vmatpush2.xpose.msra.mxu0 0.0
        %4675 = vmatprep.subr.mxu0 0.0
        %4676 = vmatpush2.xpose.msra.mxu0 0.0
        %4677 = vmatprep.subr.mxu0 0.0
        %4678 = vmatpush2.xpose.msra.mxu0 0.0
        %4679 = vmatprep.subr.mxu0 0.0
        %4680 = vmatpush2.xpose.msra.mxu0 0.0
        %4681 = vmatprep.subr.mxu0 0.0
        %4682 = vmatpush2.xpose.msra.mxu0 0.0
        %4683 = vmatprep.subr.mxu0 0.0
        %4684 = vmatpush2.xpose.msra.mxu0 0.0
        %4685 = vmatprep.subr.mxu0 0.0
        %4686 = vmatpush2.xpose.msra.mxu0 0.0
        %4687 = vmatprep.subr.mxu0 0.0
        %4688 = vmatpush2.xpose.msra.mxu0 0.0
        %4689 = vmatprep.subr.mxu0 0.0
        %4690 = vmatpush2.xpose.msra.mxu0 0.0
        %4691 = vmatprep.subr.mxu0 0.0
        %4692 = vmatpush2.xpose.msra.mxu0 0.0
        %4693 = vmatprep.subr.mxu0 0.0
        %4694 = vmatpush2.xpose.msra.mxu0 0.0
        %4695 = vmatprep.subr.mxu0 0.0
        %4696 = vmatpush2.xpose.msra.mxu0 0.0
        %4697 = vmatprep.subr.mxu0 0.0
        %4698 = vmatpush2.xpose.msra.mxu0 0.0
        %4699 = vmatprep.subr.mxu0 0.0
        %4700 = vmatpush2.xpose.msra.mxu0 0.0
        %4701 = vmatprep.subr.mxu0 0.0
        %4702 = vmatpush2.xpose.msra.mxu0 0.0
        %4703 = vmatprep.subr.mxu0 0.0
        %4704 = vmatpush2.xpose.msra.mxu0 0.0
        %4705 = vmatprep.mubr.f32.mxu0 0.0
        %v4706 = vand.u32 %v4410, 4294901760
        %v4707 = vsub.f32 %v4410, %v4706
        %v4708 = vand.u32 %v4707, 4294901760
        %4709 = vmatmul.mubr.f32.gmra.mxu0 %v4708
        %v4710 = vpop.f32.mrf.mxu0
        %v4711 = vadd.f32 %v4637, %v4710
        %v4712 = vpop.f32.mrf.mxu0
        %4713 = vdwg.mxu0
        %4714 = vmatprep.subr.mxu0 0.0
        %4715 = vmatpush1.xpose.msra.mxu0 0.0
        %4716 = vmatprep.subr.mxu0 0.0
        %4717 = vmatpush1.xpose.msra.mxu0 0.0
        %4718 = vmatprep.subr.mxu0 0.0
        %4719 = vmatpush1.xpose.msra.mxu0 0.0
        %4720 = vmatprep.subr.mxu0 0.0
        %4721 = vmatpush1.xpose.msra.mxu0 0.0
        %4722 = vmatprep.subr.mxu0 0.0
        %4723 = vmatpush1.xpose.msra.mxu0 0.0
        %4724 = vmatprep.subr.mxu0 0.0
        %4725 = vmatpush1.xpose.msra.mxu0 0.0
        %4726 = vmatprep.subr.mxu0 0.0
        %4727 = vmatpush1.xpose.msra.mxu0 0.0
        %4728 = vmatprep.subr.mxu0 0.0
        %4729 = vmatpush1.xpose.msra.mxu0 0.0
        %4730 = vmatprep.subr.mxu0 0.0
        %4731 = vmatpush1.xpose.msra.mxu0 0.0
        %4732 = vmatprep.subr.mxu0 0.0
        %4733 = vmatpush1.xpose.msra.mxu0 0.0
        %4734 = vmatprep.subr.mxu0 0.0
        %4735 = vmatpush1.xpose.msra.mxu0 0.0
        %4736 = vmatprep.subr.mxu0 0.0
        %4737 = vmatpush1.xpose.msra.mxu0 0.0
        %4738 = vmatprep.subr.mxu0 0.0
        %4739 = vmatpush1.xpose.msra.mxu0 0.0
        %4740 = vmatprep.subr.mxu0 0.0
        %4741 = vmatpush1.xpose.msra.mxu0 0.0
        %4742 = vmatprep.subr.mxu0 0.0
        %4743 = vmatpush1.xpose.msra.mxu0 0.0
        %4744 = vmatprep.subr.mxu0 0.0
        %v4745 = vand.u32 %v4412, 4294901760
        %v4746 = vsub.f32 %v4412, %v4745
        %v4747 = vand.u32 %v4746, 4294901760
        %4748 = vmatpush1.xpose.msra.mxu0 %v4747
        %4749 = vmatprep.subr.mxu0 0.0
        %4750 = vmatpush2.xpose.msra.mxu0 0.0
        %4751 = vmatprep.subr.mxu0 0.0
        %4752 = vmatpush2.xpose.msra.mxu0 0.0
        %4753 = vmatprep.subr.mxu0 0.0
        %4754 = vmatpush2.xpose.msra.mxu0 0.0
        %4755 = vmatprep.subr.mxu0 0.0
        %4756 = vmatpush2.xpose.msra.mxu0 0.0
        %4757 = vmatprep.subr.mxu0 0.0
        %4758 = vmatpush2.xpose.msra.mxu0 0.0
        %4759 = vmatprep.subr.mxu0 0.0
        %4760 = vmatpush2.xpose.msra.mxu0 0.0
        %4761 = vmatprep.subr.mxu0 0.0
        %4762 = vmatpush2.xpose.msra.mxu0 0.0
        %4763 = vmatprep.subr.mxu0 0.0
        %4764 = vmatpush2.xpose.msra.mxu0 0.0
        %4765 = vmatprep.subr.mxu0 0.0
        %4766 = vmatpush2.xpose.msra.mxu0 0.0
        %4767 = vmatprep.subr.mxu0 0.0
        %4768 = vmatpush2.xpose.msra.mxu0 0.0
        %4769 = vmatprep.subr.mxu0 0.0
        %4770 = vmatpush2.xpose.msra.mxu0 0.0
        %4771 = vmatprep.subr.mxu0 0.0
        %4772 = vmatpush2.xpose.msra.mxu0 0.0
        %4773 = vmatprep.subr.mxu0 0.0
        %4774 = vmatpush2.xpose.msra.mxu0 0.0
        %4775 = vmatprep.subr.mxu0 0.0
        %4776 = vmatpush2.xpose.msra.mxu0 0.0
        %4777 = vmatprep.subr.mxu0 0.0
        %4778 = vmatpush2.xpose.msra.mxu0 0.0
        %4779 = vmatprep.subr.mxu0 0.0
        %4780 = vmatpush2.xpose.msra.mxu0 0.0
        %4781 = vmatprep.mubr.f32.mxu0 0.0
        %v4782 = vand.u32 %v4410, 4294901760
        %4783 = vmatmul.mubr.f32.gmra.mxu0 %v4782
        %v4784 = vpop.f32.mrf.mxu0
        %v4785 = vadd.f32 %v4711, %v4784
        %v4786 = vpop.f32.mrf.mxu0
        %4787 = vdwg.mxu0
        %4788 = vmatprep.subr.mxu0 0.0
        %4789 = vmatpush1.xpose.msra.mxu0 0.0
        %4790 = vmatprep.subr.mxu0 0.0
        %4791 = vmatpush1.xpose.msra.mxu0 0.0
        %4792 = vmatprep.subr.mxu0 0.0
        %4793 = vmatpush1.xpose.msra.mxu0 0.0
        %4794 = vmatprep.subr.mxu0 0.0
        %4795 = vmatpush1.xpose.msra.mxu0 0.0
        %4796 = vmatprep.subr.mxu0 0.0
        %4797 = vmatpush1.xpose.msra.mxu0 0.0
        %4798 = vmatprep.subr.mxu0 0.0
        %4799 = vmatpush1.xpose.msra.mxu0 0.0
        %4800 = vmatprep.subr.mxu0 0.0
        %4801 = vmatpush1.xpose.msra.mxu0 0.0
        %4802 = vmatprep.subr.mxu0 0.0
        %4803 = vmatpush1.xpose.msra.mxu0 0.0
        %4804 = vmatprep.subr.mxu0 0.0
        %4805 = vmatpush1.xpose.msra.mxu0 0.0
        %4806 = vmatprep.subr.mxu0 0.0
        %4807 = vmatpush1.xpose.msra.mxu0 0.0
        %4808 = vmatprep.subr.mxu0 0.0
        %4809 = vmatpush1.xpose.msra.mxu0 0.0
        %4810 = vmatprep.subr.mxu0 0.0
        %4811 = vmatpush1.xpose.msra.mxu0 0.0
        %4812 = vmatprep.subr.mxu0 0.0
        %4813 = vmatpush1.xpose.msra.mxu0 0.0
        %4814 = vmatprep.subr.mxu0 0.0
        %4815 = vmatpush1.xpose.msra.mxu0 0.0
        %4816 = vmatprep.subr.mxu0 0.0
        %4817 = vmatpush1.xpose.msra.mxu0 0.0
        %4818 = vmatprep.subr.mxu0 0.0
        %v4819 = vand.u32 %v4412, 4294901760
        %4820 = vmatpush1.xpose.msra.mxu0 %v4819
        %4821 = vmatprep.subr.mxu0 0.0
        %4822 = vmatpush2.xpose.msra.mxu0 0.0
        %4823 = vmatprep.subr.mxu0 0.0
        %4824 = vmatpush2.xpose.msra.mxu0 0.0
        %4825 = vmatprep.subr.mxu0 0.0
        %4826 = vmatpush2.xpose.msra.mxu0 0.0
        %4827 = vmatprep.subr.mxu0 0.0
        %4828 = vmatpush2.xpose.msra.mxu0 0.0
        %4829 = vmatprep.subr.mxu0 0.0
        %4830 = vmatpush2.xpose.msra.mxu0 0.0
        %4831 = vmatprep.subr.mxu0 0.0
        %4832 = vmatpush2.xpose.msra.mxu0 0.0
        %4833 = vmatprep.subr.mxu0 0.0
        %4834 = vmatpush2.xpose.msra.mxu0 0.0
        %4835 = vmatprep.subr.mxu0 0.0
        %4836 = vmatpush2.xpose.msra.mxu0 0.0
        %4837 = vmatprep.subr.mxu0 0.0
        %4838 = vmatpush2.xpose.msra.mxu0 0.0
        %4839 = vmatprep.subr.mxu0 0.0
        %4840 = vmatpush2.xpose.msra.mxu0 0.0
        %4841 = vmatprep.subr.mxu0 0.0
        %4842 = vmatpush2.xpose.msra.mxu0 0.0
        %4843 = vmatprep.subr.mxu0 0.0
        %4844 = vmatpush2.xpose.msra.mxu0 0.0
        %4845 = vmatprep.subr.mxu0 0.0
        %4846 = vmatpush2.xpose.msra.mxu0 0.0
        %4847 = vmatprep.subr.mxu0 0.0
        %4848 = vmatpush2.xpose.msra.mxu0 0.0
        %4849 = vmatprep.subr.mxu0 0.0
        %4850 = vmatpush2.xpose.msra.mxu0 0.0
        %4851 = vmatprep.subr.mxu0 0.0
        %4852 = vmatpush2.xpose.msra.mxu0 0.0
        %4853 = vmatprep.mubr.f32.mxu0 0.0
        %v4854 = vand.u32 %v4410, 4294901760
        %4855 = vmatmul.mubr.f32.gmra.mxu0 %v4854
        %v4856 = vpop.f32.mrf.mxu0
        %v4857 = vadd.f32 %v4785, %v4856
        %v4858 = vpop.f32.mrf.mxu0
        %4859 = vdwg.mxu0
        %v4860 = vmul.f32 %v4857, 0.17677669
        %v4861 = vsel %vm3023, -1e+09, %v4860
        %v4862 = vsel %vm3025, %v4861, -inf
        %4863 = vmax.xlane.f32.xlu0 %v4862
        %v4864 = vpop.xlane.xlu0 %4863
        %v4865 = vsub.f32 %v4861, %v4864
        %v4866 = vmul.f32 %v4865, 1.442695
        %v4867 = vpow.pop %v4866
        %v4868 = vsel %vm3025, %v4867, 0.0
        %4869 = vadd.xlane.f32.xlu0 %v4868
        %v4870 = vpop.xlane.xlu0 %4869
        %v4871 = vrcp.pop %v4870
        %v4872 = vmul.f32 %v4867, %v4871
        %4873 = vrot.lane.b32.xlu0 %v2559, 64
        %v4874 = vpop.permute.xlu0 %4873
        %v4877 = vsel %vm3025, %v4872, 0
        %4879 = vmatprep.subr.mxu0 0.0
        %4880 = vmatpush1.msra.mxu0 0.0
        %4881 = vmatprep.subr.mxu0 0.0
        %4882 = vmatpush1.msra.mxu0 0.0
        %4883 = vmatprep.subr.mxu0 0.0
        %4884 = vmatpush1.msra.mxu0 0.0
        %4885 = vmatprep.subr.mxu0 0.0
        %4886 = vmatpush1.msra.mxu0 0.0
        %4887 = vmatprep.subr.mxu0 0.0
        %4888 = vmatpush1.msra.mxu0 0.0
        %4889 = vmatprep.subr.mxu0 0.0
        %4890 = vmatpush1.msra.mxu0 0.0
        %4891 = vmatprep.subr.mxu0 0.0
        %4892 = vmatpush1.msra.mxu0 0.0
        %4893 = vmatprep.subr.mxu0 0.0
        %4894 = vmatpush1.msra.mxu0 0.0
        %4895 = vmatprep.subr.mxu0 0.0
        %4896 = vmatpush1.msra.mxu0 0.0
        %4897 = vmatprep.subr.mxu0 0.0
        %4898 = vmatpush1.msra.mxu0 0.0
        %4899 = vmatprep.subr.mxu0 0.0
        %4900 = vmatpush1.msra.mxu0 0.0
        %4901 = vmatprep.subr.mxu0 0.0
        %4902 = vmatpush1.msra.mxu0 0.0
        %4903 = vmatprep.subr.mxu0 0.0
        %4904 = vmatpush1.msra.mxu0 0.0
        %4905 = vmatprep.subr.mxu0 0.0
        %4906 = vmatpush1.msra.mxu0 0.0
        %4907 = vmatprep.subr.mxu0 0.0
        %4908 = vmatpush1.msra.mxu0 0.0
        %4909 = vmatprep.subr.mxu0 0.0
        %v4910 = vand.u32 %v4874, 4294901760
        %4911 = vmatpush1.msra.mxu0 %v4910
        %4912 = vmatprep.subr.mxu0 0.0
        %4913 = vmatpush2.msra.mxu0 0.0
        %4914 = vmatprep.subr.mxu0 0.0
        %4915 = vmatpush2.msra.mxu0 0.0
        %4916 = vmatprep.subr.mxu0 0.0
        %4917 = vmatpush2.msra.mxu0 0.0
        %4918 = vmatprep.subr.mxu0 0.0
        %4919 = vmatpush2.msra.mxu0 0.0
        %4920 = vmatprep.subr.mxu0 0.0
        %4921 = vmatpush2.msra.mxu0 0.0
        %4922 = vmatprep.subr.mxu0 0.0
        %4923 = vmatpush2.msra.mxu0 0.0
        %4924 = vmatprep.subr.mxu0 0.0
        %4925 = vmatpush2.msra.mxu0 0.0
        %4926 = vmatprep.subr.mxu0 0.0
        %4927 = vmatpush2.msra.mxu0 0.0
        %4928 = vmatprep.subr.mxu0 0.0
        %4929 = vmatpush2.msra.mxu0 0.0
        %4930 = vmatprep.subr.mxu0 0.0
        %4931 = vmatpush2.msra.mxu0 0.0
        %4932 = vmatprep.subr.mxu0 0.0
        %4933 = vmatpush2.msra.mxu0 0.0
        %4934 = vmatprep.subr.mxu0 0.0
        %4935 = vmatpush2.msra.mxu0 0.0
        %4936 = vmatprep.subr.mxu0 0.0
        %4937 = vmatpush2.msra.mxu0 0.0
        %4938 = vmatprep.subr.mxu0 0.0
        %4939 = vmatpush2.msra.mxu0 0.0
        %4940 = vmatprep.subr.mxu0 0.0
        %4941 = vmatpush2.msra.mxu0 0.0
        %4942 = vmatprep.subr.mxu0 0.0
        %4943 = vmatpush2.msra.mxu0 0.0
        %4944 = vmatprep.mubr.f32.mxu0 0.0
        %v4945 = vand.u32 %v4877, 4294901760
        %v4946 = vsub.f32 %v4877, %v4945
        %v4947 = vand.u32 %v4946, 4294901760
        %v4948 = vsub.f32 %v4946, %v4947
        %v4949 = vand.u32 %v4948, 4294901760
        %4950 = vmatmul.mubr.f32.gmra.mxu0 %v4949
        %v4951 = vpop.f32.mrf.mxu0
        %v4952 = vadd.f32 0.0, %v4951
        %v4953 = vpop.f32.mrf.mxu0
        %4954 = vdwg.mxu0
        %4955 = vmatprep.subr.mxu0 0.0
        %4956 = vmatpush1.msra.mxu0 0.0
        %4957 = vmatprep.subr.mxu0 0.0
        %4958 = vmatpush1.msra.mxu0 0.0
        %4959 = vmatprep.subr.mxu0 0.0
        %4960 = vmatpush1.msra.mxu0 0.0
        %4961 = vmatprep.subr.mxu0 0.0
        %4962 = vmatpush1.msra.mxu0 0.0
        %4963 = vmatprep.subr.mxu0 0.0
        %4964 = vmatpush1.msra.mxu0 0.0
        %4965 = vmatprep.subr.mxu0 0.0
        %4966 = vmatpush1.msra.mxu0 0.0
        %4967 = vmatprep.subr.mxu0 0.0
        %4968 = vmatpush1.msra.mxu0 0.0
        %4969 = vmatprep.subr.mxu0 0.0
        %4970 = vmatpush1.msra.mxu0 0.0
        %4971 = vmatprep.subr.mxu0 0.0
        %4972 = vmatpush1.msra.mxu0 0.0
        %4973 = vmatprep.subr.mxu0 0.0
        %4974 = vmatpush1.msra.mxu0 0.0
        %4975 = vmatprep.subr.mxu0 0.0
        %4976 = vmatpush1.msra.mxu0 0.0
        %4977 = vmatprep.subr.mxu0 0.0
        %4978 = vmatpush1.msra.mxu0 0.0
        %4979 = vmatprep.subr.mxu0 0.0
        %4980 = vmatpush1.msra.mxu0 0.0
        %4981 = vmatprep.subr.mxu0 0.0
        %4982 = vmatpush1.msra.mxu0 0.0
        %4983 = vmatprep.subr.mxu0 0.0
        %4984 = vmatpush1.msra.mxu0 0.0
        %4985 = vmatprep.subr.mxu0 0.0
        %v4986 = vand.u32 %v4874, 4294901760
        %v4987 = vsub.f32 %v4874, %v4986
        %v4988 = vand.u32 %v4987, 4294901760
        %v4989 = vsub.f32 %v4987, %v4988
        %v4990 = vand.u32 %v4989, 4294901760
        %4991 = vmatpush1.msra.mxu0 %v4990
        %4992 = vmatprep.subr.mxu0 0.0
        %4993 = vmatpush2.msra.mxu0 0.0
        %4994 = vmatprep.subr.mxu0 0.0
        %4995 = vmatpush2.msra.mxu0 0.0
        %4996 = vmatprep.subr.mxu0 0.0
        %4997 = vmatpush2.msra.mxu0 0.0
        %4998 = vmatprep.subr.mxu0 0.0
        %4999 = vmatpush2.msra.mxu0 0.0
        %5000 = vmatprep.subr.mxu0 0.0
        %5001 = vmatpush2.msra.mxu0 0.0
        %5002 = vmatprep.subr.mxu0 0.0
        %5003 = vmatpush2.msra.mxu0 0.0
        %5004 = vmatprep.subr.mxu0 0.0
        %5005 = vmatpush2.msra.mxu0 0.0
        %5006 = vmatprep.subr.mxu0 0.0
        %5007 = vmatpush2.msra.mxu0 0.0
        %5008 = vmatprep.subr.mxu0 0.0
        %5009 = vmatpush2.msra.mxu0 0.0
        %5010 = vmatprep.subr.mxu0 0.0
        %5011 = vmatpush2.msra.mxu0 0.0
        %5012 = vmatprep.subr.mxu0 0.0
        %5013 = vmatpush2.msra.mxu0 0.0
        %5014 = vmatprep.subr.mxu0 0.0
        %5015 = vmatpush2.msra.mxu0 0.0
        %5016 = vmatprep.subr.mxu0 0.0
        %5017 = vmatpush2.msra.mxu0 0.0
        %5018 = vmatprep.subr.mxu0 0.0
        %5019 = vmatpush2.msra.mxu0 0.0
        %5020 = vmatprep.subr.mxu0 0.0
        %5021 = vmatpush2.msra.mxu0 0.0
        %5022 = vmatprep.subr.mxu0 0.0
        %5023 = vmatpush2.msra.mxu0 0.0
        %5024 = vmatprep.mubr.f32.mxu0 0.0
        %v5025 = vand.u32 %v4877, 4294901760
        %5026 = vmatmul.mubr.f32.gmra.mxu0 %v5025
        %v5027 = vpop.f32.mrf.mxu0
        %v5028 = vadd.f32 %v4952, %v5027
        %v5029 = vpop.f32.mrf.mxu0
        %5030 = vdwg.mxu0
        %5031 = vmatprep.subr.mxu0 0.0
        %5032 = vmatpush1.msra.mxu0 0.0
        %5033 = vmatprep.subr.mxu0 0.0
        %5034 = vmatpush1.msra.mxu0 0.0
        %5035 = vmatprep.subr.mxu0 0.0
        %5036 = vmatpush1.msra.mxu0 0.0
        %5037 = vmatprep.subr.mxu0 0.0
        %5038 = vmatpush1.msra.mxu0 0.0
        %5039 = vmatprep.subr.mxu0 0.0
        %5040 = vmatpush1.msra.mxu0 0.0
        %5041 = vmatprep.subr.mxu0 0.0
        %5042 = vmatpush1.msra.mxu0 0.0
        %5043 = vmatprep.subr.mxu0 0.0
        %5044 = vmatpush1.msra.mxu0 0.0
        %5045 = vmatprep.subr.mxu0 0.0
        %5046 = vmatpush1.msra.mxu0 0.0
        %5047 = vmatprep.subr.mxu0 0.0
        %5048 = vmatpush1.msra.mxu0 0.0
        %5049 = vmatprep.subr.mxu0 0.0
        %5050 = vmatpush1.msra.mxu0 0.0
        %5051 = vmatprep.subr.mxu0 0.0
        %5052 = vmatpush1.msra.mxu0 0.0
        %5053 = vmatprep.subr.mxu0 0.0
        %5054 = vmatpush1.msra.mxu0 0.0
        %5055 = vmatprep.subr.mxu0 0.0
        %5056 = vmatpush1.msra.mxu0 0.0
        %5057 = vmatprep.subr.mxu0 0.0
        %5058 = vmatpush1.msra.mxu0 0.0
        %5059 = vmatprep.subr.mxu0 0.0
        %5060 = vmatpush1.msra.mxu0 0.0
        %5061 = vmatprep.subr.mxu0 0.0
        %v5062 = vand.u32 %v4874, 4294901760
        %v5063 = vsub.f32 %v4874, %v5062
        %5064 = vmatpush1.msra.mxu0 %v5063
        %5065 = vmatprep.subr.mxu0 0.0
        %5066 = vmatpush2.msra.mxu0 0.0
        %5067 = vmatprep.subr.mxu0 0.0
        %5068 = vmatpush2.msra.mxu0 0.0
        %5069 = vmatprep.subr.mxu0 0.0
        %5070 = vmatpush2.msra.mxu0 0.0
        %5071 = vmatprep.subr.mxu0 0.0
        %5072 = vmatpush2.msra.mxu0 0.0
        %5073 = vmatprep.subr.mxu0 0.0
        %5074 = vmatpush2.msra.mxu0 0.0
        %5075 = vmatprep.subr.mxu0 0.0
        %5076 = vmatpush2.msra.mxu0 0.0
        %5077 = vmatprep.subr.mxu0 0.0
        %5078 = vmatpush2.msra.mxu0 0.0
        %5079 = vmatprep.subr.mxu0 0.0
        %5080 = vmatpush2.msra.mxu0 0.0
        %5081 = vmatprep.subr.mxu0 0.0
        %5082 = vmatpush2.msra.mxu0 0.0
        %5083 = vmatprep.subr.mxu0 0.0
        %5084 = vmatpush2.msra.mxu0 0.0
        %5085 = vmatprep.subr.mxu0 0.0
        %5086 = vmatpush2.msra.mxu0 0.0
        %5087 = vmatprep.subr.mxu0 0.0
        %5088 = vmatpush2.msra.mxu0 0.0
        %5089 = vmatprep.subr.mxu0 0.0
        %5090 = vmatpush2.msra.mxu0 0.0
        %5091 = vmatprep.subr.mxu0 0.0
        %5092 = vmatpush2.msra.mxu0 0.0
        %5093 = vmatprep.subr.mxu0 0.0
        %5094 = vmatpush2.msra.mxu0 0.0
        %5095 = vmatprep.subr.mxu0 0.0
        %5096 = vmatpush2.msra.mxu0 0.0
        %5097 = vmatprep.mubr.f32.mxu0 0.0
        %v5098 = vand.u32 %v4877, 4294901760
        %v5099 = vsub.f32 %v4877, %v5098
        %5100 = vmatmul.mubr.f32.gmra.mxu0 %v5099
        %v5101 = vpop.f32.mrf.mxu0
        %v5102 = vadd.f32 %v5028, %v5101
        %v5103 = vpop.f32.mrf.mxu0
        %5104 = vdwg.mxu0
        %5105 = vmatprep.subr.mxu0 0.0
        %5106 = vmatpush1.msra.mxu0 0.0
        %5107 = vmatprep.subr.mxu0 0.0
        %5108 = vmatpush1.msra.mxu0 0.0
        %5109 = vmatprep.subr.mxu0 0.0
        %5110 = vmatpush1.msra.mxu0 0.0
        %5111 = vmatprep.subr.mxu0 0.0
        %5112 = vmatpush1.msra.mxu0 0.0
        %5113 = vmatprep.subr.mxu0 0.0
        %5114 = vmatpush1.msra.mxu0 0.0
        %5115 = vmatprep.subr.mxu0 0.0
        %5116 = vmatpush1.msra.mxu0 0.0
        %5117 = vmatprep.subr.mxu0 0.0
        %5118 = vmatpush1.msra.mxu0 0.0
        %5119 = vmatprep.subr.mxu0 0.0
        %5120 = vmatpush1.msra.mxu0 0.0
        %5121 = vmatprep.subr.mxu0 0.0
        %5122 = vmatpush1.msra.mxu0 0.0
        %5123 = vmatprep.subr.mxu0 0.0
        %5124 = vmatpush1.msra.mxu0 0.0
        %5125 = vmatprep.subr.mxu0 0.0
        %5126 = vmatpush1.msra.mxu0 0.0
        %5127 = vmatprep.subr.mxu0 0.0
        %5128 = vmatpush1.msra.mxu0 0.0
        %5129 = vmatprep.subr.mxu0 0.0
        %5130 = vmatpush1.msra.mxu0 0.0
        %5131 = vmatprep.subr.mxu0 0.0
        %5132 = vmatpush1.msra.mxu0 0.0
        %5133 = vmatprep.subr.mxu0 0.0
        %5134 = vmatpush1.msra.mxu0 0.0
        %5135 = vmatprep.subr.mxu0 0.0
        %v5136 = vand.u32 %v4874, 4294901760
        %5137 = vmatpush1.msra.mxu0 %v5136
        %5138 = vmatprep.subr.mxu0 0.0
        %5139 = vmatpush2.msra.mxu0 0.0
        %5140 = vmatprep.subr.mxu0 0.0
        %5141 = vmatpush2.msra.mxu0 0.0
        %5142 = vmatprep.subr.mxu0 0.0
        %5143 = vmatpush2.msra.mxu0 0.0
        %5144 = vmatprep.subr.mxu0 0.0
        %5145 = vmatpush2.msra.mxu0 0.0
        %5146 = vmatprep.subr.mxu0 0.0
        %5147 = vmatpush2.msra.mxu0 0.0
        %5148 = vmatprep.subr.mxu0 0.0
        %5149 = vmatpush2.msra.mxu0 0.0
        %5150 = vmatprep.subr.mxu0 0.0
        %5151 = vmatpush2.msra.mxu0 0.0
        %5152 = vmatprep.subr.mxu0 0.0
        %5153 = vmatpush2.msra.mxu0 0.0
        %5154 = vmatprep.subr.mxu0 0.0
        %5155 = vmatpush2.msra.mxu0 0.0
        %5156 = vmatprep.subr.mxu0 0.0
        %5157 = vmatpush2.msra.mxu0 0.0
        %5158 = vmatprep.subr.mxu0 0.0
        %5159 = vmatpush2.msra.mxu0 0.0
        %5160 = vmatprep.subr.mxu0 0.0
        %5161 = vmatpush2.msra.mxu0 0.0
        %5162 = vmatprep.subr.mxu0 0.0
        %5163 = vmatpush2.msra.mxu0 0.0
        %5164 = vmatprep.subr.mxu0 0.0
        %5165 = vmatpush2.msra.mxu0 0.0
        %5166 = vmatprep.subr.mxu0 0.0
        %5167 = vmatpush2.msra.mxu0 0.0
        %5168 = vmatprep.subr.mxu0 0.0
        %5169 = vmatpush2.msra.mxu0 0.0
        %5170 = vmatprep.mubr.f32.mxu0 0.0
        %v5171 = vand.u32 %v4877, 4294901760
        %v5172 = vsub.f32 %v4877, %v5171
        %v5173 = vand.u32 %v5172, 4294901760
        %5174 = vmatmul.mubr.f32.gmra.mxu0 %v5173
        %v5175 = vpop.f32.mrf.mxu0
        %v5176 = vadd.f32 %v5102, %v5175
        %v5177 = vpop.f32.mrf.mxu0
        %5178 = vdwg.mxu0
        %5179 = vmatprep.subr.mxu0 0.0
        %5180 = vmatpush1.msra.mxu0 0.0
        %5181 = vmatprep.subr.mxu0 0.0
        %5182 = vmatpush1.msra.mxu0 0.0
        %5183 = vmatprep.subr.mxu0 0.0
        %5184 = vmatpush1.msra.mxu0 0.0
        %5185 = vmatprep.subr.mxu0 0.0
        %5186 = vmatpush1.msra.mxu0 0.0
        %5187 = vmatprep.subr.mxu0 0.0
        %5188 = vmatpush1.msra.mxu0 0.0
        %5189 = vmatprep.subr.mxu0 0.0
        %5190 = vmatpush1.msra.mxu0 0.0
        %5191 = vmatprep.subr.mxu0 0.0
        %5192 = vmatpush1.msra.mxu0 0.0
        %5193 = vmatprep.subr.mxu0 0.0
        %5194 = vmatpush1.msra.mxu0 0.0
        %5195 = vmatprep.subr.mxu0 0.0
        %5196 = vmatpush1.msra.mxu0 0.0
        %5197 = vmatprep.subr.mxu0 0.0
        %5198 = vmatpush1.msra.mxu0 0.0
        %5199 = vmatprep.subr.mxu0 0.0
        %5200 = vmatpush1.msra.mxu0 0.0
        %5201 = vmatprep.subr.mxu0 0.0
        %5202 = vmatpush1.msra.mxu0 0.0
        %5203 = vmatprep.subr.mxu0 0.0
        %5204 = vmatpush1.msra.mxu0 0.0
        %5205 = vmatprep.subr.mxu0 0.0
        %5206 = vmatpush1.msra.mxu0 0.0
        %5207 = vmatprep.subr.mxu0 0.0
        %5208 = vmatpush1.msra.mxu0 0.0
        %5209 = vmatprep.subr.mxu0 0.0
        %v5210 = vand.u32 %v4874, 4294901760
        %v5211 = vsub.f32 %v4874, %v5210
        %v5212 = vand.u32 %v5211, 4294901760
        %5213 = vmatpush1.msra.mxu0 %v5212
        %5214 = vmatprep.subr.mxu0 0.0
        %5215 = vmatpush2.msra.mxu0 0.0
        %5216 = vmatprep.subr.mxu0 0.0
        %5217 = vmatpush2.msra.mxu0 0.0
        %5218 = vmatprep.subr.mxu0 0.0
        %5219 = vmatpush2.msra.mxu0 0.0
        %5220 = vmatprep.subr.mxu0 0.0
        %5221 = vmatpush2.msra.mxu0 0.0
        %5222 = vmatprep.subr.mxu0 0.0
        %5223 = vmatpush2.msra.mxu0 0.0
        %5224 = vmatprep.subr.mxu0 0.0
        %5225 = vmatpush2.msra.mxu0 0.0
        %5226 = vmatprep.subr.mxu0 0.0
        %5227 = vmatpush2.msra.mxu0 0.0
        %5228 = vmatprep.subr.mxu0 0.0
        %5229 = vmatpush2.msra.mxu0 0.0
        %5230 = vmatprep.subr.mxu0 0.0
        %5231 = vmatpush2.msra.mxu0 0.0
        %5232 = vmatprep.subr.mxu0 0.0
        %5233 = vmatpush2.msra.mxu0 0.0
        %5234 = vmatprep.subr.mxu0 0.0
        %5235 = vmatpush2.msra.mxu0 0.0
        %5236 = vmatprep.subr.mxu0 0.0
        %5237 = vmatpush2.msra.mxu0 0.0
        %5238 = vmatprep.subr.mxu0 0.0
        %5239 = vmatpush2.msra.mxu0 0.0
        %5240 = vmatprep.subr.mxu0 0.0
        %5241 = vmatpush2.msra.mxu0 0.0
        %5242 = vmatprep.subr.mxu0 0.0
        %5243 = vmatpush2.msra.mxu0 0.0
        %5244 = vmatprep.subr.mxu0 0.0
        %5245 = vmatpush2.msra.mxu0 0.0
        %5246 = vmatprep.mubr.f32.mxu0 0.0
        %v5247 = vand.u32 %v4877, 4294901760
        %5248 = vmatmul.mubr.f32.gmra.mxu0 %v5247
        %v5249 = vpop.f32.mrf.mxu0
        %v5250 = vadd.f32 %v5176, %v5249
        %v5251 = vpop.f32.mrf.mxu0
        %5252 = vdwg.mxu0
        %5253 = vmatprep.subr.mxu0 0.0
        %5254 = vmatpush1.msra.mxu0 0.0
        %5255 = vmatprep.subr.mxu0 0.0
        %5256 = vmatpush1.msra.mxu0 0.0
        %5257 = vmatprep.subr.mxu0 0.0
        %5258 = vmatpush1.msra.mxu0 0.0
        %5259 = vmatprep.subr.mxu0 0.0
        %5260 = vmatpush1.msra.mxu0 0.0
        %5261 = vmatprep.subr.mxu0 0.0
        %5262 = vmatpush1.msra.mxu0 0.0
        %5263 = vmatprep.subr.mxu0 0.0
        %5264 = vmatpush1.msra.mxu0 0.0
        %5265 = vmatprep.subr.mxu0 0.0
        %5266 = vmatpush1.msra.mxu0 0.0
        %5267 = vmatprep.subr.mxu0 0.0
        %5268 = vmatpush1.msra.mxu0 0.0
        %5269 = vmatprep.subr.mxu0 0.0
        %5270 = vmatpush1.msra.mxu0 0.0
        %5271 = vmatprep.subr.mxu0 0.0
        %5272 = vmatpush1.msra.mxu0 0.0
        %5273 = vmatprep.subr.mxu0 0.0
        %5274 = vmatpush1.msra.mxu0 0.0
        %5275 = vmatprep.subr.mxu0 0.0
        %5276 = vmatpush1.msra.mxu0 0.0
        %5277 = vmatprep.subr.mxu0 0.0
        %5278 = vmatpush1.msra.mxu0 0.0
        %5279 = vmatprep.subr.mxu0 0.0
        %5280 = vmatpush1.msra.mxu0 0.0
        %5281 = vmatprep.subr.mxu0 0.0
        %5282 = vmatpush1.msra.mxu0 0.0
        %5283 = vmatprep.subr.mxu0 0.0
        %v5284 = vand.u32 %v4874, 4294901760
        %5285 = vmatpush1.msra.mxu0 %v5284
        %5286 = vmatprep.subr.mxu0 0.0
        %5287 = vmatpush2.msra.mxu0 0.0
        %5288 = vmatprep.subr.mxu0 0.0
        %5289 = vmatpush2.msra.mxu0 0.0
        %5290 = vmatprep.subr.mxu0 0.0
        %5291 = vmatpush2.msra.mxu0 0.0
        %5292 = vmatprep.subr.mxu0 0.0
        %5293 = vmatpush2.msra.mxu0 0.0
        %5294 = vmatprep.subr.mxu0 0.0
        %5295 = vmatpush2.msra.mxu0 0.0
        %5296 = vmatprep.subr.mxu0 0.0
        %5297 = vmatpush2.msra.mxu0 0.0
        %5298 = vmatprep.subr.mxu0 0.0
        %5299 = vmatpush2.msra.mxu0 0.0
        %5300 = vmatprep.subr.mxu0 0.0
        %5301 = vmatpush2.msra.mxu0 0.0
        %5302 = vmatprep.subr.mxu0 0.0
        %5303 = vmatpush2.msra.mxu0 0.0
        %5304 = vmatprep.subr.mxu0 0.0
        %5305 = vmatpush2.msra.mxu0 0.0
        %5306 = vmatprep.subr.mxu0 0.0
        %5307 = vmatpush2.msra.mxu0 0.0
        %5308 = vmatprep.subr.mxu0 0.0
        %5309 = vmatpush2.msra.mxu0 0.0
        %5310 = vmatprep.subr.mxu0 0.0
        %5311 = vmatpush2.msra.mxu0 0.0
        %5312 = vmatprep.subr.mxu0 0.0
        %5313 = vmatpush2.msra.mxu0 0.0
        %5314 = vmatprep.subr.mxu0 0.0
        %5315 = vmatpush2.msra.mxu0 0.0
        %5316 = vmatprep.subr.mxu0 0.0
        %5317 = vmatpush2.msra.mxu0 0.0
        %5318 = vmatprep.mubr.f32.mxu0 0.0
        %v5319 = vand.u32 %v4877, 4294901760
        %5320 = vmatmul.mubr.f32.gmra.mxu0 %v5319
        %v5321 = vpop.f32.mrf.mxu0
        %v5322 = vadd.f32 %v5250, %v5321
        %v5323 = vpop.f32.mrf.mxu0
        %5324 = vdwg.mxu0
        %5325 = vrot.lane.b32.xlu0 %v1231, 32
        %v5326 = vpop.permute.xlu0 %5325
        %5327 = vrot.lane.b32.xlu0 %v1895, 32
        %v5328 = vpop.permute.xlu0 %5327
        %v5329 = vsel %vm2563, %v5326, 0
        %v5331 = vsel %vm2563, %v5328, 0
        %5333 = vmatprep.subr.mxu0 0.0
        %5334 = vmatpush1.xpose.msra.mxu0 0.0
        %5335 = vmatprep.subr.mxu0 0.0
        %5336 = vmatpush1.xpose.msra.mxu0 0.0
        %5337 = vmatprep.subr.mxu0 0.0
        %5338 = vmatpush1.xpose.msra.mxu0 0.0
        %5339 = vmatprep.subr.mxu0 0.0
        %5340 = vmatpush1.xpose.msra.mxu0 0.0
        %5341 = vmatprep.subr.mxu0 0.0
        %5342 = vmatpush1.xpose.msra.mxu0 0.0
        %5343 = vmatprep.subr.mxu0 0.0
        %5344 = vmatpush1.xpose.msra.mxu0 0.0
        %5345 = vmatprep.subr.mxu0 0.0
        %5346 = vmatpush1.xpose.msra.mxu0 0.0
        %5347 = vmatprep.subr.mxu0 0.0
        %5348 = vmatpush1.xpose.msra.mxu0 0.0
        %5349 = vmatprep.subr.mxu0 0.0
        %5350 = vmatpush1.xpose.msra.mxu0 0.0
        %5351 = vmatprep.subr.mxu0 0.0
        %5352 = vmatpush1.xpose.msra.mxu0 0.0
        %5353 = vmatprep.subr.mxu0 0.0
        %5354 = vmatpush1.xpose.msra.mxu0 0.0
        %5355 = vmatprep.subr.mxu0 0.0
        %5356 = vmatpush1.xpose.msra.mxu0 0.0
        %5357 = vmatprep.subr.mxu0 0.0
        %5358 = vmatpush1.xpose.msra.mxu0 0.0
        %5359 = vmatprep.subr.mxu0 0.0
        %5360 = vmatpush1.xpose.msra.mxu0 0.0
        %5361 = vmatprep.subr.mxu0 0.0
        %5362 = vmatpush1.xpose.msra.mxu0 0.0
        %5363 = vmatprep.subr.mxu0 0.0
        %v5364 = vand.u32 %v5331, 4294901760
        %5365 = vmatpush1.xpose.msra.mxu0 %v5364
        %5366 = vmatprep.subr.mxu0 0.0
        %5367 = vmatpush2.xpose.msra.mxu0 0.0
        %5368 = vmatprep.subr.mxu0 0.0
        %5369 = vmatpush2.xpose.msra.mxu0 0.0
        %5370 = vmatprep.subr.mxu0 0.0
        %5371 = vmatpush2.xpose.msra.mxu0 0.0
        %5372 = vmatprep.subr.mxu0 0.0
        %5373 = vmatpush2.xpose.msra.mxu0 0.0
        %5374 = vmatprep.subr.mxu0 0.0
        %5375 = vmatpush2.xpose.msra.mxu0 0.0
        %5376 = vmatprep.subr.mxu0 0.0
        %5377 = vmatpush2.xpose.msra.mxu0 0.0
        %5378 = vmatprep.subr.mxu0 0.0
        %5379 = vmatpush2.xpose.msra.mxu0 0.0
        %5380 = vmatprep.subr.mxu0 0.0
        %5381 = vmatpush2.xpose.msra.mxu0 0.0
        %5382 = vmatprep.subr.mxu0 0.0
        %5383 = vmatpush2.xpose.msra.mxu0 0.0
        %5384 = vmatprep.subr.mxu0 0.0
        %5385 = vmatpush2.xpose.msra.mxu0 0.0
        %5386 = vmatprep.subr.mxu0 0.0
        %5387 = vmatpush2.xpose.msra.mxu0 0.0
        %5388 = vmatprep.subr.mxu0 0.0
        %5389 = vmatpush2.xpose.msra.mxu0 0.0
        %5390 = vmatprep.subr.mxu0 0.0
        %5391 = vmatpush2.xpose.msra.mxu0 0.0
        %5392 = vmatprep.subr.mxu0 0.0
        %5393 = vmatpush2.xpose.msra.mxu0 0.0
        %5394 = vmatprep.subr.mxu0 0.0
        %5395 = vmatpush2.xpose.msra.mxu0 0.0
        %5396 = vmatprep.subr.mxu0 0.0
        %5397 = vmatpush2.xpose.msra.mxu0 0.0
        %5398 = vmatprep.mubr.f32.mxu0 0.0
        %v5399 = vand.u32 %v5329, 4294901760
        %v5400 = vsub.f32 %v5329, %v5399
        %v5401 = vand.u32 %v5400, 4294901760
        %v5402 = vsub.f32 %v5400, %v5401
        %v5403 = vand.u32 %v5402, 4294901760
        %5404 = vmatmul.mubr.f32.gmra.mxu0 %v5403
        %v5405 = vpop.f32.mrf.mxu0
        %v5406 = vadd.f32 0.0, %v5405
        %v5407 = vpop.f32.mrf.mxu0
        %5408 = vdwg.mxu0
        %5409 = vmatprep.subr.mxu0 0.0
        %5410 = vmatpush1.xpose.msra.mxu0 0.0
        %5411 = vmatprep.subr.mxu0 0.0
        %5412 = vmatpush1.xpose.msra.mxu0 0.0
        %5413 = vmatprep.subr.mxu0 0.0
        %5414 = vmatpush1.xpose.msra.mxu0 0.0
        %5415 = vmatprep.subr.mxu0 0.0
        %5416 = vmatpush1.xpose.msra.mxu0 0.0
        %5417 = vmatprep.subr.mxu0 0.0
        %5418 = vmatpush1.xpose.msra.mxu0 0.0
        %5419 = vmatprep.subr.mxu0 0.0
        %5420 = vmatpush1.xpose.msra.mxu0 0.0
        %5421 = vmatprep.subr.mxu0 0.0
        %5422 = vmatpush1.xpose.msra.mxu0 0.0
        %5423 = vmatprep.subr.mxu0 0.0
        %5424 = vmatpush1.xpose.msra.mxu0 0.0
        %5425 = vmatprep.subr.mxu0 0.0
        %5426 = vmatpush1.xpose.msra.mxu0 0.0
        %5427 = vmatprep.subr.mxu0 0.0
        %5428 = vmatpush1.xpose.msra.mxu0 0.0
        %5429 = vmatprep.subr.mxu0 0.0
        %5430 = vmatpush1.xpose.msra.mxu0 0.0
        %5431 = vmatprep.subr.mxu0 0.0
        %5432 = vmatpush1.xpose.msra.mxu0 0.0
        %5433 = vmatprep.subr.mxu0 0.0
        %5434 = vmatpush1.xpose.msra.mxu0 0.0
        %5435 = vmatprep.subr.mxu0 0.0
        %5436 = vmatpush1.xpose.msra.mxu0 0.0
        %5437 = vmatprep.subr.mxu0 0.0
        %5438 = vmatpush1.xpose.msra.mxu0 0.0
        %5439 = vmatprep.subr.mxu0 0.0
        %v5440 = vand.u32 %v5331, 4294901760
        %v5441 = vsub.f32 %v5331, %v5440
        %v5442 = vand.u32 %v5441, 4294901760
        %v5443 = vsub.f32 %v5441, %v5442
        %v5444 = vand.u32 %v5443, 4294901760
        %5445 = vmatpush1.xpose.msra.mxu0 %v5444
        %5446 = vmatprep.subr.mxu0 0.0
        %5447 = vmatpush2.xpose.msra.mxu0 0.0
        %5448 = vmatprep.subr.mxu0 0.0
        %5449 = vmatpush2.xpose.msra.mxu0 0.0
        %5450 = vmatprep.subr.mxu0 0.0
        %5451 = vmatpush2.xpose.msra.mxu0 0.0
        %5452 = vmatprep.subr.mxu0 0.0
        %5453 = vmatpush2.xpose.msra.mxu0 0.0
        %5454 = vmatprep.subr.mxu0 0.0
        %5455 = vmatpush2.xpose.msra.mxu0 0.0
        %5456 = vmatprep.subr.mxu0 0.0
        %5457 = vmatpush2.xpose.msra.mxu0 0.0
        %5458 = vmatprep.subr.mxu0 0.0
        %5459 = vmatpush2.xpose.msra.mxu0 0.0
        %5460 = vmatprep.subr.mxu0 0.0
        %5461 = vmatpush2.xpose.msra.mxu0 0.0
        %5462 = vmatprep.subr.mxu0 0.0
        %5463 = vmatpush2.xpose.msra.mxu0 0.0
        %5464 = vmatprep.subr.mxu0 0.0
        %5465 = vmatpush2.xpose.msra.mxu0 0.0
        %5466 = vmatprep.subr.mxu0 0.0
        %5467 = vmatpush2.xpose.msra.mxu0 0.0
        %5468 = vmatprep.subr.mxu0 0.0
        %5469 = vmatpush2.xpose.msra.mxu0 0.0
        %5470 = vmatprep.subr.mxu0 0.0
        %5471 = vmatpush2.xpose.msra.mxu0 0.0
        %5472 = vmatprep.subr.mxu0 0.0
        %5473 = vmatpush2.xpose.msra.mxu0 0.0
        %5474 = vmatprep.subr.mxu0 0.0
        %5475 = vmatpush2.xpose.msra.mxu0 0.0
        %5476 = vmatprep.subr.mxu0 0.0
        %5477 = vmatpush2.xpose.msra.mxu0 0.0
        %5478 = vmatprep.mubr.f32.mxu0 0.0
        %v5479 = vand.u32 %v5329, 4294901760
        %5480 = vmatmul.mubr.f32.gmra.mxu0 %v5479
        %v5481 = vpop.f32.mrf.mxu0
        %v5482 = vadd.f32 %v5406, %v5481
        %v5483 = vpop.f32.mrf.mxu0
        %5484 = vdwg.mxu0
        %5485 = vmatprep.subr.mxu0 0.0
        %5486 = vmatpush1.xpose.msra.mxu0 0.0
        %5487 = vmatprep.subr.mxu0 0.0
        %5488 = vmatpush1.xpose.msra.mxu0 0.0
        %5489 = vmatprep.subr.mxu0 0.0
        %5490 = vmatpush1.xpose.msra.mxu0 0.0
        %5491 = vmatprep.subr.mxu0 0.0
        %5492 = vmatpush1.xpose.msra.mxu0 0.0
        %5493 = vmatprep.subr.mxu0 0.0
        %5494 = vmatpush1.xpose.msra.mxu0 0.0
        %5495 = vmatprep.subr.mxu0 0.0
        %5496 = vmatpush1.xpose.msra.mxu0 0.0
        %5497 = vmatprep.subr.mxu0 0.0
        %5498 = vmatpush1.xpose.msra.mxu0 0.0
        %5499 = vmatprep.subr.mxu0 0.0
        %5500 = vmatpush1.xpose.msra.mxu0 0.0
        %5501 = vmatprep.subr.mxu0 0.0
        %5502 = vmatpush1.xpose.msra.mxu0 0.0
        %5503 = vmatprep.subr.mxu0 0.0
        %5504 = vmatpush1.xpose.msra.mxu0 0.0
        %5505 = vmatprep.subr.mxu0 0.0
        %5506 = vmatpush1.xpose.msra.mxu0 0.0
        %5507 = vmatprep.subr.mxu0 0.0
        %5508 = vmatpush1.xpose.msra.mxu0 0.0
        %5509 = vmatprep.subr.mxu0 0.0
        %5510 = vmatpush1.xpose.msra.mxu0 0.0
        %5511 = vmatprep.subr.mxu0 0.0
        %5512 = vmatpush1.xpose.msra.mxu0 0.0
        %5513 = vmatprep.subr.mxu0 0.0
        %5514 = vmatpush1.xpose.msra.mxu0 0.0
        %5515 = vmatprep.subr.mxu0 0.0
        %v5516 = vand.u32 %v5331, 4294901760
        %v5517 = vsub.f32 %v5331, %v5516
        %5518 = vmatpush1.xpose.msra.mxu0 %v5517
        %5519 = vmatprep.subr.mxu0 0.0
        %5520 = vmatpush2.xpose.msra.mxu0 0.0
        %5521 = vmatprep.subr.mxu0 0.0
        %5522 = vmatpush2.xpose.msra.mxu0 0.0
        %5523 = vmatprep.subr.mxu0 0.0
        %5524 = vmatpush2.xpose.msra.mxu0 0.0
        %5525 = vmatprep.subr.mxu0 0.0
        %5526 = vmatpush2.xpose.msra.mxu0 0.0
        %5527 = vmatprep.subr.mxu0 0.0
        %5528 = vmatpush2.xpose.msra.mxu0 0.0
        %5529 = vmatprep.subr.mxu0 0.0
        %5530 = vmatpush2.xpose.msra.mxu0 0.0
        %5531 = vmatprep.subr.mxu0 0.0
        %5532 = vmatpush2.xpose.msra.mxu0 0.0
        %5533 = vmatprep.subr.mxu0 0.0
        %5534 = vmatpush2.xpose.msra.mxu0 0.0
        %5535 = vmatprep.subr.mxu0 0.0
        %5536 = vmatpush2.xpose.msra.mxu0 0.0
        %5537 = vmatprep.subr.mxu0 0.0
        %5538 = vmatpush2.xpose.msra.mxu0 0.0
        %5539 = vmatprep.subr.mxu0 0.0
        %5540 = vmatpush2.xpose.msra.mxu0 0.0
        %5541 = vmatprep.subr.mxu0 0.0
        %5542 = vmatpush2.xpose.msra.mxu0 0.0
        %5543 = vmatprep.subr.mxu0 0.0
        %5544 = vmatpush2.xpose.msra.mxu0 0.0
        %5545 = vmatprep.subr.mxu0 0.0
        %5546 = vmatpush2.xpose.msra.mxu0 0.0
        %5547 = vmatprep.subr.mxu0 0.0
        %5548 = vmatpush2.xpose.msra.mxu0 0.0
        %5549 = vmatprep.subr.mxu0 0.0
        %5550 = vmatpush2.xpose.msra.mxu0 0.0
        %5551 = vmatprep.mubr.f32.mxu0 0.0
        %v5552 = vand.u32 %v5329, 4294901760
        %v5553 = vsub.f32 %v5329, %v5552
        %5554 = vmatmul.mubr.f32.gmra.mxu0 %v5553
        %v5555 = vpop.f32.mrf.mxu0
        %v5556 = vadd.f32 %v5482, %v5555
        %v5557 = vpop.f32.mrf.mxu0
        %5558 = vdwg.mxu0
        %5559 = vmatprep.subr.mxu0 0.0
        %5560 = vmatpush1.xpose.msra.mxu0 0.0
        %5561 = vmatprep.subr.mxu0 0.0
        %5562 = vmatpush1.xpose.msra.mxu0 0.0
        %5563 = vmatprep.subr.mxu0 0.0
        %5564 = vmatpush1.xpose.msra.mxu0 0.0
        %5565 = vmatprep.subr.mxu0 0.0
        %5566 = vmatpush1.xpose.msra.mxu0 0.0
        %5567 = vmatprep.subr.mxu0 0.0
        %5568 = vmatpush1.xpose.msra.mxu0 0.0
        %5569 = vmatprep.subr.mxu0 0.0
        %5570 = vmatpush1.xpose.msra.mxu0 0.0
        %5571 = vmatprep.subr.mxu0 0.0
        %5572 = vmatpush1.xpose.msra.mxu0 0.0
        %5573 = vmatprep.subr.mxu0 0.0
        %5574 = vmatpush1.xpose.msra.mxu0 0.0
        %5575 = vmatprep.subr.mxu0 0.0
        %5576 = vmatpush1.xpose.msra.mxu0 0.0
        %5577 = vmatprep.subr.mxu0 0.0
        %5578 = vmatpush1.xpose.msra.mxu0 0.0
        %5579 = vmatprep.subr.mxu0 0.0
        %5580 = vmatpush1.xpose.msra.mxu0 0.0
        %5581 = vmatprep.subr.mxu0 0.0
        %5582 = vmatpush1.xpose.msra.mxu0 0.0
        %5583 = vmatprep.subr.mxu0 0.0
        %5584 = vmatpush1.xpose.msra.mxu0 0.0
        %5585 = vmatprep.subr.mxu0 0.0
        %5586 = vmatpush1.xpose.msra.mxu0 0.0
        %5587 = vmatprep.subr.mxu0 0.0
        %5588 = vmatpush1.xpose.msra.mxu0 0.0
        %5589 = vmatprep.subr.mxu0 0.0
        %v5590 = vand.u32 %v5331, 4294901760
        %5591 = vmatpush1.xpose.msra.mxu0 %v5590
        %5592 = vmatprep.subr.mxu0 0.0
        %5593 = vmatpush2.xpose.msra.mxu0 0.0
        %5594 = vmatprep.subr.mxu0 0.0
        %5595 = vmatpush2.xpose.msra.mxu0 0.0
        %5596 = vmatprep.subr.mxu0 0.0
        %5597 = vmatpush2.xpose.msra.mxu0 0.0
        %5598 = vmatprep.subr.mxu0 0.0
        %5599 = vmatpush2.xpose.msra.mxu0 0.0
        %5600 = vmatprep.subr.mxu0 0.0
        %5601 = vmatpush2.xpose.msra.mxu0 0.0
        %5602 = vmatprep.subr.mxu0 0.0
        %5603 = vmatpush2.xpose.msra.mxu0 0.0
        %5604 = vmatprep.subr.mxu0 0.0
        %5605 = vmatpush2.xpose.msra.mxu0 0.0
        %5606 = vmatprep.subr.mxu0 0.0
        %5607 = vmatpush2.xpose.msra.mxu0 0.0
        %5608 = vmatprep.subr.mxu0 0.0
        %5609 = vmatpush2.xpose.msra.mxu0 0.0
        %5610 = vmatprep.subr.mxu0 0.0
        %5611 = vmatpush2.xpose.msra.mxu0 0.0
        %5612 = vmatprep.subr.mxu0 0.0
        %5613 = vmatpush2.xpose.msra.mxu0 0.0
        %5614 = vmatprep.subr.mxu0 0.0
        %5615 = vmatpush2.xpose.msra.mxu0 0.0
        %5616 = vmatprep.subr.mxu0 0.0
        %5617 = vmatpush2.xpose.msra.mxu0 0.0
        %5618 = vmatprep.subr.mxu0 0.0
        %5619 = vmatpush2.xpose.msra.mxu0 0.0
        %5620 = vmatprep.subr.mxu0 0.0
        %5621 = vmatpush2.xpose.msra.mxu0 0.0
        %5622 = vmatprep.subr.mxu0 0.0
        %5623 = vmatpush2.xpose.msra.mxu0 0.0
        %5624 = vmatprep.mubr.f32.mxu0 0.0
        %v5625 = vand.u32 %v5329, 4294901760
        %v5626 = vsub.f32 %v5329, %v5625
        %v5627 = vand.u32 %v5626, 4294901760
        %5628 = vmatmul.mubr.f32.gmra.mxu0 %v5627
        %v5629 = vpop.f32.mrf.mxu0
        %v5630 = vadd.f32 %v5556, %v5629
        %v5631 = vpop.f32.mrf.mxu0
        %5632 = vdwg.mxu0
        %5633 = vmatprep.subr.mxu0 0.0
        %5634 = vmatpush1.xpose.msra.mxu0 0.0
        %5635 = vmatprep.subr.mxu0 0.0
        %5636 = vmatpush1.xpose.msra.mxu0 0.0
        %5637 = vmatprep.subr.mxu0 0.0
        %5638 = vmatpush1.xpose.msra.mxu0 0.0
        %5639 = vmatprep.subr.mxu0 0.0
        %5640 = vmatpush1.xpose.msra.mxu0 0.0
        %5641 = vmatprep.subr.mxu0 0.0
        %5642 = vmatpush1.xpose.msra.mxu0 0.0
        %5643 = vmatprep.subr.mxu0 0.0
        %5644 = vmatpush1.xpose.msra.mxu0 0.0
        %5645 = vmatprep.subr.mxu0 0.0
        %5646 = vmatpush1.xpose.msra.mxu0 0.0
        %5647 = vmatprep.subr.mxu0 0.0
        %5648 = vmatpush1.xpose.msra.mxu0 0.0
        %5649 = vmatprep.subr.mxu0 0.0
        %5650 = vmatpush1.xpose.msra.mxu0 0.0
        %5651 = vmatprep.subr.mxu0 0.0
        %5652 = vmatpush1.xpose.msra.mxu0 0.0
        %5653 = vmatprep.subr.mxu0 0.0
        %5654 = vmatpush1.xpose.msra.mxu0 0.0
        %5655 = vmatprep.subr.mxu0 0.0
        %5656 = vmatpush1.xpose.msra.mxu0 0.0
        %5657 = vmatprep.subr.mxu0 0.0
        %5658 = vmatpush1.xpose.msra.mxu0 0.0
        %5659 = vmatprep.subr.mxu0 0.0
        %5660 = vmatpush1.xpose.msra.mxu0 0.0
        %5661 = vmatprep.subr.mxu0 0.0
        %5662 = vmatpush1.xpose.msra.mxu0 0.0
        %5663 = vmatprep.subr.mxu0 0.0
        %v5664 = vand.u32 %v5331, 4294901760
        %v5665 = vsub.f32 %v5331, %v5664
        %v5666 = vand.u32 %v5665, 4294901760
        %5667 = vmatpush1.xpose.msra.mxu0 %v5666
        %5668 = vmatprep.subr.mxu0 0.0
        %5669 = vmatpush2.xpose.msra.mxu0 0.0
        %5670 = vmatprep.subr.mxu0 0.0
        %5671 = vmatpush2.xpose.msra.mxu0 0.0
        %5672 = vmatprep.subr.mxu0 0.0
        %5673 = vmatpush2.xpose.msra.mxu0 0.0
        %5674 = vmatprep.subr.mxu0 0.0
        %5675 = vmatpush2.xpose.msra.mxu0 0.0
        %5676 = vmatprep.subr.mxu0 0.0
        %5677 = vmatpush2.xpose.msra.mxu0 0.0
        %5678 = vmatprep.subr.mxu0 0.0
        %5679 = vmatpush2.xpose.msra.mxu0 0.0
        %5680 = vmatprep.subr.mxu0 0.0
        %5681 = vmatpush2.xpose.msra.mxu0 0.0
        %5682 = vmatprep.subr.mxu0 0.0
        %5683 = vmatpush2.xpose.msra.mxu0 0.0
        %5684 = vmatprep.subr.mxu0 0.0
        %5685 = vmatpush2.xpose.msra.mxu0 0.0
        %5686 = vmatprep.subr.mxu0 0.0
        %5687 = vmatpush2.xpose.msra.mxu0 0.0
        %5688 = vmatprep.subr.mxu0 0.0
        %5689 = vmatpush2.xpose.msra.mxu0 0.0
        %5690 = vmatprep.subr.mxu0 0.0
        %5691 = vmatpush2.xpose.msra.mxu0 0.0
        %5692 = vmatprep.subr.mxu0 0.0
        %5693 = vmatpush2.xpose.msra.mxu0 0.0
        %5694 = vmatprep.subr.mxu0 0.0
        %5695 = vmatpush2.xpose.msra.mxu0 0.0
        %5696 = vmatprep.subr.mxu0 0.0
        %5697 = vmatpush2.xpose.msra.mxu0 0.0
        %5698 = vmatprep.subr.mxu0 0.0
        %5699 = vmatpush2.xpose.msra.mxu0 0.0
        %5700 = vmatprep.mubr.f32.mxu0 0.0
        %v5701 = vand.u32 %v5329, 4294901760
        %5702 = vmatmul.mubr.f32.gmra.mxu0 %v5701
        %v5703 = vpop.f32.mrf.mxu0
        %v5704 = vadd.f32 %v5630, %v5703
        %v5705 = vpop.f32.mrf.mxu0
        %5706 = vdwg.mxu0
        %5707 = vmatprep.subr.mxu0 0.0
        %5708 = vmatpush1.xpose.msra.mxu0 0.0
        %5709 = vmatprep.subr.mxu0 0.0
        %5710 = vmatpush1.xpose.msra.mxu0 0.0
        %5711 = vmatprep.subr.mxu0 0.0
        %5712 = vmatpush1.xpose.msra.mxu0 0.0
        %5713 = vmatprep.subr.mxu0 0.0
        %5714 = vmatpush1.xpose.msra.mxu0 0.0
        %5715 = vmatprep.subr.mxu0 0.0
        %5716 = vmatpush1.xpose.msra.mxu0 0.0
        %5717 = vmatprep.subr.mxu0 0.0
        %5718 = vmatpush1.xpose.msra.mxu0 0.0
        %5719 = vmatprep.subr.mxu0 0.0
        %5720 = vmatpush1.xpose.msra.mxu0 0.0
        %5721 = vmatprep.subr.mxu0 0.0
        %5722 = vmatpush1.xpose.msra.mxu0 0.0
        %5723 = vmatprep.subr.mxu0 0.0
        %5724 = vmatpush1.xpose.msra.mxu0 0.0
        %5725 = vmatprep.subr.mxu0 0.0
        %5726 = vmatpush1.xpose.msra.mxu0 0.0
        %5727 = vmatprep.subr.mxu0 0.0
        %5728 = vmatpush1.xpose.msra.mxu0 0.0
        %5729 = vmatprep.subr.mxu0 0.0
        %5730 = vmatpush1.xpose.msra.mxu0 0.0
        %5731 = vmatprep.subr.mxu0 0.0
        %5732 = vmatpush1.xpose.msra.mxu0 0.0
        %5733 = vmatprep.subr.mxu0 0.0
        %5734 = vmatpush1.xpose.msra.mxu0 0.0
        %5735 = vmatprep.subr.mxu0 0.0
        %5736 = vmatpush1.xpose.msra.mxu0 0.0
        %5737 = vmatprep.subr.mxu0 0.0
        %v5738 = vand.u32 %v5331, 4294901760
        %5739 = vmatpush1.xpose.msra.mxu0 %v5738
        %5740 = vmatprep.subr.mxu0 0.0
        %5741 = vmatpush2.xpose.msra.mxu0 0.0
        %5742 = vmatprep.subr.mxu0 0.0
        %5743 = vmatpush2.xpose.msra.mxu0 0.0
        %5744 = vmatprep.subr.mxu0 0.0
        %5745 = vmatpush2.xpose.msra.mxu0 0.0
        %5746 = vmatprep.subr.mxu0 0.0
        %5747 = vmatpush2.xpose.msra.mxu0 0.0
        %5748 = vmatprep.subr.mxu0 0.0
        %5749 = vmatpush2.xpose.msra.mxu0 0.0
        %5750 = vmatprep.subr.mxu0 0.0
        %5751 = vmatpush2.xpose.msra.mxu0 0.0
        %5752 = vmatprep.subr.mxu0 0.0
        %5753 = vmatpush2.xpose.msra.mxu0 0.0
        %5754 = vmatprep.subr.mxu0 0.0
        %5755 = vmatpush2.xpose.msra.mxu0 0.0
        %5756 = vmatprep.subr.mxu0 0.0
        %5757 = vmatpush2.xpose.msra.mxu0 0.0
        %5758 = vmatprep.subr.mxu0 0.0
        %5759 = vmatpush2.xpose.msra.mxu0 0.0
        %5760 = vmatprep.subr.mxu0 0.0
        %5761 = vmatpush2.xpose.msra.mxu0 0.0
        %5762 = vmatprep.subr.mxu0 0.0
        %5763 = vmatpush2.xpose.msra.mxu0 0.0
        %5764 = vmatprep.subr.mxu0 0.0
        %5765 = vmatpush2.xpose.msra.mxu0 0.0
        %5766 = vmatprep.subr.mxu0 0.0
        %5767 = vmatpush2.xpose.msra.mxu0 0.0
        %5768 = vmatprep.subr.mxu0 0.0
        %5769 = vmatpush2.xpose.msra.mxu0 0.0
        %5770 = vmatprep.subr.mxu0 0.0
        %5771 = vmatpush2.xpose.msra.mxu0 0.0
        %5772 = vmatprep.mubr.f32.mxu0 0.0
        %v5773 = vand.u32 %v5329, 4294901760
        %5774 = vmatmul.mubr.f32.gmra.mxu0 %v5773
        %v5775 = vpop.f32.mrf.mxu0
        %v5776 = vadd.f32 %v5704, %v5775
        %v5777 = vpop.f32.mrf.mxu0
        %5778 = vdwg.mxu0
        %v5779 = vmul.f32 %v5776, 0.17677669
        %v5780 = vsel %vm3023, -1e+09, %v5779
        %v5781 = vsel %vm3025, %v5780, -inf
        %5782 = vmax.xlane.f32.xlu0 %v5781
        %v5783 = vpop.xlane.xlu0 %5782
        %v5784 = vsub.f32 %v5780, %v5783
        %v5785 = vmul.f32 %v5784, 1.442695
        %v5786 = vpow.pop %v5785
        %v5787 = vsel %vm3025, %v5786, 0.0
        %5788 = vadd.xlane.f32.xlu0 %v5787
        %v5789 = vpop.xlane.xlu0 %5788
        %v5790 = vrcp.pop %v5789
        %v5791 = vmul.f32 %v5786, %v5790
        %5792 = vrot.lane.b32.xlu0 %v2559, 32
        %v5793 = vpop.permute.xlu0 %5792
        %v5796 = vsel %vm3025, %v5791, 0
        %5798 = vmatprep.subr.mxu0 0.0
        %5799 = vmatpush1.msra.mxu0 0.0
        %5800 = vmatprep.subr.mxu0 0.0
        %5801 = vmatpush1.msra.mxu0 0.0
        %5802 = vmatprep.subr.mxu0 0.0
        %5803 = vmatpush1.msra.mxu0 0.0
        %5804 = vmatprep.subr.mxu0 0.0
        %5805 = vmatpush1.msra.mxu0 0.0
        %5806 = vmatprep.subr.mxu0 0.0
        %5807 = vmatpush1.msra.mxu0 0.0
        %5808 = vmatprep.subr.mxu0 0.0
        %5809 = vmatpush1.msra.mxu0 0.0
        %5810 = vmatprep.subr.mxu0 0.0
        %5811 = vmatpush1.msra.mxu0 0.0
        %5812 = vmatprep.subr.mxu0 0.0
        %5813 = vmatpush1.msra.mxu0 0.0
        %5814 = vmatprep.subr.mxu0 0.0
        %5815 = vmatpush1.msra.mxu0 0.0
        %5816 = vmatprep.subr.mxu0 0.0
        %5817 = vmatpush1.msra.mxu0 0.0
        %5818 = vmatprep.subr.mxu0 0.0
        %5819 = vmatpush1.msra.mxu0 0.0
        %5820 = vmatprep.subr.mxu0 0.0
        %5821 = vmatpush1.msra.mxu0 0.0
        %5822 = vmatprep.subr.mxu0 0.0
        %5823 = vmatpush1.msra.mxu0 0.0
        %5824 = vmatprep.subr.mxu0 0.0
        %5825 = vmatpush1.msra.mxu0 0.0
        %5826 = vmatprep.subr.mxu0 0.0
        %5827 = vmatpush1.msra.mxu0 0.0
        %5828 = vmatprep.subr.mxu0 0.0
        %v5829 = vand.u32 %v5793, 4294901760
        %5830 = vmatpush1.msra.mxu0 %v5829
        %5831 = vmatprep.subr.mxu0 0.0
        %5832 = vmatpush2.msra.mxu0 0.0
        %5833 = vmatprep.subr.mxu0 0.0
        %5834 = vmatpush2.msra.mxu0 0.0
        %5835 = vmatprep.subr.mxu0 0.0
        %5836 = vmatpush2.msra.mxu0 0.0
        %5837 = vmatprep.subr.mxu0 0.0
        %5838 = vmatpush2.msra.mxu0 0.0
        %5839 = vmatprep.subr.mxu0 0.0
        %5840 = vmatpush2.msra.mxu0 0.0
        %5841 = vmatprep.subr.mxu0 0.0
        %5842 = vmatpush2.msra.mxu0 0.0
        %5843 = vmatprep.subr.mxu0 0.0
        %5844 = vmatpush2.msra.mxu0 0.0
        %5845 = vmatprep.subr.mxu0 0.0
        %5846 = vmatpush2.msra.mxu0 0.0
        %5847 = vmatprep.subr.mxu0 0.0
        %5848 = vmatpush2.msra.mxu0 0.0
        %5849 = vmatprep.subr.mxu0 0.0
        %5850 = vmatpush2.msra.mxu0 0.0
        %5851 = vmatprep.subr.mxu0 0.0
        %5852 = vmatpush2.msra.mxu0 0.0
        %5853 = vmatprep.subr.mxu0 0.0
        %5854 = vmatpush2.msra.mxu0 0.0
        %5855 = vmatprep.subr.mxu0 0.0
        %5856 = vmatpush2.msra.mxu0 0.0
        %5857 = vmatprep.subr.mxu0 0.0
        %5858 = vmatpush2.msra.mxu0 0.0
        %5859 = vmatprep.subr.mxu0 0.0
        %5860 = vmatpush2.msra.mxu0 0.0
        %5861 = vmatprep.subr.mxu0 0.0
        %5862 = vmatpush2.msra.mxu0 0.0
        %5863 = vmatprep.mubr.f32.mxu0 0.0
        %v5864 = vand.u32 %v5796, 4294901760
        %v5865 = vsub.f32 %v5796, %v5864
        %v5866 = vand.u32 %v5865, 4294901760
        %v5867 = vsub.f32 %v5865, %v5866
        %v5868 = vand.u32 %v5867, 4294901760
        %5869 = vmatmul.mubr.f32.gmra.mxu0 %v5868
        %v5870 = vpop.f32.mrf.mxu0
        %v5871 = vadd.f32 0.0, %v5870
        %v5872 = vpop.f32.mrf.mxu0
        %5873 = vdwg.mxu0
        %5874 = vmatprep.subr.mxu0 0.0
        %5875 = vmatpush1.msra.mxu0 0.0
        %5876 = vmatprep.subr.mxu0 0.0
        %5877 = vmatpush1.msra.mxu0 0.0
        %5878 = vmatprep.subr.mxu0 0.0
        %5879 = vmatpush1.msra.mxu0 0.0
        %5880 = vmatprep.subr.mxu0 0.0
        %5881 = vmatpush1.msra.mxu0 0.0
        %5882 = vmatprep.subr.mxu0 0.0
        %5883 = vmatpush1.msra.mxu0 0.0
        %5884 = vmatprep.subr.mxu0 0.0
        %5885 = vmatpush1.msra.mxu0 0.0
        %5886 = vmatprep.subr.mxu0 0.0
        %5887 = vmatpush1.msra.mxu0 0.0
        %5888 = vmatprep.subr.mxu0 0.0
        %5889 = vmatpush1.msra.mxu0 0.0
        %5890 = vmatprep.subr.mxu0 0.0
        %5891 = vmatpush1.msra.mxu0 0.0
        %5892 = vmatprep.subr.mxu0 0.0
        %5893 = vmatpush1.msra.mxu0 0.0
        %5894 = vmatprep.subr.mxu0 0.0
        %5895 = vmatpush1.msra.mxu0 0.0
        %5896 = vmatprep.subr.mxu0 0.0
        %5897 = vmatpush1.msra.mxu0 0.0
        %5898 = vmatprep.subr.mxu0 0.0
        %5899 = vmatpush1.msra.mxu0 0.0
        %5900 = vmatprep.subr.mxu0 0.0
        %5901 = vmatpush1.msra.mxu0 0.0
        %5902 = vmatprep.subr.mxu0 0.0
        %5903 = vmatpush1.msra.mxu0 0.0
        %5904 = vmatprep.subr.mxu0 0.0
        %v5905 = vand.u32 %v5793, 4294901760
        %v5906 = vsub.f32 %v5793, %v5905
        %v5907 = vand.u32 %v5906, 4294901760
        %v5908 = vsub.f32 %v5906, %v5907
        %v5909 = vand.u32 %v5908, 4294901760
        %5910 = vmatpush1.msra.mxu0 %v5909
        %5911 = vmatprep.subr.mxu0 0.0
        %5912 = vmatpush2.msra.mxu0 0.0
        %5913 = vmatprep.subr.mxu0 0.0
        %5914 = vmatpush2.msra.mxu0 0.0
        %5915 = vmatprep.subr.mxu0 0.0
        %5916 = vmatpush2.msra.mxu0 0.0
        %5917 = vmatprep.subr.mxu0 0.0
        %5918 = vmatpush2.msra.mxu0 0.0
        %5919 = vmatprep.subr.mxu0 0.0
        %5920 = vmatpush2.msra.mxu0 0.0
        %5921 = vmatprep.subr.mxu0 0.0
        %5922 = vmatpush2.msra.mxu0 0.0
        %5923 = vmatprep.subr.mxu0 0.0
        %5924 = vmatpush2.msra.mxu0 0.0
        %5925 = vmatprep.subr.mxu0 0.0
        %5926 = vmatpush2.msra.mxu0 0.0
        %5927 = vmatprep.subr.mxu0 0.0
        %5928 = vmatpush2.msra.mxu0 0.0
        %5929 = vmatprep.subr.mxu0 0.0
        %5930 = vmatpush2.msra.mxu0 0.0
        %5931 = vmatprep.subr.mxu0 0.0
        %5932 = vmatpush2.msra.mxu0 0.0
        %5933 = vmatprep.subr.mxu0 0.0
        %5934 = vmatpush2.msra.mxu0 0.0
        %5935 = vmatprep.subr.mxu0 0.0
        %5936 = vmatpush2.msra.mxu0 0.0
        %5937 = vmatprep.subr.mxu0 0.0
        %5938 = vmatpush2.msra.mxu0 0.0
        %5939 = vmatprep.subr.mxu0 0.0
        %5940 = vmatpush2.msra.mxu0 0.0
        %5941 = vmatprep.subr.mxu0 0.0
        %5942 = vmatpush2.msra.mxu0 0.0
        %5943 = vmatprep.mubr.f32.mxu0 0.0
        %v5944 = vand.u32 %v5796, 4294901760
        %5945 = vmatmul.mubr.f32.gmra.mxu0 %v5944
        %v5946 = vpop.f32.mrf.mxu0
        %v5947 = vadd.f32 %v5871, %v5946
        %v5948 = vpop.f32.mrf.mxu0
        %5949 = vdwg.mxu0
        %5950 = vmatprep.subr.mxu0 0.0
        %5951 = vmatpush1.msra.mxu0 0.0
        %5952 = vmatprep.subr.mxu0 0.0
        %5953 = vmatpush1.msra.mxu0 0.0
        %5954 = vmatprep.subr.mxu0 0.0
        %5955 = vmatpush1.msra.mxu0 0.0
        %5956 = vmatprep.subr.mxu0 0.0
        %5957 = vmatpush1.msra.mxu0 0.0
        %5958 = vmatprep.subr.mxu0 0.0
        %5959 = vmatpush1.msra.mxu0 0.0
        %5960 = vmatprep.subr.mxu0 0.0
        %5961 = vmatpush1.msra.mxu0 0.0
        %5962 = vmatprep.subr.mxu0 0.0
        %5963 = vmatpush1.msra.mxu0 0.0
        %5964 = vmatprep.subr.mxu0 0.0
        %5965 = vmatpush1.msra.mxu0 0.0
        %5966 = vmatprep.subr.mxu0 0.0
        %5967 = vmatpush1.msra.mxu0 0.0
        %5968 = vmatprep.subr.mxu0 0.0
        %5969 = vmatpush1.msra.mxu0 0.0
        %5970 = vmatprep.subr.mxu0 0.0
        %5971 = vmatpush1.msra.mxu0 0.0
        %5972 = vmatprep.subr.mxu0 0.0
        %5973 = vmatpush1.msra.mxu0 0.0
        %5974 = vmatprep.subr.mxu0 0.0
        %5975 = vmatpush1.msra.mxu0 0.0
        %5976 = vmatprep.subr.mxu0 0.0
        %5977 = vmatpush1.msra.mxu0 0.0
        %5978 = vmatprep.subr.mxu0 0.0
        %5979 = vmatpush1.msra.mxu0 0.0
        %5980 = vmatprep.subr.mxu0 0.0
        %v5981 = vand.u32 %v5793, 4294901760
        %v5982 = vsub.f32 %v5793, %v5981
        %5983 = vmatpush1.msra.mxu0 %v5982
        %5984 = vmatprep.subr.mxu0 0.0
        %5985 = vmatpush2.msra.mxu0 0.0
        %5986 = vmatprep.subr.mxu0 0.0
        %5987 = vmatpush2.msra.mxu0 0.0
        %5988 = vmatprep.subr.mxu0 0.0
        %5989 = vmatpush2.msra.mxu0 0.0
        %5990 = vmatprep.subr.mxu0 0.0
        %5991 = vmatpush2.msra.mxu0 0.0
        %5992 = vmatprep.subr.mxu0 0.0
        %5993 = vmatpush2.msra.mxu0 0.0
        %5994 = vmatprep.subr.mxu0 0.0
        %5995 = vmatpush2.msra.mxu0 0.0
        %5996 = vmatprep.subr.mxu0 0.0
        %5997 = vmatpush2.msra.mxu0 0.0
        %5998 = vmatprep.subr.mxu0 0.0
        %5999 = vmatpush2.msra.mxu0 0.0
        %6000 = vmatprep.subr.mxu0 0.0
        %6001 = vmatpush2.msra.mxu0 0.0
        %6002 = vmatprep.subr.mxu0 0.0
        %6003 = vmatpush2.msra.mxu0 0.0
        %6004 = vmatprep.subr.mxu0 0.0
        %6005 = vmatpush2.msra.mxu0 0.0
        %6006 = vmatprep.subr.mxu0 0.0
        %6007 = vmatpush2.msra.mxu0 0.0
        %6008 = vmatprep.subr.mxu0 0.0
        %6009 = vmatpush2.msra.mxu0 0.0
        %6010 = vmatprep.subr.mxu0 0.0
        %6011 = vmatpush2.msra.mxu0 0.0
        %6012 = vmatprep.subr.mxu0 0.0
        %6013 = vmatpush2.msra.mxu0 0.0
        %6014 = vmatprep.subr.mxu0 0.0
        %6015 = vmatpush2.msra.mxu0 0.0
        %6016 = vmatprep.mubr.f32.mxu0 0.0
        %v6017 = vand.u32 %v5796, 4294901760
        %v6018 = vsub.f32 %v5796, %v6017
        %6019 = vmatmul.mubr.f32.gmra.mxu0 %v6018
        %v6020 = vpop.f32.mrf.mxu0
        %v6021 = vadd.f32 %v5947, %v6020
        %v6022 = vpop.f32.mrf.mxu0
        %6023 = vdwg.mxu0
        %6024 = vmatprep.subr.mxu0 0.0
        %6025 = vmatpush1.msra.mxu0 0.0
        %6026 = vmatprep.subr.mxu0 0.0
        %6027 = vmatpush1.msra.mxu0 0.0
        %6028 = vmatprep.subr.mxu0 0.0
        %6029 = vmatpush1.msra.mxu0 0.0
        %6030 = vmatprep.subr.mxu0 0.0
        %6031 = vmatpush1.msra.mxu0 0.0
        %6032 = vmatprep.subr.mxu0 0.0
        %6033 = vmatpush1.msra.mxu0 0.0
        %6034 = vmatprep.subr.mxu0 0.0
        %6035 = vmatpush1.msra.mxu0 0.0
        %6036 = vmatprep.subr.mxu0 0.0
        %6037 = vmatpush1.msra.mxu0 0.0
        %6038 = vmatprep.subr.mxu0 0.0
        %6039 = vmatpush1.msra.mxu0 0.0
        %6040 = vmatprep.subr.mxu0 0.0
        %6041 = vmatpush1.msra.mxu0 0.0
        %6042 = vmatprep.subr.mxu0 0.0
        %6043 = vmatpush1.msra.mxu0 0.0
        %6044 = vmatprep.subr.mxu0 0.0
        %6045 = vmatpush1.msra.mxu0 0.0
        %6046 = vmatprep.subr.mxu0 0.0
        %6047 = vmatpush1.msra.mxu0 0.0
        %6048 = vmatprep.subr.mxu0 0.0
        %6049 = vmatpush1.msra.mxu0 0.0
        %6050 = vmatprep.subr.mxu0 0.0
        %6051 = vmatpush1.msra.mxu0 0.0
        %6052 = vmatprep.subr.mxu0 0.0
        %6053 = vmatpush1.msra.mxu0 0.0
        %6054 = vmatprep.subr.mxu0 0.0
        %v6055 = vand.u32 %v5793, 4294901760
        %6056 = vmatpush1.msra.mxu0 %v6055
        %6057 = vmatprep.subr.mxu0 0.0
        %6058 = vmatpush2.msra.mxu0 0.0
        %6059 = vmatprep.subr.mxu0 0.0
        %6060 = vmatpush2.msra.mxu0 0.0
        %6061 = vmatprep.subr.mxu0 0.0
        %6062 = vmatpush2.msra.mxu0 0.0
        %6063 = vmatprep.subr.mxu0 0.0
        %6064 = vmatpush2.msra.mxu0 0.0
        %6065 = vmatprep.subr.mxu0 0.0
        %6066 = vmatpush2.msra.mxu0 0.0
        %6067 = vmatprep.subr.mxu0 0.0
        %6068 = vmatpush2.msra.mxu0 0.0
        %6069 = vmatprep.subr.mxu0 0.0
        %6070 = vmatpush2.msra.mxu0 0.0
        %6071 = vmatprep.subr.mxu0 0.0
        %6072 = vmatpush2.msra.mxu0 0.0
        %6073 = vmatprep.subr.mxu0 0.0
        %6074 = vmatpush2.msra.mxu0 0.0
        %6075 = vmatprep.subr.mxu0 0.0
        %6076 = vmatpush2.msra.mxu0 0.0
        %6077 = vmatprep.subr.mxu0 0.0
        %6078 = vmatpush2.msra.mxu0 0.0
        %6079 = vmatprep.subr.mxu0 0.0
        %6080 = vmatpush2.msra.mxu0 0.0
        %6081 = vmatprep.subr.mxu0 0.0
        %6082 = vmatpush2.msra.mxu0 0.0
        %6083 = vmatprep.subr.mxu0 0.0
        %6084 = vmatpush2.msra.mxu0 0.0
        %6085 = vmatprep.subr.mxu0 0.0
        %6086 = vmatpush2.msra.mxu0 0.0
        %6087 = vmatprep.subr.mxu0 0.0
        %6088 = vmatpush2.msra.mxu0 0.0
        %6089 = vmatprep.mubr.f32.mxu0 0.0
        %v6090 = vand.u32 %v5796, 4294901760
        %v6091 = vsub.f32 %v5796, %v6090
        %v6092 = vand.u32 %v6091, 4294901760
        %6093 = vmatmul.mubr.f32.gmra.mxu0 %v6092
        %v6094 = vpop.f32.mrf.mxu0
        %v6095 = vadd.f32 %v6021, %v6094
        %v6096 = vpop.f32.mrf.mxu0
        %6097 = vdwg.mxu0
        %6098 = vmatprep.subr.mxu0 0.0
        %6099 = vmatpush1.msra.mxu0 0.0
        %6100 = vmatprep.subr.mxu0 0.0
        %6101 = vmatpush1.msra.mxu0 0.0
        %6102 = vmatprep.subr.mxu0 0.0
        %6103 = vmatpush1.msra.mxu0 0.0
        %6104 = vmatprep.subr.mxu0 0.0
        %6105 = vmatpush1.msra.mxu0 0.0
        %6106 = vmatprep.subr.mxu0 0.0
        %6107 = vmatpush1.msra.mxu0 0.0
        %6108 = vmatprep.subr.mxu0 0.0
        %6109 = vmatpush1.msra.mxu0 0.0
        %6110 = vmatprep.subr.mxu0 0.0
        %6111 = vmatpush1.msra.mxu0 0.0
        %6112 = vmatprep.subr.mxu0 0.0
        %6113 = vmatpush1.msra.mxu0 0.0
        %6114 = vmatprep.subr.mxu0 0.0
        %6115 = vmatpush1.msra.mxu0 0.0
        %6116 = vmatprep.subr.mxu0 0.0
        %6117 = vmatpush1.msra.mxu0 0.0
        %6118 = vmatprep.subr.mxu0 0.0
        %6119 = vmatpush1.msra.mxu0 0.0
        %6120 = vmatprep.subr.mxu0 0.0
        %6121 = vmatpush1.msra.mxu0 0.0
        %6122 = vmatprep.subr.mxu0 0.0
        %6123 = vmatpush1.msra.mxu0 0.0
        %6124 = vmatprep.subr.mxu0 0.0
        %6125 = vmatpush1.msra.mxu0 0.0
        %6126 = vmatprep.subr.mxu0 0.0
        %6127 = vmatpush1.msra.mxu0 0.0
        %6128 = vmatprep.subr.mxu0 0.0
        %v6129 = vand.u32 %v5793, 4294901760
        %v6130 = vsub.f32 %v5793, %v6129
        %v6131 = vand.u32 %v6130, 4294901760
        %6132 = vmatpush1.msra.mxu0 %v6131
        %6133 = vmatprep.subr.mxu0 0.0
        %6134 = vmatpush2.msra.mxu0 0.0
        %6135 = vmatprep.subr.mxu0 0.0
        %6136 = vmatpush2.msra.mxu0 0.0
        %6137 = vmatprep.subr.mxu0 0.0
        %6138 = vmatpush2.msra.mxu0 0.0
        %6139 = vmatprep.subr.mxu0 0.0
        %6140 = vmatpush2.msra.mxu0 0.0
        %6141 = vmatprep.subr.mxu0 0.0
        %6142 = vmatpush2.msra.mxu0 0.0
        %6143 = vmatprep.subr.mxu0 0.0
        %6144 = vmatpush2.msra.mxu0 0.0
        %6145 = vmatprep.subr.mxu0 0.0
        %6146 = vmatpush2.msra.mxu0 0.0
        %6147 = vmatprep.subr.mxu0 0.0
        %6148 = vmatpush2.msra.mxu0 0.0
        %6149 = vmatprep.subr.mxu0 0.0
        %6150 = vmatpush2.msra.mxu0 0.0
        %6151 = vmatprep.subr.mxu0 0.0
        %6152 = vmatpush2.msra.mxu0 0.0
        %6153 = vmatprep.subr.mxu0 0.0
        %6154 = vmatpush2.msra.mxu0 0.0
        %6155 = vmatprep.subr.mxu0 0.0
        %6156 = vmatpush2.msra.mxu0 0.0
        %6157 = vmatprep.subr.mxu0 0.0
        %6158 = vmatpush2.msra.mxu0 0.0
        %6159 = vmatprep.subr.mxu0 0.0
        %6160 = vmatpush2.msra.mxu0 0.0
        %6161 = vmatprep.subr.mxu0 0.0
        %6162 = vmatpush2.msra.mxu0 0.0
        %6163 = vmatprep.subr.mxu0 0.0
        %6164 = vmatpush2.msra.mxu0 0.0
        %6165 = vmatprep.mubr.f32.mxu0 0.0
        %v6166 = vand.u32 %v5796, 4294901760
        %6167 = vmatmul.mubr.f32.gmra.mxu0 %v6166
        %v6168 = vpop.f32.mrf.mxu0
        %v6169 = vadd.f32 %v6095, %v6168
        %v6170 = vpop.f32.mrf.mxu0
        %6171 = vdwg.mxu0
        %6172 = vmatprep.subr.mxu0 0.0
        %6173 = vmatpush1.msra.mxu0 0.0
        %6174 = vmatprep.subr.mxu0 0.0
        %6175 = vmatpush1.msra.mxu0 0.0
        %6176 = vmatprep.subr.mxu0 0.0
        %6177 = vmatpush1.msra.mxu0 0.0
        %6178 = vmatprep.subr.mxu0 0.0
        %6179 = vmatpush1.msra.mxu0 0.0
        %6180 = vmatprep.subr.mxu0 0.0
        %6181 = vmatpush1.msra.mxu0 0.0
        %6182 = vmatprep.subr.mxu0 0.0
        %6183 = vmatpush1.msra.mxu0 0.0
        %6184 = vmatprep.subr.mxu0 0.0
        %6185 = vmatpush1.msra.mxu0 0.0
        %6186 = vmatprep.subr.mxu0 0.0
        %6187 = vmatpush1.msra.mxu0 0.0
        %6188 = vmatprep.subr.mxu0 0.0
        %6189 = vmatpush1.msra.mxu0 0.0
        %6190 = vmatprep.subr.mxu0 0.0
        %6191 = vmatpush1.msra.mxu0 0.0
        %6192 = vmatprep.subr.mxu0 0.0
        %6193 = vmatpush1.msra.mxu0 0.0
        %6194 = vmatprep.subr.mxu0 0.0
        %6195 = vmatpush1.msra.mxu0 0.0
        %6196 = vmatprep.subr.mxu0 0.0
        %6197 = vmatpush1.msra.mxu0 0.0
        %6198 = vmatprep.subr.mxu0 0.0
        %6199 = vmatpush1.msra.mxu0 0.0
        %6200 = vmatprep.subr.mxu0 0.0
        %6201 = vmatpush1.msra.mxu0 0.0
        %6202 = vmatprep.subr.mxu0 0.0
        %v6203 = vand.u32 %v5793, 4294901760
        %6204 = vmatpush1.msra.mxu0 %v6203
        %6205 = vmatprep.subr.mxu0 0.0
        %6206 = vmatpush2.msra.mxu0 0.0
        %6207 = vmatprep.subr.mxu0 0.0
        %6208 = vmatpush2.msra.mxu0 0.0
        %6209 = vmatprep.subr.mxu0 0.0
        %6210 = vmatpush2.msra.mxu0 0.0
        %6211 = vmatprep.subr.mxu0 0.0
        %6212 = vmatpush2.msra.mxu0 0.0
        %6213 = vmatprep.subr.mxu0 0.0
        %6214 = vmatpush2.msra.mxu0 0.0
        %6215 = vmatprep.subr.mxu0 0.0
        %6216 = vmatpush2.msra.mxu0 0.0
        %6217 = vmatprep.subr.mxu0 0.0
        %6218 = vmatpush2.msra.mxu0 0.0
        %6219 = vmatprep.subr.mxu0 0.0
        %6220 = vmatpush2.msra.mxu0 0.0
        %6221 = vmatprep.subr.mxu0 0.0
        %6222 = vmatpush2.msra.mxu0 0.0
        %6223 = vmatprep.subr.mxu0 0.0
        %6224 = vmatpush2.msra.mxu0 0.0
        %6225 = vmatprep.subr.mxu0 0.0
        %6226 = vmatpush2.msra.mxu0 0.0
        %6227 = vmatprep.subr.mxu0 0.0
        %6228 = vmatpush2.msra.mxu0 0.0
        %6229 = vmatprep.subr.mxu0 0.0
        %6230 = vmatpush2.msra.mxu0 0.0
        %6231 = vmatprep.subr.mxu0 0.0
        %6232 = vmatpush2.msra.mxu0 0.0
        %6233 = vmatprep.subr.mxu0 0.0
        %6234 = vmatpush2.msra.mxu0 0.0
        %6235 = vmatprep.subr.mxu0 0.0
        %6236 = vmatpush2.msra.mxu0 0.0
        %6237 = vmatprep.mubr.f32.mxu0 0.0
        %v6238 = vand.u32 %v5796, 4294901760
        %6239 = vmatmul.mubr.f32.gmra.mxu0 %v6238
        %v6240 = vpop.f32.mrf.mxu0
        %v6241 = vadd.f32 %v6169, %v6240
        %v6242 = vpop.f32.mrf.mxu0
        %6243 = vdwg.mxu0
        %6245 = vrot.lane.b32.xlu0 %v4403, 32
        %v6246 = vpop.permute.xlu0 %6245
        %6249 = vrot.lane.b32.xlu0 %v5322, 64
        %v6250 = vpop.permute.xlu0 %6249
        %6253 = vrot.lane.b32.xlu0 %v6241, 96
        %v6254 = vpop.permute.xlu0 %6253
        %v6256 = vsel %vm2563, %v3483, %v6246
        %vm6257 = vcmask 523264
        %v6258 = vsel %vm6257, %v6256, %v6250
        %vm6259 = vcmask 785408
        %v6260 = vsel %vm6259, %v6258, %v6254
        %v6261 = vld [vmem:[#allocation13] sm:$0xff]
        %v6262 = vld [vmem:[#allocation13 + $0x8] sm:$0xff]
        %v6263 = vld [vmem:[#allocation13 + $0x10] sm:$0xff]
        %v6264 = vld [vmem:[#allocation13 + $0x18] sm:$0xff]
        %v6265 = vld [vmem:[#allocation13 + $0x20] sm:$0xff]
        %v6266 = vld [vmem:[#allocation13 + $0x28] sm:$0xff]
        %v6267 = vld [vmem:[#allocation13 + $0x30] sm:$0xff]
        %v6268 = vld [vmem:[#allocation13 + $0x38] sm:$0xff]
        %v6269 = vld [vmem:[#allocation13 + $0x40] sm:$0xff]
        %v6270 = vld [vmem:[#allocation13 + $0x48] sm:$0xff]
        %v6271 = vld [vmem:[#allocation13 + $0x50] sm:$0xff]
        %v6272 = vld [vmem:[#allocation13 + $0x58] sm:$0xff]
        %v6273 = vld [vmem:[#allocation13 + $0x60] sm:$0xff]
        %v6274 = vld [vmem:[#allocation13 + $0x68] sm:$0xff]
        %v6275 = vld [vmem:[#allocation13 + $0x70] sm:$0xff]
        %v6276 = vld [vmem:[#allocation13 + $0x78] sm:$0xff]
        %v6277 = vld [vmem:[%s9] sm:$0x1]
        %v6279 = vlaneseq
        %v6280 = vshrl.u32 %v6279, 7
        %v6281 = vsub.s32 0, %v6280
        %v6282 = vrot.slane %v6277, %v6281
        %6284 = vmatprep.subr.mxu0 0.0
        %v6285 = vand.u32 %v6276, 4294901760
        %6286 = vmatpush1.msra.mxu0 %v6285
        %6287 = vmatprep.subr.mxu0 0.0
        %v6288 = vand.u32 %v6275, 4294901760
        %6289 = vmatpush1.msra.mxu0 %v6288
        %6290 = vmatprep.subr.mxu0 0.0
        %v6291 = vand.u32 %v6274, 4294901760
        %6292 = vmatpush1.msra.mxu0 %v6291
        %6293 = vmatprep.subr.mxu0 0.0
        %v6294 = vand.u32 %v6273, 4294901760
        %6295 = vmatpush1.msra.mxu0 %v6294
        %6296 = vmatprep.subr.mxu0 0.0
        %v6297 = vand.u32 %v6272, 4294901760
        %6298 = vmatpush1.msra.mxu0 %v6297
        %6299 = vmatprep.subr.mxu0 0.0
        %v6300 = vand.u32 %v6271, 4294901760
        %6301 = vmatpush1.msra.mxu0 %v6300
        %6302 = vmatprep.subr.mxu0 0.0
        %v6303 = vand.u32 %v6270, 4294901760
        %6304 = vmatpush1.msra.mxu0 %v6303
        %6305 = vmatprep.subr.mxu0 0.0
        %v6306 = vand.u32 %v6269, 4294901760
        %6307 = vmatpush1.msra.mxu0 %v6306
        %6308 = vmatprep.subr.mxu0 0.0
        %v6309 = vand.u32 %v6268, 4294901760
        %6310 = vmatpush1.msra.mxu0 %v6309
        %6311 = vmatprep.subr.mxu0 0.0
        %v6312 = vand.u32 %v6267, 4294901760
        %6313 = vmatpush1.msra.mxu0 %v6312
        %6314 = vmatprep.subr.mxu0 0.0
        %v6315 = vand.u32 %v6266, 4294901760
        %6316 = vmatpush1.msra.mxu0 %v6315
        %6317 = vmatprep.subr.mxu0 0.0
        %v6318 = vand.u32 %v6265, 4294901760
        %6319 = vmatpush1.msra.mxu0 %v6318
        %6320 = vmatprep.subr.mxu0 0.0
        %v6321 = vand.u32 %v6264, 4294901760
        %6322 = vmatpush1.msra.mxu0 %v6321
        %6323 = vmatprep.subr.mxu0 0.0
        %v6324 = vand.u32 %v6263, 4294901760
        %6325 = vmatpush1.msra.mxu0 %v6324
        %6326 = vmatprep.subr.mxu0 0.0
        %v6327 = vand.u32 %v6262, 4294901760
        %6328 = vmatpush1.msra.mxu0 %v6327
        %6329 = vmatprep.subr.mxu0 0.0
        %v6330 = vand.u32 %v6261, 4294901760
        %6331 = vmatpush1.msra.mxu0 %v6330
        %6332 = vmatprep.subr.mxu0 0.0
        %6333 = vmatpush2.msra.mxu0 0.0
        %6334 = vmatprep.subr.mxu0 0.0
        %6335 = vmatpush2.msra.mxu0 0.0
        %6336 = vmatprep.subr.mxu0 0.0
        %6337 = vmatpush2.msra.mxu0 0.0
        %6338 = vmatprep.subr.mxu0 0.0
        %6339 = vmatpush2.msra.mxu0 0.0
        %6340 = vmatprep.subr.mxu0 0.0
        %6341 = vmatpush2.msra.mxu0 0.0
        %6342 = vmatprep.subr.mxu0 0.0
        %6343 = vmatpush2.msra.mxu0 0.0
        %6344 = vmatprep.subr.mxu0 0.0
        %6345 = vmatpush2.msra.mxu0 0.0
        %6346 = vmatprep.subr.mxu0 0.0
        %6347 = vmatpush2.msra.mxu0 0.0
        %6348 = vmatprep.subr.mxu0 0.0
        %6349 = vmatpush2.msra.mxu0 0.0
        %6350 = vmatprep.subr.mxu0 0.0
        %6351 = vmatpush2.msra.mxu0 0.0
        %6352 = vmatprep.subr.mxu0 0.0
        %6353 = vmatpush2.msra.mxu0 0.0
        %6354 = vmatprep.subr.mxu0 0.0
        %6355 = vmatpush2.msra.mxu0 0.0
        %6356 = vmatprep.subr.mxu0 0.0
        %6357 = vmatpush2.msra.mxu0 0.0
        %6358 = vmatprep.subr.mxu0 0.0
        %6359 = vmatpush2.msra.mxu0 0.0
        %6360 = vmatprep.subr.mxu0 0.0
        %6361 = vmatpush2.msra.mxu0 0.0
        %6362 = vmatprep.subr.mxu0 0.0
        %6363 = vmatpush2.msra.mxu0 0.0
        %6364 = vmatprep.mubr.f32.mxu0 0.0
        %v6365 = vand.u32 %v6260, 4294901760
        %v6366 = vsub.f32 %v6260, %v6365
        %v6367 = vand.u32 %v6366, 4294901760
        %v6368 = vsub.f32 %v6366, %v6367
        %v6369 = vand.u32 %v6368, 4294901760
        %6370 = vmatmul.mubr.f32.gmra.mxu0 %v6369
        %v6371 = vpop.f32.mrf.mxu0
        %v6372 = vadd.f32 %v6282, %v6371
        %v6373 = vpop.f32.mrf.mxu0
        %6374 = vdwg.mxu0
        %6375 = vmatprep.subr.mxu0 0.0
        %v6376 = vand.u32 %v6276, 4294901760
        %v6377 = vsub.f32 %v6276, %v6376
        %v6378 = vand.u32 %v6377, 4294901760
        %v6379 = vsub.f32 %v6377, %v6378
        %v6380 = vand.u32 %v6379, 4294901760
        %6381 = vmatpush1.msra.mxu0 %v6380
        %6382 = vmatprep.subr.mxu0 0.0
        %v6383 = vand.u32 %v6275, 4294901760
        %v6384 = vsub.f32 %v6275, %v6383
        %v6385 = vand.u32 %v6384, 4294901760
        %v6386 = vsub.f32 %v6384, %v6385
        %v6387 = vand.u32 %v6386, 4294901760
        %6388 = vmatpush1.msra.mxu0 %v6387
        %6389 = vmatprep.subr.mxu0 0.0
        %v6390 = vand.u32 %v6274, 4294901760
        %v6391 = vsub.f32 %v6274, %v6390
        %v6392 = vand.u32 %v6391, 4294901760
        %v6393 = vsub.f32 %v6391, %v6392
        %v6394 = vand.u32 %v6393, 4294901760
        %6395 = vmatpush1.msra.mxu0 %v6394
        %6396 = vmatprep.subr.mxu0 0.0
        %v6397 = vand.u32 %v6273, 4294901760
        %v6398 = vsub.f32 %v6273, %v6397
        %v6399 = vand.u32 %v6398, 4294901760
        %v6400 = vsub.f32 %v6398, %v6399
        %v6401 = vand.u32 %v6400, 4294901760
        %6402 = vmatpush1.msra.mxu0 %v6401
        %6403 = vmatprep.subr.mxu0 0.0
        %v6404 = vand.u32 %v6272, 4294901760
        %v6405 = vsub.f32 %v6272, %v6404
        %v6406 = vand.u32 %v6405, 4294901760
        %v6407 = vsub.f32 %v6405, %v6406
        %v6408 = vand.u32 %v6407, 4294901760
        %6409 = vmatpush1.msra.mxu0 %v6408
        %6410 = vmatprep.subr.mxu0 0.0
        %v6411 = vand.u32 %v6271, 4294901760
        %v6412 = vsub.f32 %v6271, %v6411
        %v6413 = vand.u32 %v6412, 4294901760
        %v6414 = vsub.f32 %v6412, %v6413
        %v6415 = vand.u32 %v6414, 4294901760
        %6416 = vmatpush1.msra.mxu0 %v6415
        %6417 = vmatprep.subr.mxu0 0.0
        %v6418 = vand.u32 %v6270, 4294901760
        %v6419 = vsub.f32 %v6270, %v6418
        %v6420 = vand.u32 %v6419, 4294901760
        %v6421 = vsub.f32 %v6419, %v6420
        %v6422 = vand.u32 %v6421, 4294901760
        %6423 = vmatpush1.msra.mxu0 %v6422
        %6424 = vmatprep.subr.mxu0 0.0
        %v6425 = vand.u32 %v6269, 4294901760
        %v6426 = vsub.f32 %v6269, %v6425
        %v6427 = vand.u32 %v6426, 4294901760
        %v6428 = vsub.f32 %v6426, %v6427
        %v6429 = vand.u32 %v6428, 4294901760
        %6430 = vmatpush1.msra.mxu0 %v6429
        %6431 = vmatprep.subr.mxu0 0.0
        %v6432 = vand.u32 %v6268, 4294901760
        %v6433 = vsub.f32 %v6268, %v6432
        %v6434 = vand.u32 %v6433, 4294901760
        %v6435 = vsub.f32 %v6433, %v6434
        %v6436 = vand.u32 %v6435, 4294901760
        %6437 = vmatpush1.msra.mxu0 %v6436
        %6438 = vmatprep.subr.mxu0 0.0
        %v6439 = vand.u32 %v6267, 4294901760
        %v6440 = vsub.f32 %v6267, %v6439
        %v6441 = vand.u32 %v6440, 4294901760
        %v6442 = vsub.f32 %v6440, %v6441
        %v6443 = vand.u32 %v6442, 4294901760
        %6444 = vmatpush1.msra.mxu0 %v6443
        %6445 = vmatprep.subr.mxu0 0.0
        %v6446 = vand.u32 %v6266, 4294901760
        %v6447 = vsub.f32 %v6266, %v6446
        %v6448 = vand.u32 %v6447, 4294901760
        %v6449 = vsub.f32 %v6447, %v6448
        %v6450 = vand.u32 %v6449, 4294901760
        %6451 = vmatpush1.msra.mxu0 %v6450
        %6452 = vmatprep.subr.mxu0 0.0
        %v6453 = vand.u32 %v6265, 4294901760
        %v6454 = vsub.f32 %v6265, %v6453
        %v6455 = vand.u32 %v6454, 4294901760
        %v6456 = vsub.f32 %v6454, %v6455
        %v6457 = vand.u32 %v6456, 4294901760
        %6458 = vmatpush1.msra.mxu0 %v6457
        %6459 = vmatprep.subr.mxu0 0.0
        %v6460 = vand.u32 %v6264, 4294901760
        %v6461 = vsub.f32 %v6264, %v6460
        %v6462 = vand.u32 %v6461, 4294901760
        %v6463 = vsub.f32 %v6461, %v6462
        %v6464 = vand.u32 %v6463, 4294901760
        %6465 = vmatpush1.msra.mxu0 %v6464
        %6466 = vmatprep.subr.mxu0 0.0
        %v6467 = vand.u32 %v6263, 4294901760
        %v6468 = vsub.f32 %v6263, %v6467
        %v6469 = vand.u32 %v6468, 4294901760
        %v6470 = vsub.f32 %v6468, %v6469
        %v6471 = vand.u32 %v6470, 4294901760
        %6472 = vmatpush1.msra.mxu0 %v6471
        %6473 = vmatprep.subr.mxu0 0.0
        %v6474 = vand.u32 %v6262, 4294901760
        %v6475 = vsub.f32 %v6262, %v6474
        %v6476 = vand.u32 %v6475, 4294901760
        %v6477 = vsub.f32 %v6475, %v6476
        %v6478 = vand.u32 %v6477, 4294901760
        %6479 = vmatpush1.msra.mxu0 %v6478
        %6480 = vmatprep.subr.mxu0 0.0
        %v6481 = vand.u32 %v6261, 4294901760
        %v6482 = vsub.f32 %v6261, %v6481
        %v6483 = vand.u32 %v6482, 4294901760
        %v6484 = vsub.f32 %v6482, %v6483
        %v6485 = vand.u32 %v6484, 4294901760
        %6486 = vmatpush1.msra.mxu0 %v6485
        %6487 = vmatprep.subr.mxu0 0.0
        %6488 = vmatpush2.msra.mxu0 0.0
        %6489 = vmatprep.subr.mxu0 0.0
        %6490 = vmatpush2.msra.mxu0 0.0
        %6491 = vmatprep.subr.mxu0 0.0
        %6492 = vmatpush2.msra.mxu0 0.0
        %6493 = vmatprep.subr.mxu0 0.0
        %6494 = vmatpush2.msra.mxu0 0.0
        %6495 = vmatprep.subr.mxu0 0.0
        %6496 = vmatpush2.msra.mxu0 0.0
        %6497 = vmatprep.subr.mxu0 0.0
        %6498 = vmatpush2.msra.mxu0 0.0
        %6499 = vmatprep.subr.mxu0 0.0
        %6500 = vmatpush2.msra.mxu0 0.0
        %6501 = vmatprep.subr.mxu0 0.0
        %6502 = vmatpush2.msra.mxu0 0.0
        %6503 = vmatprep.subr.mxu0 0.0
        %6504 = vmatpush2.msra.mxu0 0.0
        %6505 = vmatprep.subr.mxu0 0.0
        %6506 = vmatpush2.msra.mxu0 0.0
        %6507 = vmatprep.subr.mxu0 0.0
        %6508 = vmatpush2.msra.mxu0 0.0
        %6509 = vmatprep.subr.mxu0 0.0
        %6510 = vmatpush2.msra.mxu0 0.0
        %6511 = vmatprep.subr.mxu0 0.0
        %6512 = vmatpush2.msra.mxu0 0.0
        %6513 = vmatprep.subr.mxu0 0.0
        %6514 = vmatpush2.msra.mxu0 0.0
        %6515 = vmatprep.subr.mxu0 0.0
        %6516 = vmatpush2.msra.mxu0 0.0
        %6517 = vmatprep.subr.mxu0 0.0
        %6518 = vmatpush2.msra.mxu0 0.0
        %6519 = vmatprep.mubr.f32.mxu0 0.0
        %v6520 = vand.u32 %v6260, 4294901760
        %6521 = vmatmul.mubr.f32.gmra.mxu0 %v6520
        %v6522 = vpop.f32.mrf.mxu0
        %v6523 = vadd.f32 %v6372, %v6522
        %v6524 = vpop.f32.mrf.mxu0
        %6525 = vdwg.mxu0
        %6526 = vmatprep.subr.mxu0 0.0
        %v6527 = vand.u32 %v6276, 4294901760
        %v6528 = vsub.f32 %v6276, %v6527
        %6529 = vmatpush1.msra.mxu0 %v6528
        %6530 = vmatprep.subr.mxu0 0.0
        %v6531 = vand.u32 %v6275, 4294901760
        %v6532 = vsub.f32 %v6275, %v6531
        %6533 = vmatpush1.msra.mxu0 %v6532
        %6534 = vmatprep.subr.mxu0 0.0
        %v6535 = vand.u32 %v6274, 4294901760
        %v6536 = vsub.f32 %v6274, %v6535
        %6537 = vmatpush1.msra.mxu0 %v6536
        %6538 = vmatprep.subr.mxu0 0.0
        %v6539 = vand.u32 %v6273, 4294901760
        %v6540 = vsub.f32 %v6273, %v6539
        %6541 = vmatpush1.msra.mxu0 %v6540
        %6542 = vmatprep.subr.mxu0 0.0
        %v6543 = vand.u32 %v6272, 4294901760
        %v6544 = vsub.f32 %v6272, %v6543
        %6545 = vmatpush1.msra.mxu0 %v6544
        %6546 = vmatprep.subr.mxu0 0.0
        %v6547 = vand.u32 %v6271, 4294901760
        %v6548 = vsub.f32 %v6271, %v6547
        %6549 = vmatpush1.msra.mxu0 %v6548
        %6550 = vmatprep.subr.mxu0 0.0
        %v6551 = vand.u32 %v6270, 4294901760
        %v6552 = vsub.f32 %v6270, %v6551
        %6553 = vmatpush1.msra.mxu0 %v6552
        %6554 = vmatprep.subr.mxu0 0.0
        %v6555 = vand.u32 %v6269, 4294901760
        %v6556 = vsub.f32 %v6269, %v6555
        %6557 = vmatpush1.msra.mxu0 %v6556
        %6558 = vmatprep.subr.mxu0 0.0
        %v6559 = vand.u32 %v6268, 4294901760
        %v6560 = vsub.f32 %v6268, %v6559
        %6561 = vmatpush1.msra.mxu0 %v6560
        %6562 = vmatprep.subr.mxu0 0.0
        %v6563 = vand.u32 %v6267, 4294901760
        %v6564 = vsub.f32 %v6267, %v6563
        %6565 = vmatpush1.msra.mxu0 %v6564
        %6566 = vmatprep.subr.mxu0 0.0
        %v6567 = vand.u32 %v6266, 4294901760
        %v6568 = vsub.f32 %v6266, %v6567
        %6569 = vmatpush1.msra.mxu0 %v6568
        %6570 = vmatprep.subr.mxu0 0.0
        %v6571 = vand.u32 %v6265, 4294901760
        %v6572 = vsub.f32 %v6265, %v6571
        %6573 = vmatpush1.msra.mxu0 %v6572
        %6574 = vmatprep.subr.mxu0 0.0
        %v6575 = vand.u32 %v6264, 4294901760
        %v6576 = vsub.f32 %v6264, %v6575
        %6577 = vmatpush1.msra.mxu0 %v6576
        %6578 = vmatprep.subr.mxu0 0.0
        %v6579 = vand.u32 %v6263, 4294901760
        %v6580 = vsub.f32 %v6263, %v6579
        %6581 = vmatpush1.msra.mxu0 %v6580
        %6582 = vmatprep.subr.mxu0 0.0
        %v6583 = vand.u32 %v6262, 4294901760
        %v6584 = vsub.f32 %v6262, %v6583
        %6585 = vmatpush1.msra.mxu0 %v6584
        %6586 = vmatprep.subr.mxu0 0.0
        %v6587 = vand.u32 %v6261, 4294901760
        %v6588 = vsub.f32 %v6261, %v6587
        %6589 = vmatpush1.msra.mxu0 %v6588
        %6590 = vmatprep.subr.mxu0 0.0
        %6591 = vmatpush2.msra.mxu0 0.0
        %6592 = vmatprep.subr.mxu0 0.0
        %6593 = vmatpush2.msra.mxu0 0.0
        %6594 = vmatprep.subr.mxu0 0.0
        %6595 = vmatpush2.msra.mxu0 0.0
        %6596 = vmatprep.subr.mxu0 0.0
        %6597 = vmatpush2.msra.mxu0 0.0
        %6598 = vmatprep.subr.mxu0 0.0
        %6599 = vmatpush2.msra.mxu0 0.0
        %6600 = vmatprep.subr.mxu0 0.0
        %6601 = vmatpush2.msra.mxu0 0.0
        %6602 = vmatprep.subr.mxu0 0.0
        %6603 = vmatpush2.msra.mxu0 0.0
        %6604 = vmatprep.subr.mxu0 0.0
        %6605 = vmatpush2.msra.mxu0 0.0
        %6606 = vmatprep.subr.mxu0 0.0
        %6607 = vmatpush2.msra.mxu0 0.0
        %6608 = vmatprep.subr.mxu0 0.0
        %6609 = vmatpush2.msra.mxu0 0.0
        %6610 = vmatprep.subr.mxu0 0.0
        %6611 = vmatpush2.msra.mxu0 0.0
        %6612 = vmatprep.subr.mxu0 0.0
        %6613 = vmatpush2.msra.mxu0 0.0
        %6614 = vmatprep.subr.mxu0 0.0
        %6615 = vmatpush2.msra.mxu0 0.0
        %6616 = vmatprep.subr.mxu0 0.0
        %6617 = vmatpush2.msra.mxu0 0.0
        %6618 = vmatprep.subr.mxu0 0.0
        %6619 = vmatpush2.msra.mxu0 0.0
        %6620 = vmatprep.subr.mxu0 0.0
        %6621 = vmatpush2.msra.mxu0 0.0
        %6622 = vmatprep.mubr.f32.mxu0 0.0
        %v6623 = vand.u32 %v6260, 4294901760
        %v6624 = vsub.f32 %v6260, %v6623
        %6625 = vmatmul.mubr.f32.gmra.mxu0 %v6624
        %v6626 = vpop.f32.mrf.mxu0
        %v6627 = vadd.f32 %v6523, %v6626
        %v6628 = vpop.f32.mrf.mxu0
        %6629 = vdwg.mxu0
        %6630 = vmatprep.subr.mxu0 0.0
        %v6631 = vand.u32 %v6276, 4294901760
        %6632 = vmatpush1.msra.mxu0 %v6631
        %6633 = vmatprep.subr.mxu0 0.0
        %v6634 = vand.u32 %v6275, 4294901760
        %6635 = vmatpush1.msra.mxu0 %v6634
        %6636 = vmatprep.subr.mxu0 0.0
        %v6637 = vand.u32 %v6274, 4294901760
        %6638 = vmatpush1.msra.mxu0 %v6637
        %6639 = vmatprep.subr.mxu0 0.0
        %v6640 = vand.u32 %v6273, 4294901760
        %6641 = vmatpush1.msra.mxu0 %v6640
        %6642 = vmatprep.subr.mxu0 0.0
        %v6643 = vand.u32 %v6272, 4294901760
        %6644 = vmatpush1.msra.mxu0 %v6643
        %6645 = vmatprep.subr.mxu0 0.0
        %v6646 = vand.u32 %v6271, 4294901760
        %6647 = vmatpush1.msra.mxu0 %v6646
        %6648 = vmatprep.subr.mxu0 0.0
        %v6649 = vand.u32 %v6270, 4294901760
        %6650 = vmatpush1.msra.mxu0 %v6649
        %6651 = vmatprep.subr.mxu0 0.0
        %v6652 = vand.u32 %v6269, 4294901760
        %6653 = vmatpush1.msra.mxu0 %v6652
        %6654 = vmatprep.subr.mxu0 0.0
        %v6655 = vand.u32 %v6268, 4294901760
        %6656 = vmatpush1.msra.mxu0 %v6655
        %6657 = vmatprep.subr.mxu0 0.0
        %v6658 = vand.u32 %v6267, 4294901760
        %6659 = vmatpush1.msra.mxu0 %v6658
        %6660 = vmatprep.subr.mxu0 0.0
        %v6661 = vand.u32 %v6266, 4294901760
        %6662 = vmatpush1.msra.mxu0 %v6661
        %6663 = vmatprep.subr.mxu0 0.0
        %v6664 = vand.u32 %v6265, 4294901760
        %6665 = vmatpush1.msra.mxu0 %v6664
        %6666 = vmatprep.subr.mxu0 0.0
        %v6667 = vand.u32 %v6264, 4294901760
        %6668 = vmatpush1.msra.mxu0 %v6667
        %6669 = vmatprep.subr.mxu0 0.0
        %v6670 = vand.u32 %v6263, 4294901760
        %6671 = vmatpush1.msra.mxu0 %v6670
        %6672 = vmatprep.subr.mxu0 0.0
        %v6673 = vand.u32 %v6262, 4294901760
        %6674 = vmatpush1.msra.mxu0 %v6673
        %6675 = vmatprep.subr.mxu0 0.0
        %v6676 = vand.u32 %v6261, 4294901760
        %6677 = vmatpush1.msra.mxu0 %v6676
        %6678 = vmatprep.subr.mxu0 0.0
        %6679 = vmatpush2.msra.mxu0 0.0
        %6680 = vmatprep.subr.mxu0 0.0
        %6681 = vmatpush2.msra.mxu0 0.0
        %6682 = vmatprep.subr.mxu0 0.0
        %6683 = vmatpush2.msra.mxu0 0.0
        %6684 = vmatprep.subr.mxu0 0.0
        %6685 = vmatpush2.msra.mxu0 0.0
        %6686 = vmatprep.subr.mxu0 0.0
        %6687 = vmatpush2.msra.mxu0 0.0
        %6688 = vmatprep.subr.mxu0 0.0
        %6689 = vmatpush2.msra.mxu0 0.0
        %6690 = vmatprep.subr.mxu0 0.0
        %6691 = vmatpush2.msra.mxu0 0.0
        %6692 = vmatprep.subr.mxu0 0.0
        %6693 = vmatpush2.msra.mxu0 0.0
        %6694 = vmatprep.subr.mxu0 0.0
        %6695 = vmatpush2.msra.mxu0 0.0
        %6696 = vmatprep.subr.mxu0 0.0
        %6697 = vmatpush2.msra.mxu0 0.0
        %6698 = vmatprep.subr.mxu0 0.0
        %6699 = vmatpush2.msra.mxu0 0.0
        %6700 = vmatprep.subr.mxu0 0.0
        %6701 = vmatpush2.msra.mxu0 0.0
        %6702 = vmatprep.subr.mxu0 0.0
        %6703 = vmatpush2.msra.mxu0 0.0
        %6704 = vmatprep.subr.mxu0 0.0
        %6705 = vmatpush2.msra.mxu0 0.0
        %6706 = vmatprep.subr.mxu0 0.0
        %6707 = vmatpush2.msra.mxu0 0.0
        %6708 = vmatprep.subr.mxu0 0.0
        %6709 = vmatpush2.msra.mxu0 0.0
        %6710 = vmatprep.mubr.f32.mxu0 0.0
        %v6711 = vand.u32 %v6260, 4294901760
        %v6712 = vsub.f32 %v6260, %v6711
        %v6713 = vand.u32 %v6712, 4294901760
        %6714 = vmatmul.mubr.f32.gmra.mxu0 %v6713
        %v6715 = vpop.f32.mrf.mxu0
        %v6716 = vadd.f32 %v6627, %v6715
        %v6717 = vpop.f32.mrf.mxu0
        %6718 = vdwg.mxu0
        %6719 = vmatprep.subr.mxu0 0.0
        %v6720 = vand.u32 %v6276, 4294901760
        %v6721 = vsub.f32 %v6276, %v6720
        %v6722 = vand.u32 %v6721, 4294901760
        %6723 = vmatpush1.msra.mxu0 %v6722
        %6724 = vmatprep.subr.mxu0 0.0
        %v6725 = vand.u32 %v6275, 4294901760
        %v6726 = vsub.f32 %v6275, %v6725
        %v6727 = vand.u32 %v6726, 4294901760
        %6728 = vmatpush1.msra.mxu0 %v6727
        %6729 = vmatprep.subr.mxu0 0.0
        %v6730 = vand.u32 %v6274, 4294901760
        %v6731 = vsub.f32 %v6274, %v6730
        %v6732 = vand.u32 %v6731, 4294901760
        %6733 = vmatpush1.msra.mxu0 %v6732
        %6734 = vmatprep.subr.mxu0 0.0
        %v6735 = vand.u32 %v6273, 4294901760
        %v6736 = vsub.f32 %v6273, %v6735
        %v6737 = vand.u32 %v6736, 4294901760
        %6738 = vmatpush1.msra.mxu0 %v6737
        %6739 = vmatprep.subr.mxu0 0.0
        %v6740 = vand.u32 %v6272, 4294901760
        %v6741 = vsub.f32 %v6272, %v6740
        %v6742 = vand.u32 %v6741, 4294901760
        %6743 = vmatpush1.msra.mxu0 %v6742
        %6744 = vmatprep.subr.mxu0 0.0
        %v6745 = vand.u32 %v6271, 4294901760
        %v6746 = vsub.f32 %v6271, %v6745
        %v6747 = vand.u32 %v6746, 4294901760
        %6748 = vmatpush1.msra.mxu0 %v6747
        %6749 = vmatprep.subr.mxu0 0.0
        %v6750 = vand.u32 %v6270, 4294901760
        %v6751 = vsub.f32 %v6270, %v6750
        %v6752 = vand.u32 %v6751, 4294901760
        %6753 = vmatpush1.msra.mxu0 %v6752
        %6754 = vmatprep.subr.mxu0 0.0
        %v6755 = vand.u32 %v6269, 4294901760
        %v6756 = vsub.f32 %v6269, %v6755
        %v6757 = vand.u32 %v6756, 4294901760
        %6758 = vmatpush1.msra.mxu0 %v6757
        %6759 = vmatprep.subr.mxu0 0.0
        %v6760 = vand.u32 %v6268, 4294901760
        %v6761 = vsub.f32 %v6268, %v6760
        %v6762 = vand.u32 %v6761, 4294901760
        %6763 = vmatpush1.msra.mxu0 %v6762
        %6764 = vmatprep.subr.mxu0 0.0
        %v6765 = vand.u32 %v6267, 4294901760
        %v6766 = vsub.f32 %v6267, %v6765
        %v6767 = vand.u32 %v6766, 4294901760
        %6768 = vmatpush1.msra.mxu0 %v6767
        %6769 = vmatprep.subr.mxu0 0.0
        %v6770 = vand.u32 %v6266, 4294901760
        %v6771 = vsub.f32 %v6266, %v6770
        %v6772 = vand.u32 %v6771, 4294901760
        %6773 = vmatpush1.msra.mxu0 %v6772
        %6774 = vmatprep.subr.mxu0 0.0
        %v6775 = vand.u32 %v6265, 4294901760
        %v6776 = vsub.f32 %v6265, %v6775
        %v6777 = vand.u32 %v6776, 4294901760
        %6778 = vmatpush1.msra.mxu0 %v6777
        %6779 = vmatprep.subr.mxu0 0.0
        %v6780 = vand.u32 %v6264, 4294901760
        %v6781 = vsub.f32 %v6264, %v6780
        %v6782 = vand.u32 %v6781, 4294901760
        %6783 = vmatpush1.msra.mxu0 %v6782
        %6784 = vmatprep.subr.mxu0 0.0
        %v6785 = vand.u32 %v6263, 4294901760
        %v6786 = vsub.f32 %v6263, %v6785
        %v6787 = vand.u32 %v6786, 4294901760
        %6788 = vmatpush1.msra.mxu0 %v6787
        %6789 = vmatprep.subr.mxu0 0.0
        %v6790 = vand.u32 %v6262, 4294901760
        %v6791 = vsub.f32 %v6262, %v6790
        %v6792 = vand.u32 %v6791, 4294901760
        %6793 = vmatpush1.msra.mxu0 %v6792
        %6794 = vmatprep.subr.mxu0 0.0
        %v6795 = vand.u32 %v6261, 4294901760
        %v6796 = vsub.f32 %v6261, %v6795
        %v6797 = vand.u32 %v6796, 4294901760
        %6798 = vmatpush1.msra.mxu0 %v6797
        %6799 = vmatprep.subr.mxu0 0.0
        %6800 = vmatpush2.msra.mxu0 0.0
        %6801 = vmatprep.subr.mxu0 0.0
        %6802 = vmatpush2.msra.mxu0 0.0
        %6803 = vmatprep.subr.mxu0 0.0
        %6804 = vmatpush2.msra.mxu0 0.0
        %6805 = vmatprep.subr.mxu0 0.0
        %6806 = vmatpush2.msra.mxu0 0.0
        %6807 = vmatprep.subr.mxu0 0.0
        %6808 = vmatpush2.msra.mxu0 0.0
        %6809 = vmatprep.subr.mxu0 0.0
        %6810 = vmatpush2.msra.mxu0 0.0
        %6811 = vmatprep.subr.mxu0 0.0
        %6812 = vmatpush2.msra.mxu0 0.0
        %6813 = vmatprep.subr.mxu0 0.0
        %6814 = vmatpush2.msra.mxu0 0.0
        %6815 = vmatprep.subr.mxu0 0.0
        %6816 = vmatpush2.msra.mxu0 0.0
        %6817 = vmatprep.subr.mxu0 0.0
        %6818 = vmatpush2.msra.mxu0 0.0
        %6819 = vmatprep.subr.mxu0 0.0
        %6820 = vmatpush2.msra.mxu0 0.0
        %6821 = vmatprep.subr.mxu0 0.0
        %6822 = vmatpush2.msra.mxu0 0.0
        %6823 = vmatprep.subr.mxu0 0.0
        %6824 = vmatpush2.msra.mxu0 0.0
        %6825 = vmatprep.subr.mxu0 0.0
        %6826 = vmatpush2.msra.mxu0 0.0
        %6827 = vmatprep.subr.mxu0 0.0
        %6828 = vmatpush2.msra.mxu0 0.0
        %6829 = vmatprep.subr.mxu0 0.0
        %6830 = vmatpush2.msra.mxu0 0.0
        %6831 = vmatprep.mubr.f32.mxu0 0.0
        %v6832 = vand.u32 %v6260, 4294901760
        %6833 = vmatmul.mubr.f32.gmra.mxu0 %v6832
        %v6834 = vpop.f32.mrf.mxu0
        %v6835 = vadd.f32 %v6716, %v6834
        %v6836 = vpop.f32.mrf.mxu0
        %6837 = vdwg.mxu0
        %6838 = vmatprep.subr.mxu0 0.0
        %v6839 = vand.u32 %v6276, 4294901760
        %6840 = vmatpush1.msra.mxu0 %v6839
        %6841 = vmatprep.subr.mxu0 0.0
        %v6842 = vand.u32 %v6275, 4294901760
        %6843 = vmatpush1.msra.mxu0 %v6842
        %6844 = vmatprep.subr.mxu0 0.0
        %v6845 = vand.u32 %v6274, 4294901760
        %6846 = vmatpush1.msra.mxu0 %v6845
        %6847 = vmatprep.subr.mxu0 0.0
        %v6848 = vand.u32 %v6273, 4294901760
        %6849 = vmatpush1.msra.mxu0 %v6848
        %6850 = vmatprep.subr.mxu0 0.0
        %v6851 = vand.u32 %v6272, 4294901760
        %6852 = vmatpush1.msra.mxu0 %v6851
        %6853 = vmatprep.subr.mxu0 0.0
        %v6854 = vand.u32 %v6271, 4294901760
        %6855 = vmatpush1.msra.mxu0 %v6854
        %6856 = vmatprep.subr.mxu0 0.0
        %v6857 = vand.u32 %v6270, 4294901760
        %6858 = vmatpush1.msra.mxu0 %v6857
        %6859 = vmatprep.subr.mxu0 0.0
        %v6860 = vand.u32 %v6269, 4294901760
        %6861 = vmatpush1.msra.mxu0 %v6860
        %6862 = vmatprep.subr.mxu0 0.0
        %v6863 = vand.u32 %v6268, 4294901760
        %6864 = vmatpush1.msra.mxu0 %v6863
        %6865 = vmatprep.subr.mxu0 0.0
        %v6866 = vand.u32 %v6267, 4294901760
        %6867 = vmatpush1.msra.mxu0 %v6866
        %6868 = vmatprep.subr.mxu0 0.0
        %v6869 = vand.u32 %v6266, 4294901760
        %6870 = vmatpush1.msra.mxu0 %v6869
        %6871 = vmatprep.subr.mxu0 0.0
        %v6872 = vand.u32 %v6265, 4294901760
        %6873 = vmatpush1.msra.mxu0 %v6872
        %6874 = vmatprep.subr.mxu0 0.0
        %v6875 = vand.u32 %v6264, 4294901760
        %6876 = vmatpush1.msra.mxu0 %v6875
        %6877 = vmatprep.subr.mxu0 0.0
        %v6878 = vand.u32 %v6263, 4294901760
        %6879 = vmatpush1.msra.mxu0 %v6878
        %6880 = vmatprep.subr.mxu0 0.0
        %v6881 = vand.u32 %v6262, 4294901760
        %6882 = vmatpush1.msra.mxu0 %v6881
        %6883 = vmatprep.subr.mxu0 0.0
        %v6884 = vand.u32 %v6261, 4294901760
        %6885 = vmatpush1.msra.mxu0 %v6884
        %6886 = vmatprep.subr.mxu0 0.0
        %6887 = vmatpush2.msra.mxu0 0.0
        %6888 = vmatprep.subr.mxu0 0.0
        %6889 = vmatpush2.msra.mxu0 0.0
        %6890 = vmatprep.subr.mxu0 0.0
        %6891 = vmatpush2.msra.mxu0 0.0
        %6892 = vmatprep.subr.mxu0 0.0
        %6893 = vmatpush2.msra.mxu0 0.0
        %6894 = vmatprep.subr.mxu0 0.0
        %6895 = vmatpush2.msra.mxu0 0.0
        %6896 = vmatprep.subr.mxu0 0.0
        %6897 = vmatpush2.msra.mxu0 0.0
        %6898 = vmatprep.subr.mxu0 0.0
        %6899 = vmatpush2.msra.mxu0 0.0
        %6900 = vmatprep.subr.mxu0 0.0
        %6901 = vmatpush2.msra.mxu0 0.0
        %6902 = vmatprep.subr.mxu0 0.0
        %6903 = vmatpush2.msra.mxu0 0.0
        %6904 = vmatprep.subr.mxu0 0.0
        %6905 = vmatpush2.msra.mxu0 0.0
        %6906 = vmatprep.subr.mxu0 0.0
        %6907 = vmatpush2.msra.mxu0 0.0
        %6908 = vmatprep.subr.mxu0 0.0
        %6909 = vmatpush2.msra.mxu0 0.0
        %6910 = vmatprep.subr.mxu0 0.0
        %6911 = vmatpush2.msra.mxu0 0.0
        %6912 = vmatprep.subr.mxu0 0.0
        %6913 = vmatpush2.msra.mxu0 0.0
        %6914 = vmatprep.subr.mxu0 0.0
        %6915 = vmatpush2.msra.mxu0 0.0
        %6916 = vmatprep.subr.mxu0 0.0
        %6917 = vmatpush2.msra.mxu0 0.0
        %6918 = vmatprep.mubr.f32.mxu0 0.0
        %v6919 = vand.u32 %v6260, 4294901760
        %6920 = vmatmul.mubr.f32.gmra.mxu0 %v6919
        %v6921 = vpop.f32.mrf.mxu0
        %v6922 = vadd.f32 %v6835, %v6921
        %v6923 = vpop.f32.mrf.mxu0
        %6924 = vdwg.mxu0
        %v6925 = vadd.f32 %v544, %v6922
        %6926 = vst [vmem:[%s540] sm:$0xff] %v6925
        %s6927 = sand.u32 %s326, 1
        %s6928 = scalar_lea.sflag [#allocation6], %s6927
        %s6929 = sand.u32 %s326, 1
        %s6930 = smul.addr %s6929, 8
        %s6931 = scalar_lea.vmem [#allocation15], %s6930
        // Predicated region
        $region97: #{tpu_custom_call.1} parent=71 // pred_check
          %p6932 = pneg %p336
        $region98: #{tpu_custom_call.1} parent=71 // pred_check_branch
          %6934 = sbr.rel (%p6932) target = $region100
        $region99: #{tpu_custom_call.1} parent=71 // pred_region
          %s6936 = ssub.s32 128, 128
          %6937 = vsyncadd %s6928, %s6936
          %s6938 = smul.addr %s35, 128
          %s6939 = scalar_lea.hbm %s13, %s6938
          %s6941 = sshll.u32 %s6931, 4
          %s6942 = int_to_ptr.vmem [resolvable:$true] %s6941
          %6944 = dma.vmem_to_hbm [thread:$0]  %s6942, 128, %s6939, %s6928
        $region100: #{tpu_custom_call.1} parent=71 // pred_fallthru
          _
      $region72: #{tpu_custom_call.1} parent=5 // pred_fallthru
        _
      %p6945 = scmp.le.s32.totalorder 2, %s30
      // Predicated region
      $region101: #{tpu_custom_call.1} parent=5 // pred_check
        %p6946 = pneg %p6945
      $region102: #{tpu_custom_call.1} parent=5 // pred_check_branch
        %6948 = sbr.rel (%p6946) target = $region104
      $region103: #{tpu_custom_call.1} parent=5 // pred_region
        %s6949 = ssub.s32 %s30, 2
        // Predicated region
        $region105: #{tpu_custom_call.1} parent=103 // pred_check
          %p6950 = pneg %p342
        $region106: #{tpu_custom_call.1} parent=103 // pred_check_branch
          %6952 = sbr.rel (%p6950) target = $region108
        $region107: #{tpu_custom_call.1} parent=103 // pred_region
          %s6953 = sand.u32 %s327, 1
          %s6954 = scalar_lea.sflag [#allocation6], %s6953
          %s6955 = sand.u32 %s327, 1
          %s6956 = smul.addr %s6955, 8
          %s6957 = scalar_lea.vmem [#allocation15], %s6956
          %6958 = dma.done %s6954, 128
        $region108: #{tpu_custom_call.1} parent=103 // pred_fallthru
          _
      $region104: #{tpu_custom_call.1} parent=5 // pred_fallthru
        _
    $region6: #{tpu_custom_call.1} parent=1 // loop_footer
      %s34 = sadd.s32 1, %s30
    $region7: #{tpu_custom_call.1} parent=1 // loop_footer_branch
      %29 = sbr.rel target = $region3
    $region8: #{tpu_custom_call.1} parent=1 // loop_exit
      _
    %6959 = vsyncpa [#allocation5], 1
    %s6960 = scalar_lea.sflag [#allocation5], 1
    %6961 = vsyncpa %s6960, 1
    %6962 = vsyncpa [#allocation9], 1
    %6963 = vsyncpa [#allocation12], 1
    %6964 = vsyncpa [#allocation6], 1
    %s6965 = scalar_lea.sflag [#allocation6], 1
    %6966 = vsyncpa %s6965, 1
    %6967 = vsyncpa [#allocation7], 1
    %s6968 = scalar_lea.sflag [#allocation7], 1
    %6969 = vsyncpa %s6968, 1

</llo_original>
